<compile_context>
chip_gen: v5e
topology: v5e:2x2
jax: 0.10.0
libtpu: 0.0.40
codegen_flags: <defaults>
</compile_context>

<pallas_src>
import math

import jax
import jax.numpy as jnp
from jax.experimental import pallas as pl
from jax.experimental.pallas import tpu as pltpu

# ---------------- model config (matches nn.TransformerDecoderLayer defaults) ----
HIDDEN = 64          # hidden_dim from config
NHEAD = 8            # nn.TransformerDecoderLayer default nhead used in module
HEAD_DIM = HIDDEN // NHEAD
FFN = 2048           # nn.TransformerDecoderLayer default dim_feedforward
LN_EPS = 1e-5
VOCAB = 120          # synthetic vocab (real module uses spacy-derived vocab size)
MAX_LEN = 5000


# ---------------------------- Pallas kernel -------------------------------------
def _layer_norm(v, w, b):
    mu = jnp.mean(v, axis=-1, keepdims=True)
    var = jnp.mean((v - mu) ** 2, axis=-1, keepdims=True)
    return (v - mu) * jax.lax.rsqrt(var + LN_EPS) * w + b


def make_decoder_kernel(B, T, S):
    H, NH, D = HIDDEN, NHEAD, HEAD_DIM
    scale = 1.0 / math.sqrt(D)

    def mha(q_rows, kv_rows, n_q, n_kv, qkv_w_ref, qkv_b_ref, ow_ref, ob_ref):
        # q_rows: (B*n_q, H) f32, kv_rows: (B*n_kv, H) f32
        q_in = q_rows.astype(jnp.bfloat16)
        kv_in = kv_rows.astype(jnp.bfloat16)
        acc = jnp.zeros((B * n_q, H), jnp.float32)
        for h in range(NH):  # static unroll; per-head weights -> no lane slices, no concat
            qh = jnp.dot(q_in, qkv_w_ref[0, h], preferred_element_type=jnp.float32) + qkv_b_ref[0, h]
            kh = jnp.dot(kv_in, qkv_w_ref[1, h], preferred_element_type=jnp.float32) + qkv_b_ref[1, h]
            vh = jnp.dot(kv_in, qkv_w_ref[2, h], preferred_element_type=jnp.float32) + qkv_b_ref[2, h]
            # fold/unfold only the leading (major) dim -> layout-safe reshapes
            qh = qh.reshape(B, n_q, D)
            kh = kh.reshape(B, n_kv, D)
            vh = vh.reshape(B, n_kv, D)
            s = jnp.einsum('bqd,bkd->bqk',
                           qh.astype(jnp.bfloat16), kh.astype(jnp.bfloat16),
                           preferred_element_type=jnp.float32) * scale
            s = s - jnp.max(s, axis=-1, keepdims=True)
            p = jnp.exp(s)
            p = p * pl.reciprocal(jnp.sum(p, axis=-1, keepdims=True), approx=True)
            oh = jnp.einsum('bqk,bkd->bqd',
                            p.astype(jnp.bfloat16), vh.astype(jnp.bfloat16),
                            preferred_element_type=jnp.float32)
            oh = oh.reshape(B * n_q, D)
            # fused out-projection: accumulate head contribution directly
            acc = acc + jnp.dot(oh.astype(jnp.bfloat16), ow_ref[h],
                                preferred_element_type=jnp.float32)
        return acc + ob_ref[...]

    def kernel(x_ref, mem_ref,
               sa_qkv_w_ref, sa_qkv_b_ref, sa_ow_ref, sa_ob_ref,
               ca_qkv_w_ref, ca_qkv_b_ref, ca_ow_ref, ca_ob_ref,
               f1w_ref, f1b_ref, f2w_ref, f2b_ref,
               lnw_ref, lnb_ref, o_ref):
        x = x_ref[...]       # (B*T, H) f32, embedded + positioned tgt, batch folded into rows
        mem = mem_ref[...]   # (B*S, H) f32, encoder memory, batch folded into rows
        lnw = lnw_ref[...]   # (3, H)
        lnb = lnb_ref[...]   # (3, H)

        # --- self-attention block (no tgt mask: module's forward passes none) ----
        sa = mha(x, x, T, T, sa_qkv_w_ref, sa_qkv_b_ref, sa_ow_ref, sa_ob_ref)
        x = _layer_norm(x + sa, lnw[0], lnb[0])

        # --- cross-attention block -----------------------------------------------
        ca = mha(x, mem, T, S, ca_qkv_w_ref, ca_qkv_b_ref, ca_ow_ref, ca_ob_ref)
        x = _layer_norm(x + ca, lnw[1], lnb[1])

        # --- feed-forward block ----------------------------------------------------
        h1 = jnp.dot(x.astype(jnp.bfloat16), f1w_ref[...],
                     preferred_element_type=jnp.float32) + f1b_ref[...]
        h1 = jnp.maximum(h1, 0.0)
        ff = jnp.dot(h1.astype(jnp.bfloat16), f2w_ref[...],
                     preferred_element_type=jnp.float32) + f2b_ref[...]
        x = _layer_norm(x + ff, lnw[2], lnb[2])

        o_ref[...] = x

    return kernel


def run_decoder_layer(x_2d, mem_2d, kp, B, T, S):
    """x_2d: (B*T, H) f32; mem_2d: (B*S, H) f32 -> (B*T, H) f32."""
    H = HIDDEN
    args = (
        x_2d, mem_2d,
        kp["sa_qkv_w"], kp["sa_qkv_b"], kp["sa_out_w"], kp["sa_out_b"],
        kp["ca_qkv_w"], kp["ca_qkv_b"], kp["ca_out_w"], kp["ca_out_b"],
        kp["ff1_w"], kp["ff1_b"], kp["ff2_w"], kp["ff2_b"],
        kp["ln_w"], kp["ln_b"],
    )

    flops = (
        2 * (B * T) * H * (3 * H)                 # self-attn q/k/v projections
        + 2 * (B * T) * H * H                     # cross-attn q projection
        + 2 * (B * S) * H * (2 * H)               # cross-attn k/v projections
        + 2 * B * NHEAD * T * T * HEAD_DIM * 2    # self-attn scores + p@v
        + 2 * B * NHEAD * T * S * HEAD_DIM * 2    # cross-attn scores + p@v
        + 2 * 2 * (B * T) * H * H                 # two out-projections
        + 2 * (B * T) * H * FFN * 2               # FFN (dominant)
    )
    transcendentals = B * NHEAD * T * (T + S)     # exp in the two softmaxes
    bytes_accessed = sum(int(a.size) * a.dtype.itemsize for a in args) + (B * T) * H * 4

    vmem = pl.BlockSpec(memory_space=pltpu.MemorySpace.VMEM)
    return pl.pallas_call(
        make_decoder_kernel(B, T, S),
        out_shape=jax.ShapeDtypeStruct((B * T, H), jnp.float32),
        in_specs=[vmem] * len(args),
        out_specs=vmem,
        cost_estimate=pl.CostEstimate(
            flops=int(flops),
            transcendentals=int(transcendentals),
            bytes_accessed=int(bytes_accessed),
        ),
    )(*args)


# ---------------------------- glue: params, embedding, pos-enc ------------------
def make_positional_encoding(d_model, max_len=MAX_LEN):
    position = jnp.arange(0, max_len, dtype=jnp.float32)[:, None]
    div_term = jnp.exp(
        jnp.arange(0, d_model, 2, dtype=jnp.float32) * (-math.log(10000.0) / d_model)
    )
    pe = jnp.zeros((max_len, d_model), dtype=jnp.float32)
    pe = pe.at[:, 0::2].set(jnp.sin(position * div_term))
    pe = pe.at[:, 1::2].set(jnp.cos(position * div_term))
    return pe[:, None, :]  # (max_len, 1, d_model)


def init_params(key):
    """Parameters in PyTorch nn.TransformerDecoderLayer layout."""
    ks = jax.random.split(key, 13)
    s = 0.02
    H = HIDDEN
    return {
        "embedding": jax.random.normal(ks[0], (VOCAB, H), jnp.float32) * s,
        "sa_in_w": jax.random.normal(ks[1], (3 * H, H), jnp.float32) * s,   # in_proj_weight
        "sa_in_b": jax.random.normal(ks[2], (3 * H,), jnp.float32) * s,
        "sa_out_w": jax.random.normal(ks[3], (H, H), jnp.float32) * s,      # out_proj.weight
        "sa_out_b": jax.random.normal(ks[4], (H,), jnp.float32) * s,
        "ca_in_w": jax.random.normal(ks[5], (3 * H, H), jnp.float32) * s,
        "ca_in_b": jax.random.normal(ks[6], (3 * H,), jnp.float32) * s,
        "ca_out_w": jax.random.normal(ks[7], (H, H), jnp.float32) * s,
        "ca_out_b": jax.random.normal(ks[8], (H,), jnp.float32) * s,
        "ff1_w": jax.random.normal(ks[9], (FFN, H), jnp.float32) * s,       # linear1.weight
        "ff1_b": jax.random.normal(ks[10], (FFN,), jnp.float32) * s,
        "ff2_w": jax.random.normal(ks[11], (H, FFN), jnp.float32) * s,      # linear2.weight
        "ff2_b": jax.random.normal(ks[12], (H,), jnp.float32) * s,
        "ln1_w": jnp.ones((H,), jnp.float32), "ln1_b": jnp.zeros((H,), jnp.float32),
        "ln2_w": jnp.ones((H,), jnp.float32), "ln2_b": jnp.zeros((H,), jnp.float32),
        "ln3_w": jnp.ones((H,), jnp.float32), "ln3_b": jnp.zeros((H,), jnp.float32),
    }


def prepare_kernel_params(p):
    """Rearrange PyTorch-layout weights into the kernel-friendly per-head bf16 layout (done once)."""
    H, NH, D = HIDDEN, NHEAD, HEAD_DIM

    def split_in_proj(w, b):
        wt = w.T                                   # (H_in, 3H) ; columns [q | k | v]
        def heads(m):                              # (H_in, H_out) -> (NH, H_in, D)
            return m.reshape(H, NH, D).transpose(1, 0, 2)
        qkv_w = jnp.stack([heads(wt[:, :H]), heads(wt[:, H:2 * H]), heads(wt[:, 2 * H:])], 0)
        qkv_b = b.reshape(3, NH, 1, D)
        return qkv_w.astype(jnp.bfloat16), qkv_b.astype(jnp.float32)

    def split_out_proj(w, b):
        ow = w.T.reshape(NH, D, H)                 # out = concat @ w.T  (row block h per head)
        return ow.astype(jnp.bfloat16), b.reshape(1, H).astype(jnp.float32)

    sa_qkv_w, sa_qkv_b = split_in_proj(p["sa_in_w"], p["sa_in_b"])
    sa_out_w, sa_out_b = split_out_proj(p["sa_out_w"], p["sa_out_b"])
    ca_qkv_w, ca_qkv_b = split_in_proj(p["ca_in_w"], p["ca_in_b"])
    ca_out_w, ca_out_b = split_out_proj(p["ca_out_w"], p["ca_out_b"])

    return {
        "embedding": p["embedding"],
        "pe": make_positional_encoding(HIDDEN),
        "sa_qkv_w": sa_qkv_w, "sa_qkv_b": sa_qkv_b, "sa_out_w": sa_out_w, "sa_out_b": sa_out_b,
        "ca_qkv_w": ca_qkv_w, "ca_qkv_b": ca_qkv_b, "ca_out_w": ca_out_w, "ca_out_b": ca_out_b,
        "ff1_w": p["ff1_w"].T.astype(jnp.bfloat16),                  # (H, FFN)
        "ff1_b": p["ff1_b"].reshape(1, FFN).astype(jnp.float32),
        "ff2_w": p["ff2_w"].T.astype(jnp.bfloat16),                  # (FFN, H)
        "ff2_b": p["ff2_b"].reshape(1, HIDDEN).astype(jnp.float32),
        "ln_w": jnp.stack([p["ln1_w"], p["ln2_w"], p["ln3_w"]], 0),  # (3, H)
        "ln_b": jnp.stack([p["ln1_b"], p["ln2_b"], p["ln3_b"]], 0),
    }


@jax.jit
def transformer_decoder_forward(tgt_ids, memory_sbH, kp):
    """tgt_ids: (T, B) int32; memory_sbH: (S, B, H) f32 -> (T, B, H) f32 (PyTorch seq-first)."""
    T, B = tgt_ids.shape
    S = memory_sbH.shape[0]
    # embedding * sqrt(H) + positional encoding
    emb = jnp.take(kp["embedding"], tgt_ids, axis=0) * math.sqrt(HIDDEN)  # (T, B, H)
    emb = emb + kp["pe"][:T]
    # TODO(synk): dropout layers are identity here (eval mode); no RNG dropout in kernel.
    x_2d = jnp.transpose(emb, (1, 0, 2)).reshape(B * T, HIDDEN)           # batch folded into rows
    mem_2d = jnp.transpose(memory_sbH, (1, 0, 2)).reshape(B * S, HIDDEN)
    out_2d = run_decoder_layer(x_2d, mem_2d, kp, B, T, S)
    return jnp.transpose(out_2d.reshape(B, T, HIDDEN), (1, 0, 2))         # back to (T, B, H)


# ---------------------------------- main -----------------------------------------
if __name__ == "__main__":
    key = jax.random.PRNGKey(0)
    k_par, k_tgt, k_mem = jax.random.split(key, 3)

    T, B, S = 8, 2, 10
    params = init_params(k_par)
    kparams = prepare_kernel_params(params)   # one-time bf16 / per-head weight prep

    tgt_ids = jax.random.randint(k_tgt, (T, B), 0, VOCAB, dtype=jnp.int32)     # (T, B)
    memory = jax.random.normal(k_mem, (S, B, HIDDEN), dtype=jnp.float32)       # (S, B, H)

    out = transformer_decoder_forward(tgt_ids, memory, kparams)
    out = jax.block_until_ready(out)

    assert out.shape == (T, B, HIDDEN)
    assert bool(jnp.all(jnp.isfinite(out)))
    print("KERNEL_OK")
</pallas_src>

<mosaic_0001>
module attributes {stable_mosaic.version = 11 : i64} {
  func.func @kernel(%arg0: memref<16x64xf32, #tpu.memory_space<vmem>>, %arg1: memref<20x64xf32, #tpu.memory_space<vmem>>, %arg2: memref<3x8x64x8xbf16, #tpu.memory_space<vmem>>, %arg3: memref<3x8x1x8xf32, #tpu.memory_space<vmem>>, %arg4: memref<8x8x64xbf16, #tpu.memory_space<vmem>>, %arg5: memref<1x64xf32, #tpu.memory_space<vmem>>, %arg6: memref<3x8x64x8xbf16, #tpu.memory_space<vmem>>, %arg7: memref<3x8x1x8xf32, #tpu.memory_space<vmem>>, %arg8: memref<8x8x64xbf16, #tpu.memory_space<vmem>>, %arg9: memref<1x64xf32, #tpu.memory_space<vmem>>, %arg10: memref<64x2048xbf16, #tpu.memory_space<vmem>>, %arg11: memref<1x2048xf32, #tpu.memory_space<vmem>>, %arg12: memref<2048x64xbf16, #tpu.memory_space<vmem>>, %arg13: memref<1x64xf32, #tpu.memory_space<vmem>>, %arg14: memref<3x64xf32, #tpu.memory_space<vmem>>, %arg15: memref<3x64xf32, #tpu.memory_space<vmem>>, %arg16: memref<16x64xf32, #tpu.memory_space<vmem>>) attributes {dimension_semantics = [], scalar_prefetch = 0 : i64, scratch_operands = 0 : i64, tpu.core_type = #tpu.core_type<tc>} {
    %c0 = arith.constant 0 : index
    %c0_0 = arith.constant 0 : index
    %0 = vector.load %arg0[%c0, %c0_0] : memref<16x64xf32, #tpu.memory_space<vmem>>, vector<16x64xf32>
    %c0_1 = arith.constant 0 : index
    %c0_2 = arith.constant 0 : index
    %1 = vector.load %arg1[%c0_1, %c0_2] : memref<20x64xf32, #tpu.memory_space<vmem>>, vector<20x64xf32>
    %c0_3 = arith.constant 0 : index
    %c0_4 = arith.constant 0 : index
    %2 = vector.load %arg14[%c0_3, %c0_4] : memref<3x64xf32, #tpu.memory_space<vmem>>, vector<3x64xf32>
    %c0_5 = arith.constant 0 : index
    %c0_6 = arith.constant 0 : index
    %3 = vector.load %arg15[%c0_5, %c0_6] : memref<3x64xf32, #tpu.memory_space<vmem>>, vector<3x64xf32>
    %4 = arith.truncf %0 : vector<16x64xf32> to vector<16x64xbf16>
    %5 = arith.truncf %0 : vector<16x64xf32> to vector<16x64xbf16>
    %cst = arith.constant 0.000000e+00 : f32
    %6 = vector.broadcast %cst : f32 to vector<16x64xf32>
    %c0_7 = arith.constant 0 : index
    %c0_8 = arith.constant 0 : index
    %c0_9 = arith.constant 0 : index
    %c0_10 = arith.constant 0 : index
    %7 = vector.load %arg2[%c0_7, %c0_8, %c0_9, %c0_10] : memref<3x8x64x8xbf16, #tpu.memory_space<vmem>>, vector<1x1x64x8xbf16>
    %8 = vector.shape_cast %7 : vector<1x1x64x8xbf16> to vector<64x8xbf16>
    %cst_11 = arith.constant dense<0.000000e+00> : vector<16x8xf32>
    %9 = tpu.matmul %4, %8, %cst_11 {dimension_numbers = #tpu.dot_dimension_numbers<[1], [0], [0], [1], [0, 0, 1, 1], [], []>} : vector<16x64xbf16>, vector<64x8xbf16>, vector<16x8xf32> -> vector<16x8xf32>
    %c0_12 = arith.constant 0 : index
    %c0_13 = arith.constant 0 : index
    %c0_14 = arith.constant 0 : index
    %c0_15 = arith.constant 0 : index
    %10 = vector.load %arg3[%c0_12, %c0_13, %c0_14, %c0_15] : memref<3x8x1x8xf32, #tpu.memory_space<vmem>>, vector<1x1x1x8xf32>
    %11 = vector.shape_cast %10 : vector<1x1x1x8xf32> to vector<1x8xf32>
    %12 = vector.broadcast %11 : vector<1x8xf32> to vector<16x8xf32>
    %13 = arith.addf %9, %12 : vector<16x8xf32>
    %c1 = arith.constant 1 : index
    %c0_16 = arith.constant 0 : index
    %c0_17 = arith.constant 0 : index
    %c0_18 = arith.constant 0 : index
    %14 = vector.load %arg2[%c1, %c0_16, %c0_17, %c0_18] : memref<3x8x64x8xbf16, #tpu.memory_space<vmem>>, vector<1x1x64x8xbf16>
    %15 = vector.shape_cast %14 : vector<1x1x64x8xbf16> to vector<64x8xbf16>
    %cst_19 = arith.constant dense<0.000000e+00> : vector<16x8xf32>
    %16 = tpu.matmul %5, %15, %cst_19 {dimension_numbers = #tpu.dot_dimension_numbers<[1], [0], [0], [1], [0, 0, 1, 1], [], []>} : vector<16x64xbf16>, vector<64x8xbf16>, vector<16x8xf32> -> vector<16x8xf32>
    %c1_20 = arith.constant 1 : index
    %c0_21 = arith.constant 0 : index
    %c0_22 = arith.constant 0 : index
    %c0_23 = arith.constant 0 : index
    %17 = vector.load %arg3[%c1_20, %c0_21, %c0_22, %c0_23] : memref<3x8x1x8xf32, #tpu.memory_space<vmem>>, vector<1x1x1x8xf32>
    %18 = vector.shape_cast %17 : vector<1x1x1x8xf32> to vector<1x8xf32>
    %19 = vector.broadcast %18 : vector<1x8xf32> to vector<16x8xf32>
    %20 = arith.addf %16, %19 : vector<16x8xf32>
    %c2 = arith.constant 2 : index
    %c0_24 = arith.constant 0 : index
    %c0_25 = arith.constant 0 : index
    %c0_26 = arith.constant 0 : index
    %21 = vector.load %arg2[%c2, %c0_24, %c0_25, %c0_26] : memref<3x8x64x8xbf16, #tpu.memory_space<vmem>>, vector<1x1x64x8xbf16>
    %22 = vector.shape_cast %21 : vector<1x1x64x8xbf16> to vector<64x8xbf16>
    %cst_27 = arith.constant dense<0.000000e+00> : vector<16x8xf32>
    %23 = tpu.matmul %5, %22, %cst_27 {dimension_numbers = #tpu.dot_dimension_numbers<[1], [0], [0], [1], [0, 0, 1, 1], [], []>} : vector<16x64xbf16>, vector<64x8xbf16>, vector<16x8xf32> -> vector<16x8xf32>
    %c2_28 = arith.constant 2 : index
    %c0_29 = arith.constant 0 : index
    %c0_30 = arith.constant 0 : index
    %c0_31 = arith.constant 0 : index
    %24 = vector.load %arg3[%c2_28, %c0_29, %c0_30, %c0_31] : memref<3x8x1x8xf32, #tpu.memory_space<vmem>>, vector<1x1x1x8xf32>
    %25 = vector.shape_cast %24 : vector<1x1x1x8xf32> to vector<1x8xf32>
    %26 = vector.broadcast %25 : vector<1x8xf32> to vector<16x8xf32>
    %27 = arith.addf %23, %26 : vector<16x8xf32>
    %28 = vector.shape_cast %13 : vector<16x8xf32> to vector<2x8x8xf32>
    %29 = vector.shape_cast %20 : vector<16x8xf32> to vector<2x8x8xf32>
    %30 = vector.shape_cast %27 : vector<16x8xf32> to vector<2x8x8xf32>
    %31 = arith.truncf %28 : vector<2x8x8xf32> to vector<2x8x8xbf16>
    %32 = arith.truncf %29 : vector<2x8x8xf32> to vector<2x8x8xbf16>
    "tpu.trace_start"() <{level = 10 : i32, message = "bqd,bkd->bqk"}> : () -> ()
    %cst_32 = arith.constant dense<0.000000e+00> : vector<2x8x8xf32>
    %33 = tpu.matmul %31, %32, %cst_32 {dimension_numbers = #tpu.dot_dimension_numbers<[2], [2], [1], [1], [0, 0, 0, 1, 1, 1], [0], [0]>} : vector<2x8x8xbf16>, vector<2x8x8xbf16>, vector<2x8x8xf32> -> vector<2x8x8xf32>
    "tpu.trace_stop"() : () -> ()
    %cst_33 = arith.constant 0.353553385 : f32
    %34 = vector.broadcast %cst_33 : f32 to vector<2x8x8xf32>
    %35 = arith.mulf %33, %34 : vector<2x8x8xf32>
    %cst_34 = arith.constant dense<0xFF800000> : vector<2x8xf32>
    %36 = vector.multi_reduction <maximumf>, %35, %cst_34 [2] : vector<2x8x8xf32> to vector<2x8xf32>
    %37 = vector.shape_cast %36 : vector<2x8xf32> to vector<2x8x1xf32>
    %38 = vector.broadcast %37 : vector<2x8x1xf32> to vector<2x8x8xf32>
    %39 = arith.subf %35, %38 : vector<2x8x8xf32>
    %40 = math.exp %39 : vector<2x8x8xf32>
    %cst_35 = arith.constant dense<0.000000e+00> : vector<2x8xf32>
    %41 = vector.multi_reduction <add>, %40, %cst_35 [2] : vector<2x8x8xf32> to vector<2x8xf32>
    %42 = vector.shape_cast %41 : vector<2x8xf32> to vector<2x8x1xf32>
    %43 = tpu.reciprocal %42 {approx = true} : vector<2x8x1xf32> -> vector<2x8x1xf32>
    %44 = vector.broadcast %43 : vector<2x8x1xf32> to vector<2x8x8xf32>
    %45 = arith.mulf %40, %44 : vector<2x8x8xf32>
    %46 = arith.truncf %45 : vector<2x8x8xf32> to vector<2x8x8xbf16>
    %47 = arith.truncf %30 : vector<2x8x8xf32> to vector<2x8x8xbf16>
    "tpu.trace_start"() <{level = 10 : i32, message = "bqk,bkd->bqd"}> : () -> ()
    %cst_36 = arith.constant dense<0.000000e+00> : vector<2x8x8xf32>
    %48 = tpu.matmul %46, %47, %cst_36 {dimension_numbers = #tpu.dot_dimension_numbers<[2], [1], [1], [2], [0, 0, 0, 1, 1, 2], [0], [0]>} : vector<2x8x8xbf16>, vector<2x8x8xbf16>, vector<2x8x8xf32> -> vector<2x8x8xf32>
    "tpu.trace_stop"() : () -> ()
    %49 = vector.shape_cast %48 : vector<2x8x8xf32> to vector<16x8xf32>
    %50 = arith.truncf %49 : vector<16x8xf32> to vector<16x8xbf16>
    %c0_37 = arith.constant 0 : index
    %c0_38 = arith.constant 0 : index
    %c0_39 = arith.constant 0 : index
    %51 = vector.load %arg4[%c0_37, %c0_38, %c0_39] : memref<8x8x64xbf16, #tpu.memory_space<vmem>>, vector<1x8x64xbf16>
    %52 = vector.shape_cast %51 : vector<1x8x64xbf16> to vector<8x64xbf16>
    %cst_40 = arith.constant dense<0.000000e+00> : vector<16x64xf32>
    %53 = tpu.matmul %50, %52, %cst_40 {dimension_numbers = #tpu.dot_dimension_numbers<[1], [0], [0], [1], [0, 0, 1, 1], [], []>} : vector<16x8xbf16>, vector<8x64xbf16>, vector<16x64xf32> -> vector<16x64xf32>
    %54 = arith.addf %6, %53 : vector<16x64xf32>
    %c0_41 = arith.constant 0 : index
    %c1_42 = arith.constant 1 : index
    %c0_43 = arith.constant 0 : index
    %c0_44 = arith.constant 0 : index
    %55 = vector.load %arg2[%c0_41, %c1_42, %c0_43, %c0_44] : memref<3x8x64x8xbf16, #tpu.memory_space<vmem>>, vector<1x1x64x8xbf16>
    %56 = vector.shape_cast %55 : vector<1x1x64x8xbf16> to vector<64x8xbf16>
    %cst_45 = arith.constant dense<0.000000e+00> : vector<16x8xf32>
    %57 = tpu.matmul %4, %56, %cst_45 {dimension_numbers = #tpu.dot_dimension_numbers<[1], [0], [0], [1], [0, 0, 1, 1], [], []>} : vector<16x64xbf16>, vector<64x8xbf16>, vector<16x8xf32> -> vector<16x8xf32>
    %c0_46 = arith.constant 0 : index
    %c1_47 = arith.constant 1 : index
    %c0_48 = arith.constant 0 : index
    %c0_49 = arith.constant 0 : index
    %58 = vector.load %arg3[%c0_46, %c1_47, %c0_48, %c0_49] : memref<3x8x1x8xf32, #tpu.memory_space<vmem>>, vector<1x1x1x8xf32>
    %59 = vector.shape_cast %58 : vector<1x1x1x8xf32> to vector<1x8xf32>
    %60 = vector.broadcast %59 : vector<1x8xf32> to vector<16x8xf32>
    %61 = arith.addf %57, %60 : vector<16x8xf32>
    %c1_50 = arith.constant 1 : index
    %c1_51 = arith.constant 1 : index
    %c0_52 = arith.constant 0 : index
    %c0_53 = arith.constant 0 : index
    %62 = vector.load %arg2[%c1_50, %c1_51, %c0_52, %c0_53] : memref<3x8x64x8xbf16, #tpu.memory_space<vmem>>, vector<1x1x64x8xbf16>
    %63 = vector.shape_cast %62 : vector<1x1x64x8xbf16> to vector<64x8xbf16>
    %cst_54 = arith.constant dense<0.000000e+00> : vector<16x8xf32>
    %64 = tpu.matmul %5, %63, %cst_54 {dimension_numbers = #tpu.dot_dimension_numbers<[1], [0], [0], [1], [0, 0, 1, 1], [], []>} : vector<16x64xbf16>, vector<64x8xbf16>, vector<16x8xf32> -> vector<16x8xf32>
    %c1_55 = arith.constant 1 : index
    %c1_56 = arith.constant 1 : index
    %c0_57 = arith.constant 0 : index
    %c0_58 = arith.constant 0 : index
    %65 = vector.load %arg3[%c1_55, %c1_56, %c0_57, %c0_58] : memref<3x8x1x8xf32, #tpu.memory_space<vmem>>, vector<1x1x1x8xf32>
    %66 = vector.shape_cast %65 : vector<1x1x1x8xf32> to vector<1x8xf32>
    %67 = vector.broadcast %66 : vector<1x8xf32> to vector<16x8xf32>
    %68 = arith.addf %64, %67 : vector<16x8xf32>
    %c2_59 = arith.constant 2 : index
    %c1_60 = arith.constant 1 : index
    %c0_61 = arith.constant 0 : index
    %c0_62 = arith.constant 0 : index
    %69 = vector.load %arg2[%c2_59, %c1_60, %c0_61, %c0_62] : memref<3x8x64x8xbf16, #tpu.memory_space<vmem>>, vector<1x1x64x8xbf16>
    %70 = vector.shape_cast %69 : vector<1x1x64x8xbf16> to vector<64x8xbf16>
    %cst_63 = arith.constant dense<0.000000e+00> : vector<16x8xf32>
    %71 = tpu.matmul %5, %70, %cst_63 {dimension_numbers = #tpu.dot_dimension_numbers<[1], [0], [0], [1], [0, 0, 1, 1], [], []>} : vector<16x64xbf16>, vector<64x8xbf16>, vector<16x8xf32> -> vector<16x8xf32>
    %c2_64 = arith.constant 2 : index
    %c1_65 = arith.constant 1 : index
    %c0_66 = arith.constant 0 : index
    %c0_67 = arith.constant 0 : index
    %72 = vector.load %arg3[%c2_64, %c1_65, %c0_66, %c0_67] : memref<3x8x1x8xf32, #tpu.memory_space<vmem>>, vector<1x1x1x8xf32>
    %73 = vector.shape_cast %72 : vector<1x1x1x8xf32> to vector<1x8xf32>
    %74 = vector.broadcast %73 : vector<1x8xf32> to vector<16x8xf32>
    %75 = arith.addf %71, %74 : vector<16x8xf32>
    %76 = vector.shape_cast %61 : vector<16x8xf32> to vector<2x8x8xf32>
    %77 = vector.shape_cast %68 : vector<16x8xf32> to vector<2x8x8xf32>
    %78 = vector.shape_cast %75 : vector<16x8xf32> to vector<2x8x8xf32>
    %79 = arith.truncf %76 : vector<2x8x8xf32> to vector<2x8x8xbf16>
    %80 = arith.truncf %77 : vector<2x8x8xf32> to vector<2x8x8xbf16>
    "tpu.trace_start"() <{level = 10 : i32, message = "bqd,bkd->bqk"}> : () -> ()
    %cst_68 = arith.constant dense<0.000000e+00> : vector<2x8x8xf32>
    %81 = tpu.matmul %79, %80, %cst_68 {dimension_numbers = #tpu.dot_dimension_numbers<[2], [2], [1], [1], [0, 0, 0, 1, 1, 1], [0], [0]>} : vector<2x8x8xbf16>, vector<2x8x8xbf16>, vector<2x8x8xf32> -> vector<2x8x8xf32>
    "tpu.trace_stop"() : () -> ()
    %cst_69 = arith.constant 0.353553385 : f32
    %82 = vector.broadcast %cst_69 : f32 to vector<2x8x8xf32>
    %83 = arith.mulf %81, %82 : vector<2x8x8xf32>
    %cst_70 = arith.constant dense<0xFF800000> : vector<2x8xf32>
    %84 = vector.multi_reduction <maximumf>, %83, %cst_70 [2] : vector<2x8x8xf32> to vector<2x8xf32>
    %85 = vector.shape_cast %84 : vector<2x8xf32> to vector<2x8x1xf32>
    %86 = vector.broadcast %85 : vector<2x8x1xf32> to vector<2x8x8xf32>
    %87 = arith.subf %83, %86 : vector<2x8x8xf32>
    %88 = math.exp %87 : vector<2x8x8xf32>
    %cst_71 = arith.constant dense<0.000000e+00> : vector<2x8xf32>
    %89 = vector.multi_reduction <add>, %88, %cst_71 [2] : vector<2x8x8xf32> to vector<2x8xf32>
    %90 = vector.shape_cast %89 : vector<2x8xf32> to vector<2x8x1xf32>
    %91 = tpu.reciprocal %90 {approx = true} : vector<2x8x1xf32> -> vector<2x8x1xf32>
    %92 = vector.broadcast %91 : vector<2x8x1xf32> to vector<2x8x8xf32>
    %93 = arith.mulf %88, %92 : vector<2x8x8xf32>
    %94 = arith.truncf %93 : vector<2x8x8xf32> to vector<2x8x8xbf16>
    %95 = arith.truncf %78 : vector<2x8x8xf32> to vector<2x8x8xbf16>
    "tpu.trace_start"() <{level = 10 : i32, message = "bqk,bkd->bqd"}> : () -> ()
    %cst_72 = arith.constant dense<0.000000e+00> : vector<2x8x8xf32>
    %96 = tpu.matmul %94, %95, %cst_72 {dimension_numbers = #tpu.dot_dimension_numbers<[2], [1], [1], [2], [0, 0, 0, 1, 1, 2], [0], [0]>} : vector<2x8x8xbf16>, vector<2x8x8xbf16>, vector<2x8x8xf32> -> vector<2x8x8xf32>
    "tpu.trace_stop"() : () -> ()
    %97 = vector.shape_cast %96 : vector<2x8x8xf32> to vector<16x8xf32>
    %98 = arith.truncf %97 : vector<16x8xf32> to vector<16x8xbf16>
    %c1_73 = arith.constant 1 : index
    %c0_74 = arith.constant 0 : index
    %c0_75 = arith.constant 0 : index
    %99 = vector.load %arg4[%c1_73, %c0_74, %c0_75] : memref<8x8x64xbf16, #tpu.memory_space<vmem>>, vector<1x8x64xbf16>
    %100 = vector.shape_cast %99 : vector<1x8x64xbf16> to vector<8x64xbf16>
    %cst_76 = arith.constant dense<0.000000e+00> : vector<16x64xf32>
    %101 = tpu.matmul %98, %100, %cst_76 {dimension_numbers = #tpu.dot_dimension_numbers<[1], [0], [0], [1], [0, 0, 1, 1], [], []>} : vector<16x8xbf16>, vector<8x64xbf16>, vector<16x64xf32> -> vector<16x64xf32>
    %102 = arith.addf %54, %101 : vector<16x64xf32>
    %c0_77 = arith.constant 0 : index
    %c2_78 = arith.constant 2 : index
    %c0_79 = arith.constant 0 : index
    %c0_80 = arith.constant 0 : index
    %103 = vector.load %arg2[%c0_77, %c2_78, %c0_79, %c0_80] : memref<3x8x64x8xbf16, #tpu.memory_space<vmem>>, vector<1x1x64x8xbf16>
    %104 = vector.shape_cast %103 : vector<1x1x64x8xbf16> to vector<64x8xbf16>
    %cst_81 = arith.constant dense<0.000000e+00> : vector<16x8xf32>
    %105 = tpu.matmul %4, %104, %cst_81 {dimension_numbers = #tpu.dot_dimension_numbers<[1], [0], [0], [1], [0, 0, 1, 1], [], []>} : vector<16x64xbf16>, vector<64x8xbf16>, vector<16x8xf32> -> vector<16x8xf32>
    %c0_82 = arith.constant 0 : index
    %c2_83 = arith.constant 2 : index
    %c0_84 = arith.constant 0 : index
    %c0_85 = arith.constant 0 : index
    %106 = vector.load %arg3[%c0_82, %c2_83, %c0_84, %c0_85] : memref<3x8x1x8xf32, #tpu.memory_space<vmem>>, vector<1x1x1x8xf32>
    %107 = vector.shape_cast %106 : vector<1x1x1x8xf32> to vector<1x8xf32>
    %108 = vector.broadcast %107 : vector<1x8xf32> to vector<16x8xf32>
    %109 = arith.addf %105, %108 : vector<16x8xf32>
    %c1_86 = arith.constant 1 : index
    %c2_87 = arith.constant 2 : index
    %c0_88 = arith.constant 0 : index
    %c0_89 = arith.constant 0 : index
    %110 = vector.load %arg2[%c1_86, %c2_87, %c0_88, %c0_89] : memref<3x8x64x8xbf16, #tpu.memory_space<vmem>>, vector<1x1x64x8xbf16>
    %111 = vector.shape_cast %110 : vector<1x1x64x8xbf16> to vector<64x8xbf16>
    %cst_90 = arith.constant dense<0.000000e+00> : vector<16x8xf32>
    %112 = tpu.matmul %5, %111, %cst_90 {dimension_numbers = #tpu.dot_dimension_numbers<[1], [0], [0], [1], [0, 0, 1, 1], [], []>} : vector<16x64xbf16>, vector<64x8xbf16>, vector<16x8xf32> -> vector<16x8xf32>
    %c1_91 = arith.constant 1 : index
    %c2_92 = arith.constant 2 : index
    %c0_93 = arith.constant 0 : index
    %c0_94 = arith.constant 0 : index
    %113 = vector.load %arg3[%c1_91, %c2_92, %c0_93, %c0_94] : memref<3x8x1x8xf32, #tpu.memory_space<vmem>>, vector<1x1x1x8xf32>
    %114 = vector.shape_cast %113 : vector<1x1x1x8xf32> to vector<1x8xf32>
    %115 = vector.broadcast %114 : vector<1x8xf32> to vector<16x8xf32>
    %116 = arith.addf %112, %115 : vector<16x8xf32>
    %c2_95 = arith.constant 2 : index
    %c2_96 = arith.constant 2 : index
    %c0_97 = arith.constant 0 : index
    %c0_98 = arith.constant 0 : index
    %117 = vector.load %arg2[%c2_95, %c2_96, %c0_97, %c0_98] : memref<3x8x64x8xbf16, #tpu.memory_space<vmem>>, vector<1x1x64x8xbf16>
    %118 = vector.shape_cast %117 : vector<1x1x64x8xbf16> to vector<64x8xbf16>
    %cst_99 = arith.constant dense<0.000000e+00> : vector<16x8xf32>
    %119 = tpu.matmul %5, %118, %cst_99 {dimension_numbers = #tpu.dot_dimension_numbers<[1], [0], [0], [1], [0, 0, 1, 1], [], []>} : vector<16x64xbf16>, vector<64x8xbf16>, vector<16x8xf32> -> vector<16x8xf32>
    %c2_100 = arith.constant 2 : index
    %c2_101 = arith.constant 2 : index
    %c0_102 = arith.constant 0 : index
    %c0_103 = arith.constant 0 : index
    %120 = vector.load %arg3[%c2_100, %c2_101, %c0_102, %c0_103] : memref<3x8x1x8xf32, #tpu.memory_space<vmem>>, vector<1x1x1x8xf32>
    %121 = vector.shape_cast %120 : vector<1x1x1x8xf32> to vector<1x8xf32>
    %122 = vector.broadcast %121 : vector<1x8xf32> to vector<16x8xf32>
    %123 = arith.addf %119, %122 : vector<16x8xf32>
    %124 = vector.shape_cast %109 : vector<16x8xf32> to vector<2x8x8xf32>
    %125 = vector.shape_cast %116 : vector<16x8xf32> to vector<2x8x8xf32>
    %126 = vector.shape_cast %123 : vector<16x8xf32> to vector<2x8x8xf32>
    %127 = arith.truncf %124 : vector<2x8x8xf32> to vector<2x8x8xbf16>
    %128 = arith.truncf %125 : vector<2x8x8xf32> to vector<2x8x8xbf16>
    "tpu.trace_start"() <{level = 10 : i32, message = "bqd,bkd->bqk"}> : () -> ()
    %cst_104 = arith.constant dense<0.000000e+00> : vector<2x8x8xf32>
    %129 = tpu.matmul %127, %128, %cst_104 {dimension_numbers = #tpu.dot_dimension_numbers<[2], [2], [1], [1], [0, 0, 0, 1, 1, 1], [0], [0]>} : vector<2x8x8xbf16>, vector<2x8x8xbf16>, vector<2x8x8xf32> -> vector<2x8x8xf32>
    "tpu.trace_stop"() : () -> ()
    %cst_105 = arith.constant 0.353553385 : f32
    %130 = vector.broadcast %cst_105 : f32 to vector<2x8x8xf32>
    %131 = arith.mulf %129, %130 : vector<2x8x8xf32>
    %cst_106 = arith.constant dense<0xFF800000> : vector<2x8xf32>
    %132 = vector.multi_reduction <maximumf>, %131, %cst_106 [2] : vector<2x8x8xf32> to vector<2x8xf32>
    %133 = vector.shape_cast %132 : vector<2x8xf32> to vector<2x8x1xf32>
    %134 = vector.broadcast %133 : vector<2x8x1xf32> to vector<2x8x8xf32>
    %135 = arith.subf %131, %134 : vector<2x8x8xf32>
    %136 = math.exp %135 : vector<2x8x8xf32>
    %cst_107 = arith.constant dense<0.000000e+00> : vector<2x8xf32>
    %137 = vector.multi_reduction <add>, %136, %cst_107 [2] : vector<2x8x8xf32> to vector<2x8xf32>
    %138 = vector.shape_cast %137 : vector<2x8xf32> to vector<2x8x1xf32>
    %139 = tpu.reciprocal %138 {approx = true} : vector<2x8x1xf32> -> vector<2x8x1xf32>
    %140 = vector.broadcast %139 : vector<2x8x1xf32> to vector<2x8x8xf32>
    %141 = arith.mulf %136, %140 : vector<2x8x8xf32>
    %142 = arith.truncf %141 : vector<2x8x8xf32> to vector<2x8x8xbf16>
    %143 = arith.truncf %126 : vector<2x8x8xf32> to vector<2x8x8xbf16>
    "tpu.trace_start"() <{level = 10 : i32, message = "bqk,bkd->bqd"}> : () -> ()
    %cst_108 = arith.constant dense<0.000000e+00> : vector<2x8x8xf32>
    %144 = tpu.matmul %142, %143, %cst_108 {dimension_numbers = #tpu.dot_dimension_numbers<[2], [1], [1], [2], [0, 0, 0, 1, 1, 2], [0], [0]>} : vector<2x8x8xbf16>, vector<2x8x8xbf16>, vector<2x8x8xf32> -> vector<2x8x8xf32>
    "tpu.trace_stop"() : () -> ()
    %145 = vector.shape_cast %144 : vector<2x8x8xf32> to vector<16x8xf32>
    %146 = arith.truncf %145 : vector<16x8xf32> to vector<16x8xbf16>
    %c2_109 = arith.constant 2 : index
    %c0_110 = arith.constant 0 : index
    %c0_111 = arith.constant 0 : index
    %147 = vector.load %arg4[%c2_109, %c0_110, %c0_111] : memref<8x8x64xbf16, #tpu.memory_space<vmem>>, vector<1x8x64xbf16>
    %148 = vector.shape_cast %147 : vector<1x8x64xbf16> to vector<8x64xbf16>
    %cst_112 = arith.constant dense<0.000000e+00> : vector<16x64xf32>
    %149 = tpu.matmul %146, %148, %cst_112 {dimension_numbers = #tpu.dot_dimension_numbers<[1], [0], [0], [1], [0, 0, 1, 1], [], []>} : vector<16x8xbf16>, vector<8x64xbf16>, vector<16x64xf32> -> vector<16x64xf32>
    %150 = arith.addf %102, %149 : vector<16x64xf32>
    %c0_113 = arith.constant 0 : index
    %c3 = arith.constant 3 : index
    %c0_114 = arith.constant 0 : index
    %c0_115 = arith.constant 0 : index
    %151 = vector.load %arg2[%c0_113, %c3, %c0_114, %c0_115] : memref<3x8x64x8xbf16, #tpu.memory_space<vmem>>, vector<1x1x64x8xbf16>
    %152 = vector.shape_cast %151 : vector<1x1x64x8xbf16> to vector<64x8xbf16>
    %cst_116 = arith.constant dense<0.000000e+00> : vector<16x8xf32>
    %153 = tpu.matmul %4, %152, %cst_116 {dimension_numbers = #tpu.dot_dimension_numbers<[1], [0], [0], [1], [0, 0, 1, 1], [], []>} : vector<16x64xbf16>, vector<64x8xbf16>, vector<16x8xf32> -> vector<16x8xf32>
    %c0_117 = arith.constant 0 : index
    %c3_118 = arith.constant 3 : index
    %c0_119 = arith.constant 0 : index
    %c0_120 = arith.constant 0 : index
    %154 = vector.load %arg3[%c0_117, %c3_118, %c0_119, %c0_120] : memref<3x8x1x8xf32, #tpu.memory_space<vmem>>, vector<1x1x1x8xf32>
    %155 = vector.shape_cast %154 : vector<1x1x1x8xf32> to vector<1x8xf32>
    %156 = vector.broadcast %155 : vector<1x8xf32> to vector<16x8xf32>
    %157 = arith.addf %153, %156 : vector<16x8xf32>
    %c1_121 = arith.constant 1 : index
    %c3_122 = arith.constant 3 : index
    %c0_123 = arith.constant 0 : index
    %c0_124 = arith.constant 0 : index
    %158 = vector.load %arg2[%c1_121, %c3_122, %c0_123, %c0_124] : memref<3x8x64x8xbf16, #tpu.memory_space<vmem>>, vector<1x1x64x8xbf16>
    %159 = vector.shape_cast %158 : vector<1x1x64x8xbf16> to vector<64x8xbf16>
    %cst_125 = arith.constant dense<0.000000e+00> : vector<16x8xf32>
    %160 = tpu.matmul %5, %159, %cst_125 {dimension_numbers = #tpu.dot_dimension_numbers<[1], [0], [0], [1], [0, 0, 1, 1], [], []>} : vector<16x64xbf16>, vector<64x8xbf16>, vector<16x8xf32> -> vector<16x8xf32>
    %c1_126 = arith.constant 1 : index
    %c3_127 = arith.constant 3 : index
    %c0_128 = arith.constant 0 : index
    %c0_129 = arith.constant 0 : index
    %161 = vector.load %arg3[%c1_126, %c3_127, %c0_128, %c0_129] : memref<3x8x1x8xf32, #tpu.memory_space<vmem>>, vector<1x1x1x8xf32>
    %162 = vector.shape_cast %161 : vector<1x1x1x8xf32> to vector<1x8xf32>
    %163 = vector.broadcast %162 : vector<1x8xf32> to vector<16x8xf32>
    %164 = arith.addf %160, %163 : vector<16x8xf32>
    %c2_130 = arith.constant 2 : index
    %c3_131 = arith.constant 3 : index
    %c0_132 = arith.constant 0 : index
    %c0_133 = arith.constant 0 : index
    %165 = vector.load %arg2[%c2_130, %c3_131, %c0_132, %c0_133] : memref<3x8x64x8xbf16, #tpu.memory_space<vmem>>, vector<1x1x64x8xbf16>
    %166 = vector.shape_cast %165 : vector<1x1x64x8xbf16> to vector<64x8xbf16>
    %cst_134 = arith.constant dense<0.000000e+00> : vector<16x8xf32>
    %167 = tpu.matmul %5, %166, %cst_134 {dimension_numbers = #tpu.dot_dimension_numbers<[1], [0], [0], [1], [0, 0, 1, 1], [], []>} : vector<16x64xbf16>, vector<64x8xbf16>, vector<16x8xf32> -> vector<16x8xf32>
    %c2_135 = arith.constant 2 : index
    %c3_136 = arith.constant 3 : index
    %c0_137 = arith.constant 0 : index
    %c0_138 = arith.constant 0 : index
    %168 = vector.load %arg3[%c2_135, %c3_136, %c0_137, %c0_138] : memref<3x8x1x8xf32, #tpu.memory_space<vmem>>, vector<1x1x1x8xf32>
    %169 = vector.shape_cast %168 : vector<1x1x1x8xf32> to vector<1x8xf32>
    %170 = vector.broadcast %169 : vector<1x8xf32> to vector<16x8xf32>
    %171 = arith.addf %167, %170 : vector<16x8xf32>
    %172 = vector.shape_cast %157 : vector<16x8xf32> to vector<2x8x8xf32>
    %173 = vector.shape_cast %164 : vector<16x8xf32> to vector<2x8x8xf32>
    %174 = vector.shape_cast %171 : vector<16x8xf32> to vector<2x8x8xf32>
    %175 = arith.truncf %172 : vector<2x8x8xf32> to vector<2x8x8xbf16>
    %176 = arith.truncf %173 : vector<2x8x8xf32> to vector<2x8x8xbf16>
    "tpu.trace_start"() <{level = 10 : i32, message = "bqd,bkd->bqk"}> : () -> ()
    %cst_139 = arith.constant dense<0.000000e+00> : vector<2x8x8xf32>
    %177 = tpu.matmul %175, %176, %cst_139 {dimension_numbers = #tpu.dot_dimension_numbers<[2], [2], [1], [1], [0, 0, 0, 1, 1, 1], [0], [0]>} : vector<2x8x8xbf16>, vector<2x8x8xbf16>, vector<2x8x8xf32> -> vector<2x8x8xf32>
    "tpu.trace_stop"() : () -> ()
    %cst_140 = arith.constant 0.353553385 : f32
    %178 = vector.broadcast %cst_140 : f32 to vector<2x8x8xf32>
    %179 = arith.mulf %177, %178 : vector<2x8x8xf32>
    %cst_141 = arith.constant dense<0xFF800000> : vector<2x8xf32>
    %180 = vector.multi_reduction <maximumf>, %179, %cst_141 [2] : vector<2x8x8xf32> to vector<2x8xf32>
    %181 = vector.shape_cast %180 : vector<2x8xf32> to vector<2x8x1xf32>
    %182 = vector.broadcast %181 : vector<2x8x1xf32> to vector<2x8x8xf32>
    %183 = arith.subf %179, %182 : vector<2x8x8xf32>
    %184 = math.exp %183 : vector<2x8x8xf32>
    %cst_142 = arith.constant dense<0.000000e+00> : vector<2x8xf32>
    %185 = vector.multi_reduction <add>, %184, %cst_142 [2] : vector<2x8x8xf32> to vector<2x8xf32>
    %186 = vector.shape_cast %185 : vector<2x8xf32> to vector<2x8x1xf32>
    %187 = tpu.reciprocal %186 {approx = true} : vector<2x8x1xf32> -> vector<2x8x1xf32>
    %188 = vector.broadcast %187 : vector<2x8x1xf32> to vector<2x8x8xf32>
    %189 = arith.mulf %184, %188 : vector<2x8x8xf32>
    %190 = arith.truncf %189 : vector<2x8x8xf32> to vector<2x8x8xbf16>
    %191 = arith.truncf %174 : vector<2x8x8xf32> to vector<2x8x8xbf16>
    "tpu.trace_start"() <{level = 10 : i32, message = "bqk,bkd->bqd"}> : () -> ()
    %cst_143 = arith.constant dense<0.000000e+00> : vector<2x8x8xf32>
    %192 = tpu.matmul %190, %191, %cst_143 {dimension_numbers = #tpu.dot_dimension_numbers<[2], [1], [1], [2], [0, 0, 0, 1, 1, 2], [0], [0]>} : vector<2x8x8xbf16>, vector<2x8x8xbf16>, vector<2x8x8xf32> -> vector<2x8x8xf32>
    "tpu.trace_stop"() : () -> ()
    %193 = vector.shape_cast %192 : vector<2x8x8xf32> to vector<16x8xf32>
    %194 = arith.truncf %193 : vector<16x8xf32> to vector<16x8xbf16>
    %c3_144 = arith.constant 3 : index
    %c0_145 = arith.constant 0 : index
    %c0_146 = arith.constant 0 : index
    %195 = vector.load %arg4[%c3_144, %c0_145, %c0_146] : memref<8x8x64xbf16, #tpu.memory_space<vmem>>, vector<1x8x64xbf16>
    %196 = vector.shape_cast %195 : vector<1x8x64xbf16> to vector<8x64xbf16>
    %cst_147 = arith.constant dense<0.000000e+00> : vector<16x64xf32>
    %197 = tpu.matmul %194, %196, %cst_147 {dimension_numbers = #tpu.dot_dimension_numbers<[1], [0], [0], [1], [0, 0, 1, 1], [], []>} : vector<16x8xbf16>, vector<8x64xbf16>, vector<16x64xf32> -> vector<16x64xf32>
    %198 = arith.addf %150, %197 : vector<16x64xf32>
    %c0_148 = arith.constant 0 : index
    %c4 = arith.constant 4 : index
    %c0_149 = arith.constant 0 : index
    %c0_150 = arith.constant 0 : index
    %199 = vector.load %arg2[%c0_148, %c4, %c0_149, %c0_150] : memref<3x8x64x8xbf16, #tpu.memory_space<vmem>>, vector<1x1x64x8xbf16>
    %200 = vector.shape_cast %199 : vector<1x1x64x8xbf16> to vector<64x8xbf16>
    %cst_151 = arith.constant dense<0.000000e+00> : vector<16x8xf32>
    %201 = tpu.matmul %4, %200, %cst_151 {dimension_numbers = #tpu.dot_dimension_numbers<[1], [0], [0], [1], [0, 0, 1, 1], [], []>} : vector<16x64xbf16>, vector<64x8xbf16>, vector<16x8xf32> -> vector<16x8xf32>
    %c0_152 = arith.constant 0 : index
    %c4_153 = arith.constant 4 : index
    %c0_154 = arith.constant 0 : index
    %c0_155 = arith.constant 0 : index
    %202 = vector.load %arg3[%c0_152, %c4_153, %c0_154, %c0_155] : memref<3x8x1x8xf32, #tpu.memory_space<vmem>>, vector<1x1x1x8xf32>
    %203 = vector.shape_cast %202 : vector<1x1x1x8xf32> to vector<1x8xf32>
    %204 = vector.broadcast %203 : vector<1x8xf32> to vector<16x8xf32>
    %205 = arith.addf %201, %204 : vector<16x8xf32>
    %c1_156 = arith.constant 1 : index
    %c4_157 = arith.constant 4 : index
    %c0_158 = arith.constant 0 : index
    %c0_159 = arith.constant 0 : index
    %206 = vector.load %arg2[%c1_156, %c4_157, %c0_158, %c0_159] : memref<3x8x64x8xbf16, #tpu.memory_space<vmem>>, vector<1x1x64x8xbf16>
    %207 = vector.shape_cast %206 : vector<1x1x64x8xbf16> to vector<64x8xbf16>
    %cst_160 = arith.constant dense<0.000000e+00> : vector<16x8xf32>
    %208 = tpu.matmul %5, %207, %cst_160 {dimension_numbers = #tpu.dot_dimension_numbers<[1], [0], [0], [1], [0, 0, 1, 1], [], []>} : vector<16x64xbf16>, vector<64x8xbf16>, vector<16x8xf32> -> vector<16x8xf32>
    %c1_161 = arith.constant 1 : index
    %c4_162 = arith.constant 4 : index
    %c0_163 = arith.constant 0 : index
    %c0_164 = arith.constant 0 : index
    %209 = vector.load %arg3[%c1_161, %c4_162, %c0_163, %c0_164] : memref<3x8x1x8xf32, #tpu.memory_space<vmem>>, vector<1x1x1x8xf32>
    %210 = vector.shape_cast %209 : vector<1x1x1x8xf32> to vector<1x8xf32>
    %211 = vector.broadcast %210 : vector<1x8xf32> to vector<16x8xf32>
    %212 = arith.addf %208, %211 : vector<16x8xf32>
    %c2_165 = arith.constant 2 : index
    %c4_166 = arith.constant 4 : index
    %c0_167 = arith.constant 0 : index
    %c0_168 = arith.constant 0 : index
    %213 = vector.load %arg2[%c2_165, %c4_166, %c0_167, %c0_168] : memref<3x8x64x8xbf16, #tpu.memory_space<vmem>>, vector<1x1x64x8xbf16>
    %214 = vector.shape_cast %213 : vector<1x1x64x8xbf16> to vector<64x8xbf16>
    %cst_169 = arith.constant dense<0.000000e+00> : vector<16x8xf32>
    %215 = tpu.matmul %5, %214, %cst_169 {dimension_numbers = #tpu.dot_dimension_numbers<[1], [0], [0], [1], [0, 0, 1, 1], [], []>} : vector<16x64xbf16>, vector<64x8xbf16>, vector<16x8xf32> -> vector<16x8xf32>
    %c2_170 = arith.constant 2 : index
    %c4_171 = arith.constant 4 : index
    %c0_172 = arith.constant 0 : index
    %c0_173 = arith.constant 0 : index
    %216 = vector.load %arg3[%c2_170, %c4_171, %c0_172, %c0_173] : memref<3x8x1x8xf32, #tpu.memory_space<vmem>>, vector<1x1x1x8xf32>
    %217 = vector.shape_cast %216 : vector<1x1x1x8xf32> to vector<1x8xf32>
    %218 = vector.broadcast %217 : vector<1x8xf32> to vector<16x8xf32>
    %219 = arith.addf %215, %218 : vector<16x8xf32>
    %220 = vector.shape_cast %205 : vector<16x8xf32> to vector<2x8x8xf32>
    %221 = vector.shape_cast %212 : vector<16x8xf32> to vector<2x8x8xf32>
    %222 = vector.shape_cast %219 : vector<16x8xf32> to vector<2x8x8xf32>
    %223 = arith.truncf %220 : vector<2x8x8xf32> to vector<2x8x8xbf16>
    %224 = arith.truncf %221 : vector<2x8x8xf32> to vector<2x8x8xbf16>
    "tpu.trace_start"() <{level = 10 : i32, message = "bqd,bkd->bqk"}> : () -> ()
    %cst_174 = arith.constant dense<0.000000e+00> : vector<2x8x8xf32>
    %225 = tpu.matmul %223, %224, %cst_174 {dimension_numbers = #tpu.dot_dimension_numbers<[2], [2], [1], [1], [0, 0, 0, 1, 1, 1], [0], [0]>} : vector<2x8x8xbf16>, vector<2x8x8xbf16>, vector<2x8x8xf32> -> vector<2x8x8xf32>
    "tpu.trace_stop"() : () -> ()
    %cst_175 = arith.constant 0.353553385 : f32
    %226 = vector.broadcast %cst_175 : f32 to vector<2x8x8xf32>
    %227 = arith.mulf %225, %226 : vector<2x8x8xf32>
    %cst_176 = arith.constant dense<0xFF800000> : vector<2x8xf32>
    %228 = vector.multi_reduction <maximumf>, %227, %cst_176 [2] : vector<2x8x8xf32> to vector<2x8xf32>
    %229 = vector.shape_cast %228 : vector<2x8xf32> to vector<2x8x1xf32>
    %230 = vector.broadcast %229 : vector<2x8x1xf32> to vector<2x8x8xf32>
    %231 = arith.subf %227, %230 : vector<2x8x8xf32>
    %232 = math.exp %231 : vector<2x8x8xf32>
    %cst_177 = arith.constant dense<0.000000e+00> : vector<2x8xf32>
    %233 = vector.multi_reduction <add>, %232, %cst_177 [2] : vector<2x8x8xf32> to vector<2x8xf32>
    %234 = vector.shape_cast %233 : vector<2x8xf32> to vector<2x8x1xf32>
    %235 = tpu.reciprocal %234 {approx = true} : vector<2x8x1xf32> -> vector<2x8x1xf32>
    %236 = vector.broadcast %235 : vector<2x8x1xf32> to vector<2x8x8xf32>
    %237 = arith.mulf %232, %236 : vector<2x8x8xf32>
    %238 = arith.truncf %237 : vector<2x8x8xf32> to vector<2x8x8xbf16>
    %239 = arith.truncf %222 : vector<2x8x8xf32> to vector<2x8x8xbf16>
    "tpu.trace_start"() <{level = 10 : i32, message = "bqk,bkd->bqd"}> : () -> ()
    %cst_178 = arith.constant dense<0.000000e+00> : vector<2x8x8xf32>
    %240 = tpu.matmul %238, %239, %cst_178 {dimension_numbers = #tpu.dot_dimension_numbers<[2], [1], [1], [2], [0, 0, 0, 1, 1, 2], [0], [0]>} : vector<2x8x8xbf16>, vector<2x8x8xbf16>, vector<2x8x8xf32> -> vector<2x8x8xf32>
    "tpu.trace_stop"() : () -> ()
    %241 = vector.shape_cast %240 : vector<2x8x8xf32> to vector<16x8xf32>
    %242 = arith.truncf %241 : vector<16x8xf32> to vector<16x8xbf16>
    %c4_179 = arith.constant 4 : index
    %c0_180 = arith.constant 0 : index
    %c0_181 = arith.constant 0 : index
    %243 = vector.load %arg4[%c4_179, %c0_180, %c0_181] : memref<8x8x64xbf16, #tpu.memory_space<vmem>>, vector<1x8x64xbf16>
    %244 = vector.shape_cast %243 : vector<1x8x64xbf16> to vector<8x64xbf16>
    %cst_182 = arith.constant dense<0.000000e+00> : vector<16x64xf32>
    %245 = tpu.matmul %242, %244, %cst_182 {dimension_numbers = #tpu.dot_dimension_numbers<[1], [0], [0], [1], [0, 0, 1, 1], [], []>} : vector<16x8xbf16>, vector<8x64xbf16>, vector<16x64xf32> -> vector<16x64xf32>
    %246 = arith.addf %198, %245 : vector<16x64xf32>
    %c0_183 = arith.constant 0 : index
    %c5 = arith.constant 5 : index
    %c0_184 = arith.constant 0 : index
    %c0_185 = arith.constant 0 : index
    %247 = vector.load %arg2[%c0_183, %c5, %c0_184, %c0_185] : memref<3x8x64x8xbf16, #tpu.memory_space<vmem>>, vector<1x1x64x8xbf16>
    %248 = vector.shape_cast %247 : vector<1x1x64x8xbf16> to vector<64x8xbf16>
    %cst_186 = arith.constant dense<0.000000e+00> : vector<16x8xf32>
    %249 = tpu.matmul %4, %248, %cst_186 {dimension_numbers = #tpu.dot_dimension_numbers<[1], [0], [0], [1], [0, 0, 1, 1], [], []>} : vector<16x64xbf16>, vector<64x8xbf16>, vector<16x8xf32> -> vector<16x8xf32>
    %c0_187 = arith.constant 0 : index
    %c5_188 = arith.constant 5 : index
    %c0_189 = arith.constant 0 : index
    %c0_190 = arith.constant 0 : index
    %250 = vector.load %arg3[%c0_187, %c5_188, %c0_189, %c0_190] : memref<3x8x1x8xf32, #tpu.memory_space<vmem>>, vector<1x1x1x8xf32>
    %251 = vector.shape_cast %250 : vector<1x1x1x8xf32> to vector<1x8xf32>
    %252 = vector.broadcast %251 : vector<1x8xf32> to vector<16x8xf32>
    %253 = arith.addf %249, %252 : vector<16x8xf32>
    %c1_191 = arith.constant 1 : index
    %c5_192 = arith.constant 5 : index
    %c0_193 = arith.constant 0 : index
    %c0_194 = arith.constant 0 : index
    %254 = vector.load %arg2[%c1_191, %c5_192, %c0_193, %c0_194] : memref<3x8x64x8xbf16, #tpu.memory_space<vmem>>, vector<1x1x64x8xbf16>
    %255 = vector.shape_cast %254 : vector<1x1x64x8xbf16> to vector<64x8xbf16>
    %cst_195 = arith.constant dense<0.000000e+00> : vector<16x8xf32>
    %256 = tpu.matmul %5, %255, %cst_195 {dimension_numbers = #tpu.dot_dimension_numbers<[1], [0], [0], [1], [0, 0, 1, 1], [], []>} : vector<16x64xbf16>, vector<64x8xbf16>, vector<16x8xf32> -> vector<16x8xf32>
    %c1_196 = arith.constant 1 : index
    %c5_197 = arith.constant 5 : index
    %c0_198 = arith.constant 0 : index
    %c0_199 = arith.constant 0 : index
    %257 = vector.load %arg3[%c1_196, %c5_197, %c0_198, %c0_199] : memref<3x8x1x8xf32, #tpu.memory_space<vmem>>, vector<1x1x1x8xf32>
    %258 = vector.shape_cast %257 : vector<1x1x1x8xf32> to vector<1x8xf32>
    %259 = vector.broadcast %258 : vector<1x8xf32> to vector<16x8xf32>
    %260 = arith.addf %256, %259 : vector<16x8xf32>
    %c2_200 = arith.constant 2 : index
    %c5_201 = arith.constant 5 : index
    %c0_202 = arith.constant 0 : index
    %c0_203 = arith.constant 0 : index
    %261 = vector.load %arg2[%c2_200, %c5_201, %c0_202, %c0_203] : memref<3x8x64x8xbf16, #tpu.memory_space<vmem>>, vector<1x1x64x8xbf16>
    %262 = vector.shape_cast %261 : vector<1x1x64x8xbf16> to vector<64x8xbf16>
    %cst_204 = arith.constant dense<0.000000e+00> : vector<16x8xf32>
    %263 = tpu.matmul %5, %262, %cst_204 {dimension_numbers = #tpu.dot_dimension_numbers<[1], [0], [0], [1], [0, 0, 1, 1], [], []>} : vector<16x64xbf16>, vector<64x8xbf16>, vector<16x8xf32> -> vector<16x8xf32>
    %c2_205 = arith.constant 2 : index
    %c5_206 = arith.constant 5 : index
    %c0_207 = arith.constant 0 : index
    %c0_208 = arith.constant 0 : index
    %264 = vector.load %arg3[%c2_205, %c5_206, %c0_207, %c0_208] : memref<3x8x1x8xf32, #tpu.memory_space<vmem>>, vector<1x1x1x8xf32>
    %265 = vector.shape_cast %264 : vector<1x1x1x8xf32> to vector<1x8xf32>
    %266 = vector.broadcast %265 : vector<1x8xf32> to vector<16x8xf32>
    %267 = arith.addf %263, %266 : vector<16x8xf32>
    %268 = vector.shape_cast %253 : vector<16x8xf32> to vector<2x8x8xf32>
    %269 = vector.shape_cast %260 : vector<16x8xf32> to vector<2x8x8xf32>
    %270 = vector.shape_cast %267 : vector<16x8xf32> to vector<2x8x8xf32>
    %271 = arith.truncf %268 : vector<2x8x8xf32> to vector<2x8x8xbf16>
    %272 = arith.truncf %269 : vector<2x8x8xf32> to vector<2x8x8xbf16>
    "tpu.trace_start"() <{level = 10 : i32, message = "bqd,bkd->bqk"}> : () -> ()
    %cst_209 = arith.constant dense<0.000000e+00> : vector<2x8x8xf32>
    %273 = tpu.matmul %271, %272, %cst_209 {dimension_numbers = #tpu.dot_dimension_numbers<[2], [2], [1], [1], [0, 0, 0, 1, 1, 1], [0], [0]>} : vector<2x8x8xbf16>, vector<2x8x8xbf16>, vector<2x8x8xf32> -> vector<2x8x8xf32>
    "tpu.trace_stop"() : () -> ()
    %cst_210 = arith.constant 0.353553385 : f32
    %274 = vector.broadcast %cst_210 : f32 to vector<2x8x8xf32>
    %275 = arith.mulf %273, %274 : vector<2x8x8xf32>
    %cst_211 = arith.constant dense<0xFF800000> : vector<2x8xf32>
    %276 = vector.multi_reduction <maximumf>, %275, %cst_211 [2] : vector<2x8x8xf32> to vector<2x8xf32>
    %277 = vector.shape_cast %276 : vector<2x8xf32> to vector<2x8x1xf32>
    %278 = vector.broadcast %277 : vector<2x8x1xf32> to vector<2x8x8xf32>
    %279 = arith.subf %275, %278 : vector<2x8x8xf32>
    %280 = math.exp %279 : vector<2x8x8xf32>
    %cst_212 = arith.constant dense<0.000000e+00> : vector<2x8xf32>
    %281 = vector.multi_reduction <add>, %280, %cst_212 [2] : vector<2x8x8xf32> to vector<2x8xf32>
    %282 = vector.shape_cast %281 : vector<2x8xf32> to vector<2x8x1xf32>
    %283 = tpu.reciprocal %282 {approx = true} : vector<2x8x1xf32> -> vector<2x8x1xf32>
    %284 = vector.broadcast %283 : vector<2x8x1xf32> to vector<2x8x8xf32>
    %285 = arith.mulf %280, %284 : vector<2x8x8xf32>
    %286 = arith.truncf %285 : vector<2x8x8xf32> to vector<2x8x8xbf16>
    %287 = arith.truncf %270 : vector<2x8x8xf32> to vector<2x8x8xbf16>
    "tpu.trace_start"() <{level = 10 : i32, message = "bqk,bkd->bqd"}> : () -> ()
    %cst_213 = arith.constant dense<0.000000e+00> : vector<2x8x8xf32>
    %288 = tpu.matmul %286, %287, %cst_213 {dimension_numbers = #tpu.dot_dimension_numbers<[2], [1], [1], [2], [0, 0, 0, 1, 1, 2], [0], [0]>} : vector<2x8x8xbf16>, vector<2x8x8xbf16>, vector<2x8x8xf32> -> vector<2x8x8xf32>
    "tpu.trace_stop"() : () -> ()
    %289 = vector.shape_cast %288 : vector<2x8x8xf32> to vector<16x8xf32>
    %290 = arith.truncf %289 : vector<16x8xf32> to vector<16x8xbf16>
    %c5_214 = arith.constant 5 : index
    %c0_215 = arith.constant 0 : index
    %c0_216 = arith.constant 0 : index
    %291 = vector.load %arg4[%c5_214, %c0_215, %c0_216] : memref<8x8x64xbf16, #tpu.memory_space<vmem>>, vector<1x8x64xbf16>
    %292 = vector.shape_cast %291 : vector<1x8x64xbf16> to vector<8x64xbf16>
    %cst_217 = arith.constant dense<0.000000e+00> : vector<16x64xf32>
    %293 = tpu.matmul %290, %292, %cst_217 {dimension_numbers = #tpu.dot_dimension_numbers<[1], [0], [0], [1], [0, 0, 1, 1], [], []>} : vector<16x8xbf16>, vector<8x64xbf16>, vector<16x64xf32> -> vector<16x64xf32>
    %294 = arith.addf %246, %293 : vector<16x64xf32>
    %c0_218 = arith.constant 0 : index
    %c6 = arith.constant 6 : index
    %c0_219 = arith.constant 0 : index
    %c0_220 = arith.constant 0 : index
    %295 = vector.load %arg2[%c0_218, %c6, %c0_219, %c0_220] : memref<3x8x64x8xbf16, #tpu.memory_space<vmem>>, vector<1x1x64x8xbf16>
    %296 = vector.shape_cast %295 : vector<1x1x64x8xbf16> to vector<64x8xbf16>
    %cst_221 = arith.constant dense<0.000000e+00> : vector<16x8xf32>
    %297 = tpu.matmul %4, %296, %cst_221 {dimension_numbers = #tpu.dot_dimension_numbers<[1], [0], [0], [1], [0, 0, 1, 1], [], []>} : vector<16x64xbf16>, vector<64x8xbf16>, vector<16x8xf32> -> vector<16x8xf32>
    %c0_222 = arith.constant 0 : index
    %c6_223 = arith.constant 6 : index
    %c0_224 = arith.constant 0 : index
    %c0_225 = arith.constant 0 : index
    %298 = vector.load %arg3[%c0_222, %c6_223, %c0_224, %c0_225] : memref<3x8x1x8xf32, #tpu.memory_space<vmem>>, vector<1x1x1x8xf32>
    %299 = vector.shape_cast %298 : vector<1x1x1x8xf32> to vector<1x8xf32>
    %300 = vector.broadcast %299 : vector<1x8xf32> to vector<16x8xf32>
    %301 = arith.addf %297, %300 : vector<16x8xf32>
    %c1_226 = arith.constant 1 : index
    %c6_227 = arith.constant 6 : index
    %c0_228 = arith.constant 0 : index
    %c0_229 = arith.constant 0 : index
    %302 = vector.load %arg2[%c1_226, %c6_227, %c0_228, %c0_229] : memref<3x8x64x8xbf16, #tpu.memory_space<vmem>>, vector<1x1x64x8xbf16>
    %303 = vector.shape_cast %302 : vector<1x1x64x8xbf16> to vector<64x8xbf16>
    %cst_230 = arith.constant dense<0.000000e+00> : vector<16x8xf32>
    %304 = tpu.matmul %5, %303, %cst_230 {dimension_numbers = #tpu.dot_dimension_numbers<[1], [0], [0], [1], [0, 0, 1, 1], [], []>} : vector<16x64xbf16>, vector<64x8xbf16>, vector<16x8xf32> -> vector<16x8xf32>
    %c1_231 = arith.constant 1 : index
    %c6_232 = arith.constant 6 : index
    %c0_233 = arith.constant 0 : index
    %c0_234 = arith.constant 0 : index
    %305 = vector.load %arg3[%c1_231, %c6_232, %c0_233, %c0_234] : memref<3x8x1x8xf32, #tpu.memory_space<vmem>>, vector<1x1x1x8xf32>
    %306 = vector.shape_cast %305 : vector<1x1x1x8xf32> to vector<1x8xf32>
    %307 = vector.broadcast %306 : vector<1x8xf32> to vector<16x8xf32>
    %308 = arith.addf %304, %307 : vector<16x8xf32>
    %c2_235 = arith.constant 2 : index
    %c6_236 = arith.constant 6 : index
    %c0_237 = arith.constant 0 : index
    %c0_238 = arith.constant 0 : index
    %309 = vector.load %arg2[%c2_235, %c6_236, %c0_237, %c0_238] : memref<3x8x64x8xbf16, #tpu.memory_space<vmem>>, vector<1x1x64x8xbf16>
    %310 = vector.shape_cast %309 : vector<1x1x64x8xbf16> to vector<64x8xbf16>
    %cst_239 = arith.constant dense<0.000000e+00> : vector<16x8xf32>
    %311 = tpu.matmul %5, %310, %cst_239 {dimension_numbers = #tpu.dot_dimension_numbers<[1], [0], [0], [1], [0, 0, 1, 1], [], []>} : vector<16x64xbf16>, vector<64x8xbf16>, vector<16x8xf32> -> vector<16x8xf32>
    %c2_240 = arith.constant 2 : index
    %c6_241 = arith.constant 6 : index
    %c0_242 = arith.constant 0 : index
    %c0_243 = arith.constant 0 : index
    %312 = vector.load %arg3[%c2_240, %c6_241, %c0_242, %c0_243] : memref<3x8x1x8xf32, #tpu.memory_space<vmem>>, vector<1x1x1x8xf32>
    %313 = vector.shape_cast %312 : vector<1x1x1x8xf32> to vector<1x8xf32>
    %314 = vector.broadcast %313 : vector<1x8xf32> to vector<16x8xf32>
    %315 = arith.addf %311, %314 : vector<16x8xf32>
    %316 = vector.shape_cast %301 : vector<16x8xf32> to vector<2x8x8xf32>
    %317 = vector.shape_cast %308 : vector<16x8xf32> to vector<2x8x8xf32>
    %318 = vector.shape_cast %315 : vector<16x8xf32> to vector<2x8x8xf32>
    %319 = arith.truncf %316 : vector<2x8x8xf32> to vector<2x8x8xbf16>
    %320 = arith.truncf %317 : vector<2x8x8xf32> to vector<2x8x8xbf16>
    "tpu.trace_start"() <{level = 10 : i32, message = "bqd,bkd->bqk"}> : () -> ()
    %cst_244 = arith.constant dense<0.000000e+00> : vector<2x8x8xf32>
    %321 = tpu.matmul %319, %320, %cst_244 {dimension_numbers = #tpu.dot_dimension_numbers<[2], [2], [1], [1], [0, 0, 0, 1, 1, 1], [0], [0]>} : vector<2x8x8xbf16>, vector<2x8x8xbf16>, vector<2x8x8xf32> -> vector<2x8x8xf32>
    "tpu.trace_stop"() : () -> ()
    %cst_245 = arith.constant 0.353553385 : f32
    %322 = vector.broadcast %cst_245 : f32 to vector<2x8x8xf32>
    %323 = arith.mulf %321, %322 : vector<2x8x8xf32>
    %cst_246 = arith.constant dense<0xFF800000> : vector<2x8xf32>
    %324 = vector.multi_reduction <maximumf>, %323, %cst_246 [2] : vector<2x8x8xf32> to vector<2x8xf32>
    %325 = vector.shape_cast %324 : vector<2x8xf32> to vector<2x8x1xf32>
    %326 = vector.broadcast %325 : vector<2x8x1xf32> to vector<2x8x8xf32>
    %327 = arith.subf %323, %326 : vector<2x8x8xf32>
    %328 = math.exp %327 : vector<2x8x8xf32>
    %cst_247 = arith.constant dense<0.000000e+00> : vector<2x8xf32>
    %329 = vector.multi_reduction <add>, %328, %cst_247 [2] : vector<2x8x8xf32> to vector<2x8xf32>
    %330 = vector.shape_cast %329 : vector<2x8xf32> to vector<2x8x1xf32>
    %331 = tpu.reciprocal %330 {approx = true} : vector<2x8x1xf32> -> vector<2x8x1xf32>
    %332 = vector.broadcast %331 : vector<2x8x1xf32> to vector<2x8x8xf32>
    %333 = arith.mulf %328, %332 : vector<2x8x8xf32>
    %334 = arith.truncf %333 : vector<2x8x8xf32> to vector<2x8x8xbf16>
    %335 = arith.truncf %318 : vector<2x8x8xf32> to vector<2x8x8xbf16>
    "tpu.trace_start"() <{level = 10 : i32, message = "bqk,bkd->bqd"}> : () -> ()
    %cst_248 = arith.constant dense<0.000000e+00> : vector<2x8x8xf32>
    %336 = tpu.matmul %334, %335, %cst_248 {dimension_numbers = #tpu.dot_dimension_numbers<[2], [1], [1], [2], [0, 0, 0, 1, 1, 2], [0], [0]>} : vector<2x8x8xbf16>, vector<2x8x8xbf16>, vector<2x8x8xf32> -> vector<2x8x8xf32>
    "tpu.trace_stop"() : () -> ()
    %337 = vector.shape_cast %336 : vector<2x8x8xf32> to vector<16x8xf32>
    %338 = arith.truncf %337 : vector<16x8xf32> to vector<16x8xbf16>
    %c6_249 = arith.constant 6 : index
    %c0_250 = arith.constant 0 : index
    %c0_251 = arith.constant 0 : index
    %339 = vector.load %arg4[%c6_249, %c0_250, %c0_251] : memref<8x8x64xbf16, #tpu.memory_space<vmem>>, vector<1x8x64xbf16>
    %340 = vector.shape_cast %339 : vector<1x8x64xbf16> to vector<8x64xbf16>
    %cst_252 = arith.constant dense<0.000000e+00> : vector<16x64xf32>
    %341 = tpu.matmul %338, %340, %cst_252 {dimension_numbers = #tpu.dot_dimension_numbers<[1], [0], [0], [1], [0, 0, 1, 1], [], []>} : vector<16x8xbf16>, vector<8x64xbf16>, vector<16x64xf32> -> vector<16x64xf32>
    %342 = arith.addf %294, %341 : vector<16x64xf32>
    %c0_253 = arith.constant 0 : index
    %c7 = arith.constant 7 : index
    %c0_254 = arith.constant 0 : index
    %c0_255 = arith.constant 0 : index
    %343 = vector.load %arg2[%c0_253, %c7, %c0_254, %c0_255] : memref<3x8x64x8xbf16, #tpu.memory_space<vmem>>, vector<1x1x64x8xbf16>
    %344 = vector.shape_cast %343 : vector<1x1x64x8xbf16> to vector<64x8xbf16>
    %cst_256 = arith.constant dense<0.000000e+00> : vector<16x8xf32>
    %345 = tpu.matmul %4, %344, %cst_256 {dimension_numbers = #tpu.dot_dimension_numbers<[1], [0], [0], [1], [0, 0, 1, 1], [], []>} : vector<16x64xbf16>, vector<64x8xbf16>, vector<16x8xf32> -> vector<16x8xf32>
    %c0_257 = arith.constant 0 : index
    %c7_258 = arith.constant 7 : index
    %c0_259 = arith.constant 0 : index
    %c0_260 = arith.constant 0 : index
    %346 = vector.load %arg3[%c0_257, %c7_258, %c0_259, %c0_260] : memref<3x8x1x8xf32, #tpu.memory_space<vmem>>, vector<1x1x1x8xf32>
    %347 = vector.shape_cast %346 : vector<1x1x1x8xf32> to vector<1x8xf32>
    %348 = vector.broadcast %347 : vector<1x8xf32> to vector<16x8xf32>
    %349 = arith.addf %345, %348 : vector<16x8xf32>
    %c1_261 = arith.constant 1 : index
    %c7_262 = arith.constant 7 : index
    %c0_263 = arith.constant 0 : index
    %c0_264 = arith.constant 0 : index
    %350 = vector.load %arg2[%c1_261, %c7_262, %c0_263, %c0_264] : memref<3x8x64x8xbf16, #tpu.memory_space<vmem>>, vector<1x1x64x8xbf16>
    %351 = vector.shape_cast %350 : vector<1x1x64x8xbf16> to vector<64x8xbf16>
    %cst_265 = arith.constant dense<0.000000e+00> : vector<16x8xf32>
    %352 = tpu.matmul %5, %351, %cst_265 {dimension_numbers = #tpu.dot_dimension_numbers<[1], [0], [0], [1], [0, 0, 1, 1], [], []>} : vector<16x64xbf16>, vector<64x8xbf16>, vector<16x8xf32> -> vector<16x8xf32>
    %c1_266 = arith.constant 1 : index
    %c7_267 = arith.constant 7 : index
    %c0_268 = arith.constant 0 : index
    %c0_269 = arith.constant 0 : index
    %353 = vector.load %arg3[%c1_266, %c7_267, %c0_268, %c0_269] : memref<3x8x1x8xf32, #tpu.memory_space<vmem>>, vector<1x1x1x8xf32>
    %354 = vector.shape_cast %353 : vector<1x1x1x8xf32> to vector<1x8xf32>
    %355 = vector.broadcast %354 : vector<1x8xf32> to vector<16x8xf32>
    %356 = arith.addf %352, %355 : vector<16x8xf32>
    %c2_270 = arith.constant 2 : index
    %c7_271 = arith.constant 7 : index
    %c0_272 = arith.constant 0 : index
    %c0_273 = arith.constant 0 : index
    %357 = vector.load %arg2[%c2_270, %c7_271, %c0_272, %c0_273] : memref<3x8x64x8xbf16, #tpu.memory_space<vmem>>, vector<1x1x64x8xbf16>
    %358 = vector.shape_cast %357 : vector<1x1x64x8xbf16> to vector<64x8xbf16>
    %cst_274 = arith.constant dense<0.000000e+00> : vector<16x8xf32>
    %359 = tpu.matmul %5, %358, %cst_274 {dimension_numbers = #tpu.dot_dimension_numbers<[1], [0], [0], [1], [0, 0, 1, 1], [], []>} : vector<16x64xbf16>, vector<64x8xbf16>, vector<16x8xf32> -> vector<16x8xf32>
    %c2_275 = arith.constant 2 : index
    %c7_276 = arith.constant 7 : index
    %c0_277 = arith.constant 0 : index
    %c0_278 = arith.constant 0 : index
    %360 = vector.load %arg3[%c2_275, %c7_276, %c0_277, %c0_278] : memref<3x8x1x8xf32, #tpu.memory_space<vmem>>, vector<1x1x1x8xf32>
    %361 = vector.shape_cast %360 : vector<1x1x1x8xf32> to vector<1x8xf32>
    %362 = vector.broadcast %361 : vector<1x8xf32> to vector<16x8xf32>
    %363 = arith.addf %359, %362 : vector<16x8xf32>
    %364 = vector.shape_cast %349 : vector<16x8xf32> to vector<2x8x8xf32>
    %365 = vector.shape_cast %356 : vector<16x8xf32> to vector<2x8x8xf32>
    %366 = vector.shape_cast %363 : vector<16x8xf32> to vector<2x8x8xf32>
    %367 = arith.truncf %364 : vector<2x8x8xf32> to vector<2x8x8xbf16>
    %368 = arith.truncf %365 : vector<2x8x8xf32> to vector<2x8x8xbf16>
    "tpu.trace_start"() <{level = 10 : i32, message = "bqd,bkd->bqk"}> : () -> ()
    %cst_279 = arith.constant dense<0.000000e+00> : vector<2x8x8xf32>
    %369 = tpu.matmul %367, %368, %cst_279 {dimension_numbers = #tpu.dot_dimension_numbers<[2], [2], [1], [1], [0, 0, 0, 1, 1, 1], [0], [0]>} : vector<2x8x8xbf16>, vector<2x8x8xbf16>, vector<2x8x8xf32> -> vector<2x8x8xf32>
    "tpu.trace_stop"() : () -> ()
    %cst_280 = arith.constant 0.353553385 : f32
    %370 = vector.broadcast %cst_280 : f32 to vector<2x8x8xf32>
    %371 = arith.mulf %369, %370 : vector<2x8x8xf32>
    %cst_281 = arith.constant dense<0xFF800000> : vector<2x8xf32>
    %372 = vector.multi_reduction <maximumf>, %371, %cst_281 [2] : vector<2x8x8xf32> to vector<2x8xf32>
    %373 = vector.shape_cast %372 : vector<2x8xf32> to vector<2x8x1xf32>
    %374 = vector.broadcast %373 : vector<2x8x1xf32> to vector<2x8x8xf32>
    %375 = arith.subf %371, %374 : vector<2x8x8xf32>
    %376 = math.exp %375 : vector<2x8x8xf32>
    %cst_282 = arith.constant dense<0.000000e+00> : vector<2x8xf32>
    %377 = vector.multi_reduction <add>, %376, %cst_282 [2] : vector<2x8x8xf32> to vector<2x8xf32>
    %378 = vector.shape_cast %377 : vector<2x8xf32> to vector<2x8x1xf32>
    %379 = tpu.reciprocal %378 {approx = true} : vector<2x8x1xf32> -> vector<2x8x1xf32>
    %380 = vector.broadcast %379 : vector<2x8x1xf32> to vector<2x8x8xf32>
    %381 = arith.mulf %376, %380 : vector<2x8x8xf32>
    %382 = arith.truncf %381 : vector<2x8x8xf32> to vector<2x8x8xbf16>
    %383 = arith.truncf %366 : vector<2x8x8xf32> to vector<2x8x8xbf16>
    "tpu.trace_start"() <{level = 10 : i32, message = "bqk,bkd->bqd"}> : () -> ()
    %cst_283 = arith.constant dense<0.000000e+00> : vector<2x8x8xf32>
    %384 = tpu.matmul %382, %383, %cst_283 {dimension_numbers = #tpu.dot_dimension_numbers<[2], [1], [1], [2], [0, 0, 0, 1, 1, 2], [0], [0]>} : vector<2x8x8xbf16>, vector<2x8x8xbf16>, vector<2x8x8xf32> -> vector<2x8x8xf32>
    "tpu.trace_stop"() : () -> ()
    %385 = vector.shape_cast %384 : vector<2x8x8xf32> to vector<16x8xf32>
    %386 = arith.truncf %385 : vector<16x8xf32> to vector<16x8xbf16>
    %c7_284 = arith.constant 7 : index
    %c0_285 = arith.constant 0 : index
    %c0_286 = arith.constant 0 : index
    %387 = vector.load %arg4[%c7_284, %c0_285, %c0_286] : memref<8x8x64xbf16, #tpu.memory_space<vmem>>, vector<1x8x64xbf16>
    %388 = vector.shape_cast %387 : vector<1x8x64xbf16> to vector<8x64xbf16>
    %cst_287 = arith.constant dense<0.000000e+00> : vector<16x64xf32>
    %389 = tpu.matmul %386, %388, %cst_287 {dimension_numbers = #tpu.dot_dimension_numbers<[1], [0], [0], [1], [0, 0, 1, 1], [], []>} : vector<16x8xbf16>, vector<8x64xbf16>, vector<16x64xf32> -> vector<16x64xf32>
    %390 = arith.addf %342, %389 : vector<16x64xf32>
    %c0_288 = arith.constant 0 : index
    %c0_289 = arith.constant 0 : index
    %391 = vector.load %arg5[%c0_288, %c0_289] : memref<1x64xf32, #tpu.memory_space<vmem>>, vector<1x64xf32>
    %392 = vector.broadcast %391 : vector<1x64xf32> to vector<16x64xf32>
    %393 = arith.addf %390, %392 : vector<16x64xf32>
    %394 = arith.addf %0, %393 : vector<16x64xf32>
    %395 = vector.extract_strided_slice %2 {offsets = [0, 0], sizes = [1, 64], strides = [1, 1]} : vector<3x64xf32> to vector<1x64xf32>
    %396 = vector.shape_cast %395 : vector<1x64xf32> to vector<64xf32>
    %397 = vector.extract_strided_slice %3 {offsets = [0, 0], sizes = [1, 64], strides = [1, 1]} : vector<3x64xf32> to vector<1x64xf32>
    %398 = vector.shape_cast %397 : vector<1x64xf32> to vector<64xf32>
    %cst_290 = arith.constant dense<0.000000e+00> : vector<16xf32>
    %399 = vector.multi_reduction <add>, %394, %cst_290 [1] : vector<16x64xf32> to vector<16xf32>
    %400 = vector.shape_cast %399 : vector<16xf32> to vector<16x1xf32>
    %cst_291 = arith.constant 6.400000e+01 : f32
    %401 = vector.broadcast %cst_291 : f32 to vector<16x1xf32>
    %402 = arith.divf %400, %401 : vector<16x1xf32>
    %403 = vector.broadcast %402 : vector<16x1xf32> to vector<16x64xf32>
    %404 = arith.subf %394, %403 : vector<16x64xf32>
    %405 = arith.mulf %404, %404 : vector<16x64xf32>
    %cst_292 = arith.constant dense<0.000000e+00> : vector<16xf32>
    %406 = vector.multi_reduction <add>, %405, %cst_292 [1] : vector<16x64xf32> to vector<16xf32>
    %407 = vector.shape_cast %406 : vector<16xf32> to vector<16x1xf32>
    %cst_293 = arith.constant 6.400000e+01 : f32
    %408 = vector.broadcast %cst_293 : f32 to vector<16x1xf32>
    %409 = arith.divf %407, %408 : vector<16x1xf32>
    %410 = vector.broadcast %402 : vector<16x1xf32> to vector<16x64xf32>
    %411 = arith.subf %394, %410 : vector<16x64xf32>
    %cst_294 = arith.constant 9.99999974E-6 : f32
    %412 = vector.broadcast %cst_294 : f32 to vector<16x1xf32>
    %413 = arith.addf %409, %412 : vector<16x1xf32>
    %414 = math.rsqrt %413 : vector<16x1xf32>
    %415 = vector.broadcast %414 : vector<16x1xf32> to vector<16x64xf32>
    %416 = arith.mulf %411, %415 : vector<16x64xf32>
    %417 = vector.shape_cast %396 : vector<64xf32> to vector<1x64xf32>
    %418 = vector.broadcast %417 : vector<1x64xf32> to vector<16x64xf32>
    %419 = arith.mulf %416, %418 : vector<16x64xf32>
    %420 = vector.shape_cast %398 : vector<64xf32> to vector<1x64xf32>
    %421 = vector.broadcast %420 : vector<1x64xf32> to vector<16x64xf32>
    %422 = arith.addf %419, %421 : vector<16x64xf32>
    %423 = arith.truncf %422 : vector<16x64xf32> to vector<16x64xbf16>
    %424 = arith.truncf %1 : vector<20x64xf32> to vector<20x64xbf16>
    %cst_295 = arith.constant 0.000000e+00 : f32
    %425 = vector.broadcast %cst_295 : f32 to vector<16x64xf32>
    %c0_296 = arith.constant 0 : index
    %c0_297 = arith.constant 0 : index
    %c0_298 = arith.constant 0 : index
    %c0_299 = arith.constant 0 : index
    %426 = vector.load %arg6[%c0_296, %c0_297, %c0_298, %c0_299] : memref<3x8x64x8xbf16, #tpu.memory_space<vmem>>, vector<1x1x64x8xbf16>
    %427 = vector.shape_cast %426 : vector<1x1x64x8xbf16> to vector<64x8xbf16>
    %cst_300 = arith.constant dense<0.000000e+00> : vector<16x8xf32>
    %428 = tpu.matmul %423, %427, %cst_300 {dimension_numbers = #tpu.dot_dimension_numbers<[1], [0], [0], [1], [0, 0, 1, 1], [], []>} : vector<16x64xbf16>, vector<64x8xbf16>, vector<16x8xf32> -> vector<16x8xf32>
    %c0_301 = arith.constant 0 : index
    %c0_302 = arith.constant 0 : index
    %c0_303 = arith.constant 0 : index
    %c0_304 = arith.constant 0 : index
    %429 = vector.load %arg7[%c0_301, %c0_302, %c0_303, %c0_304] : memref<3x8x1x8xf32, #tpu.memory_space<vmem>>, vector<1x1x1x8xf32>
    %430 = vector.shape_cast %429 : vector<1x1x1x8xf32> to vector<1x8xf32>
    %431 = vector.broadcast %430 : vector<1x8xf32> to vector<16x8xf32>
    %432 = arith.addf %428, %431 : vector<16x8xf32>
    %c1_305 = arith.constant 1 : index
    %c0_306 = arith.constant 0 : index
    %c0_307 = arith.constant 0 : index
    %c0_308 = arith.constant 0 : index
    %433 = vector.load %arg6[%c1_305, %c0_306, %c0_307, %c0_308] : memref<3x8x64x8xbf16, #tpu.memory_space<vmem>>, vector<1x1x64x8xbf16>
    %434 = vector.shape_cast %433 : vector<1x1x64x8xbf16> to vector<64x8xbf16>
    %cst_309 = arith.constant dense<0.000000e+00> : vector<20x8xf32>
    %435 = tpu.matmul %424, %434, %cst_309 {dimension_numbers = #tpu.dot_dimension_numbers<[1], [0], [0], [1], [0, 0, 1, 1], [], []>} : vector<20x64xbf16>, vector<64x8xbf16>, vector<20x8xf32> -> vector<20x8xf32>
    %c1_310 = arith.constant 1 : index
    %c0_311 = arith.constant 0 : index
    %c0_312 = arith.constant 0 : index
    %c0_313 = arith.constant 0 : index
    %436 = vector.load %arg7[%c1_310, %c0_311, %c0_312, %c0_313] : memref<3x8x1x8xf32, #tpu.memory_space<vmem>>, vector<1x1x1x8xf32>
    %437 = vector.shape_cast %436 : vector<1x1x1x8xf32> to vector<1x8xf32>
    %438 = vector.broadcast %437 : vector<1x8xf32> to vector<20x8xf32>
    %439 = arith.addf %435, %438 : vector<20x8xf32>
    %c2_314 = arith.constant 2 : index
    %c0_315 = arith.constant 0 : index
    %c0_316 = arith.constant 0 : index
    %c0_317 = arith.constant 0 : index
    %440 = vector.load %arg6[%c2_314, %c0_315, %c0_316, %c0_317] : memref<3x8x64x8xbf16, #tpu.memory_space<vmem>>, vector<1x1x64x8xbf16>
    %441 = vector.shape_cast %440 : vector<1x1x64x8xbf16> to vector<64x8xbf16>
    %cst_318 = arith.constant dense<0.000000e+00> : vector<20x8xf32>
    %442 = tpu.matmul %424, %441, %cst_318 {dimension_numbers = #tpu.dot_dimension_numbers<[1], [0], [0], [1], [0, 0, 1, 1], [], []>} : vector<20x64xbf16>, vector<64x8xbf16>, vector<20x8xf32> -> vector<20x8xf32>
    %c2_319 = arith.constant 2 : index
    %c0_320 = arith.constant 0 : index
    %c0_321 = arith.constant 0 : index
    %c0_322 = arith.constant 0 : index
    %443 = vector.load %arg7[%c2_319, %c0_320, %c0_321, %c0_322] : memref<3x8x1x8xf32, #tpu.memory_space<vmem>>, vector<1x1x1x8xf32>
    %444 = vector.shape_cast %443 : vector<1x1x1x8xf32> to vector<1x8xf32>
    %445 = vector.broadcast %444 : vector<1x8xf32> to vector<20x8xf32>
    %446 = arith.addf %442, %445 : vector<20x8xf32>
    %447 = vector.shape_cast %432 : vector<16x8xf32> to vector<2x8x8xf32>
    %448 = vector.shape_cast %439 : vector<20x8xf32> to vector<2x10x8xf32>
    %449 = vector.shape_cast %446 : vector<20x8xf32> to vector<2x10x8xf32>
    %450 = arith.truncf %447 : vector<2x8x8xf32> to vector<2x8x8xbf16>
    %451 = arith.truncf %448 : vector<2x10x8xf32> to vector<2x10x8xbf16>
    "tpu.trace_start"() <{level = 10 : i32, message = "bqd,bkd->bqk"}> : () -> ()
    %cst_323 = arith.constant dense<0.000000e+00> : vector<2x8x10xf32>
    %452 = tpu.matmul %450, %451, %cst_323 {dimension_numbers = #tpu.dot_dimension_numbers<[2], [2], [1], [1], [0, 0, 0, 1, 1, 1], [0], [0]>} : vector<2x8x8xbf16>, vector<2x10x8xbf16>, vector<2x8x10xf32> -> vector<2x8x10xf32>
    "tpu.trace_stop"() : () -> ()
    %cst_324 = arith.constant 0.353553385 : f32
    %453 = vector.broadcast %cst_324 : f32 to vector<2x8x10xf32>
    %454 = arith.mulf %452, %453 : vector<2x8x10xf32>
    %cst_325 = arith.constant dense<0xFF800000> : vector<2x8xf32>
    %455 = vector.multi_reduction <maximumf>, %454, %cst_325 [2] : vector<2x8x10xf32> to vector<2x8xf32>
    %456 = vector.shape_cast %455 : vector<2x8xf32> to vector<2x8x1xf32>
    %457 = vector.broadcast %456 : vector<2x8x1xf32> to vector<2x8x10xf32>
    %458 = arith.subf %454, %457 : vector<2x8x10xf32>
    %459 = math.exp %458 : vector<2x8x10xf32>
    %cst_326 = arith.constant dense<0.000000e+00> : vector<2x8xf32>
    %460 = vector.multi_reduction <add>, %459, %cst_326 [2] : vector<2x8x10xf32> to vector<2x8xf32>
    %461 = vector.shape_cast %460 : vector<2x8xf32> to vector<2x8x1xf32>
    %462 = tpu.reciprocal %461 {approx = true} : vector<2x8x1xf32> -> vector<2x8x1xf32>
    %463 = vector.broadcast %462 : vector<2x8x1xf32> to vector<2x8x10xf32>
    %464 = arith.mulf %459, %463 : vector<2x8x10xf32>
    %465 = arith.truncf %464 : vector<2x8x10xf32> to vector<2x8x10xbf16>
    %466 = arith.truncf %449 : vector<2x10x8xf32> to vector<2x10x8xbf16>
    "tpu.trace_start"() <{level = 10 : i32, message = "bqk,bkd->bqd"}> : () -> ()
    %cst_327 = arith.constant dense<0.000000e+00> : vector<2x8x8xf32>
    %467 = tpu.matmul %465, %466, %cst_327 {dimension_numbers = #tpu.dot_dimension_numbers<[2], [1], [1], [2], [0, 0, 0, 1, 1, 2], [0], [0]>} : vector<2x8x10xbf16>, vector<2x10x8xbf16>, vector<2x8x8xf32> -> vector<2x8x8xf32>
    "tpu.trace_stop"() : () -> ()
    %468 = vector.shape_cast %467 : vector<2x8x8xf32> to vector<16x8xf32>
    %469 = arith.truncf %468 : vector<16x8xf32> to vector<16x8xbf16>
    %c0_328 = arith.constant 0 : index
    %c0_329 = arith.constant 0 : index
    %c0_330 = arith.constant 0 : index
    %470 = vector.load %arg8[%c0_328, %c0_329, %c0_330] : memref<8x8x64xbf16, #tpu.memory_space<vmem>>, vector<1x8x64xbf16>
    %471 = vector.shape_cast %470 : vector<1x8x64xbf16> to vector<8x64xbf16>
    %cst_331 = arith.constant dense<0.000000e+00> : vector<16x64xf32>
    %472 = tpu.matmul %469, %471, %cst_331 {dimension_numbers = #tpu.dot_dimension_numbers<[1], [0], [0], [1], [0, 0, 1, 1], [], []>} : vector<16x8xbf16>, vector<8x64xbf16>, vector<16x64xf32> -> vector<16x64xf32>
    %473 = arith.addf %425, %472 : vector<16x64xf32>
    %c0_332 = arith.constant 0 : index
    %c1_333 = arith.constant 1 : index
    %c0_334 = arith.constant 0 : index
    %c0_335 = arith.constant 0 : index
    %474 = vector.load %arg6[%c0_332, %c1_333, %c0_334, %c0_335] : memref<3x8x64x8xbf16, #tpu.memory_space<vmem>>, vector<1x1x64x8xbf16>
    %475 = vector.shape_cast %474 : vector<1x1x64x8xbf16> to vector<64x8xbf16>
    %cst_336 = arith.constant dense<0.000000e+00> : vector<16x8xf32>
    %476 = tpu.matmul %423, %475, %cst_336 {dimension_numbers = #tpu.dot_dimension_numbers<[1], [0], [0], [1], [0, 0, 1, 1], [], []>} : vector<16x64xbf16>, vector<64x8xbf16>, vector<16x8xf32> -> vector<16x8xf32>
    %c0_337 = arith.constant 0 : index
    %c1_338 = arith.constant 1 : index
    %c0_339 = arith.constant 0 : index
    %c0_340 = arith.constant 0 : index
    %477 = vector.load %arg7[%c0_337, %c1_338, %c0_339, %c0_340] : memref<3x8x1x8xf32, #tpu.memory_space<vmem>>, vector<1x1x1x8xf32>
    %478 = vector.shape_cast %477 : vector<1x1x1x8xf32> to vector<1x8xf32>
    %479 = vector.broadcast %478 : vector<1x8xf32> to vector<16x8xf32>
    %480 = arith.addf %476, %479 : vector<16x8xf32>
    %c1_341 = arith.constant 1 : index
    %c1_342 = arith.constant 1 : index
    %c0_343 = arith.constant 0 : index
    %c0_344 = arith.constant 0 : index
    %481 = vector.load %arg6[%c1_341, %c1_342, %c0_343, %c0_344] : memref<3x8x64x8xbf16, #tpu.memory_space<vmem>>, vector<1x1x64x8xbf16>
    %482 = vector.shape_cast %481 : vector<1x1x64x8xbf16> to vector<64x8xbf16>
    %cst_345 = arith.constant dense<0.000000e+00> : vector<20x8xf32>
    %483 = tpu.matmul %424, %482, %cst_345 {dimension_numbers = #tpu.dot_dimension_numbers<[1], [0], [0], [1], [0, 0, 1, 1], [], []>} : vector<20x64xbf16>, vector<64x8xbf16>, vector<20x8xf32> -> vector<20x8xf32>
    %c1_346 = arith.constant 1 : index
    %c1_347 = arith.constant 1 : index
    %c0_348 = arith.constant 0 : index
    %c0_349 = arith.constant 0 : index
    %484 = vector.load %arg7[%c1_346, %c1_347, %c0_348, %c0_349] : memref<3x8x1x8xf32, #tpu.memory_space<vmem>>, vector<1x1x1x8xf32>
    %485 = vector.shape_cast %484 : vector<1x1x1x8xf32> to vector<1x8xf32>
    %486 = vector.broadcast %485 : vector<1x8xf32> to vector<20x8xf32>
    %487 = arith.addf %483, %486 : vector<20x8xf32>
    %c2_350 = arith.constant 2 : index
    %c1_351 = arith.constant 1 : index
    %c0_352 = arith.constant 0 : index
    %c0_353 = arith.constant 0 : index
    %488 = vector.load %arg6[%c2_350, %c1_351, %c0_352, %c0_353] : memref<3x8x64x8xbf16, #tpu.memory_space<vmem>>, vector<1x1x64x8xbf16>
    %489 = vector.shape_cast %488 : vector<1x1x64x8xbf16> to vector<64x8xbf16>
    %cst_354 = arith.constant dense<0.000000e+00> : vector<20x8xf32>
    %490 = tpu.matmul %424, %489, %cst_354 {dimension_numbers = #tpu.dot_dimension_numbers<[1], [0], [0], [1], [0, 0, 1, 1], [], []>} : vector<20x64xbf16>, vector<64x8xbf16>, vector<20x8xf32> -> vector<20x8xf32>
    %c2_355 = arith.constant 2 : index
    %c1_356 = arith.constant 1 : index
    %c0_357 = arith.constant 0 : index
    %c0_358 = arith.constant 0 : index
    %491 = vector.load %arg7[%c2_355, %c1_356, %c0_357, %c0_358] : memref<3x8x1x8xf32, #tpu.memory_space<vmem>>, vector<1x1x1x8xf32>
    %492 = vector.shape_cast %491 : vector<1x1x1x8xf32> to vector<1x8xf32>
    %493 = vector.broadcast %492 : vector<1x8xf32> to vector<20x8xf32>
    %494 = arith.addf %490, %493 : vector<20x8xf32>
    %495 = vector.shape_cast %480 : vector<16x8xf32> to vector<2x8x8xf32>
    %496 = vector.shape_cast %487 : vector<20x8xf32> to vector<2x10x8xf32>
    %497 = vector.shape_cast %494 : vector<20x8xf32> to vector<2x10x8xf32>
    %498 = arith.truncf %495 : vector<2x8x8xf32> to vector<2x8x8xbf16>
    %499 = arith.truncf %496 : vector<2x10x8xf32> to vector<2x10x8xbf16>
    "tpu.trace_start"() <{level = 10 : i32, message = "bqd,bkd->bqk"}> : () -> ()
    %cst_359 = arith.constant dense<0.000000e+00> : vector<2x8x10xf32>
    %500 = tpu.matmul %498, %499, %cst_359 {dimension_numbers = #tpu.dot_dimension_numbers<[2], [2], [1], [1], [0, 0, 0, 1, 1, 1], [0], [0]>} : vector<2x8x8xbf16>, vector<2x10x8xbf16>, vector<2x8x10xf32> -> vector<2x8x10xf32>
    "tpu.trace_stop"() : () -> ()
    %cst_360 = arith.constant 0.353553385 : f32
    %501 = vector.broadcast %cst_360 : f32 to vector<2x8x10xf32>
    %502 = arith.mulf %500, %501 : vector<2x8x10xf32>
    %cst_361 = arith.constant dense<0xFF800000> : vector<2x8xf32>
    %503 = vector.multi_reduction <maximumf>, %502, %cst_361 [2] : vector<2x8x10xf32> to vector<2x8xf32>
    %504 = vector.shape_cast %503 : vector<2x8xf32> to vector<2x8x1xf32>
    %505 = vector.broadcast %504 : vector<2x8x1xf32> to vector<2x8x10xf32>
    %506 = arith.subf %502, %505 : vector<2x8x10xf32>
    %507 = math.exp %506 : vector<2x8x10xf32>
    %cst_362 = arith.constant dense<0.000000e+00> : vector<2x8xf32>
    %508 = vector.multi_reduction <add>, %507, %cst_362 [2] : vector<2x8x10xf32> to vector<2x8xf32>
    %509 = vector.shape_cast %508 : vector<2x8xf32> to vector<2x8x1xf32>
    %510 = tpu.reciprocal %509 {approx = true} : vector<2x8x1xf32> -> vector<2x8x1xf32>
    %511 = vector.broadcast %510 : vector<2x8x1xf32> to vector<2x8x10xf32>
    %512 = arith.mulf %507, %511 : vector<2x8x10xf32>
    %513 = arith.truncf %512 : vector<2x8x10xf32> to vector<2x8x10xbf16>
    %514 = arith.truncf %497 : vector<2x10x8xf32> to vector<2x10x8xbf16>
    "tpu.trace_start"() <{level = 10 : i32, message = "bqk,bkd->bqd"}> : () -> ()
    %cst_363 = arith.constant dense<0.000000e+00> : vector<2x8x8xf32>
    %515 = tpu.matmul %513, %514, %cst_363 {dimension_numbers = #tpu.dot_dimension_numbers<[2], [1], [1], [2], [0, 0, 0, 1, 1, 2], [0], [0]>} : vector<2x8x10xbf16>, vector<2x10x8xbf16>, vector<2x8x8xf32> -> vector<2x8x8xf32>
    "tpu.trace_stop"() : () -> ()
    %516 = vector.shape_cast %515 : vector<2x8x8xf32> to vector<16x8xf32>
    %517 = arith.truncf %516 : vector<16x8xf32> to vector<16x8xbf16>
    %c1_364 = arith.constant 1 : index
    %c0_365 = arith.constant 0 : index
    %c0_366 = arith.constant 0 : index
    %518 = vector.load %arg8[%c1_364, %c0_365, %c0_366] : memref<8x8x64xbf16, #tpu.memory_space<vmem>>, vector<1x8x64xbf16>
    %519 = vector.shape_cast %518 : vector<1x8x64xbf16> to vector<8x64xbf16>
    %cst_367 = arith.constant dense<0.000000e+00> : vector<16x64xf32>
    %520 = tpu.matmul %517, %519, %cst_367 {dimension_numbers = #tpu.dot_dimension_numbers<[1], [0], [0], [1], [0, 0, 1, 1], [], []>} : vector<16x8xbf16>, vector<8x64xbf16>, vector<16x64xf32> -> vector<16x64xf32>
    %521 = arith.addf %473, %520 : vector<16x64xf32>
    %c0_368 = arith.constant 0 : index
    %c2_369 = arith.constant 2 : index
    %c0_370 = arith.constant 0 : index
    %c0_371 = arith.constant 0 : index
    %522 = vector.load %arg6[%c0_368, %c2_369, %c0_370, %c0_371] : memref<3x8x64x8xbf16, #tpu.memory_space<vmem>>, vector<1x1x64x8xbf16>
    %523 = vector.shape_cast %522 : vector<1x1x64x8xbf16> to vector<64x8xbf16>
    %cst_372 = arith.constant dense<0.000000e+00> : vector<16x8xf32>
    %524 = tpu.matmul %423, %523, %cst_372 {dimension_numbers = #tpu.dot_dimension_numbers<[1], [0], [0], [1], [0, 0, 1, 1], [], []>} : vector<16x64xbf16>, vector<64x8xbf16>, vector<16x8xf32> -> vector<16x8xf32>
    %c0_373 = arith.constant 0 : index
    %c2_374 = arith.constant 2 : index
    %c0_375 = arith.constant 0 : index
    %c0_376 = arith.constant 0 : index
    %525 = vector.load %arg7[%c0_373, %c2_374, %c0_375, %c0_376] : memref<3x8x1x8xf32, #tpu.memory_space<vmem>>, vector<1x1x1x8xf32>
    %526 = vector.shape_cast %525 : vector<1x1x1x8xf32> to vector<1x8xf32>
    %527 = vector.broadcast %526 : vector<1x8xf32> to vector<16x8xf32>
    %528 = arith.addf %524, %527 : vector<16x8xf32>
    %c1_377 = arith.constant 1 : index
    %c2_378 = arith.constant 2 : index
    %c0_379 = arith.constant 0 : index
    %c0_380 = arith.constant 0 : index
    %529 = vector.load %arg6[%c1_377, %c2_378, %c0_379, %c0_380] : memref<3x8x64x8xbf16, #tpu.memory_space<vmem>>, vector<1x1x64x8xbf16>
    %530 = vector.shape_cast %529 : vector<1x1x64x8xbf16> to vector<64x8xbf16>
    %cst_381 = arith.constant dense<0.000000e+00> : vector<20x8xf32>
    %531 = tpu.matmul %424, %530, %cst_381 {dimension_numbers = #tpu.dot_dimension_numbers<[1], [0], [0], [1], [0, 0, 1, 1], [], []>} : vector<20x64xbf16>, vector<64x8xbf16>, vector<20x8xf32> -> vector<20x8xf32>
    %c1_382 = arith.constant 1 : index
    %c2_383 = arith.constant 2 : index
    %c0_384 = arith.constant 0 : index
    %c0_385 = arith.constant 0 : index
    %532 = vector.load %arg7[%c1_382, %c2_383, %c0_384, %c0_385] : memref<3x8x1x8xf32, #tpu.memory_space<vmem>>, vector<1x1x1x8xf32>
    %533 = vector.shape_cast %532 : vector<1x1x1x8xf32> to vector<1x8xf32>
    %534 = vector.broadcast %533 : vector<1x8xf32> to vector<20x8xf32>
    %535 = arith.addf %531, %534 : vector<20x8xf32>
    %c2_386 = arith.constant 2 : index
    %c2_387 = arith.constant 2 : index
    %c0_388 = arith.constant 0 : index
    %c0_389 = arith.constant 0 : index
    %536 = vector.load %arg6[%c2_386, %c2_387, %c0_388, %c0_389] : memref<3x8x64x8xbf16, #tpu.memory_space<vmem>>, vector<1x1x64x8xbf16>
    %537 = vector.shape_cast %536 : vector<1x1x64x8xbf16> to vector<64x8xbf16>
    %cst_390 = arith.constant dense<0.000000e+00> : vector<20x8xf32>
    %538 = tpu.matmul %424, %537, %cst_390 {dimension_numbers = #tpu.dot_dimension_numbers<[1], [0], [0], [1], [0, 0, 1, 1], [], []>} : vector<20x64xbf16>, vector<64x8xbf16>, vector<20x8xf32> -> vector<20x8xf32>
    %c2_391 = arith.constant 2 : index
    %c2_392 = arith.constant 2 : index
    %c0_393 = arith.constant 0 : index
    %c0_394 = arith.constant 0 : index
    %539 = vector.load %arg7[%c2_391, %c2_392, %c0_393, %c0_394] : memref<3x8x1x8xf32, #tpu.memory_space<vmem>>, vector<1x1x1x8xf32>
    %540 = vector.shape_cast %539 : vector<1x1x1x8xf32> to vector<1x8xf32>
    %541 = vector.broadcast %540 : vector<1x8xf32> to vector<20x8xf32>
    %542 = arith.addf %538, %541 : vector<20x8xf32>
    %543 = vector.shape_cast %528 : vector<16x8xf32> to vector<2x8x8xf32>
    %544 = vector.shape_cast %535 : vector<20x8xf32> to vector<2x10x8xf32>
    %545 = vector.shape_cast %542 : vector<20x8xf32> to vector<2x10x8xf32>
    %546 = arith.truncf %543 : vector<2x8x8xf32> to vector<2x8x8xbf16>
    %547 = arith.truncf %544 : vector<2x10x8xf32> to vector<2x10x8xbf16>
    "tpu.trace_start"() <{level = 10 : i32, message = "bqd,bkd->bqk"}> : () -> ()
    %cst_395 = arith.constant dense<0.000000e+00> : vector<2x8x10xf32>
    %548 = tpu.matmul %546, %547, %cst_395 {dimension_numbers = #tpu.dot_dimension_numbers<[2], [2], [1], [1], [0, 0, 0, 1, 1, 1], [0], [0]>} : vector<2x8x8xbf16>, vector<2x10x8xbf16>, vector<2x8x10xf32> -> vector<2x8x10xf32>
    "tpu.trace_stop"() : () -> ()
    %cst_396 = arith.constant 0.353553385 : f32
    %549 = vector.broadcast %cst_396 : f32 to vector<2x8x10xf32>
    %550 = arith.mulf %548, %549 : vector<2x8x10xf32>
    %cst_397 = arith.constant dense<0xFF800000> : vector<2x8xf32>
    %551 = vector.multi_reduction <maximumf>, %550, %cst_397 [2] : vector<2x8x10xf32> to vector<2x8xf32>
    %552 = vector.shape_cast %551 : vector<2x8xf32> to vector<2x8x1xf32>
    %553 = vector.broadcast %552 : vector<2x8x1xf32> to vector<2x8x10xf32>
    %554 = arith.subf %550, %553 : vector<2x8x10xf32>
    %555 = math.exp %554 : vector<2x8x10xf32>
    %cst_398 = arith.constant dense<0.000000e+00> : vector<2x8xf32>
    %556 = vector.multi_reduction <add>, %555, %cst_398 [2] : vector<2x8x10xf32> to vector<2x8xf32>
    %557 = vector.shape_cast %556 : vector<2x8xf32> to vector<2x8x1xf32>
    %558 = tpu.reciprocal %557 {approx = true} : vector<2x8x1xf32> -> vector<2x8x1xf32>
    %559 = vector.broadcast %558 : vector<2x8x1xf32> to vector<2x8x10xf32>
    %560 = arith.mulf %555, %559 : vector<2x8x10xf32>
    %561 = arith.truncf %560 : vector<2x8x10xf32> to vector<2x8x10xbf16>
    %562 = arith.truncf %545 : vector<2x10x8xf32> to vector<2x10x8xbf16>
    "tpu.trace_start"() <{level = 10 : i32, message = "bqk,bkd->bqd"}> : () -> ()
    %cst_399 = arith.constant dense<0.000000e+00> : vector<2x8x8xf32>
    %563 = tpu.matmul %561, %562, %cst_399 {dimension_numbers = #tpu.dot_dimension_numbers<[2], [1], [1], [2], [0, 0, 0, 1, 1, 2], [0], [0]>} : vector<2x8x10xbf16>, vector<2x10x8xbf16>, vector<2x8x8xf32> -> vector<2x8x8xf32>
    "tpu.trace_stop"() : () -> ()
    %564 = vector.shape_cast %563 : vector<2x8x8xf32> to vector<16x8xf32>
    %565 = arith.truncf %564 : vector<16x8xf32> to vector<16x8xbf16>
    %c2_400 = arith.constant 2 : index
    %c0_401 = arith.constant 0 : index
    %c0_402 = arith.constant 0 : index
    %566 = vector.load %arg8[%c2_400, %c0_401, %c0_402] : memref<8x8x64xbf16, #tpu.memory_space<vmem>>, vector<1x8x64xbf16>
    %567 = vector.shape_cast %566 : vector<1x8x64xbf16> to vector<8x64xbf16>
    %cst_403 = arith.constant dense<0.000000e+00> : vector<16x64xf32>
    %568 = tpu.matmul %565, %567, %cst_403 {dimension_numbers = #tpu.dot_dimension_numbers<[1], [0], [0], [1], [0, 0, 1, 1], [], []>} : vector<16x8xbf16>, vector<8x64xbf16>, vector<16x64xf32> -> vector<16x64xf32>
    %569 = arith.addf %521, %568 : vector<16x64xf32>
    %c0_404 = arith.constant 0 : index
    %c3_405 = arith.constant 3 : index
    %c0_406 = arith.constant 0 : index
    %c0_407 = arith.constant 0 : index
    %570 = vector.load %arg6[%c0_404, %c3_405, %c0_406, %c0_407] : memref<3x8x64x8xbf16, #tpu.memory_space<vmem>>, vector<1x1x64x8xbf16>
    %571 = vector.shape_cast %570 : vector<1x1x64x8xbf16> to vector<64x8xbf16>
    %cst_408 = arith.constant dense<0.000000e+00> : vector<16x8xf32>
    %572 = tpu.matmul %423, %571, %cst_408 {dimension_numbers = #tpu.dot_dimension_numbers<[1], [0], [0], [1], [0, 0, 1, 1], [], []>} : vector<16x64xbf16>, vector<64x8xbf16>, vector<16x8xf32> -> vector<16x8xf32>
    %c0_409 = arith.constant 0 : index
    %c3_410 = arith.constant 3 : index
    %c0_411 = arith.constant 0 : index
    %c0_412 = arith.constant 0 : index
    %573 = vector.load %arg7[%c0_409, %c3_410, %c0_411, %c0_412] : memref<3x8x1x8xf32, #tpu.memory_space<vmem>>, vector<1x1x1x8xf32>
    %574 = vector.shape_cast %573 : vector<1x1x1x8xf32> to vector<1x8xf32>
    %575 = vector.broadcast %574 : vector<1x8xf32> to vector<16x8xf32>
    %576 = arith.addf %572, %575 : vector<16x8xf32>
    %c1_413 = arith.constant 1 : index
    %c3_414 = arith.constant 3 : index
    %c0_415 = arith.constant 0 : index
    %c0_416 = arith.constant 0 : index
    %577 = vector.load %arg6[%c1_413, %c3_414, %c0_415, %c0_416] : memref<3x8x64x8xbf16, #tpu.memory_space<vmem>>, vector<1x1x64x8xbf16>
    %578 = vector.shape_cast %577 : vector<1x1x64x8xbf16> to vector<64x8xbf16>
    %cst_417 = arith.constant dense<0.000000e+00> : vector<20x8xf32>
    %579 = tpu.matmul %424, %578, %cst_417 {dimension_numbers = #tpu.dot_dimension_numbers<[1], [0], [0], [1], [0, 0, 1, 1], [], []>} : vector<20x64xbf16>, vector<64x8xbf16>, vector<20x8xf32> -> vector<20x8xf32>
    %c1_418 = arith.constant 1 : index
    %c3_419 = arith.constant 3 : index
    %c0_420 = arith.constant 0 : index
    %c0_421 = arith.constant 0 : index
    %580 = vector.load %arg7[%c1_418, %c3_419, %c0_420, %c0_421] : memref<3x8x1x8xf32, #tpu.memory_space<vmem>>, vector<1x1x1x8xf32>
    %581 = vector.shape_cast %580 : vector<1x1x1x8xf32> to vector<1x8xf32>
    %582 = vector.broadcast %581 : vector<1x8xf32> to vector<20x8xf32>
    %583 = arith.addf %579, %582 : vector<20x8xf32>
    %c2_422 = arith.constant 2 : index
    %c3_423 = arith.constant 3 : index
    %c0_424 = arith.constant 0 : index
    %c0_425 = arith.constant 0 : index
    %584 = vector.load %arg6[%c2_422, %c3_423, %c0_424, %c0_425] : memref<3x8x64x8xbf16, #tpu.memory_space<vmem>>, vector<1x1x64x8xbf16>
    %585 = vector.shape_cast %584 : vector<1x1x64x8xbf16> to vector<64x8xbf16>
    %cst_426 = arith.constant dense<0.000000e+00> : vector<20x8xf32>
    %586 = tpu.matmul %424, %585, %cst_426 {dimension_numbers = #tpu.dot_dimension_numbers<[1], [0], [0], [1], [0, 0, 1, 1], [], []>} : vector<20x64xbf16>, vector<64x8xbf16>, vector<20x8xf32> -> vector<20x8xf32>
    %c2_427 = arith.constant 2 : index
    %c3_428 = arith.constant 3 : index
    %c0_429 = arith.constant 0 : index
    %c0_430 = arith.constant 0 : index
    %587 = vector.load %arg7[%c2_427, %c3_428, %c0_429, %c0_430] : memref<3x8x1x8xf32, #tpu.memory_space<vmem>>, vector<1x1x1x8xf32>
    %588 = vector.shape_cast %587 : vector<1x1x1x8xf32> to vector<1x8xf32>
    %589 = vector.broadcast %588 : vector<1x8xf32> to vector<20x8xf32>
    %590 = arith.addf %586, %589 : vector<20x8xf32>
    %591 = vector.shape_cast %576 : vector<16x8xf32> to vector<2x8x8xf32>
    %592 = vector.shape_cast %583 : vector<20x8xf32> to vector<2x10x8xf32>
    %593 = vector.shape_cast %590 : vector<20x8xf32> to vector<2x10x8xf32>
    %594 = arith.truncf %591 : vector<2x8x8xf32> to vector<2x8x8xbf16>
    %595 = arith.truncf %592 : vector<2x10x8xf32> to vector<2x10x8xbf16>
    "tpu.trace_start"() <{level = 10 : i32, message = "bqd,bkd->bqk"}> : () -> ()
    %cst_431 = arith.constant dense<0.000000e+00> : vector<2x8x10xf32>
    %596 = tpu.matmul %594, %595, %cst_431 {dimension_numbers = #tpu.dot_dimension_numbers<[2], [2], [1], [1], [0, 0, 0, 1, 1, 1], [0], [0]>} : vector<2x8x8xbf16>, vector<2x10x8xbf16>, vector<2x8x10xf32> -> vector<2x8x10xf32>
    "tpu.trace_stop"() : () -> ()
    %cst_432 = arith.constant 0.353553385 : f32
    %597 = vector.broadcast %cst_432 : f32 to vector<2x8x10xf32>
    %598 = arith.mulf %596, %597 : vector<2x8x10xf32>
    %cst_433 = arith.constant dense<0xFF800000> : vector<2x8xf32>
    %599 = vector.multi_reduction <maximumf>, %598, %cst_433 [2] : vector<2x8x10xf32> to vector<2x8xf32>
    %600 = vector.shape_cast %599 : vector<2x8xf32> to vector<2x8x1xf32>
    %601 = vector.broadcast %600 : vector<2x8x1xf32> to vector<2x8x10xf32>
    %602 = arith.subf %598, %601 : vector<2x8x10xf32>
    %603 = math.exp %602 : vector<2x8x10xf32>
    %cst_434 = arith.constant dense<0.000000e+00> : vector<2x8xf32>
    %604 = vector.multi_reduction <add>, %603, %cst_434 [2] : vector<2x8x10xf32> to vector<2x8xf32>
    %605 = vector.shape_cast %604 : vector<2x8xf32> to vector<2x8x1xf32>
    %606 = tpu.reciprocal %605 {approx = true} : vector<2x8x1xf32> -> vector<2x8x1xf32>
    %607 = vector.broadcast %606 : vector<2x8x1xf32> to vector<2x8x10xf32>
    %608 = arith.mulf %603, %607 : vector<2x8x10xf32>
    %609 = arith.truncf %608 : vector<2x8x10xf32> to vector<2x8x10xbf16>
    %610 = arith.truncf %593 : vector<2x10x8xf32> to vector<2x10x8xbf16>
    "tpu.trace_start"() <{level = 10 : i32, message = "bqk,bkd->bqd"}> : () -> ()
    %cst_435 = arith.constant dense<0.000000e+00> : vector<2x8x8xf32>
    %611 = tpu.matmul %609, %610, %cst_435 {dimension_numbers = #tpu.dot_dimension_numbers<[2], [1], [1], [2], [0, 0, 0, 1, 1, 2], [0], [0]>} : vector<2x8x10xbf16>, vector<2x10x8xbf16>, vector<2x8x8xf32> -> vector<2x8x8xf32>
    "tpu.trace_stop"() : () -> ()
    %612 = vector.shape_cast %611 : vector<2x8x8xf32> to vector<16x8xf32>
    %613 = arith.truncf %612 : vector<16x8xf32> to vector<16x8xbf16>
    %c3_436 = arith.constant 3 : index
    %c0_437 = arith.constant 0 : index
    %c0_438 = arith.constant 0 : index
    %614 = vector.load %arg8[%c3_436, %c0_437, %c0_438] : memref<8x8x64xbf16, #tpu.memory_space<vmem>>, vector<1x8x64xbf16>
    %615 = vector.shape_cast %614 : vector<1x8x64xbf16> to vector<8x64xbf16>
    %cst_439 = arith.constant dense<0.000000e+00> : vector<16x64xf32>
    %616 = tpu.matmul %613, %615, %cst_439 {dimension_numbers = #tpu.dot_dimension_numbers<[1], [0], [0], [1], [0, 0, 1, 1], [], []>} : vector<16x8xbf16>, vector<8x64xbf16>, vector<16x64xf32> -> vector<16x64xf32>
    %617 = arith.addf %569, %616 : vector<16x64xf32>
    %c0_440 = arith.constant 0 : index
    %c4_441 = arith.constant 4 : index
    %c0_442 = arith.constant 0 : index
    %c0_443 = arith.constant 0 : index
    %618 = vector.load %arg6[%c0_440, %c4_441, %c0_442, %c0_443] : memref<3x8x64x8xbf16, #tpu.memory_space<vmem>>, vector<1x1x64x8xbf16>
    %619 = vector.shape_cast %618 : vector<1x1x64x8xbf16> to vector<64x8xbf16>
    %cst_444 = arith.constant dense<0.000000e+00> : vector<16x8xf32>
    %620 = tpu.matmul %423, %619, %cst_444 {dimension_numbers = #tpu.dot_dimension_numbers<[1], [0], [0], [1], [0, 0, 1, 1], [], []>} : vector<16x64xbf16>, vector<64x8xbf16>, vector<16x8xf32> -> vector<16x8xf32>
    %c0_445 = arith.constant 0 : index
    %c4_446 = arith.constant 4 : index
    %c0_447 = arith.constant 0 : index
    %c0_448 = arith.constant 0 : index
    %621 = vector.load %arg7[%c0_445, %c4_446, %c0_447, %c0_448] : memref<3x8x1x8xf32, #tpu.memory_space<vmem>>, vector<1x1x1x8xf32>
    %622 = vector.shape_cast %621 : vector<1x1x1x8xf32> to vector<1x8xf32>
    %623 = vector.broadcast %622 : vector<1x8xf32> to vector<16x8xf32>
    %624 = arith.addf %620, %623 : vector<16x8xf32>
    %c1_449 = arith.constant 1 : index
    %c4_450 = arith.constant 4 : index
    %c0_451 = arith.constant 0 : index
    %c0_452 = arith.constant 0 : index
    %625 = vector.load %arg6[%c1_449, %c4_450, %c0_451, %c0_452] : memref<3x8x64x8xbf16, #tpu.memory_space<vmem>>, vector<1x1x64x8xbf16>
    %626 = vector.shape_cast %625 : vector<1x1x64x8xbf16> to vector<64x8xbf16>
    %cst_453 = arith.constant dense<0.000000e+00> : vector<20x8xf32>
    %627 = tpu.matmul %424, %626, %cst_453 {dimension_numbers = #tpu.dot_dimension_numbers<[1], [0], [0], [1], [0, 0, 1, 1], [], []>} : vector<20x64xbf16>, vector<64x8xbf16>, vector<20x8xf32> -> vector<20x8xf32>
    %c1_454 = arith.constant 1 : index
    %c4_455 = arith.constant 4 : index
    %c0_456 = arith.constant 0 : index
    %c0_457 = arith.constant 0 : index
    %628 = vector.load %arg7[%c1_454, %c4_455, %c0_456, %c0_457] : memref<3x8x1x8xf32, #tpu.memory_space<vmem>>, vector<1x1x1x8xf32>
    %629 = vector.shape_cast %628 : vector<1x1x1x8xf32> to vector<1x8xf32>
    %630 = vector.broadcast %629 : vector<1x8xf32> to vector<20x8xf32>
    %631 = arith.addf %627, %630 : vector<20x8xf32>
    %c2_458 = arith.constant 2 : index
    %c4_459 = arith.constant 4 : index
    %c0_460 = arith.constant 0 : index
    %c0_461 = arith.constant 0 : index
    %632 = vector.load %arg6[%c2_458, %c4_459, %c0_460, %c0_461] : memref<3x8x64x8xbf16, #tpu.memory_space<vmem>>, vector<1x1x64x8xbf16>
    %633 = vector.shape_cast %632 : vector<1x1x64x8xbf16> to vector<64x8xbf16>
    %cst_462 = arith.constant dense<0.000000e+00> : vector<20x8xf32>
    %634 = tpu.matmul %424, %633, %cst_462 {dimension_numbers = #tpu.dot_dimension_numbers<[1], [0], [0], [1], [0, 0, 1, 1], [], []>} : vector<20x64xbf16>, vector<64x8xbf16>, vector<20x8xf32> -> vector<20x8xf32>
    %c2_463 = arith.constant 2 : index
    %c4_464 = arith.constant 4 : index
    %c0_465 = arith.constant 0 : index
    %c0_466 = arith.constant 0 : index
    %635 = vector.load %arg7[%c2_463, %c4_464, %c0_465, %c0_466] : memref<3x8x1x8xf32, #tpu.memory_space<vmem>>, vector<1x1x1x8xf32>
    %636 = vector.shape_cast %635 : vector<1x1x1x8xf32> to vector<1x8xf32>
    %637 = vector.broadcast %636 : vector<1x8xf32> to vector<20x8xf32>
    %638 = arith.addf %634, %637 : vector<20x8xf32>
    %639 = vector.shape_cast %624 : vector<16x8xf32> to vector<2x8x8xf32>
    %640 = vector.shape_cast %631 : vector<20x8xf32> to vector<2x10x8xf32>
    %641 = vector.shape_cast %638 : vector<20x8xf32> to vector<2x10x8xf32>
    %642 = arith.truncf %639 : vector<2x8x8xf32> to vector<2x8x8xbf16>
    %643 = arith.truncf %640 : vector<2x10x8xf32> to vector<2x10x8xbf16>
    "tpu.trace_start"() <{level = 10 : i32, message = "bqd,bkd->bqk"}> : () -> ()
    %cst_467 = arith.constant dense<0.000000e+00> : vector<2x8x10xf32>
    %644 = tpu.matmul %642, %643, %cst_467 {dimension_numbers = #tpu.dot_dimension_numbers<[2], [2], [1], [1], [0, 0, 0, 1, 1, 1], [0], [0]>} : vector<2x8x8xbf16>, vector<2x10x8xbf16>, vector<2x8x10xf32> -> vector<2x8x10xf32>
    "tpu.trace_stop"() : () -> ()
    %cst_468 = arith.constant 0.353553385 : f32
    %645 = vector.broadcast %cst_468 : f32 to vector<2x8x10xf32>
    %646 = arith.mulf %644, %645 : vector<2x8x10xf32>
    %cst_469 = arith.constant dense<0xFF800000> : vector<2x8xf32>
    %647 = vector.multi_reduction <maximumf>, %646, %cst_469 [2] : vector<2x8x10xf32> to vector<2x8xf32>
    %648 = vector.shape_cast %647 : vector<2x8xf32> to vector<2x8x1xf32>
    %649 = vector.broadcast %648 : vector<2x8x1xf32> to vector<2x8x10xf32>
    %650 = arith.subf %646, %649 : vector<2x8x10xf32>
    %651 = math.exp %650 : vector<2x8x10xf32>
    %cst_470 = arith.constant dense<0.000000e+00> : vector<2x8xf32>
    %652 = vector.multi_reduction <add>, %651, %cst_470 [2] : vector<2x8x10xf32> to vector<2x8xf32>
    %653 = vector.shape_cast %652 : vector<2x8xf32> to vector<2x8x1xf32>
    %654 = tpu.reciprocal %653 {approx = true} : vector<2x8x1xf32> -> vector<2x8x1xf32>
    %655 = vector.broadcast %654 : vector<2x8x1xf32> to vector<2x8x10xf32>
    %656 = arith.mulf %651, %655 : vector<2x8x10xf32>
    %657 = arith.truncf %656 : vector<2x8x10xf32> to vector<2x8x10xbf16>
    %658 = arith.truncf %641 : vector<2x10x8xf32> to vector<2x10x8xbf16>
    "tpu.trace_start"() <{level = 10 : i32, message = "bqk,bkd->bqd"}> : () -> ()
    %cst_471 = arith.constant dense<0.000000e+00> : vector<2x8x8xf32>
    %659 = tpu.matmul %657, %658, %cst_471 {dimension_numbers = #tpu.dot_dimension_numbers<[2], [1], [1], [2], [0, 0, 0, 1, 1, 2], [0], [0]>} : vector<2x8x10xbf16>, vector<2x10x8xbf16>, vector<2x8x8xf32> -> vector<2x8x8xf32>
    "tpu.trace_stop"() : () -> ()
    %660 = vector.shape_cast %659 : vector<2x8x8xf32> to vector<16x8xf32>
    %661 = arith.truncf %660 : vector<16x8xf32> to vector<16x8xbf16>
    %c4_472 = arith.constant 4 : index
    %c0_473 = arith.constant 0 : index
    %c0_474 = arith.constant 0 : index
    %662 = vector.load %arg8[%c4_472, %c0_473, %c0_474] : memref<8x8x64xbf16, #tpu.memory_space<vmem>>, vector<1x8x64xbf16>
    %663 = vector.shape_cast %662 : vector<1x8x64xbf16> to vector<8x64xbf16>
    %cst_475 = arith.constant dense<0.000000e+00> : vector<16x64xf32>
    %664 = tpu.matmul %661, %663, %cst_475 {dimension_numbers = #tpu.dot_dimension_numbers<[1], [0], [0], [1], [0, 0, 1, 1], [], []>} : vector<16x8xbf16>, vector<8x64xbf16>, vector<16x64xf32> -> vector<16x64xf32>
    %665 = arith.addf %617, %664 : vector<16x64xf32>
    %c0_476 = arith.constant 0 : index
    %c5_477 = arith.constant 5 : index
    %c0_478 = arith.constant 0 : index
    %c0_479 = arith.constant 0 : index
    %666 = vector.load %arg6[%c0_476, %c5_477, %c0_478, %c0_479] : memref<3x8x64x8xbf16, #tpu.memory_space<vmem>>, vector<1x1x64x8xbf16>
    %667 = vector.shape_cast %666 : vector<1x1x64x8xbf16> to vector<64x8xbf16>
    %cst_480 = arith.constant dense<0.000000e+00> : vector<16x8xf32>
    %668 = tpu.matmul %423, %667, %cst_480 {dimension_numbers = #tpu.dot_dimension_numbers<[1], [0], [0], [1], [0, 0, 1, 1], [], []>} : vector<16x64xbf16>, vector<64x8xbf16>, vector<16x8xf32> -> vector<16x8xf32>
    %c0_481 = arith.constant 0 : index
    %c5_482 = arith.constant 5 : index
    %c0_483 = arith.constant 0 : index
    %c0_484 = arith.constant 0 : index
    %669 = vector.load %arg7[%c0_481, %c5_482, %c0_483, %c0_484] : memref<3x8x1x8xf32, #tpu.memory_space<vmem>>, vector<1x1x1x8xf32>
    %670 = vector.shape_cast %669 : vector<1x1x1x8xf32> to vector<1x8xf32>
    %671 = vector.broadcast %670 : vector<1x8xf32> to vector<16x8xf32>
    %672 = arith.addf %668, %671 : vector<16x8xf32>
    %c1_485 = arith.constant 1 : index
    %c5_486 = arith.constant 5 : index
    %c0_487 = arith.constant 0 : index
    %c0_488 = arith.constant 0 : index
    %673 = vector.load %arg6[%c1_485, %c5_486, %c0_487, %c0_488] : memref<3x8x64x8xbf16, #tpu.memory_space<vmem>>, vector<1x1x64x8xbf16>
    %674 = vector.shape_cast %673 : vector<1x1x64x8xbf16> to vector<64x8xbf16>
    %cst_489 = arith.constant dense<0.000000e+00> : vector<20x8xf32>
    %675 = tpu.matmul %424, %674, %cst_489 {dimension_numbers = #tpu.dot_dimension_numbers<[1], [0], [0], [1], [0, 0, 1, 1], [], []>} : vector<20x64xbf16>, vector<64x8xbf16>, vector<20x8xf32> -> vector<20x8xf32>
    %c1_490 = arith.constant 1 : index
    %c5_491 = arith.constant 5 : index
    %c0_492 = arith.constant 0 : index
    %c0_493 = arith.constant 0 : index
    %676 = vector.load %arg7[%c1_490, %c5_491, %c0_492, %c0_493] : memref<3x8x1x8xf32, #tpu.memory_space<vmem>>, vector<1x1x1x8xf32>
    %677 = vector.shape_cast %676 : vector<1x1x1x8xf32> to vector<1x8xf32>
    %678 = vector.broadcast %677 : vector<1x8xf32> to vector<20x8xf32>
    %679 = arith.addf %675, %678 : vector<20x8xf32>
    %c2_494 = arith.constant 2 : index
    %c5_495 = arith.constant 5 : index
    %c0_496 = arith.constant 0 : index
    %c0_497 = arith.constant 0 : index
    %680 = vector.load %arg6[%c2_494, %c5_495, %c0_496, %c0_497] : memref<3x8x64x8xbf16, #tpu.memory_space<vmem>>, vector<1x1x64x8xbf16>
    %681 = vector.shape_cast %680 : vector<1x1x64x8xbf16> to vector<64x8xbf16>
    %cst_498 = arith.constant dense<0.000000e+00> : vector<20x8xf32>
    %682 = tpu.matmul %424, %681, %cst_498 {dimension_numbers = #tpu.dot_dimension_numbers<[1], [0], [0], [1], [0, 0, 1, 1], [], []>} : vector<20x64xbf16>, vector<64x8xbf16>, vector<20x8xf32> -> vector<20x8xf32>
    %c2_499 = arith.constant 2 : index
    %c5_500 = arith.constant 5 : index
    %c0_501 = arith.constant 0 : index
    %c0_502 = arith.constant 0 : index
    %683 = vector.load %arg7[%c2_499, %c5_500, %c0_501, %c0_502] : memref<3x8x1x8xf32, #tpu.memory_space<vmem>>, vector<1x1x1x8xf32>
    %684 = vector.shape_cast %683 : vector<1x1x1x8xf32> to vector<1x8xf32>
    %685 = vector.broadcast %684 : vector<1x8xf32> to vector<20x8xf32>
    %686 = arith.addf %682, %685 : vector<20x8xf32>
    %687 = vector.shape_cast %672 : vector<16x8xf32> to vector<2x8x8xf32>
    %688 = vector.shape_cast %679 : vector<20x8xf32> to vector<2x10x8xf32>
    %689 = vector.shape_cast %686 : vector<20x8xf32> to vector<2x10x8xf32>
    %690 = arith.truncf %687 : vector<2x8x8xf32> to vector<2x8x8xbf16>
    %691 = arith.truncf %688 : vector<2x10x8xf32> to vector<2x10x8xbf16>
    "tpu.trace_start"() <{level = 10 : i32, message = "bqd,bkd->bqk"}> : () -> ()
    %cst_503 = arith.constant dense<0.000000e+00> : vector<2x8x10xf32>
    %692 = tpu.matmul %690, %691, %cst_503 {dimension_numbers = #tpu.dot_dimension_numbers<[2], [2], [1], [1], [0, 0, 0, 1, 1, 1], [0], [0]>} : vector<2x8x8xbf16>, vector<2x10x8xbf16>, vector<2x8x10xf32> -> vector<2x8x10xf32>
    "tpu.trace_stop"() : () -> ()
    %cst_504 = arith.constant 0.353553385 : f32
    %693 = vector.broadcast %cst_504 : f32 to vector<2x8x10xf32>
    %694 = arith.mulf %692, %693 : vector<2x8x10xf32>
    %cst_505 = arith.constant dense<0xFF800000> : vector<2x8xf32>
    %695 = vector.multi_reduction <maximumf>, %694, %cst_505 [2] : vector<2x8x10xf32> to vector<2x8xf32>
    %696 = vector.shape_cast %695 : vector<2x8xf32> to vector<2x8x1xf32>
    %697 = vector.broadcast %696 : vector<2x8x1xf32> to vector<2x8x10xf32>
    %698 = arith.subf %694, %697 : vector<2x8x10xf32>
    %699 = math.exp %698 : vector<2x8x10xf32>
    %cst_506 = arith.constant dense<0.000000e+00> : vector<2x8xf32>
    %700 = vector.multi_reduction <add>, %699, %cst_506 [2] : vector<2x8x10xf32> to vector<2x8xf32>
    %701 = vector.shape_cast %700 : vector<2x8xf32> to vector<2x8x1xf32>
    %702 = tpu.reciprocal %701 {approx = true} : vector<2x8x1xf32> -> vector<2x8x1xf32>
    %703 = vector.broadcast %702 : vector<2x8x1xf32> to vector<2x8x10xf32>
    %704 = arith.mulf %699, %703 : vector<2x8x10xf32>
    %705 = arith.truncf %704 : vector<2x8x10xf32> to vector<2x8x10xbf16>
    %706 = arith.truncf %689 : vector<2x10x8xf32> to vector<2x10x8xbf16>
    "tpu.trace_start"() <{level = 10 : i32, message = "bqk,bkd->bqd"}> : () -> ()
    %cst_507 = arith.constant dense<0.000000e+00> : vector<2x8x8xf32>
    %707 = tpu.matmul %705, %706, %cst_507 {dimension_numbers = #tpu.dot_dimension_numbers<[2], [1], [1], [2], [0, 0, 0, 1, 1, 2], [0], [0]>} : vector<2x8x10xbf16>, vector<2x10x8xbf16>, vector<2x8x8xf32> -> vector<2x8x8xf32>
    "tpu.trace_stop"() : () -> ()
    %708 = vector.shape_cast %707 : vector<2x8x8xf32> to vector<16x8xf32>
    %709 = arith.truncf %708 : vector<16x8xf32> to vector<16x8xbf16>
    %c5_508 = arith.constant 5 : index
    %c0_509 = arith.constant 0 : index
    %c0_510 = arith.constant 0 : index
    %710 = vector.load %arg8[%c5_508, %c0_509, %c0_510] : memref<8x8x64xbf16, #tpu.memory_space<vmem>>, vector<1x8x64xbf16>
    %711 = vector.shape_cast %710 : vector<1x8x64xbf16> to vector<8x64xbf16>
    %cst_511 = arith.constant dense<0.000000e+00> : vector<16x64xf32>
    %712 = tpu.matmul %709, %711, %cst_511 {dimension_numbers = #tpu.dot_dimension_numbers<[1], [0], [0], [1], [0, 0, 1, 1], [], []>} : vector<16x8xbf16>, vector<8x64xbf16>, vector<16x64xf32> -> vector<16x64xf32>
    %713 = arith.addf %665, %712 : vector<16x64xf32>
    %c0_512 = arith.constant 0 : index
    %c6_513 = arith.constant 6 : index
    %c0_514 = arith.constant 0 : index
    %c0_515 = arith.constant 0 : index
    %714 = vector.load %arg6[%c0_512, %c6_513, %c0_514, %c0_515] : memref<3x8x64x8xbf16, #tpu.memory_space<vmem>>, vector<1x1x64x8xbf16>
    %715 = vector.shape_cast %714 : vector<1x1x64x8xbf16> to vector<64x8xbf16>
    %cst_516 = arith.constant dense<0.000000e+00> : vector<16x8xf32>
    %716 = tpu.matmul %423, %715, %cst_516 {dimension_numbers = #tpu.dot_dimension_numbers<[1], [0], [0], [1], [0, 0, 1, 1], [], []>} : vector<16x64xbf16>, vector<64x8xbf16>, vector<16x8xf32> -> vector<16x8xf32>
    %c0_517 = arith.constant 0 : index
    %c6_518 = arith.constant 6 : index
    %c0_519 = arith.constant 0 : index
    %c0_520 = arith.constant 0 : index
    %717 = vector.load %arg7[%c0_517, %c6_518, %c0_519, %c0_520] : memref<3x8x1x8xf32, #tpu.memory_space<vmem>>, vector<1x1x1x8xf32>
    %718 = vector.shape_cast %717 : vector<1x1x1x8xf32> to vector<1x8xf32>
    %719 = vector.broadcast %718 : vector<1x8xf32> to vector<16x8xf32>
    %720 = arith.addf %716, %719 : vector<16x8xf32>
    %c1_521 = arith.constant 1 : index
    %c6_522 = arith.constant 6 : index
    %c0_523 = arith.constant 0 : index
    %c0_524 = arith.constant 0 : index
    %721 = vector.load %arg6[%c1_521, %c6_522, %c0_523, %c0_524] : memref<3x8x64x8xbf16, #tpu.memory_space<vmem>>, vector<1x1x64x8xbf16>
    %722 = vector.shape_cast %721 : vector<1x1x64x8xbf16> to vector<64x8xbf16>
    %cst_525 = arith.constant dense<0.000000e+00> : vector<20x8xf32>
    %723 = tpu.matmul %424, %722, %cst_525 {dimension_numbers = #tpu.dot_dimension_numbers<[1], [0], [0], [1], [0, 0, 1, 1], [], []>} : vector<20x64xbf16>, vector<64x8xbf16>, vector<20x8xf32> -> vector<20x8xf32>
    %c1_526 = arith.constant 1 : index
    %c6_527 = arith.constant 6 : index
    %c0_528 = arith.constant 0 : index
    %c0_529 = arith.constant 0 : index
    %724 = vector.load %arg7[%c1_526, %c6_527, %c0_528, %c0_529] : memref<3x8x1x8xf32, #tpu.memory_space<vmem>>, vector<1x1x1x8xf32>
    %725 = vector.shape_cast %724 : vector<1x1x1x8xf32> to vector<1x8xf32>
    %726 = vector.broadcast %725 : vector<1x8xf32> to vector<20x8xf32>
    %727 = arith.addf %723, %726 : vector<20x8xf32>
    %c2_530 = arith.constant 2 : index
    %c6_531 = arith.constant 6 : index
    %c0_532 = arith.constant 0 : index
    %c0_533 = arith.constant 0 : index
    %728 = vector.load %arg6[%c2_530, %c6_531, %c0_532, %c0_533] : memref<3x8x64x8xbf16, #tpu.memory_space<vmem>>, vector<1x1x64x8xbf16>
    %729 = vector.shape_cast %728 : vector<1x1x64x8xbf16> to vector<64x8xbf16>
    %cst_534 = arith.constant dense<0.000000e+00> : vector<20x8xf32>
    %730 = tpu.matmul %424, %729, %cst_534 {dimension_numbers = #tpu.dot_dimension_numbers<[1], [0], [0], [1], [0, 0, 1, 1], [], []>} : vector<20x64xbf16>, vector<64x8xbf16>, vector<20x8xf32> -> vector<20x8xf32>
    %c2_535 = arith.constant 2 : index
    %c6_536 = arith.constant 6 : index
    %c0_537 = arith.constant 0 : index
    %c0_538 = arith.constant 0 : index
    %731 = vector.load %arg7[%c2_535, %c6_536, %c0_537, %c0_538] : memref<3x8x1x8xf32, #tpu.memory_space<vmem>>, vector<1x1x1x8xf32>
    %732 = vector.shape_cast %731 : vector<1x1x1x8xf32> to vector<1x8xf32>
    %733 = vector.broadcast %732 : vector<1x8xf32> to vector<20x8xf32>
    %734 = arith.addf %730, %733 : vector<20x8xf32>
    %735 = vector.shape_cast %720 : vector<16x8xf32> to vector<2x8x8xf32>
    %736 = vector.shape_cast %727 : vector<20x8xf32> to vector<2x10x8xf32>
    %737 = vector.shape_cast %734 : vector<20x8xf32> to vector<2x10x8xf32>
    %738 = arith.truncf %735 : vector<2x8x8xf32> to vector<2x8x8xbf16>
    %739 = arith.truncf %736 : vector<2x10x8xf32> to vector<2x10x8xbf16>
    "tpu.trace_start"() <{level = 10 : i32, message = "bqd,bkd->bqk"}> : () -> ()
    %cst_539 = arith.constant dense<0.000000e+00> : vector<2x8x10xf32>
    %740 = tpu.matmul %738, %739, %cst_539 {dimension_numbers = #tpu.dot_dimension_numbers<[2], [2], [1], [1], [0, 0, 0, 1, 1, 1], [0], [0]>} : vector<2x8x8xbf16>, vector<2x10x8xbf16>, vector<2x8x10xf32> -> vector<2x8x10xf32>
    "tpu.trace_stop"() : () -> ()
    %cst_540 = arith.constant 0.353553385 : f32
    %741 = vector.broadcast %cst_540 : f32 to vector<2x8x10xf32>
    %742 = arith.mulf %740, %741 : vector<2x8x10xf32>
    %cst_541 = arith.constant dense<0xFF800000> : vector<2x8xf32>
    %743 = vector.multi_reduction <maximumf>, %742, %cst_541 [2] : vector<2x8x10xf32> to vector<2x8xf32>
    %744 = vector.shape_cast %743 : vector<2x8xf32> to vector<2x8x1xf32>
    %745 = vector.broadcast %744 : vector<2x8x1xf32> to vector<2x8x10xf32>
    %746 = arith.subf %742, %745 : vector<2x8x10xf32>
    %747 = math.exp %746 : vector<2x8x10xf32>
    %cst_542 = arith.constant dense<0.000000e+00> : vector<2x8xf32>
    %748 = vector.multi_reduction <add>, %747, %cst_542 [2] : vector<2x8x10xf32> to vector<2x8xf32>
    %749 = vector.shape_cast %748 : vector<2x8xf32> to vector<2x8x1xf32>
    %750 = tpu.reciprocal %749 {approx = true} : vector<2x8x1xf32> -> vector<2x8x1xf32>
    %751 = vector.broadcast %750 : vector<2x8x1xf32> to vector<2x8x10xf32>
    %752 = arith.mulf %747, %751 : vector<2x8x10xf32>
    %753 = arith.truncf %752 : vector<2x8x10xf32> to vector<2x8x10xbf16>
    %754 = arith.truncf %737 : vector<2x10x8xf32> to vector<2x10x8xbf16>
    "tpu.trace_start"() <{level = 10 : i32, message = "bqk,bkd->bqd"}> : () -> ()
    %cst_543 = arith.constant dense<0.000000e+00> : vector<2x8x8xf32>
    %755 = tpu.matmul %753, %754, %cst_543 {dimension_numbers = #tpu.dot_dimension_numbers<[2], [1], [1], [2], [0, 0, 0, 1, 1, 2], [0], [0]>} : vector<2x8x10xbf16>, vector<2x10x8xbf16>, vector<2x8x8xf32> -> vector<2x8x8xf32>
    "tpu.trace_stop"() : () -> ()
    %756 = vector.shape_cast %755 : vector<2x8x8xf32> to vector<16x8xf32>
    %757 = arith.truncf %756 : vector<16x8xf32> to vector<16x8xbf16>
    %c6_544 = arith.constant 6 : index
    %c0_545 = arith.constant 0 : index
    %c0_546 = arith.constant 0 : index
    %758 = vector.load %arg8[%c6_544, %c0_545, %c0_546] : memref<8x8x64xbf16, #tpu.memory_space<vmem>>, vector<1x8x64xbf16>
    %759 = vector.shape_cast %758 : vector<1x8x64xbf16> to vector<8x64xbf16>
    %cst_547 = arith.constant dense<0.000000e+00> : vector<16x64xf32>
    %760 = tpu.matmul %757, %759, %cst_547 {dimension_numbers = #tpu.dot_dimension_numbers<[1], [0], [0], [1], [0, 0, 1, 1], [], []>} : vector<16x8xbf16>, vector<8x64xbf16>, vector<16x64xf32> -> vector<16x64xf32>
    %761 = arith.addf %713, %760 : vector<16x64xf32>
    %c0_548 = arith.constant 0 : index
    %c7_549 = arith.constant 7 : index
    %c0_550 = arith.constant 0 : index
    %c0_551 = arith.constant 0 : index
    %762 = vector.load %arg6[%c0_548, %c7_549, %c0_550, %c0_551] : memref<3x8x64x8xbf16, #tpu.memory_space<vmem>>, vector<1x1x64x8xbf16>
    %763 = vector.shape_cast %762 : vector<1x1x64x8xbf16> to vector<64x8xbf16>
    %cst_552 = arith.constant dense<0.000000e+00> : vector<16x8xf32>
    %764 = tpu.matmul %423, %763, %cst_552 {dimension_numbers = #tpu.dot_dimension_numbers<[1], [0], [0], [1], [0, 0, 1, 1], [], []>} : vector<16x64xbf16>, vector<64x8xbf16>, vector<16x8xf32> -> vector<16x8xf32>
    %c0_553 = arith.constant 0 : index
    %c7_554 = arith.constant 7 : index
    %c0_555 = arith.constant 0 : index
    %c0_556 = arith.constant 0 : index
    %765 = vector.load %arg7[%c0_553, %c7_554, %c0_555, %c0_556] : memref<3x8x1x8xf32, #tpu.memory_space<vmem>>, vector<1x1x1x8xf32>
    %766 = vector.shape_cast %765 : vector<1x1x1x8xf32> to vector<1x8xf32>
    %767 = vector.broadcast %766 : vector<1x8xf32> to vector<16x8xf32>
    %768 = arith.addf %764, %767 : vector<16x8xf32>
    %c1_557 = arith.constant 1 : index
    %c7_558 = arith.constant 7 : index
    %c0_559 = arith.constant 0 : index
    %c0_560 = arith.constant 0 : index
    %769 = vector.load %arg6[%c1_557, %c7_558, %c0_559, %c0_560] : memref<3x8x64x8xbf16, #tpu.memory_space<vmem>>, vector<1x1x64x8xbf16>
    %770 = vector.shape_cast %769 : vector<1x1x64x8xbf16> to vector<64x8xbf16>
    %cst_561 = arith.constant dense<0.000000e+00> : vector<20x8xf32>
    %771 = tpu.matmul %424, %770, %cst_561 {dimension_numbers = #tpu.dot_dimension_numbers<[1], [0], [0], [1], [0, 0, 1, 1], [], []>} : vector<20x64xbf16>, vector<64x8xbf16>, vector<20x8xf32> -> vector<20x8xf32>
    %c1_562 = arith.constant 1 : index
    %c7_563 = arith.constant 7 : index
    %c0_564 = arith.constant 0 : index
    %c0_565 = arith.constant 0 : index
    %772 = vector.load %arg7[%c1_562, %c7_563, %c0_564, %c0_565] : memref<3x8x1x8xf32, #tpu.memory_space<vmem>>, vector<1x1x1x8xf32>
    %773 = vector.shape_cast %772 : vector<1x1x1x8xf32> to vector<1x8xf32>
    %774 = vector.broadcast %773 : vector<1x8xf32> to vector<20x8xf32>
    %775 = arith.addf %771, %774 : vector<20x8xf32>
    %c2_566 = arith.constant 2 : index
    %c7_567 = arith.constant 7 : index
    %c0_568 = arith.constant 0 : index
    %c0_569 = arith.constant 0 : index
    %776 = vector.load %arg6[%c2_566, %c7_567, %c0_568, %c0_569] : memref<3x8x64x8xbf16, #tpu.memory_space<vmem>>, vector<1x1x64x8xbf16>
    %777 = vector.shape_cast %776 : vector<1x1x64x8xbf16> to vector<64x8xbf16>
    %cst_570 = arith.constant dense<0.000000e+00> : vector<20x8xf32>
    %778 = tpu.matmul %424, %777, %cst_570 {dimension_numbers = #tpu.dot_dimension_numbers<[1], [0], [0], [1], [0, 0, 1, 1], [], []>} : vector<20x64xbf16>, vector<64x8xbf16>, vector<20x8xf32> -> vector<20x8xf32>
    %c2_571 = arith.constant 2 : index
    %c7_572 = arith.constant 7 : index
    %c0_573 = arith.constant 0 : index
    %c0_574 = arith.constant 0 : index
    %779 = vector.load %arg7[%c2_571, %c7_572, %c0_573, %c0_574] : memref<3x8x1x8xf32, #tpu.memory_space<vmem>>, vector<1x1x1x8xf32>
    %780 = vector.shape_cast %779 : vector<1x1x1x8xf32> to vector<1x8xf32>
    %781 = vector.broadcast %780 : vector<1x8xf32> to vector<20x8xf32>
    %782 = arith.addf %778, %781 : vector<20x8xf32>
    %783 = vector.shape_cast %768 : vector<16x8xf32> to vector<2x8x8xf32>
    %784 = vector.shape_cast %775 : vector<20x8xf32> to vector<2x10x8xf32>
    %785 = vector.shape_cast %782 : vector<20x8xf32> to vector<2x10x8xf32>
    %786 = arith.truncf %783 : vector<2x8x8xf32> to vector<2x8x8xbf16>
    %787 = arith.truncf %784 : vector<2x10x8xf32> to vector<2x10x8xbf16>
    "tpu.trace_start"() <{level = 10 : i32, message = "bqd,bkd->bqk"}> : () -> ()
    %cst_575 = arith.constant dense<0.000000e+00> : vector<2x8x10xf32>
    %788 = tpu.matmul %786, %787, %cst_575 {dimension_numbers = #tpu.dot_dimension_numbers<[2], [2], [1], [1], [0, 0, 0, 1, 1, 1], [0], [0]>} : vector<2x8x8xbf16>, vector<2x10x8xbf16>, vector<2x8x10xf32> -> vector<2x8x10xf32>
    "tpu.trace_stop"() : () -> ()
    %cst_576 = arith.constant 0.353553385 : f32
    %789 = vector.broadcast %cst_576 : f32 to vector<2x8x10xf32>
    %790 = arith.mulf %788, %789 : vector<2x8x10xf32>
    %cst_577 = arith.constant dense<0xFF800000> : vector<2x8xf32>
    %791 = vector.multi_reduction <maximumf>, %790, %cst_577 [2] : vector<2x8x10xf32> to vector<2x8xf32>
    %792 = vector.shape_cast %791 : vector<2x8xf32> to vector<2x8x1xf32>
    %793 = vector.broadcast %792 : vector<2x8x1xf32> to vector<2x8x10xf32>
    %794 = arith.subf %790, %793 : vector<2x8x10xf32>
    %795 = math.exp %794 : vector<2x8x10xf32>
    %cst_578 = arith.constant dense<0.000000e+00> : vector<2x8xf32>
    %796 = vector.multi_reduction <add>, %795, %cst_578 [2] : vector<2x8x10xf32> to vector<2x8xf32>
    %797 = vector.shape_cast %796 : vector<2x8xf32> to vector<2x8x1xf32>
    %798 = tpu.reciprocal %797 {approx = true} : vector<2x8x1xf32> -> vector<2x8x1xf32>
    %799 = vector.broadcast %798 : vector<2x8x1xf32> to vector<2x8x10xf32>
    %800 = arith.mulf %795, %799 : vector<2x8x10xf32>
    %801 = arith.truncf %800 : vector<2x8x10xf32> to vector<2x8x10xbf16>
    %802 = arith.truncf %785 : vector<2x10x8xf32> to vector<2x10x8xbf16>
    "tpu.trace_start"() <{level = 10 : i32, message = "bqk,bkd->bqd"}> : () -> ()
    %cst_579 = arith.constant dense<0.000000e+00> : vector<2x8x8xf32>
    %803 = tpu.matmul %801, %802, %cst_579 {dimension_numbers = #tpu.dot_dimension_numbers<[2], [1], [1], [2], [0, 0, 0, 1, 1, 2], [0], [0]>} : vector<2x8x10xbf16>, vector<2x10x8xbf16>, vector<2x8x8xf32> -> vector<2x8x8xf32>
    "tpu.trace_stop"() : () -> ()
    %804 = vector.shape_cast %803 : vector<2x8x8xf32> to vector<16x8xf32>
    %805 = arith.truncf %804 : vector<16x8xf32> to vector<16x8xbf16>
    %c7_580 = arith.constant 7 : index
    %c0_581 = arith.constant 0 : index
    %c0_582 = arith.constant 0 : index
    %806 = vector.load %arg8[%c7_580, %c0_581, %c0_582] : memref<8x8x64xbf16, #tpu.memory_space<vmem>>, vector<1x8x64xbf16>
    %807 = vector.shape_cast %806 : vector<1x8x64xbf16> to vector<8x64xbf16>
    %cst_583 = arith.constant dense<0.000000e+00> : vector<16x64xf32>
    %808 = tpu.matmul %805, %807, %cst_583 {dimension_numbers = #tpu.dot_dimension_numbers<[1], [0], [0], [1], [0, 0, 1, 1], [], []>} : vector<16x8xbf16>, vector<8x64xbf16>, vector<16x64xf32> -> vector<16x64xf32>
    %809 = arith.addf %761, %808 : vector<16x64xf32>
    %c0_584 = arith.constant 0 : index
    %c0_585 = arith.constant 0 : index
    %810 = vector.load %arg9[%c0_584, %c0_585] : memref<1x64xf32, #tpu.memory_space<vmem>>, vector<1x64xf32>
    %811 = vector.broadcast %810 : vector<1x64xf32> to vector<16x64xf32>
    %812 = arith.addf %809, %811 : vector<16x64xf32>
    %813 = arith.addf %422, %812 : vector<16x64xf32>
    %814 = vector.extract_strided_slice %2 {offsets = [1, 0], sizes = [1, 64], strides = [1, 1]} : vector<3x64xf32> to vector<1x64xf32>
    %815 = vector.shape_cast %814 : vector<1x64xf32> to vector<64xf32>
    %816 = vector.extract_strided_slice %3 {offsets = [1, 0], sizes = [1, 64], strides = [1, 1]} : vector<3x64xf32> to vector<1x64xf32>
    %817 = vector.shape_cast %816 : vector<1x64xf32> to vector<64xf32>
    %cst_586 = arith.constant dense<0.000000e+00> : vector<16xf32>
    %818 = vector.multi_reduction <add>, %813, %cst_586 [1] : vector<16x64xf32> to vector<16xf32>
    %819 = vector.shape_cast %818 : vector<16xf32> to vector<16x1xf32>
    %cst_587 = arith.constant 6.400000e+01 : f32
    %820 = vector.broadcast %cst_587 : f32 to vector<16x1xf32>
    %821 = arith.divf %819, %820 : vector<16x1xf32>
    %822 = vector.broadcast %821 : vector<16x1xf32> to vector<16x64xf32>
    %823 = arith.subf %813, %822 : vector<16x64xf32>
    %824 = arith.mulf %823, %823 : vector<16x64xf32>
    %cst_588 = arith.constant dense<0.000000e+00> : vector<16xf32>
    %825 = vector.multi_reduction <add>, %824, %cst_588 [1] : vector<16x64xf32> to vector<16xf32>
    %826 = vector.shape_cast %825 : vector<16xf32> to vector<16x1xf32>
    %cst_589 = arith.constant 6.400000e+01 : f32
    %827 = vector.broadcast %cst_589 : f32 to vector<16x1xf32>
    %828 = arith.divf %826, %827 : vector<16x1xf32>
    %829 = vector.broadcast %821 : vector<16x1xf32> to vector<16x64xf32>
    %830 = arith.subf %813, %829 : vector<16x64xf32>
    %cst_590 = arith.constant 9.99999974E-6 : f32
    %831 = vector.broadcast %cst_590 : f32 to vector<16x1xf32>
    %832 = arith.addf %828, %831 : vector<16x1xf32>
    %833 = math.rsqrt %832 : vector<16x1xf32>
    %834 = vector.broadcast %833 : vector<16x1xf32> to vector<16x64xf32>
    %835 = arith.mulf %830, %834 : vector<16x64xf32>
    %836 = vector.shape_cast %815 : vector<64xf32> to vector<1x64xf32>
    %837 = vector.broadcast %836 : vector<1x64xf32> to vector<16x64xf32>
    %838 = arith.mulf %835, %837 : vector<16x64xf32>
    %839 = vector.shape_cast %817 : vector<64xf32> to vector<1x64xf32>
    %840 = vector.broadcast %839 : vector<1x64xf32> to vector<16x64xf32>
    %841 = arith.addf %838, %840 : vector<16x64xf32>
    %842 = arith.truncf %841 : vector<16x64xf32> to vector<16x64xbf16>
    %c0_591 = arith.constant 0 : index
    %c0_592 = arith.constant 0 : index
    %843 = vector.load %arg10[%c0_591, %c0_592] : memref<64x2048xbf16, #tpu.memory_space<vmem>>, vector<64x2048xbf16>
    %cst_593 = arith.constant dense<0.000000e+00> : vector<16x2048xf32>
    %844 = tpu.matmul %842, %843, %cst_593 {dimension_numbers = #tpu.dot_dimension_numbers<[1], [0], [0], [1], [0, 0, 1, 1], [], []>} : vector<16x64xbf16>, vector<64x2048xbf16>, vector<16x2048xf32> -> vector<16x2048xf32>
    %c0_594 = arith.constant 0 : index
    %c0_595 = arith.constant 0 : index
    %845 = vector.load %arg11[%c0_594, %c0_595] : memref<1x2048xf32, #tpu.memory_space<vmem>>, vector<1x2048xf32>
    %846 = vector.broadcast %845 : vector<1x2048xf32> to vector<16x2048xf32>
    %847 = arith.addf %844, %846 : vector<16x2048xf32>
    %cst_596 = arith.constant 0.000000e+00 : f32
    %848 = vector.broadcast %cst_596 : f32 to vector<16x2048xf32>
    %849 = arith.maximumf %847, %848 : vector<16x2048xf32>
    %850 = arith.truncf %849 : vector<16x2048xf32> to vector<16x2048xbf16>
    %c0_597 = arith.constant 0 : index
    %c0_598 = arith.constant 0 : index
    %851 = vector.load %arg12[%c0_597, %c0_598] : memref<2048x64xbf16, #tpu.memory_space<vmem>>, vector<2048x64xbf16>
    %cst_599 = arith.constant dense<0.000000e+00> : vector<16x64xf32>
    %852 = tpu.matmul %850, %851, %cst_599 {dimension_numbers = #tpu.dot_dimension_numbers<[1], [0], [0], [1], [0, 0, 1, 1], [], []>} : vector<16x2048xbf16>, vector<2048x64xbf16>, vector<16x64xf32> -> vector<16x64xf32>
    %c0_600 = arith.constant 0 : index
    %c0_601 = arith.constant 0 : index
    %853 = vector.load %arg13[%c0_600, %c0_601] : memref<1x64xf32, #tpu.memory_space<vmem>>, vector<1x64xf32>
    %854 = vector.broadcast %853 : vector<1x64xf32> to vector<16x64xf32>
    %855 = arith.addf %852, %854 : vector<16x64xf32>
    %856 = arith.addf %841, %855 : vector<16x64xf32>
    %857 = vector.extract_strided_slice %2 {offsets = [2, 0], sizes = [1, 64], strides = [1, 1]} : vector<3x64xf32> to vector<1x64xf32>
    %858 = vector.shape_cast %857 : vector<1x64xf32> to vector<64xf32>
    %859 = vector.extract_strided_slice %3 {offsets = [2, 0], sizes = [1, 64], strides = [1, 1]} : vector<3x64xf32> to vector<1x64xf32>
    %860 = vector.shape_cast %859 : vector<1x64xf32> to vector<64xf32>
    %cst_602 = arith.constant dense<0.000000e+00> : vector<16xf32>
    %861 = vector.multi_reduction <add>, %856, %cst_602 [1] : vector<16x64xf32> to vector<16xf32>
    %862 = vector.shape_cast %861 : vector<16xf32> to vector<16x1xf32>
    %cst_603 = arith.constant 6.400000e+01 : f32
    %863 = vector.broadcast %cst_603 : f32 to vector<16x1xf32>
    %864 = arith.divf %862, %863 : vector<16x1xf32>
    %865 = vector.broadcast %864 : vector<16x1xf32> to vector<16x64xf32>
    %866 = arith.subf %856, %865 : vector<16x64xf32>
    %867 = arith.mulf %866, %866 : vector<16x64xf32>
    %cst_604 = arith.constant dense<0.000000e+00> : vector<16xf32>
    %868 = vector.multi_reduction <add>, %867, %cst_604 [1] : vector<16x64xf32> to vector<16xf32>
    %869 = vector.shape_cast %868 : vector<16xf32> to vector<16x1xf32>
    %cst_605 = arith.constant 6.400000e+01 : f32
    %870 = vector.broadcast %cst_605 : f32 to vector<16x1xf32>
    %871 = arith.divf %869, %870 : vector<16x1xf32>
    %872 = vector.broadcast %864 : vector<16x1xf32> to vector<16x64xf32>
    %873 = arith.subf %856, %872 : vector<16x64xf32>
    %cst_606 = arith.constant 9.99999974E-6 : f32
    %874 = vector.broadcast %cst_606 : f32 to vector<16x1xf32>
    %875 = arith.addf %871, %874 : vector<16x1xf32>
    %876 = math.rsqrt %875 : vector<16x1xf32>
    %877 = vector.broadcast %876 : vector<16x1xf32> to vector<16x64xf32>
    %878 = arith.mulf %873, %877 : vector<16x64xf32>
    %879 = vector.shape_cast %858 : vector<64xf32> to vector<1x64xf32>
    %880 = vector.broadcast %879 : vector<1x64xf32> to vector<16x64xf32>
    %881 = arith.mulf %878, %880 : vector<16x64xf32>
    %882 = vector.shape_cast %860 : vector<64xf32> to vector<1x64xf32>
    %883 = vector.broadcast %882 : vector<1x64xf32> to vector<16x64xf32>
    %884 = arith.addf %881, %883 : vector<16x64xf32>
    %c0_607 = arith.constant 0 : index
    %c0_608 = arith.constant 0 : index
    %885 = vector.load %arg16[%c0_607, %c0_608] : memref<16x64xf32, #tpu.memory_space<vmem>>, vector<16x64xf32>
    tpu.vector_store %arg16[%c0_607, %c0_608], %884 {strides = array<i32>} : memref<16x64xf32, #tpu.memory_space<vmem>>, vector<16x64xf32>,
    return
  }
}

</mosaic_0001>

<llo_original>
// kernel: transformer_decoder_forward.1
$region0: #{transformer_decoder_forward.1}
  #allocation0 [shape = 'u32[]', space=smem, size = 0x4, offset = 0x4, fixed_abs, tag = 'smem constant byte address 0x4 - core index']
  #allocation1 [shape = 'u32[72,128]{1,0:T(1,128)}', space=vmem, size = 0x9000, scoped, tag = 'internal scratch']
  %s0 = inlined_call_operand.vmem [shape: f32[16,64], index: 0, kind: input, shape index: {}]
  %s1 = inlined_call_operand.vmem [shape: f32[20,64], index: 1, kind: input, shape index: {}]
  %s2 = inlined_call_operand.vmem [shape: bf16[3,8,64,8], index: 2, kind: input, shape index: {}]
  %s3 = inlined_call_operand.vmem [shape: f32[3,8,1,8], index: 3, kind: input, shape index: {}]
  %s4 = inlined_call_operand.vmem [shape: bf16[8,8,64], index: 4, kind: input, shape index: {}]
  %s5 = inlined_call_operand.vmem [shape: f32[1,64], index: 5, kind: input, shape index: {}]
  %s6 = inlined_call_operand.vmem [shape: bf16[3,8,64,8], index: 6, kind: input, shape index: {}]
  %s7 = inlined_call_operand.vmem [shape: f32[3,8,1,8], index: 7, kind: input, shape index: {}]
  %s8 = inlined_call_operand.vmem [shape: bf16[8,8,64], index: 8, kind: input, shape index: {}]
  %s9 = inlined_call_operand.vmem [shape: f32[1,64], index: 9, kind: input, shape index: {}]
  %s10 = inlined_call_operand.vmem [shape: bf16[64,2048], index: 10, kind: input, shape index: {}]
  %s11 = inlined_call_operand.vmem [shape: f32[1,2048], index: 11, kind: input, shape index: {}]
  %s12 = inlined_call_operand.vmem [shape: bf16[2048,64], index: 12, kind: input, shape index: {}]
  %s13 = inlined_call_operand.vmem [shape: f32[1,64], index: 13, kind: input, shape index: {}]
  %s14 = inlined_call_operand.vmem [shape: f32[3,64], index: 14, kind: input, shape index: {}]
  %s15 = inlined_call_operand.vmem [shape: f32[3,64], index: 15, kind: input, shape index: {}]
  %s16 = inlined_call_operand.vmem [shape: f32[16,64], index: 16, kind: output, shape index: {}]
  %s17 = sld [smem:[#allocation0]]
  $region74: #{transformer_decoder_forward.1} parent=0
    _
  %s19 = ssub.s32 1, %s17
  %s20 = scalar_select 0, %s19, %s17
  // Predicated region
  $region2: #{transformer_decoder_forward.1} parent=0 // pred_check
    _
  $region3: #{transformer_decoder_forward.1} parent=0 // pred_check_branch
    %22 = sbr.rel (0) target = $region5
  $region4: #{transformer_decoder_forward.1} parent=0 // pred_region
    _
  $region5: #{transformer_decoder_forward.1} parent=0 // pred_fallthru
    _
  // Predicated region
  $region6: #{transformer_decoder_forward.1} parent=0 // pred_check
    _
  $region7: #{transformer_decoder_forward.1} parent=0 // pred_check_branch
    %24 = sbr.rel (0) target = $region9
  $region8: #{transformer_decoder_forward.1} parent=0 // pred_region
    _
  $region9: #{transformer_decoder_forward.1} parent=0 // pred_fallthru
    _
  // Predicated region
  $region10: #{transformer_decoder_forward.1} parent=0 // pred_check
    _
  $region11: #{transformer_decoder_forward.1} parent=0 // pred_check_branch
    %26 = sbr.rel (0) target = $region13
  $region12: #{transformer_decoder_forward.1} parent=0 // pred_region
    _
  $region13: #{transformer_decoder_forward.1} parent=0 // pred_fallthru
    _
  // Predicated region
  $region14: #{transformer_decoder_forward.1} parent=0 // pred_check
    _
  $region15: #{transformer_decoder_forward.1} parent=0 // pred_check_branch
    %28 = sbr.rel (0) target = $region17
  $region16: #{transformer_decoder_forward.1} parent=0 // pred_region
    _
  $region17: #{transformer_decoder_forward.1} parent=0 // pred_fallthru
    _
  // Predicated region
  $region18: #{transformer_decoder_forward.1} parent=0 // pred_check
    _
  $region19: #{transformer_decoder_forward.1} parent=0 // pred_check_branch
    %30 = sbr.rel (0) target = $region21
  $region20: #{transformer_decoder_forward.1} parent=0 // pred_region
    _
  $region21: #{transformer_decoder_forward.1} parent=0 // pred_fallthru
    _
  // Predicated region
  $region22: #{transformer_decoder_forward.1} parent=0 // pred_check
    _
  $region23: #{transformer_decoder_forward.1} parent=0 // pred_check_branch
    %32 = sbr.rel (0) target = $region25
  $region24: #{transformer_decoder_forward.1} parent=0 // pred_region
    _
  $region25: #{transformer_decoder_forward.1} parent=0 // pred_fallthru
    _
  // Predicated region
  $region26: #{transformer_decoder_forward.1} parent=0 // pred_check
    _
  $region27: #{transformer_decoder_forward.1} parent=0 // pred_check_branch
    %34 = sbr.rel (0) target = $region29
  $region28: #{transformer_decoder_forward.1} parent=0 // pred_region
    _
  $region29: #{transformer_decoder_forward.1} parent=0 // pred_fallthru
    _
  // Predicated region
  $region30: #{transformer_decoder_forward.1} parent=0 // pred_check
    _
  $region31: #{transformer_decoder_forward.1} parent=0 // pred_check_branch
    %36 = sbr.rel (0) target = $region33
  $region32: #{transformer_decoder_forward.1} parent=0 // pred_region
    _
  $region33: #{transformer_decoder_forward.1} parent=0 // pred_fallthru
    _
  // Predicated region
  $region34: #{transformer_decoder_forward.1} parent=0 // pred_check
    _
  $region35: #{transformer_decoder_forward.1} parent=0 // pred_check_branch
    %38 = sbr.rel (0) target = $region37
  $region36: #{transformer_decoder_forward.1} parent=0 // pred_region
    _
  $region37: #{transformer_decoder_forward.1} parent=0 // pred_fallthru
    _
  // Predicated region
  $region38: #{transformer_decoder_forward.1} parent=0 // pred_check
    _
  $region39: #{transformer_decoder_forward.1} parent=0 // pred_check_branch
    %40 = sbr.rel (0) target = $region41
  $region40: #{transformer_decoder_forward.1} parent=0 // pred_region
    _
  $region41: #{transformer_decoder_forward.1} parent=0 // pred_fallthru
    _
  // Predicated region
  $region42: #{transformer_decoder_forward.1} parent=0 // pred_check
    _
  $region43: #{transformer_decoder_forward.1} parent=0 // pred_check_branch
    %42 = sbr.rel (0) target = $region45
  $region44: #{transformer_decoder_forward.1} parent=0 // pred_region
    _
  $region45: #{transformer_decoder_forward.1} parent=0 // pred_fallthru
    _
  // Predicated region
  $region46: #{transformer_decoder_forward.1} parent=0 // pred_check
    _
  $region47: #{transformer_decoder_forward.1} parent=0 // pred_check_branch
    %44 = sbr.rel (0) target = $region49
  $region48: #{transformer_decoder_forward.1} parent=0 // pred_region
    _
  $region49: #{transformer_decoder_forward.1} parent=0 // pred_fallthru
    _
  // Predicated region
  $region50: #{transformer_decoder_forward.1} parent=0 // pred_check
    _
  $region51: #{transformer_decoder_forward.1} parent=0 // pred_check_branch
    %46 = sbr.rel (0) target = $region53
  $region52: #{transformer_decoder_forward.1} parent=0 // pred_region
    _
  $region53: #{transformer_decoder_forward.1} parent=0 // pred_fallthru
    _
  // Predicated region
  $region54: #{transformer_decoder_forward.1} parent=0 // pred_check
    _
  $region55: #{transformer_decoder_forward.1} parent=0 // pred_check_branch
    %48 = sbr.rel (0) target = $region57
  $region56: #{transformer_decoder_forward.1} parent=0 // pred_region
    _
  $region57: #{transformer_decoder_forward.1} parent=0 // pred_fallthru
    _
  // Predicated region
  $region58: #{transformer_decoder_forward.1} parent=0 // pred_check
    _
  $region59: #{transformer_decoder_forward.1} parent=0 // pred_check_branch
    %50 = sbr.rel (0) target = $region61
  $region60: #{transformer_decoder_forward.1} parent=0 // pred_region
    _
  $region61: #{transformer_decoder_forward.1} parent=0 // pred_fallthru
    _
  // Predicated region
  $region62: #{transformer_decoder_forward.1} parent=0 // pred_check
    _
  $region63: #{transformer_decoder_forward.1} parent=0 // pred_check_branch
    %52 = sbr.rel (0) target = $region65
  $region64: #{transformer_decoder_forward.1} parent=0 // pred_region
    _
  $region65: #{transformer_decoder_forward.1} parent=0 // pred_fallthru
    _
  %v54 = vld [vmem:[%s0] sm:$0xff]
  %v55 = vld [vmem:[%s0 + $0x8] sm:$0xff]
  %v56 = vld [vmem:[%s1] sm:$0xff]
  %v57 = vld [vmem:[%s1 + $0x8] sm:$0xff]
  %v58 = vld [vmem:[%s1 + $0x10] sm:$0xf]
  %v59 = vld [vmem:[%s14] sm:$0x7]
  %v60 = vld [vmem:[%s15] sm:$0x7]
  %v61 = vpack.c.bf16 %v55, %v54
  %v62 = vld [vmem:[%s2] sm:$0xf]
  %v63 = vld [vmem:[%s2 + $0x4] sm:$0xf]
  %v64 = vld [vmem:[%s2 + $0x8] sm:$0xf]
  %v65 = vld [vmem:[%s2 + $0xc] sm:$0xf]
  %v66 = vld [vmem:[%s2 + $0x10] sm:$0xf]
  %v67 = vld [vmem:[%s2 + $0x14] sm:$0xf]
  %v68 = vld [vmem:[%s2 + $0x18] sm:$0xf]
  %v69 = vld [vmem:[%s2 + $0x1c] sm:$0xf]
  %v70 = vld [vmem:[%s3] sm:$0x1]
  %v72 = vperm.slane %v70, 0
  %v82 = vunpack.c.l.b16 %v62
  %v83 = vunpack.c.l.b16 %v63
  %v84 = vunpack.c.l.b16 %v64
  %v85 = vunpack.c.l.b16 %v65
  %v86 = vunpack.c.l.b16 %v66
  %v87 = vunpack.c.l.b16 %v67
  %v88 = vunpack.c.l.b16 %v68
  %v89 = vunpack.c.l.b16 %v69
  %v90 = vpack.c.b16 %v83, %v82
  %v91 = vpack.c.b16 %v85, %v84
  %v92 = vpack.c.b16 %v87, %v86
  %v93 = vpack.c.b16 %v89, %v88
  %vm98 = vcmask 523264
  %v100 = vsel %vm98, %v61, 0
  %102 = vmatpush.bf16.msra.mxu0 0
  %103 = vmatpush.bf16.msra.mxu0 0
  %104 = vmatpush.bf16.msra.mxu0 0
  %105 = vmatpush.bf16.msra.mxu0 0
  %106 = vmatpush.bf16.msra.mxu0 %v93
  %107 = vmatpush.bf16.msra.mxu0 %v92
  %108 = vmatpush.bf16.msra.mxu0 %v91
  %109 = vmatpush.bf16.msra.mxu0 %v90
  %110 = vmatmul.bf16.gmra.mxu0 %v100
  %v111 = vpop.f32.mrf.mxu0
  %v112 = vadd.f32 %v72, %v111
  %v113 = vpop.f32.mrf.mxu0
  %v114 = vadd.f32 %v72, %v113
  %115 = vdwg.mxu0
  %s116 = scalar_lea.vmem %s2, 256
  %v117 = vld [vmem:[%s116] sm:$0xf]
  %v118 = vld [vmem:[%s116 + $0x4] sm:$0xf]
  %v119 = vld [vmem:[%s116 + $0x8] sm:$0xf]
  %v120 = vld [vmem:[%s116 + $0xc] sm:$0xf]
  %v121 = vld [vmem:[%s116 + $0x10] sm:$0xf]
  %v122 = vld [vmem:[%s116 + $0x14] sm:$0xf]
  %v123 = vld [vmem:[%s116 + $0x18] sm:$0xf]
  %v124 = vld [vmem:[%s116 + $0x1c] sm:$0xf]
  %s125 = scalar_lea.vmem %s3, 8
  %v126 = vld [vmem:[%s125] sm:$0x1]
  %v128 = vperm.slane %v126, 0
  %v138 = vunpack.c.l.b16 %v117
  %v139 = vunpack.c.l.b16 %v118
  %v140 = vunpack.c.l.b16 %v119
  %v141 = vunpack.c.l.b16 %v120
  %v142 = vunpack.c.l.b16 %v121
  %v143 = vunpack.c.l.b16 %v122
  %v144 = vunpack.c.l.b16 %v123
  %v145 = vunpack.c.l.b16 %v124
  %v146 = vpack.c.b16 %v139, %v138
  %v147 = vpack.c.b16 %v141, %v140
  %v148 = vpack.c.b16 %v143, %v142
  %v149 = vpack.c.b16 %v145, %v144
  %154 = vmatpush.bf16.msra.mxu0 0
  %155 = vmatpush.bf16.msra.mxu0 0
  %156 = vmatpush.bf16.msra.mxu0 0
  %157 = vmatpush.bf16.msra.mxu0 0
  %158 = vmatpush.bf16.msra.mxu0 %v149
  %159 = vmatpush.bf16.msra.mxu0 %v148
  %160 = vmatpush.bf16.msra.mxu0 %v147
  %161 = vmatpush.bf16.msra.mxu0 %v146
  %162 = vmatmul.bf16.gmra.mxu0 %v100
  %v163 = vpop.f32.mrf.mxu0
  %v164 = vadd.f32 %v128, %v163
  %v165 = vpop.f32.mrf.mxu0
  %v166 = vadd.f32 %v128, %v165
  %167 = vdwg.mxu0
  %s168 = scalar_lea.vmem %s2, 512
  %v169 = vld [vmem:[%s168] sm:$0xf]
  %v170 = vld [vmem:[%s168 + $0x4] sm:$0xf]
  %v171 = vld [vmem:[%s168 + $0x8] sm:$0xf]
  %v172 = vld [vmem:[%s168 + $0xc] sm:$0xf]
  %v173 = vld [vmem:[%s168 + $0x10] sm:$0xf]
  %v174 = vld [vmem:[%s168 + $0x14] sm:$0xf]
  %v175 = vld [vmem:[%s168 + $0x18] sm:$0xf]
  %v176 = vld [vmem:[%s168 + $0x1c] sm:$0xf]
  %s177 = scalar_lea.vmem %s3, 16
  %v178 = vld [vmem:[%s177] sm:$0x1]
  %v180 = vperm.slane %v178, 0
  %v190 = vunpack.c.l.b16 %v169
  %v191 = vunpack.c.l.b16 %v170
  %v192 = vunpack.c.l.b16 %v171
  %v193 = vunpack.c.l.b16 %v172
  %v194 = vunpack.c.l.b16 %v173
  %v195 = vunpack.c.l.b16 %v174
  %v196 = vunpack.c.l.b16 %v175
  %v197 = vunpack.c.l.b16 %v176
  %v198 = vpack.c.b16 %v191, %v190
  %v199 = vpack.c.b16 %v193, %v192
  %v200 = vpack.c.b16 %v195, %v194
  %v201 = vpack.c.b16 %v197, %v196
  %206 = vmatpush.bf16.msra.mxu0 0
  %207 = vmatpush.bf16.msra.mxu0 0
  %208 = vmatpush.bf16.msra.mxu0 0
  %209 = vmatpush.bf16.msra.mxu0 0
  %210 = vmatpush.bf16.msra.mxu0 %v201
  %211 = vmatpush.bf16.msra.mxu0 %v200
  %212 = vmatpush.bf16.msra.mxu0 %v199
  %213 = vmatpush.bf16.msra.mxu0 %v198
  %214 = vmatmul.bf16.gmra.mxu0 %v100
  %v215 = vpop.f32.mrf.mxu0
  %v216 = vadd.f32 %v180, %v215
  %v217 = vpop.f32.mrf.mxu0
  %v218 = vadd.f32 %v180, %v217
  %219 = vdwg.mxu0
  %v220 = vpack.c.bf16 %v112, %v112
  %v221 = vpack.c.bf16 %v114, %v114
  %v222 = vpack.c.bf16 %v164, %v164
  %v223 = vpack.c.bf16 %v166, %v166
  %vm224 = vcmask 64512
  %v226 = vsel %vm224, %v220, 0
  %v229 = vsel %vm224, %v222, 0
  %231 = vmatpush.bf16.xpose.msra.mxu0 0
  %232 = vmatpush.bf16.xpose.msra.mxu0 0
  %233 = vmatpush.bf16.xpose.msra.mxu0 0
  %234 = vmatpush.bf16.xpose.msra.mxu0 0
  %235 = vmatpush.bf16.xpose.msra.mxu0 0
  %236 = vmatpush.bf16.xpose.msra.mxu0 0
  %237 = vmatpush.bf16.xpose.msra.mxu0 0
  %238 = vmatpush.bf16.xpose.msra.mxu0 %v229
  %239 = vmatmul.bf16.gmra.mxu0 %v226
  %v240 = vpop.f32.mrf.mxu0
  %v241 = vadd.f32 0.0, %v240
  %v242 = vpop.f32.mrf.mxu0
  %243 = vdwg.mxu0
  %v245 = vsel %vm224, %v221, 0
  %v248 = vsel %vm224, %v223, 0
  %250 = vmatpush.bf16.xpose.msra.mxu0 0
  %251 = vmatpush.bf16.xpose.msra.mxu0 0
  %252 = vmatpush.bf16.xpose.msra.mxu0 0
  %253 = vmatpush.bf16.xpose.msra.mxu0 0
  %254 = vmatpush.bf16.xpose.msra.mxu0 0
  %255 = vmatpush.bf16.xpose.msra.mxu0 0
  %256 = vmatpush.bf16.xpose.msra.mxu0 0
  %257 = vmatpush.bf16.xpose.msra.mxu0 %v248
  %258 = vmatmul.bf16.gmra.mxu0 %v245
  %v259 = vpop.f32.mrf.mxu0
  %v260 = vadd.f32 0.0, %v259
  %v261 = vpop.f32.mrf.mxu0
  %262 = vdwg.mxu0
  %v263 = vmul.f32 %v241, 0.35355338
  %v264 = vmul.f32 %v260, 0.35355338
  %v265 = vsel %vm224, %v263, -inf
  %266 = vmax.xlane.f32.xlu0 %v265
  %v267 = vpop.xlane.xlu0 %266
  %v268 = vsel %vm224, %v264, -inf
  %269 = vmax.xlane.f32.xlu0 %v268
  %v270 = vpop.xlane.xlu0 %269
  %v271 = vsub.f32 %v263, %v267
  %v272 = vsub.f32 %v264, %v270
  %v273 = vmul.f32 %v271, 1.442695
  %v274 = vpow.pop %v273
  %v275 = vmul.f32 %v272, 1.442695
  %v276 = vpow.pop %v275
  %v277 = vsel %vm224, %v274, 0.0
  %278 = vadd.xlane.f32.xlu0 %v277
  %v279 = vpop.xlane.xlu0 %278
  %v280 = vsel %vm224, %v276, 0.0
  %281 = vadd.xlane.f32.xlu0 %v280
  %v282 = vpop.xlane.xlu0 %281
  %v283 = vrcp.pop %v279
  %v284 = vrcp.pop %v282
  %v285 = vmul.f32 %v274, %v283
  %v286 = vmul.f32 %v276, %v284
  %v287 = vpack.c.bf16 %v285, %v285
  %v288 = vpack.c.bf16 %v286, %v286
  %v289 = vpack.c.bf16 %v216, %v216
  %v290 = vpack.c.bf16 %v218, %v218
  %v292 = vsel %vm224, %v287, 0
  %vm294 = vcmask 1043456
  %v296 = vsel %vm294, %v289, 0
  %298 = vmatpush.bf16.msra.mxu0 0
  %299 = vmatpush.bf16.msra.mxu0 0
  %300 = vmatpush.bf16.msra.mxu0 0
  %301 = vmatpush.bf16.msra.mxu0 0
  %302 = vmatpush.bf16.msra.mxu0 0
  %303 = vmatpush.bf16.msra.mxu0 0
  %304 = vmatpush.bf16.msra.mxu0 0
  %305 = vmatpush.bf16.msra.mxu0 %v296
  %306 = vmatmul.bf16.gmra.mxu0 %v292
  %v307 = vpop.f32.mrf.mxu0
  %v308 = vadd.f32 0.0, %v307
  %v309 = vpop.f32.mrf.mxu0
  %310 = vdwg.mxu0
  %v312 = vsel %vm224, %v288, 0
  %v315 = vsel %vm294, %v290, 0
  %317 = vmatpush.bf16.msra.mxu0 0
  %318 = vmatpush.bf16.msra.mxu0 0
  %319 = vmatpush.bf16.msra.mxu0 0
  %320 = vmatpush.bf16.msra.mxu0 0
  %321 = vmatpush.bf16.msra.mxu0 0
  %322 = vmatpush.bf16.msra.mxu0 0
  %323 = vmatpush.bf16.msra.mxu0 0
  %324 = vmatpush.bf16.msra.mxu0 %v315
  %325 = vmatmul.bf16.gmra.mxu0 %v312
  %v326 = vpop.f32.mrf.mxu0
  %v327 = vadd.f32 0.0, %v326
  %v328 = vpop.f32.mrf.mxu0
  %329 = vdwg.mxu0
  %v330 = vpack.c.bf16 %v327, %v308
  %v331 = vld [vmem:[%s4] sm:$0xf]
  %s332 = scalar_lea.vmem %s2, 32
  %v333 = vld [vmem:[%s332] sm:$0xf]
  %v334 = vld [vmem:[%s332 + $0x4] sm:$0xf]
  %v335 = vld [vmem:[%s332 + $0x8] sm:$0xf]
  %v336 = vld [vmem:[%s332 + $0xc] sm:$0xf]
  %v337 = vld [vmem:[%s332 + $0x10] sm:$0xf]
  %v338 = vld [vmem:[%s332 + $0x14] sm:$0xf]
  %v339 = vld [vmem:[%s332 + $0x18] sm:$0xf]
  %v340 = vld [vmem:[%s332 + $0x1c] sm:$0xf]
  %s341 = scalar_lea.vmem %s3, 1
  %v342 = vld [vmem:[%s341] sm:$0x1]
  %v344 = vperm.slane %v342, 0
  %v354 = vunpack.c.l.b16 %v333
  %v355 = vunpack.c.l.b16 %v334
  %v356 = vunpack.c.l.b16 %v335
  %v357 = vunpack.c.l.b16 %v336
  %v358 = vunpack.c.l.b16 %v337
  %v359 = vunpack.c.l.b16 %v338
  %v360 = vunpack.c.l.b16 %v339
  %v361 = vunpack.c.l.b16 %v340
  %v362 = vpack.c.b16 %v355, %v354
  %v363 = vpack.c.b16 %v357, %v356
  %v364 = vpack.c.b16 %v359, %v358
  %v365 = vpack.c.b16 %v361, %v360
  %370 = vmatpush.bf16.msra.mxu0 0
  %371 = vmatpush.bf16.msra.mxu0 0
  %372 = vmatpush.bf16.msra.mxu0 0
  %373 = vmatpush.bf16.msra.mxu0 0
  %374 = vmatpush.bf16.msra.mxu0 %v365
  %375 = vmatpush.bf16.msra.mxu0 %v364
  %376 = vmatpush.bf16.msra.mxu0 %v363
  %377 = vmatpush.bf16.msra.mxu0 %v362
  %378 = vmatmul.bf16.gmra.mxu0 %v100
  %v379 = vpop.f32.mrf.mxu0
  %v380 = vadd.f32 %v344, %v379
  %v381 = vpop.f32.mrf.mxu0
  %v382 = vadd.f32 %v344, %v381
  %383 = vdwg.mxu0
  %s384 = scalar_lea.vmem %s2, 288
  %v385 = vld [vmem:[%s384] sm:$0xf]
  %v386 = vld [vmem:[%s384 + $0x4] sm:$0xf]
  %v387 = vld [vmem:[%s384 + $0x8] sm:$0xf]
  %v388 = vld [vmem:[%s384 + $0xc] sm:$0xf]
  %v389 = vld [vmem:[%s384 + $0x10] sm:$0xf]
  %v390 = vld [vmem:[%s384 + $0x14] sm:$0xf]
  %v391 = vld [vmem:[%s384 + $0x18] sm:$0xf]
  %v392 = vld [vmem:[%s384 + $0x1c] sm:$0xf]
  %s393 = scalar_lea.vmem %s3, 9
  %v394 = vld [vmem:[%s393] sm:$0x1]
  %v396 = vperm.slane %v394, 0
  %v406 = vunpack.c.l.b16 %v385
  %v407 = vunpack.c.l.b16 %v386
  %v408 = vunpack.c.l.b16 %v387
  %v409 = vunpack.c.l.b16 %v388
  %v410 = vunpack.c.l.b16 %v389
  %v411 = vunpack.c.l.b16 %v390
  %v412 = vunpack.c.l.b16 %v391
  %v413 = vunpack.c.l.b16 %v392
  %v414 = vpack.c.b16 %v407, %v406
  %v415 = vpack.c.b16 %v409, %v408
  %v416 = vpack.c.b16 %v411, %v410
  %v417 = vpack.c.b16 %v413, %v412
  %422 = vmatpush.bf16.msra.mxu0 0
  %423 = vmatpush.bf16.msra.mxu0 0
  %424 = vmatpush.bf16.msra.mxu0 0
  %425 = vmatpush.bf16.msra.mxu0 0
  %426 = vmatpush.bf16.msra.mxu0 %v417
  %427 = vmatpush.bf16.msra.mxu0 %v416
  %428 = vmatpush.bf16.msra.mxu0 %v415
  %429 = vmatpush.bf16.msra.mxu0 %v414
  %430 = vmatmul.bf16.gmra.mxu0 %v100
  %v431 = vpop.f32.mrf.mxu0
  %v432 = vadd.f32 %v396, %v431
  %v433 = vpop.f32.mrf.mxu0
  %v434 = vadd.f32 %v396, %v433
  %435 = vdwg.mxu0
  %s436 = scalar_lea.vmem %s2, 544
  %v437 = vld [vmem:[%s436] sm:$0xf]
  %v438 = vld [vmem:[%s436 + $0x4] sm:$0xf]
  %v439 = vld [vmem:[%s436 + $0x8] sm:$0xf]
  %v440 = vld [vmem:[%s436 + $0xc] sm:$0xf]
  %v441 = vld [vmem:[%s436 + $0x10] sm:$0xf]
  %v442 = vld [vmem:[%s436 + $0x14] sm:$0xf]
  %v443 = vld [vmem:[%s436 + $0x18] sm:$0xf]
  %v444 = vld [vmem:[%s436 + $0x1c] sm:$0xf]
  %s445 = scalar_lea.vmem %s3, 17
  %v446 = vld [vmem:[%s445] sm:$0x1]
  %v448 = vperm.slane %v446, 0
  %v458 = vunpack.c.l.b16 %v437
  %v459 = vunpack.c.l.b16 %v438
  %v460 = vunpack.c.l.b16 %v439
  %v461 = vunpack.c.l.b16 %v440
  %v462 = vunpack.c.l.b16 %v441
  %v463 = vunpack.c.l.b16 %v442
  %v464 = vunpack.c.l.b16 %v443
  %v465 = vunpack.c.l.b16 %v444
  %v466 = vpack.c.b16 %v459, %v458
  %v467 = vpack.c.b16 %v461, %v460
  %v468 = vpack.c.b16 %v463, %v462
  %v469 = vpack.c.b16 %v465, %v464
  %474 = vmatpush.bf16.msra.mxu0 0
  %475 = vmatpush.bf16.msra.mxu0 0
  %476 = vmatpush.bf16.msra.mxu0 0
  %477 = vmatpush.bf16.msra.mxu0 0
  %478 = vmatpush.bf16.msra.mxu0 %v469
  %479 = vmatpush.bf16.msra.mxu0 %v468
  %480 = vmatpush.bf16.msra.mxu0 %v467
  %481 = vmatpush.bf16.msra.mxu0 %v466
  %482 = vmatmul.bf16.gmra.mxu0 %v100
  %v483 = vpop.f32.mrf.mxu0
  %v484 = vadd.f32 %v448, %v483
  %v485 = vpop.f32.mrf.mxu0
  %v486 = vadd.f32 %v448, %v485
  %487 = vdwg.mxu0
  %v488 = vpack.c.bf16 %v380, %v380
  %v489 = vpack.c.bf16 %v382, %v382
  %v490 = vpack.c.bf16 %v432, %v432
  %v491 = vpack.c.bf16 %v434, %v434
  %v493 = vsel %vm224, %v488, 0
  %v496 = vsel %vm224, %v490, 0
  %498 = vmatpush.bf16.xpose.msra.mxu0 0
  %499 = vmatpush.bf16.xpose.msra.mxu0 0
  %500 = vmatpush.bf16.xpose.msra.mxu0 0
  %501 = vmatpush.bf16.xpose.msra.mxu0 0
  %502 = vmatpush.bf16.xpose.msra.mxu0 0
  %503 = vmatpush.bf16.xpose.msra.mxu0 0
  %504 = vmatpush.bf16.xpose.msra.mxu0 0
  %505 = vmatpush.bf16.xpose.msra.mxu0 %v496
  %506 = vmatmul.bf16.gmra.mxu0 %v493
  %v507 = vpop.f32.mrf.mxu0
  %v508 = vadd.f32 0.0, %v507
  %v509 = vpop.f32.mrf.mxu0
  %510 = vdwg.mxu0
  %v512 = vsel %vm224, %v489, 0
  %v515 = vsel %vm224, %v491, 0
  %517 = vmatpush.bf16.xpose.msra.mxu0 0
  %518 = vmatpush.bf16.xpose.msra.mxu0 0
  %519 = vmatpush.bf16.xpose.msra.mxu0 0
  %520 = vmatpush.bf16.xpose.msra.mxu0 0
  %521 = vmatpush.bf16.xpose.msra.mxu0 0
  %522 = vmatpush.bf16.xpose.msra.mxu0 0
  %523 = vmatpush.bf16.xpose.msra.mxu0 0
  %524 = vmatpush.bf16.xpose.msra.mxu0 %v515
  %525 = vmatmul.bf16.gmra.mxu0 %v512
  %v526 = vpop.f32.mrf.mxu0
  %v527 = vadd.f32 0.0, %v526
  %v528 = vpop.f32.mrf.mxu0
  %529 = vdwg.mxu0
  %v530 = vmul.f32 %v508, 0.35355338
  %v531 = vmul.f32 %v527, 0.35355338
  %v532 = vsel %vm224, %v530, -inf
  %533 = vmax.xlane.f32.xlu0 %v532
  %v534 = vpop.xlane.xlu0 %533
  %v535 = vsel %vm224, %v531, -inf
  %536 = vmax.xlane.f32.xlu0 %v535
  %v537 = vpop.xlane.xlu0 %536
  %v538 = vsub.f32 %v530, %v534
  %v539 = vsub.f32 %v531, %v537
  %v540 = vmul.f32 %v538, 1.442695
  %v541 = vpow.pop %v540
  %v542 = vmul.f32 %v539, 1.442695
  %v543 = vpow.pop %v542
  %v544 = vsel %vm224, %v541, 0.0
  %545 = vadd.xlane.f32.xlu0 %v544
  %v546 = vpop.xlane.xlu0 %545
  %v547 = vsel %vm224, %v543, 0.0
  %548 = vadd.xlane.f32.xlu0 %v547
  %v549 = vpop.xlane.xlu0 %548
  %v550 = vrcp.pop %v546
  %v551 = vrcp.pop %v549
  %v552 = vmul.f32 %v541, %v550
  %v553 = vmul.f32 %v543, %v551
  %v554 = vpack.c.bf16 %v552, %v552
  %v555 = vpack.c.bf16 %v553, %v553
  %v556 = vpack.c.bf16 %v484, %v484
  %v557 = vpack.c.bf16 %v486, %v486
  %v559 = vsel %vm224, %v554, 0
  %v562 = vsel %vm294, %v556, 0
  %564 = vmatpush.bf16.msra.mxu0 0
  %565 = vmatpush.bf16.msra.mxu0 0
  %566 = vmatpush.bf16.msra.mxu0 0
  %567 = vmatpush.bf16.msra.mxu0 0
  %568 = vmatpush.bf16.msra.mxu0 0
  %569 = vmatpush.bf16.msra.mxu0 0
  %570 = vmatpush.bf16.msra.mxu0 0
  %571 = vmatpush.bf16.msra.mxu0 %v562
  %572 = vmatmul.bf16.gmra.mxu0 %v559
  %v573 = vpop.f32.mrf.mxu0
  %v574 = vadd.f32 0.0, %v573
  %v575 = vpop.f32.mrf.mxu0
  %576 = vdwg.mxu0
  %v578 = vsel %vm224, %v555, 0
  %v581 = vsel %vm294, %v557, 0
  %583 = vmatpush.bf16.msra.mxu0 0
  %584 = vmatpush.bf16.msra.mxu0 0
  %585 = vmatpush.bf16.msra.mxu0 0
  %586 = vmatpush.bf16.msra.mxu0 0
  %587 = vmatpush.bf16.msra.mxu0 0
  %588 = vmatpush.bf16.msra.mxu0 0
  %589 = vmatpush.bf16.msra.mxu0 0
  %590 = vmatpush.bf16.msra.mxu0 %v581
  %591 = vmatmul.bf16.gmra.mxu0 %v578
  %v592 = vpop.f32.mrf.mxu0
  %v593 = vadd.f32 0.0, %v592
  %v594 = vpop.f32.mrf.mxu0
  %595 = vdwg.mxu0
  %v596 = vpack.c.bf16 %v593, %v574
  %s597 = scalar_lea.vmem %s4, 4
  %v598 = vld [vmem:[%s597] sm:$0xf]
  %v600 = vsel %vm224, %v596, 0
  %v603 = vsel %vm294, %v598, 0
  %605 = vmatpush.bf16.msra.mxu0 0
  %606 = vmatpush.bf16.msra.mxu0 0
  %607 = vmatpush.bf16.msra.mxu0 0
  %608 = vmatpush.bf16.msra.mxu0 0
  %609 = vmatpush.bf16.msra.mxu0 0
  %610 = vmatpush.bf16.msra.mxu0 0
  %611 = vmatpush.bf16.msra.mxu0 0
  %612 = vmatpush.bf16.msra.mxu0 %v603
  %613 = vmatmul.bf16.gmra.mxu0 %v600
  %v614 = vpop.f32.mrf.mxu0
  %v615 = vadd.f32 0.0, %v614
  %v616 = vpop.f32.mrf.mxu0
  %v617 = vadd.f32 0.0, %v616
  %618 = vdwg.mxu0
  %v620 = vsel %vm224, %v330, 0
  %v623 = vsel %vm294, %v331, 0
  %625 = vmatpush.bf16.msra.mxu0 0
  %626 = vmatpush.bf16.msra.mxu0 0
  %627 = vmatpush.bf16.msra.mxu0 0
  %628 = vmatpush.bf16.msra.mxu0 0
  %629 = vmatpush.bf16.msra.mxu0 0
  %630 = vmatpush.bf16.msra.mxu0 0
  %631 = vmatpush.bf16.msra.mxu0 0
  %632 = vmatpush.bf16.msra.mxu0 %v623
  %633 = vmatmul.bf16.gmra.mxu0 %v620
  %v634 = vpop.f32.mrf.mxu0
  %v635 = vadd.f32 %v615, %v634
  %v636 = vpop.f32.mrf.mxu0
  %v637 = vadd.f32 %v617, %v636
  %638 = vdwg.mxu0
  %s639 = scalar_lea.vmem %s2, 64
  %v640 = vld [vmem:[%s639] sm:$0xf]
  %v641 = vld [vmem:[%s639 + $0x4] sm:$0xf]
  %v642 = vld [vmem:[%s639 + $0x8] sm:$0xf]
  %v643 = vld [vmem:[%s639 + $0xc] sm:$0xf]
  %v644 = vld [vmem:[%s639 + $0x10] sm:$0xf]
  %v645 = vld [vmem:[%s639 + $0x14] sm:$0xf]
  %v646 = vld [vmem:[%s639 + $0x18] sm:$0xf]
  %v647 = vld [vmem:[%s639 + $0x1c] sm:$0xf]
  %s648 = scalar_lea.vmem %s3, 2
  %v649 = vld [vmem:[%s648] sm:$0x1]
  %v651 = vperm.slane %v649, 0
  %v661 = vunpack.c.l.b16 %v640
  %v662 = vunpack.c.l.b16 %v641
  %v663 = vunpack.c.l.b16 %v642
  %v664 = vunpack.c.l.b16 %v643
  %v665 = vunpack.c.l.b16 %v644
  %v666 = vunpack.c.l.b16 %v645
  %v667 = vunpack.c.l.b16 %v646
  %v668 = vunpack.c.l.b16 %v647
  %v669 = vpack.c.b16 %v662, %v661
  %v670 = vpack.c.b16 %v664, %v663
  %v671 = vpack.c.b16 %v666, %v665
  %v672 = vpack.c.b16 %v668, %v667
  %677 = vmatpush.bf16.msra.mxu0 0
  %678 = vmatpush.bf16.msra.mxu0 0
  %679 = vmatpush.bf16.msra.mxu0 0
  %680 = vmatpush.bf16.msra.mxu0 0
  %681 = vmatpush.bf16.msra.mxu0 %v672
  %682 = vmatpush.bf16.msra.mxu0 %v671
  %683 = vmatpush.bf16.msra.mxu0 %v670
  %684 = vmatpush.bf16.msra.mxu0 %v669
  %685 = vmatmul.bf16.gmra.mxu0 %v100
  %v686 = vpop.f32.mrf.mxu0
  %v687 = vadd.f32 %v651, %v686
  %v688 = vpop.f32.mrf.mxu0
  %v689 = vadd.f32 %v651, %v688
  %690 = vdwg.mxu0
  %s691 = scalar_lea.vmem %s2, 320
  %v692 = vld [vmem:[%s691] sm:$0xf]
  %v693 = vld [vmem:[%s691 + $0x4] sm:$0xf]
  %v694 = vld [vmem:[%s691 + $0x8] sm:$0xf]
  %v695 = vld [vmem:[%s691 + $0xc] sm:$0xf]
  %v696 = vld [vmem:[%s691 + $0x10] sm:$0xf]
  %v697 = vld [vmem:[%s691 + $0x14] sm:$0xf]
  %v698 = vld [vmem:[%s691 + $0x18] sm:$0xf]
  %v699 = vld [vmem:[%s691 + $0x1c] sm:$0xf]
  %s700 = scalar_lea.vmem %s3, 10
  %v701 = vld [vmem:[%s700] sm:$0x1]
  %v703 = vperm.slane %v701, 0
  %v713 = vunpack.c.l.b16 %v692
  %v714 = vunpack.c.l.b16 %v693
  %v715 = vunpack.c.l.b16 %v694
  %v716 = vunpack.c.l.b16 %v695
  %v717 = vunpack.c.l.b16 %v696
  %v718 = vunpack.c.l.b16 %v697
  %v719 = vunpack.c.l.b16 %v698
  %v720 = vunpack.c.l.b16 %v699
  %v721 = vpack.c.b16 %v714, %v713
  %v722 = vpack.c.b16 %v716, %v715
  %v723 = vpack.c.b16 %v718, %v717
  %v724 = vpack.c.b16 %v720, %v719
  %729 = vmatpush.bf16.msra.mxu0 0
  %730 = vmatpush.bf16.msra.mxu0 0
  %731 = vmatpush.bf16.msra.mxu0 0
  %732 = vmatpush.bf16.msra.mxu0 0
  %733 = vmatpush.bf16.msra.mxu0 %v724
  %734 = vmatpush.bf16.msra.mxu0 %v723
  %735 = vmatpush.bf16.msra.mxu0 %v722
  %736 = vmatpush.bf16.msra.mxu0 %v721
  %737 = vmatmul.bf16.gmra.mxu0 %v100
  %v738 = vpop.f32.mrf.mxu0
  %v739 = vadd.f32 %v703, %v738
  %v740 = vpop.f32.mrf.mxu0
  %v741 = vadd.f32 %v703, %v740
  %742 = vdwg.mxu0
  %s743 = scalar_lea.vmem %s2, 576
  %v744 = vld [vmem:[%s743] sm:$0xf]
  %v745 = vld [vmem:[%s743 + $0x4] sm:$0xf]
  %v746 = vld [vmem:[%s743 + $0x8] sm:$0xf]
  %v747 = vld [vmem:[%s743 + $0xc] sm:$0xf]
  %v748 = vld [vmem:[%s743 + $0x10] sm:$0xf]
  %v749 = vld [vmem:[%s743 + $0x14] sm:$0xf]
  %v750 = vld [vmem:[%s743 + $0x18] sm:$0xf]
  %v751 = vld [vmem:[%s743 + $0x1c] sm:$0xf]
  %s752 = scalar_lea.vmem %s3, 18
  %v753 = vld [vmem:[%s752] sm:$0x1]
  %v755 = vperm.slane %v753, 0
  %v765 = vunpack.c.l.b16 %v744
  %v766 = vunpack.c.l.b16 %v745
  %v767 = vunpack.c.l.b16 %v746
  %v768 = vunpack.c.l.b16 %v747
  %v769 = vunpack.c.l.b16 %v748
  %v770 = vunpack.c.l.b16 %v749
  %v771 = vunpack.c.l.b16 %v750
  %v772 = vunpack.c.l.b16 %v751
  %v773 = vpack.c.b16 %v766, %v765
  %v774 = vpack.c.b16 %v768, %v767
  %v775 = vpack.c.b16 %v770, %v769
  %v776 = vpack.c.b16 %v772, %v771
  %781 = vmatpush.bf16.msra.mxu0 0
  %782 = vmatpush.bf16.msra.mxu0 0
  %783 = vmatpush.bf16.msra.mxu0 0
  %784 = vmatpush.bf16.msra.mxu0 0
  %785 = vmatpush.bf16.msra.mxu0 %v776
  %786 = vmatpush.bf16.msra.mxu0 %v775
  %787 = vmatpush.bf16.msra.mxu0 %v774
  %788 = vmatpush.bf16.msra.mxu0 %v773
  %789 = vmatmul.bf16.gmra.mxu0 %v100
  %v790 = vpop.f32.mrf.mxu0
  %v791 = vadd.f32 %v755, %v790
  %v792 = vpop.f32.mrf.mxu0
  %v793 = vadd.f32 %v755, %v792
  %794 = vdwg.mxu0
  %v795 = vpack.c.bf16 %v687, %v687
  %v796 = vpack.c.bf16 %v689, %v689
  %v797 = vpack.c.bf16 %v739, %v739
  %v798 = vpack.c.bf16 %v741, %v741
  %v800 = vsel %vm224, %v795, 0
  %v803 = vsel %vm224, %v797, 0
  %805 = vmatpush.bf16.xpose.msra.mxu0 0
  %806 = vmatpush.bf16.xpose.msra.mxu0 0
  %807 = vmatpush.bf16.xpose.msra.mxu0 0
  %808 = vmatpush.bf16.xpose.msra.mxu0 0
  %809 = vmatpush.bf16.xpose.msra.mxu0 0
  %810 = vmatpush.bf16.xpose.msra.mxu0 0
  %811 = vmatpush.bf16.xpose.msra.mxu0 0
  %812 = vmatpush.bf16.xpose.msra.mxu0 %v803
  %813 = vmatmul.bf16.gmra.mxu0 %v800
  %v814 = vpop.f32.mrf.mxu0
  %v815 = vadd.f32 0.0, %v814
  %v816 = vpop.f32.mrf.mxu0
  %817 = vdwg.mxu0
  %v819 = vsel %vm224, %v796, 0
  %v822 = vsel %vm224, %v798, 0
  %824 = vmatpush.bf16.xpose.msra.mxu0 0
  %825 = vmatpush.bf16.xpose.msra.mxu0 0
  %826 = vmatpush.bf16.xpose.msra.mxu0 0
  %827 = vmatpush.bf16.xpose.msra.mxu0 0
  %828 = vmatpush.bf16.xpose.msra.mxu0 0
  %829 = vmatpush.bf16.xpose.msra.mxu0 0
  %830 = vmatpush.bf16.xpose.msra.mxu0 0
  %831 = vmatpush.bf16.xpose.msra.mxu0 %v822
  %832 = vmatmul.bf16.gmra.mxu0 %v819
  %v833 = vpop.f32.mrf.mxu0
  %v834 = vadd.f32 0.0, %v833
  %v835 = vpop.f32.mrf.mxu0
  %836 = vdwg.mxu0
  %v837 = vmul.f32 %v815, 0.35355338
  %v838 = vmul.f32 %v834, 0.35355338
  %v839 = vsel %vm224, %v837, -inf
  %840 = vmax.xlane.f32.xlu0 %v839
  %v841 = vpop.xlane.xlu0 %840
  %v842 = vsel %vm224, %v838, -inf
  %843 = vmax.xlane.f32.xlu0 %v842
  %v844 = vpop.xlane.xlu0 %843
  %v845 = vsub.f32 %v837, %v841
  %v846 = vsub.f32 %v838, %v844
  %v847 = vmul.f32 %v845, 1.442695
  %v848 = vpow.pop %v847
  %v849 = vmul.f32 %v846, 1.442695
  %v850 = vpow.pop %v849
  %v851 = vsel %vm224, %v848, 0.0
  %852 = vadd.xlane.f32.xlu0 %v851
  %v853 = vpop.xlane.xlu0 %852
  %v854 = vsel %vm224, %v850, 0.0
  %855 = vadd.xlane.f32.xlu0 %v854
  %v856 = vpop.xlane.xlu0 %855
  %v857 = vrcp.pop %v853
  %v858 = vrcp.pop %v856
  %v859 = vmul.f32 %v848, %v857
  %v860 = vmul.f32 %v850, %v858
  %v861 = vpack.c.bf16 %v859, %v859
  %v862 = vpack.c.bf16 %v860, %v860
  %v863 = vpack.c.bf16 %v791, %v791
  %v864 = vpack.c.bf16 %v793, %v793
  %v866 = vsel %vm224, %v861, 0
  %v869 = vsel %vm294, %v863, 0
  %871 = vmatpush.bf16.msra.mxu0 0
  %872 = vmatpush.bf16.msra.mxu0 0
  %873 = vmatpush.bf16.msra.mxu0 0
  %874 = vmatpush.bf16.msra.mxu0 0
  %875 = vmatpush.bf16.msra.mxu0 0
  %876 = vmatpush.bf16.msra.mxu0 0
  %877 = vmatpush.bf16.msra.mxu0 0
  %878 = vmatpush.bf16.msra.mxu0 %v869
  %879 = vmatmul.bf16.gmra.mxu0 %v866
  %v880 = vpop.f32.mrf.mxu0
  %v881 = vadd.f32 0.0, %v880
  %v882 = vpop.f32.mrf.mxu0
  %883 = vdwg.mxu0
  %v885 = vsel %vm224, %v862, 0
  %v888 = vsel %vm294, %v864, 0
  %890 = vmatpush.bf16.msra.mxu0 0
  %891 = vmatpush.bf16.msra.mxu0 0
  %892 = vmatpush.bf16.msra.mxu0 0
  %893 = vmatpush.bf16.msra.mxu0 0
  %894 = vmatpush.bf16.msra.mxu0 0
  %895 = vmatpush.bf16.msra.mxu0 0
  %896 = vmatpush.bf16.msra.mxu0 0
  %897 = vmatpush.bf16.msra.mxu0 %v888
  %898 = vmatmul.bf16.gmra.mxu0 %v885
  %v899 = vpop.f32.mrf.mxu0
  %v900 = vadd.f32 0.0, %v899
  %v901 = vpop.f32.mrf.mxu0
  %902 = vdwg.mxu0
  %v903 = vpack.c.bf16 %v900, %v881
  %s904 = scalar_lea.vmem %s4, 8
  %v905 = vld [vmem:[%s904] sm:$0xf]
  %v907 = vsel %vm224, %v903, 0
  %v910 = vsel %vm294, %v905, 0
  %912 = vmatpush.bf16.msra.mxu0 0
  %913 = vmatpush.bf16.msra.mxu0 0
  %914 = vmatpush.bf16.msra.mxu0 0
  %915 = vmatpush.bf16.msra.mxu0 0
  %916 = vmatpush.bf16.msra.mxu0 0
  %917 = vmatpush.bf16.msra.mxu0 0
  %918 = vmatpush.bf16.msra.mxu0 0
  %919 = vmatpush.bf16.msra.mxu0 %v910
  %920 = vmatmul.bf16.gmra.mxu0 %v907
  %v921 = vpop.f32.mrf.mxu0
  %v922 = vadd.f32 0.0, %v921
  %v923 = vpop.f32.mrf.mxu0
  %v924 = vadd.f32 0.0, %v923
  %925 = vdwg.mxu0
  %v926 = vadd.f32 %v635, %v922
  %v927 = vadd.f32 %v637, %v924
  %s928 = scalar_lea.vmem %s2, 96
  %v929 = vld [vmem:[%s928] sm:$0xf]
  %v930 = vld [vmem:[%s928 + $0x4] sm:$0xf]
  %v931 = vld [vmem:[%s928 + $0x8] sm:$0xf]
  %v932 = vld [vmem:[%s928 + $0xc] sm:$0xf]
  %v933 = vld [vmem:[%s928 + $0x10] sm:$0xf]
  %v934 = vld [vmem:[%s928 + $0x14] sm:$0xf]
  %v935 = vld [vmem:[%s928 + $0x18] sm:$0xf]
  %v936 = vld [vmem:[%s928 + $0x1c] sm:$0xf]
  %s937 = scalar_lea.vmem %s3, 3
  %v938 = vld [vmem:[%s937] sm:$0x1]
  %v940 = vperm.slane %v938, 0
  %v950 = vunpack.c.l.b16 %v929
  %v951 = vunpack.c.l.b16 %v930
  %v952 = vunpack.c.l.b16 %v931
  %v953 = vunpack.c.l.b16 %v932
  %v954 = vunpack.c.l.b16 %v933
  %v955 = vunpack.c.l.b16 %v934
  %v956 = vunpack.c.l.b16 %v935
  %v957 = vunpack.c.l.b16 %v936
  %v958 = vpack.c.b16 %v951, %v950
  %v959 = vpack.c.b16 %v953, %v952
  %v960 = vpack.c.b16 %v955, %v954
  %v961 = vpack.c.b16 %v957, %v956
  %966 = vmatpush.bf16.msra.mxu0 0
  %967 = vmatpush.bf16.msra.mxu0 0
  %968 = vmatpush.bf16.msra.mxu0 0
  %969 = vmatpush.bf16.msra.mxu0 0
  %970 = vmatpush.bf16.msra.mxu0 %v961
  %971 = vmatpush.bf16.msra.mxu0 %v960
  %972 = vmatpush.bf16.msra.mxu0 %v959
  %973 = vmatpush.bf16.msra.mxu0 %v958
  %974 = vmatmul.bf16.gmra.mxu0 %v100
  %v975 = vpop.f32.mrf.mxu0
  %v976 = vadd.f32 %v940, %v975
  %v977 = vpop.f32.mrf.mxu0
  %v978 = vadd.f32 %v940, %v977
  %979 = vdwg.mxu0
  %s980 = scalar_lea.vmem %s2, 352
  %v981 = vld [vmem:[%s980] sm:$0xf]
  %v982 = vld [vmem:[%s980 + $0x4] sm:$0xf]
  %v983 = vld [vmem:[%s980 + $0x8] sm:$0xf]
  %v984 = vld [vmem:[%s980 + $0xc] sm:$0xf]
  %v985 = vld [vmem:[%s980 + $0x10] sm:$0xf]
  %v986 = vld [vmem:[%s980 + $0x14] sm:$0xf]
  %v987 = vld [vmem:[%s980 + $0x18] sm:$0xf]
  %v988 = vld [vmem:[%s980 + $0x1c] sm:$0xf]
  %s989 = scalar_lea.vmem %s3, 11
  %v990 = vld [vmem:[%s989] sm:$0x1]
  %v992 = vperm.slane %v990, 0
  %v1002 = vunpack.c.l.b16 %v981
  %v1003 = vunpack.c.l.b16 %v982
  %v1004 = vunpack.c.l.b16 %v983
  %v1005 = vunpack.c.l.b16 %v984
  %v1006 = vunpack.c.l.b16 %v985
  %v1007 = vunpack.c.l.b16 %v986
  %v1008 = vunpack.c.l.b16 %v987
  %v1009 = vunpack.c.l.b16 %v988
  %v1010 = vpack.c.b16 %v1003, %v1002
  %v1011 = vpack.c.b16 %v1005, %v1004
  %v1012 = vpack.c.b16 %v1007, %v1006
  %v1013 = vpack.c.b16 %v1009, %v1008
  %1018 = vmatpush.bf16.msra.mxu0 0
  %1019 = vmatpush.bf16.msra.mxu0 0
  %1020 = vmatpush.bf16.msra.mxu0 0
  %1021 = vmatpush.bf16.msra.mxu0 0
  %1022 = vmatpush.bf16.msra.mxu0 %v1013
  %1023 = vmatpush.bf16.msra.mxu0 %v1012
  %1024 = vmatpush.bf16.msra.mxu0 %v1011
  %1025 = vmatpush.bf16.msra.mxu0 %v1010
  %1026 = vmatmul.bf16.gmra.mxu0 %v100
  %v1027 = vpop.f32.mrf.mxu0
  %v1028 = vadd.f32 %v992, %v1027
  %v1029 = vpop.f32.mrf.mxu0
  %v1030 = vadd.f32 %v992, %v1029
  %1031 = vdwg.mxu0
  %s1032 = scalar_lea.vmem %s2, 608
  %v1033 = vld [vmem:[%s1032] sm:$0xf]
  %v1034 = vld [vmem:[%s1032 + $0x4] sm:$0xf]
  %v1035 = vld [vmem:[%s1032 + $0x8] sm:$0xf]
  %v1036 = vld [vmem:[%s1032 + $0xc] sm:$0xf]
  %v1037 = vld [vmem:[%s1032 + $0x10] sm:$0xf]
  %v1038 = vld [vmem:[%s1032 + $0x14] sm:$0xf]
  %v1039 = vld [vmem:[%s1032 + $0x18] sm:$0xf]
  %v1040 = vld [vmem:[%s1032 + $0x1c] sm:$0xf]
  %s1041 = scalar_lea.vmem %s3, 19
  %v1042 = vld [vmem:[%s1041] sm:$0x1]
  %v1044 = vperm.slane %v1042, 0
  %v1054 = vunpack.c.l.b16 %v1033
  %v1055 = vunpack.c.l.b16 %v1034
  %v1056 = vunpack.c.l.b16 %v1035
  %v1057 = vunpack.c.l.b16 %v1036
  %v1058 = vunpack.c.l.b16 %v1037
  %v1059 = vunpack.c.l.b16 %v1038
  %v1060 = vunpack.c.l.b16 %v1039
  %v1061 = vunpack.c.l.b16 %v1040
  %v1062 = vpack.c.b16 %v1055, %v1054
  %v1063 = vpack.c.b16 %v1057, %v1056
  %v1064 = vpack.c.b16 %v1059, %v1058
  %v1065 = vpack.c.b16 %v1061, %v1060
  %1070 = vmatpush.bf16.msra.mxu0 0
  %1071 = vmatpush.bf16.msra.mxu0 0
  %1072 = vmatpush.bf16.msra.mxu0 0
  %1073 = vmatpush.bf16.msra.mxu0 0
  %1074 = vmatpush.bf16.msra.mxu0 %v1065
  %1075 = vmatpush.bf16.msra.mxu0 %v1064
  %1076 = vmatpush.bf16.msra.mxu0 %v1063
  %1077 = vmatpush.bf16.msra.mxu0 %v1062
  %1078 = vmatmul.bf16.gmra.mxu0 %v100
  %v1079 = vpop.f32.mrf.mxu0
  %v1080 = vadd.f32 %v1044, %v1079
  %v1081 = vpop.f32.mrf.mxu0
  %v1082 = vadd.f32 %v1044, %v1081
  %1083 = vdwg.mxu0
  %v1084 = vpack.c.bf16 %v976, %v976
  %v1085 = vpack.c.bf16 %v978, %v978
  %v1086 = vpack.c.bf16 %v1028, %v1028
  %v1087 = vpack.c.bf16 %v1030, %v1030
  %v1089 = vsel %vm224, %v1084, 0
  %v1092 = vsel %vm224, %v1086, 0
  %1094 = vmatpush.bf16.xpose.msra.mxu0 0
  %1095 = vmatpush.bf16.xpose.msra.mxu0 0
  %1096 = vmatpush.bf16.xpose.msra.mxu0 0
  %1097 = vmatpush.bf16.xpose.msra.mxu0 0
  %1098 = vmatpush.bf16.xpose.msra.mxu0 0
  %1099 = vmatpush.bf16.xpose.msra.mxu0 0
  %1100 = vmatpush.bf16.xpose.msra.mxu0 0
  %1101 = vmatpush.bf16.xpose.msra.mxu0 %v1092
  %1102 = vmatmul.bf16.gmra.mxu0 %v1089
  %v1103 = vpop.f32.mrf.mxu0
  %v1104 = vadd.f32 0.0, %v1103
  %v1105 = vpop.f32.mrf.mxu0
  %1106 = vdwg.mxu0
  %v1108 = vsel %vm224, %v1085, 0
  %v1111 = vsel %vm224, %v1087, 0
  %1113 = vmatpush.bf16.xpose.msra.mxu0 0
  %1114 = vmatpush.bf16.xpose.msra.mxu0 0
  %1115 = vmatpush.bf16.xpose.msra.mxu0 0
  %1116 = vmatpush.bf16.xpose.msra.mxu0 0
  %1117 = vmatpush.bf16.xpose.msra.mxu0 0
  %1118 = vmatpush.bf16.xpose.msra.mxu0 0
  %1119 = vmatpush.bf16.xpose.msra.mxu0 0
  %1120 = vmatpush.bf16.xpose.msra.mxu0 %v1111
  %1121 = vmatmul.bf16.gmra.mxu0 %v1108
  %v1122 = vpop.f32.mrf.mxu0
  %v1123 = vadd.f32 0.0, %v1122
  %v1124 = vpop.f32.mrf.mxu0
  %1125 = vdwg.mxu0
  %v1126 = vmul.f32 %v1104, 0.35355338
  %v1127 = vmul.f32 %v1123, 0.35355338
  %v1128 = vsel %vm224, %v1126, -inf
  %1129 = vmax.xlane.f32.xlu0 %v1128
  %v1130 = vpop.xlane.xlu0 %1129
  %v1131 = vsel %vm224, %v1127, -inf
  %1132 = vmax.xlane.f32.xlu0 %v1131
  %v1133 = vpop.xlane.xlu0 %1132
  %v1134 = vsub.f32 %v1126, %v1130
  %v1135 = vsub.f32 %v1127, %v1133
  %v1136 = vmul.f32 %v1134, 1.442695
  %v1137 = vpow.pop %v1136
  %v1138 = vmul.f32 %v1135, 1.442695
  %v1139 = vpow.pop %v1138
  %v1140 = vsel %vm224, %v1137, 0.0
  %1141 = vadd.xlane.f32.xlu0 %v1140
  %v1142 = vpop.xlane.xlu0 %1141
  %v1143 = vsel %vm224, %v1139, 0.0
  %1144 = vadd.xlane.f32.xlu0 %v1143
  %v1145 = vpop.xlane.xlu0 %1144
  %v1146 = vrcp.pop %v1142
  %v1147 = vrcp.pop %v1145
  %v1148 = vmul.f32 %v1137, %v1146
  %v1149 = vmul.f32 %v1139, %v1147
  %v1150 = vpack.c.bf16 %v1148, %v1148
  %v1151 = vpack.c.bf16 %v1149, %v1149
  %v1152 = vpack.c.bf16 %v1080, %v1080
  %v1153 = vpack.c.bf16 %v1082, %v1082
  %v1155 = vsel %vm224, %v1150, 0
  %v1158 = vsel %vm294, %v1152, 0
  %1160 = vmatpush.bf16.msra.mxu0 0
  %1161 = vmatpush.bf16.msra.mxu0 0
  %1162 = vmatpush.bf16.msra.mxu0 0
  %1163 = vmatpush.bf16.msra.mxu0 0
  %1164 = vmatpush.bf16.msra.mxu0 0
  %1165 = vmatpush.bf16.msra.mxu0 0
  %1166 = vmatpush.bf16.msra.mxu0 0
  %1167 = vmatpush.bf16.msra.mxu0 %v1158
  %1168 = vmatmul.bf16.gmra.mxu0 %v1155
  %v1169 = vpop.f32.mrf.mxu0
  %v1170 = vadd.f32 0.0, %v1169
  %v1171 = vpop.f32.mrf.mxu0
  %1172 = vdwg.mxu0
  %v1174 = vsel %vm224, %v1151, 0
  %v1177 = vsel %vm294, %v1153, 0
  %1179 = vmatpush.bf16.msra.mxu0 0
  %1180 = vmatpush.bf16.msra.mxu0 0
  %1181 = vmatpush.bf16.msra.mxu0 0
  %1182 = vmatpush.bf16.msra.mxu0 0
  %1183 = vmatpush.bf16.msra.mxu0 0
  %1184 = vmatpush.bf16.msra.mxu0 0
  %1185 = vmatpush.bf16.msra.mxu0 0
  %1186 = vmatpush.bf16.msra.mxu0 %v1177
  %1187 = vmatmul.bf16.gmra.mxu0 %v1174
  %v1188 = vpop.f32.mrf.mxu0
  %v1189 = vadd.f32 0.0, %v1188
  %v1190 = vpop.f32.mrf.mxu0
  %1191 = vdwg.mxu0
  %v1192 = vpack.c.bf16 %v1189, %v1170
  %s1193 = scalar_lea.vmem %s4, 12
  %v1194 = vld [vmem:[%s1193] sm:$0xf]
  %v1196 = vsel %vm224, %v1192, 0
  %v1199 = vsel %vm294, %v1194, 0
  %1201 = vmatpush.bf16.msra.mxu0 0
  %1202 = vmatpush.bf16.msra.mxu0 0
  %1203 = vmatpush.bf16.msra.mxu0 0
  %1204 = vmatpush.bf16.msra.mxu0 0
  %1205 = vmatpush.bf16.msra.mxu0 0
  %1206 = vmatpush.bf16.msra.mxu0 0
  %1207 = vmatpush.bf16.msra.mxu0 0
  %1208 = vmatpush.bf16.msra.mxu0 %v1199
  %1209 = vmatmul.bf16.gmra.mxu0 %v1196
  %v1210 = vpop.f32.mrf.mxu0
  %v1211 = vadd.f32 0.0, %v1210
  %v1212 = vpop.f32.mrf.mxu0
  %v1213 = vadd.f32 0.0, %v1212
  %1214 = vdwg.mxu0
  %v1215 = vadd.f32 %v926, %v1211
  %v1216 = vadd.f32 %v927, %v1213
  %s1217 = scalar_lea.vmem %s2, 128
  %v1218 = vld [vmem:[%s1217] sm:$0xf]
  %v1219 = vld [vmem:[%s1217 + $0x4] sm:$0xf]
  %v1220 = vld [vmem:[%s1217 + $0x8] sm:$0xf]
  %v1221 = vld [vmem:[%s1217 + $0xc] sm:$0xf]
  %v1222 = vld [vmem:[%s1217 + $0x10] sm:$0xf]
  %v1223 = vld [vmem:[%s1217 + $0x14] sm:$0xf]
  %v1224 = vld [vmem:[%s1217 + $0x18] sm:$0xf]
  %v1225 = vld [vmem:[%s1217 + $0x1c] sm:$0xf]
  %s1226 = scalar_lea.vmem %s3, 4
  %v1227 = vld [vmem:[%s1226] sm:$0x1]
  %v1229 = vperm.slane %v1227, 0
  %v1239 = vunpack.c.l.b16 %v1218
  %v1240 = vunpack.c.l.b16 %v1219
  %v1241 = vunpack.c.l.b16 %v1220
  %v1242 = vunpack.c.l.b16 %v1221
  %v1243 = vunpack.c.l.b16 %v1222
  %v1244 = vunpack.c.l.b16 %v1223
  %v1245 = vunpack.c.l.b16 %v1224
  %v1246 = vunpack.c.l.b16 %v1225
  %v1247 = vpack.c.b16 %v1240, %v1239
  %v1248 = vpack.c.b16 %v1242, %v1241
  %v1249 = vpack.c.b16 %v1244, %v1243
  %v1250 = vpack.c.b16 %v1246, %v1245
  %1255 = vmatpush.bf16.msra.mxu0 0
  %1256 = vmatpush.bf16.msra.mxu0 0
  %1257 = vmatpush.bf16.msra.mxu0 0
  %1258 = vmatpush.bf16.msra.mxu0 0
  %1259 = vmatpush.bf16.msra.mxu0 %v1250
  %1260 = vmatpush.bf16.msra.mxu0 %v1249
  %1261 = vmatpush.bf16.msra.mxu0 %v1248
  %1262 = vmatpush.bf16.msra.mxu0 %v1247
  %1263 = vmatmul.bf16.gmra.mxu0 %v100
  %v1264 = vpop.f32.mrf.mxu0
  %v1265 = vadd.f32 %v1229, %v1264
  %v1266 = vpop.f32.mrf.mxu0
  %v1267 = vadd.f32 %v1229, %v1266
  %1268 = vdwg.mxu0
  %s1269 = scalar_lea.vmem %s2, 384
  %v1270 = vld [vmem:[%s1269] sm:$0xf]
  %v1271 = vld [vmem:[%s1269 + $0x4] sm:$0xf]
  %v1272 = vld [vmem:[%s1269 + $0x8] sm:$0xf]
  %v1273 = vld [vmem:[%s1269 + $0xc] sm:$0xf]
  %v1274 = vld [vmem:[%s1269 + $0x10] sm:$0xf]
  %v1275 = vld [vmem:[%s1269 + $0x14] sm:$0xf]
  %v1276 = vld [vmem:[%s1269 + $0x18] sm:$0xf]
  %v1277 = vld [vmem:[%s1269 + $0x1c] sm:$0xf]
  %s1278 = scalar_lea.vmem %s3, 12
  %v1279 = vld [vmem:[%s1278] sm:$0x1]
  %v1281 = vperm.slane %v1279, 0
  %v1291 = vunpack.c.l.b16 %v1270
  %v1292 = vunpack.c.l.b16 %v1271
  %v1293 = vunpack.c.l.b16 %v1272
  %v1294 = vunpack.c.l.b16 %v1273
  %v1295 = vunpack.c.l.b16 %v1274
  %v1296 = vunpack.c.l.b16 %v1275
  %v1297 = vunpack.c.l.b16 %v1276
  %v1298 = vunpack.c.l.b16 %v1277
  %v1299 = vpack.c.b16 %v1292, %v1291
  %v1300 = vpack.c.b16 %v1294, %v1293
  %v1301 = vpack.c.b16 %v1296, %v1295
  %v1302 = vpack.c.b16 %v1298, %v1297
  %1307 = vmatpush.bf16.msra.mxu0 0
  %1308 = vmatpush.bf16.msra.mxu0 0
  %1309 = vmatpush.bf16.msra.mxu0 0
  %1310 = vmatpush.bf16.msra.mxu0 0
  %1311 = vmatpush.bf16.msra.mxu0 %v1302
  %1312 = vmatpush.bf16.msra.mxu0 %v1301
  %1313 = vmatpush.bf16.msra.mxu0 %v1300
  %1314 = vmatpush.bf16.msra.mxu0 %v1299
  %1315 = vmatmul.bf16.gmra.mxu0 %v100
  %v1316 = vpop.f32.mrf.mxu0
  %v1317 = vadd.f32 %v1281, %v1316
  %v1318 = vpop.f32.mrf.mxu0
  %v1319 = vadd.f32 %v1281, %v1318
  %1320 = vdwg.mxu0
  %s1321 = scalar_lea.vmem %s2, 640
  %v1322 = vld [vmem:[%s1321] sm:$0xf]
  %v1323 = vld [vmem:[%s1321 + $0x4] sm:$0xf]
  %v1324 = vld [vmem:[%s1321 + $0x8] sm:$0xf]
  %v1325 = vld [vmem:[%s1321 + $0xc] sm:$0xf]
  %v1326 = vld [vmem:[%s1321 + $0x10] sm:$0xf]
  %v1327 = vld [vmem:[%s1321 + $0x14] sm:$0xf]
  %v1328 = vld [vmem:[%s1321 + $0x18] sm:$0xf]
  %v1329 = vld [vmem:[%s1321 + $0x1c] sm:$0xf]
  %s1330 = scalar_lea.vmem %s3, 20
  %v1331 = vld [vmem:[%s1330] sm:$0x1]
  %v1333 = vperm.slane %v1331, 0
  %v1343 = vunpack.c.l.b16 %v1322
  %v1344 = vunpack.c.l.b16 %v1323
  %v1345 = vunpack.c.l.b16 %v1324
  %v1346 = vunpack.c.l.b16 %v1325
  %v1347 = vunpack.c.l.b16 %v1326
  %v1348 = vunpack.c.l.b16 %v1327
  %v1349 = vunpack.c.l.b16 %v1328
  %v1350 = vunpack.c.l.b16 %v1329
  %v1351 = vpack.c.b16 %v1344, %v1343
  %v1352 = vpack.c.b16 %v1346, %v1345
  %v1353 = vpack.c.b16 %v1348, %v1347
  %v1354 = vpack.c.b16 %v1350, %v1349
  %1359 = vmatpush.bf16.msra.mxu0 0
  %1360 = vmatpush.bf16.msra.mxu0 0
  %1361 = vmatpush.bf16.msra.mxu0 0
  %1362 = vmatpush.bf16.msra.mxu0 0
  %1363 = vmatpush.bf16.msra.mxu0 %v1354
  %1364 = vmatpush.bf16.msra.mxu0 %v1353
  %1365 = vmatpush.bf16.msra.mxu0 %v1352
  %1366 = vmatpush.bf16.msra.mxu0 %v1351
  %1367 = vmatmul.bf16.gmra.mxu0 %v100
  %v1368 = vpop.f32.mrf.mxu0
  %v1369 = vadd.f32 %v1333, %v1368
  %v1370 = vpop.f32.mrf.mxu0
  %v1371 = vadd.f32 %v1333, %v1370
  %1372 = vdwg.mxu0
  %v1373 = vpack.c.bf16 %v1265, %v1265
  %v1374 = vpack.c.bf16 %v1267, %v1267
  %v1375 = vpack.c.bf16 %v1317, %v1317
  %v1376 = vpack.c.bf16 %v1319, %v1319
  %v1378 = vsel %vm224, %v1373, 0
  %v1381 = vsel %vm224, %v1375, 0
  %1383 = vmatpush.bf16.xpose.msra.mxu0 0
  %1384 = vmatpush.bf16.xpose.msra.mxu0 0
  %1385 = vmatpush.bf16.xpose.msra.mxu0 0
  %1386 = vmatpush.bf16.xpose.msra.mxu0 0
  %1387 = vmatpush.bf16.xpose.msra.mxu0 0
  %1388 = vmatpush.bf16.xpose.msra.mxu0 0
  %1389 = vmatpush.bf16.xpose.msra.mxu0 0
  %1390 = vmatpush.bf16.xpose.msra.mxu0 %v1381
  %1391 = vmatmul.bf16.gmra.mxu0 %v1378
  %v1392 = vpop.f32.mrf.mxu0
  %v1393 = vadd.f32 0.0, %v1392
  %v1394 = vpop.f32.mrf.mxu0
  %1395 = vdwg.mxu0
  %v1397 = vsel %vm224, %v1374, 0
  %v1400 = vsel %vm224, %v1376, 0
  %1402 = vmatpush.bf16.xpose.msra.mxu0 0
  %1403 = vmatpush.bf16.xpose.msra.mxu0 0
  %1404 = vmatpush.bf16.xpose.msra.mxu0 0
  %1405 = vmatpush.bf16.xpose.msra.mxu0 0
  %1406 = vmatpush.bf16.xpose.msra.mxu0 0
  %1407 = vmatpush.bf16.xpose.msra.mxu0 0
  %1408 = vmatpush.bf16.xpose.msra.mxu0 0
  %1409 = vmatpush.bf16.xpose.msra.mxu0 %v1400
  %1410 = vmatmul.bf16.gmra.mxu0 %v1397
  %v1411 = vpop.f32.mrf.mxu0
  %v1412 = vadd.f32 0.0, %v1411
  %v1413 = vpop.f32.mrf.mxu0
  %1414 = vdwg.mxu0
  %v1415 = vmul.f32 %v1393, 0.35355338
  %v1416 = vmul.f32 %v1412, 0.35355338
  %v1417 = vsel %vm224, %v1415, -inf
  %1418 = vmax.xlane.f32.xlu0 %v1417
  %v1419 = vpop.xlane.xlu0 %1418
  %v1420 = vsel %vm224, %v1416, -inf
  %1421 = vmax.xlane.f32.xlu0 %v1420
  %v1422 = vpop.xlane.xlu0 %1421
  %v1423 = vsub.f32 %v1415, %v1419
  %v1424 = vsub.f32 %v1416, %v1422
  %v1425 = vmul.f32 %v1423, 1.442695
  %v1426 = vpow.pop %v1425
  %v1427 = vmul.f32 %v1424, 1.442695
  %v1428 = vpow.pop %v1427
  %v1429 = vsel %vm224, %v1426, 0.0
  %1430 = vadd.xlane.f32.xlu0 %v1429
  %v1431 = vpop.xlane.xlu0 %1430
  %v1432 = vsel %vm224, %v1428, 0.0
  %1433 = vadd.xlane.f32.xlu0 %v1432
  %v1434 = vpop.xlane.xlu0 %1433
  %v1435 = vrcp.pop %v1431
  %v1436 = vrcp.pop %v1434
  %v1437 = vmul.f32 %v1426, %v1435
  %v1438 = vmul.f32 %v1428, %v1436
  %v1439 = vpack.c.bf16 %v1437, %v1437
  %v1440 = vpack.c.bf16 %v1438, %v1438
  %v1441 = vpack.c.bf16 %v1369, %v1369
  %v1442 = vpack.c.bf16 %v1371, %v1371
  %v1444 = vsel %vm224, %v1439, 0
  %v1447 = vsel %vm294, %v1441, 0
  %1449 = vmatpush.bf16.msra.mxu0 0
  %1450 = vmatpush.bf16.msra.mxu0 0
  %1451 = vmatpush.bf16.msra.mxu0 0
  %1452 = vmatpush.bf16.msra.mxu0 0
  %1453 = vmatpush.bf16.msra.mxu0 0
  %1454 = vmatpush.bf16.msra.mxu0 0
  %1455 = vmatpush.bf16.msra.mxu0 0
  %1456 = vmatpush.bf16.msra.mxu0 %v1447
  %1457 = vmatmul.bf16.gmra.mxu0 %v1444
  %v1458 = vpop.f32.mrf.mxu0
  %v1459 = vadd.f32 0.0, %v1458
  %v1460 = vpop.f32.mrf.mxu0
  %1461 = vdwg.mxu0
  %v1463 = vsel %vm224, %v1440, 0
  %v1466 = vsel %vm294, %v1442, 0
  %1468 = vmatpush.bf16.msra.mxu0 0
  %1469 = vmatpush.bf16.msra.mxu0 0
  %1470 = vmatpush.bf16.msra.mxu0 0
  %1471 = vmatpush.bf16.msra.mxu0 0
  %1472 = vmatpush.bf16.msra.mxu0 0
  %1473 = vmatpush.bf16.msra.mxu0 0
  %1474 = vmatpush.bf16.msra.mxu0 0
  %1475 = vmatpush.bf16.msra.mxu0 %v1466
  %1476 = vmatmul.bf16.gmra.mxu0 %v1463
  %v1477 = vpop.f32.mrf.mxu0
  %v1478 = vadd.f32 0.0, %v1477
  %v1479 = vpop.f32.mrf.mxu0
  %1480 = vdwg.mxu0
  %v1481 = vpack.c.bf16 %v1478, %v1459
  %s1482 = scalar_lea.vmem %s4, 16
  %v1483 = vld [vmem:[%s1482] sm:$0xf]
  %v1485 = vsel %vm224, %v1481, 0
  %v1488 = vsel %vm294, %v1483, 0
  %1490 = vmatpush.bf16.msra.mxu0 0
  %1491 = vmatpush.bf16.msra.mxu0 0
  %1492 = vmatpush.bf16.msra.mxu0 0
  %1493 = vmatpush.bf16.msra.mxu0 0
  %1494 = vmatpush.bf16.msra.mxu0 0
  %1495 = vmatpush.bf16.msra.mxu0 0
  %1496 = vmatpush.bf16.msra.mxu0 0
  %1497 = vmatpush.bf16.msra.mxu0 %v1488
  %1498 = vmatmul.bf16.gmra.mxu0 %v1485
  %v1499 = vpop.f32.mrf.mxu0
  %v1500 = vadd.f32 0.0, %v1499
  %v1501 = vpop.f32.mrf.mxu0
  %v1502 = vadd.f32 0.0, %v1501
  %1503 = vdwg.mxu0
  %v1504 = vadd.f32 %v1215, %v1500
  %v1505 = vadd.f32 %v1216, %v1502
  %s1506 = scalar_lea.vmem %s2, 160
  %v1507 = vld [vmem:[%s1506] sm:$0xf]
  %v1508 = vld [vmem:[%s1506 + $0x4] sm:$0xf]
  %v1509 = vld [vmem:[%s1506 + $0x8] sm:$0xf]
  %v1510 = vld [vmem:[%s1506 + $0xc] sm:$0xf]
  %v1511 = vld [vmem:[%s1506 + $0x10] sm:$0xf]
  %v1512 = vld [vmem:[%s1506 + $0x14] sm:$0xf]
  %v1513 = vld [vmem:[%s1506 + $0x18] sm:$0xf]
  %v1514 = vld [vmem:[%s1506 + $0x1c] sm:$0xf]
  %s1515 = scalar_lea.vmem %s3, 5
  %v1516 = vld [vmem:[%s1515] sm:$0x1]
  %v1518 = vperm.slane %v1516, 0
  %v1528 = vunpack.c.l.b16 %v1507
  %v1529 = vunpack.c.l.b16 %v1508
  %v1530 = vunpack.c.l.b16 %v1509
  %v1531 = vunpack.c.l.b16 %v1510
  %v1532 = vunpack.c.l.b16 %v1511
  %v1533 = vunpack.c.l.b16 %v1512
  %v1534 = vunpack.c.l.b16 %v1513
  %v1535 = vunpack.c.l.b16 %v1514
  %v1536 = vpack.c.b16 %v1529, %v1528
  %v1537 = vpack.c.b16 %v1531, %v1530
  %v1538 = vpack.c.b16 %v1533, %v1532
  %v1539 = vpack.c.b16 %v1535, %v1534
  %1544 = vmatpush.bf16.msra.mxu0 0
  %1545 = vmatpush.bf16.msra.mxu0 0
  %1546 = vmatpush.bf16.msra.mxu0 0
  %1547 = vmatpush.bf16.msra.mxu0 0
  %1548 = vmatpush.bf16.msra.mxu0 %v1539
  %1549 = vmatpush.bf16.msra.mxu0 %v1538
  %1550 = vmatpush.bf16.msra.mxu0 %v1537
  %1551 = vmatpush.bf16.msra.mxu0 %v1536
  %1552 = vmatmul.bf16.gmra.mxu0 %v100
  %v1553 = vpop.f32.mrf.mxu0
  %v1554 = vadd.f32 %v1518, %v1553
  %v1555 = vpop.f32.mrf.mxu0
  %v1556 = vadd.f32 %v1518, %v1555
  %1557 = vdwg.mxu0
  %s1558 = scalar_lea.vmem %s2, 416
  %v1559 = vld [vmem:[%s1558] sm:$0xf]
  %v1560 = vld [vmem:[%s1558 + $0x4] sm:$0xf]
  %v1561 = vld [vmem:[%s1558 + $0x8] sm:$0xf]
  %v1562 = vld [vmem:[%s1558 + $0xc] sm:$0xf]
  %v1563 = vld [vmem:[%s1558 + $0x10] sm:$0xf]
  %v1564 = vld [vmem:[%s1558 + $0x14] sm:$0xf]
  %v1565 = vld [vmem:[%s1558 + $0x18] sm:$0xf]
  %v1566 = vld [vmem:[%s1558 + $0x1c] sm:$0xf]
  %s1567 = scalar_lea.vmem %s3, 13
  %v1568 = vld [vmem:[%s1567] sm:$0x1]
  %v1570 = vperm.slane %v1568, 0
  %v1580 = vunpack.c.l.b16 %v1559
  %v1581 = vunpack.c.l.b16 %v1560
  %v1582 = vunpack.c.l.b16 %v1561
  %v1583 = vunpack.c.l.b16 %v1562
  %v1584 = vunpack.c.l.b16 %v1563
  %v1585 = vunpack.c.l.b16 %v1564
  %v1586 = vunpack.c.l.b16 %v1565
  %v1587 = vunpack.c.l.b16 %v1566
  %v1588 = vpack.c.b16 %v1581, %v1580
  %v1589 = vpack.c.b16 %v1583, %v1582
  %v1590 = vpack.c.b16 %v1585, %v1584
  %v1591 = vpack.c.b16 %v1587, %v1586
  %1596 = vmatpush.bf16.msra.mxu0 0
  %1597 = vmatpush.bf16.msra.mxu0 0
  %1598 = vmatpush.bf16.msra.mxu0 0
  %1599 = vmatpush.bf16.msra.mxu0 0
  %1600 = vmatpush.bf16.msra.mxu0 %v1591
  %1601 = vmatpush.bf16.msra.mxu0 %v1590
  %1602 = vmatpush.bf16.msra.mxu0 %v1589
  %1603 = vmatpush.bf16.msra.mxu0 %v1588
  %1604 = vmatmul.bf16.gmra.mxu0 %v100
  %v1605 = vpop.f32.mrf.mxu0
  %v1606 = vadd.f32 %v1570, %v1605
  %v1607 = vpop.f32.mrf.mxu0
  %v1608 = vadd.f32 %v1570, %v1607
  %1609 = vdwg.mxu0
  %s1610 = scalar_lea.vmem %s2, 672
  %v1611 = vld [vmem:[%s1610] sm:$0xf]
  %v1612 = vld [vmem:[%s1610 + $0x4] sm:$0xf]
  %v1613 = vld [vmem:[%s1610 + $0x8] sm:$0xf]
  %v1614 = vld [vmem:[%s1610 + $0xc] sm:$0xf]
  %v1615 = vld [vmem:[%s1610 + $0x10] sm:$0xf]
  %v1616 = vld [vmem:[%s1610 + $0x14] sm:$0xf]
  %v1617 = vld [vmem:[%s1610 + $0x18] sm:$0xf]
  %v1618 = vld [vmem:[%s1610 + $0x1c] sm:$0xf]
  %s1619 = scalar_lea.vmem %s3, 21
  %v1620 = vld [vmem:[%s1619] sm:$0x1]
  %v1622 = vperm.slane %v1620, 0
  %v1632 = vunpack.c.l.b16 %v1611
  %v1633 = vunpack.c.l.b16 %v1612
  %v1634 = vunpack.c.l.b16 %v1613
  %v1635 = vunpack.c.l.b16 %v1614
  %v1636 = vunpack.c.l.b16 %v1615
  %v1637 = vunpack.c.l.b16 %v1616
  %v1638 = vunpack.c.l.b16 %v1617
  %v1639 = vunpack.c.l.b16 %v1618
  %v1640 = vpack.c.b16 %v1633, %v1632
  %v1641 = vpack.c.b16 %v1635, %v1634
  %v1642 = vpack.c.b16 %v1637, %v1636
  %v1643 = vpack.c.b16 %v1639, %v1638
  %1648 = vmatpush.bf16.msra.mxu0 0
  %1649 = vmatpush.bf16.msra.mxu0 0
  %1650 = vmatpush.bf16.msra.mxu0 0
  %1651 = vmatpush.bf16.msra.mxu0 0
  %1652 = vmatpush.bf16.msra.mxu0 %v1643
  %1653 = vmatpush.bf16.msra.mxu0 %v1642
  %1654 = vmatpush.bf16.msra.mxu0 %v1641
  %1655 = vmatpush.bf16.msra.mxu0 %v1640
  %1656 = vmatmul.bf16.gmra.mxu0 %v100
  %v1657 = vpop.f32.mrf.mxu0
  %v1658 = vadd.f32 %v1622, %v1657
  %v1659 = vpop.f32.mrf.mxu0
  %v1660 = vadd.f32 %v1622, %v1659
  %1661 = vdwg.mxu0
  %v1662 = vpack.c.bf16 %v1554, %v1554
  %v1663 = vpack.c.bf16 %v1556, %v1556
  %v1664 = vpack.c.bf16 %v1606, %v1606
  %v1665 = vpack.c.bf16 %v1608, %v1608
  %v1667 = vsel %vm224, %v1662, 0
  %v1670 = vsel %vm224, %v1664, 0
  %1672 = vmatpush.bf16.xpose.msra.mxu0 0
  %1673 = vmatpush.bf16.xpose.msra.mxu0 0
  %1674 = vmatpush.bf16.xpose.msra.mxu0 0
  %1675 = vmatpush.bf16.xpose.msra.mxu0 0
  %1676 = vmatpush.bf16.xpose.msra.mxu0 0
  %1677 = vmatpush.bf16.xpose.msra.mxu0 0
  %1678 = vmatpush.bf16.xpose.msra.mxu0 0
  %1679 = vmatpush.bf16.xpose.msra.mxu0 %v1670
  %1680 = vmatmul.bf16.gmra.mxu0 %v1667
  %v1681 = vpop.f32.mrf.mxu0
  %v1682 = vadd.f32 0.0, %v1681
  %v1683 = vpop.f32.mrf.mxu0
  %1684 = vdwg.mxu0
  %v1686 = vsel %vm224, %v1663, 0
  %v1689 = vsel %vm224, %v1665, 0
  %1691 = vmatpush.bf16.xpose.msra.mxu0 0
  %1692 = vmatpush.bf16.xpose.msra.mxu0 0
  %1693 = vmatpush.bf16.xpose.msra.mxu0 0
  %1694 = vmatpush.bf16.xpose.msra.mxu0 0
  %1695 = vmatpush.bf16.xpose.msra.mxu0 0
  %1696 = vmatpush.bf16.xpose.msra.mxu0 0
  %1697 = vmatpush.bf16.xpose.msra.mxu0 0
  %1698 = vmatpush.bf16.xpose.msra.mxu0 %v1689
  %1699 = vmatmul.bf16.gmra.mxu0 %v1686
  %v1700 = vpop.f32.mrf.mxu0
  %v1701 = vadd.f32 0.0, %v1700
  %v1702 = vpop.f32.mrf.mxu0
  %1703 = vdwg.mxu0
  %v1704 = vmul.f32 %v1682, 0.35355338
  %v1705 = vmul.f32 %v1701, 0.35355338
  %v1706 = vsel %vm224, %v1704, -inf
  %1707 = vmax.xlane.f32.xlu0 %v1706
  %v1708 = vpop.xlane.xlu0 %1707
  %v1709 = vsel %vm224, %v1705, -inf
  %1710 = vmax.xlane.f32.xlu0 %v1709
  %v1711 = vpop.xlane.xlu0 %1710
  %v1712 = vsub.f32 %v1704, %v1708
  %v1713 = vsub.f32 %v1705, %v1711
  %v1714 = vmul.f32 %v1712, 1.442695
  %v1715 = vpow.pop %v1714
  %v1716 = vmul.f32 %v1713, 1.442695
  %v1717 = vpow.pop %v1716
  %v1718 = vsel %vm224, %v1715, 0.0
  %1719 = vadd.xlane.f32.xlu0 %v1718
  %v1720 = vpop.xlane.xlu0 %1719
  %v1721 = vsel %vm224, %v1717, 0.0
  %1722 = vadd.xlane.f32.xlu0 %v1721
  %v1723 = vpop.xlane.xlu0 %1722
  %v1724 = vrcp.pop %v1720
  %v1725 = vrcp.pop %v1723
  %v1726 = vmul.f32 %v1715, %v1724
  %v1727 = vmul.f32 %v1717, %v1725
  %v1728 = vpack.c.bf16 %v1726, %v1726
  %v1729 = vpack.c.bf16 %v1727, %v1727
  %v1730 = vpack.c.bf16 %v1658, %v1658
  %v1731 = vpack.c.bf16 %v1660, %v1660
  %v1733 = vsel %vm224, %v1728, 0
  %v1736 = vsel %vm294, %v1730, 0
  %1738 = vmatpush.bf16.msra.mxu0 0
  %1739 = vmatpush.bf16.msra.mxu0 0
  %1740 = vmatpush.bf16.msra.mxu0 0
  %1741 = vmatpush.bf16.msra.mxu0 0
  %1742 = vmatpush.bf16.msra.mxu0 0
  %1743 = vmatpush.bf16.msra.mxu0 0
  %1744 = vmatpush.bf16.msra.mxu0 0
  %1745 = vmatpush.bf16.msra.mxu0 %v1736
  %1746 = vmatmul.bf16.gmra.mxu0 %v1733
  %v1747 = vpop.f32.mrf.mxu0
  %v1748 = vadd.f32 0.0, %v1747
  %v1749 = vpop.f32.mrf.mxu0
  %1750 = vdwg.mxu0
  %v1752 = vsel %vm224, %v1729, 0
  %v1755 = vsel %vm294, %v1731, 0
  %1757 = vmatpush.bf16.msra.mxu0 0
  %1758 = vmatpush.bf16.msra.mxu0 0
  %1759 = vmatpush.bf16.msra.mxu0 0
  %1760 = vmatpush.bf16.msra.mxu0 0
  %1761 = vmatpush.bf16.msra.mxu0 0
  %1762 = vmatpush.bf16.msra.mxu0 0
  %1763 = vmatpush.bf16.msra.mxu0 0
  %1764 = vmatpush.bf16.msra.mxu0 %v1755
  %1765 = vmatmul.bf16.gmra.mxu0 %v1752
  %v1766 = vpop.f32.mrf.mxu0
  %v1767 = vadd.f32 0.0, %v1766
  %v1768 = vpop.f32.mrf.mxu0
  %1769 = vdwg.mxu0
  %v1770 = vpack.c.bf16 %v1767, %v1748
  %s1771 = scalar_lea.vmem %s4, 20
  %v1772 = vld [vmem:[%s1771] sm:$0xf]
  %v1774 = vsel %vm224, %v1770, 0
  %v1777 = vsel %vm294, %v1772, 0
  %1779 = vmatpush.bf16.msra.mxu0 0
  %1780 = vmatpush.bf16.msra.mxu0 0
  %1781 = vmatpush.bf16.msra.mxu0 0
  %1782 = vmatpush.bf16.msra.mxu0 0
  %1783 = vmatpush.bf16.msra.mxu0 0
  %1784 = vmatpush.bf16.msra.mxu0 0
  %1785 = vmatpush.bf16.msra.mxu0 0
  %1786 = vmatpush.bf16.msra.mxu0 %v1777
  %1787 = vmatmul.bf16.gmra.mxu0 %v1774
  %v1788 = vpop.f32.mrf.mxu0
  %v1789 = vadd.f32 0.0, %v1788
  %v1790 = vpop.f32.mrf.mxu0
  %v1791 = vadd.f32 0.0, %v1790
  %1792 = vdwg.mxu0
  %v1793 = vadd.f32 %v1504, %v1789
  %v1794 = vadd.f32 %v1505, %v1791
  %s1795 = scalar_lea.vmem %s2, 192
  %v1796 = vld [vmem:[%s1795] sm:$0xf]
  %v1797 = vld [vmem:[%s1795 + $0x4] sm:$0xf]
  %v1798 = vld [vmem:[%s1795 + $0x8] sm:$0xf]
  %v1799 = vld [vmem:[%s1795 + $0xc] sm:$0xf]
  %v1800 = vld [vmem:[%s1795 + $0x10] sm:$0xf]
  %v1801 = vld [vmem:[%s1795 + $0x14] sm:$0xf]
  %v1802 = vld [vmem:[%s1795 + $0x18] sm:$0xf]
  %v1803 = vld [vmem:[%s1795 + $0x1c] sm:$0xf]
  %s1804 = scalar_lea.vmem %s3, 6
  %v1805 = vld [vmem:[%s1804] sm:$0x1]
  %v1807 = vperm.slane %v1805, 0
  %v1817 = vunpack.c.l.b16 %v1796
  %v1818 = vunpack.c.l.b16 %v1797
  %v1819 = vunpack.c.l.b16 %v1798
  %v1820 = vunpack.c.l.b16 %v1799
  %v1821 = vunpack.c.l.b16 %v1800
  %v1822 = vunpack.c.l.b16 %v1801
  %v1823 = vunpack.c.l.b16 %v1802
  %v1824 = vunpack.c.l.b16 %v1803
  %v1825 = vpack.c.b16 %v1818, %v1817
  %v1826 = vpack.c.b16 %v1820, %v1819
  %v1827 = vpack.c.b16 %v1822, %v1821
  %v1828 = vpack.c.b16 %v1824, %v1823
  %1833 = vmatpush.bf16.msra.mxu0 0
  %1834 = vmatpush.bf16.msra.mxu0 0
  %1835 = vmatpush.bf16.msra.mxu0 0
  %1836 = vmatpush.bf16.msra.mxu0 0
  %1837 = vmatpush.bf16.msra.mxu0 %v1828
  %1838 = vmatpush.bf16.msra.mxu0 %v1827
  %1839 = vmatpush.bf16.msra.mxu0 %v1826
  %1840 = vmatpush.bf16.msra.mxu0 %v1825
  %1841 = vmatmul.bf16.gmra.mxu0 %v100
  %v1842 = vpop.f32.mrf.mxu0
  %v1843 = vadd.f32 %v1807, %v1842
  %v1844 = vpop.f32.mrf.mxu0
  %v1845 = vadd.f32 %v1807, %v1844
  %1846 = vdwg.mxu0
  %s1847 = scalar_lea.vmem %s2, 448
  %v1848 = vld [vmem:[%s1847] sm:$0xf]
  %v1849 = vld [vmem:[%s1847 + $0x4] sm:$0xf]
  %v1850 = vld [vmem:[%s1847 + $0x8] sm:$0xf]
  %v1851 = vld [vmem:[%s1847 + $0xc] sm:$0xf]
  %v1852 = vld [vmem:[%s1847 + $0x10] sm:$0xf]
  %v1853 = vld [vmem:[%s1847 + $0x14] sm:$0xf]
  %v1854 = vld [vmem:[%s1847 + $0x18] sm:$0xf]
  %v1855 = vld [vmem:[%s1847 + $0x1c] sm:$0xf]
  %s1856 = scalar_lea.vmem %s3, 14
  %v1857 = vld [vmem:[%s1856] sm:$0x1]
  %v1859 = vperm.slane %v1857, 0
  %v1869 = vunpack.c.l.b16 %v1848
  %v1870 = vunpack.c.l.b16 %v1849
  %v1871 = vunpack.c.l.b16 %v1850
  %v1872 = vunpack.c.l.b16 %v1851
  %v1873 = vunpack.c.l.b16 %v1852
  %v1874 = vunpack.c.l.b16 %v1853
  %v1875 = vunpack.c.l.b16 %v1854
  %v1876 = vunpack.c.l.b16 %v1855
  %v1877 = vpack.c.b16 %v1870, %v1869
  %v1878 = vpack.c.b16 %v1872, %v1871
  %v1879 = vpack.c.b16 %v1874, %v1873
  %v1880 = vpack.c.b16 %v1876, %v1875
  %1885 = vmatpush.bf16.msra.mxu0 0
  %1886 = vmatpush.bf16.msra.mxu0 0
  %1887 = vmatpush.bf16.msra.mxu0 0
  %1888 = vmatpush.bf16.msra.mxu0 0
  %1889 = vmatpush.bf16.msra.mxu0 %v1880
  %1890 = vmatpush.bf16.msra.mxu0 %v1879
  %1891 = vmatpush.bf16.msra.mxu0 %v1878
  %1892 = vmatpush.bf16.msra.mxu0 %v1877
  %1893 = vmatmul.bf16.gmra.mxu0 %v100
  %v1894 = vpop.f32.mrf.mxu0
  %v1895 = vadd.f32 %v1859, %v1894
  %v1896 = vpop.f32.mrf.mxu0
  %v1897 = vadd.f32 %v1859, %v1896
  %1898 = vdwg.mxu0
  %s1899 = scalar_lea.vmem %s2, 704
  %v1900 = vld [vmem:[%s1899] sm:$0xf]
  %v1901 = vld [vmem:[%s1899 + $0x4] sm:$0xf]
  %v1902 = vld [vmem:[%s1899 + $0x8] sm:$0xf]
  %v1903 = vld [vmem:[%s1899 + $0xc] sm:$0xf]
  %v1904 = vld [vmem:[%s1899 + $0x10] sm:$0xf]
  %v1905 = vld [vmem:[%s1899 + $0x14] sm:$0xf]
  %v1906 = vld [vmem:[%s1899 + $0x18] sm:$0xf]
  %v1907 = vld [vmem:[%s1899 + $0x1c] sm:$0xf]
  %s1908 = scalar_lea.vmem %s3, 22
  %v1909 = vld [vmem:[%s1908] sm:$0x1]
  %v1911 = vperm.slane %v1909, 0
  %v1921 = vunpack.c.l.b16 %v1900
  %v1922 = vunpack.c.l.b16 %v1901
  %v1923 = vunpack.c.l.b16 %v1902
  %v1924 = vunpack.c.l.b16 %v1903
  %v1925 = vunpack.c.l.b16 %v1904
  %v1926 = vunpack.c.l.b16 %v1905
  %v1927 = vunpack.c.l.b16 %v1906
  %v1928 = vunpack.c.l.b16 %v1907
  %v1929 = vpack.c.b16 %v1922, %v1921
  %v1930 = vpack.c.b16 %v1924, %v1923
  %v1931 = vpack.c.b16 %v1926, %v1925
  %v1932 = vpack.c.b16 %v1928, %v1927
  %1937 = vmatpush.bf16.msra.mxu0 0
  %1938 = vmatpush.bf16.msra.mxu0 0
  %1939 = vmatpush.bf16.msra.mxu0 0
  %1940 = vmatpush.bf16.msra.mxu0 0
  %1941 = vmatpush.bf16.msra.mxu0 %v1932
  %1942 = vmatpush.bf16.msra.mxu0 %v1931
  %1943 = vmatpush.bf16.msra.mxu0 %v1930
  %1944 = vmatpush.bf16.msra.mxu0 %v1929
  %1945 = vmatmul.bf16.gmra.mxu0 %v100
  %v1946 = vpop.f32.mrf.mxu0
  %v1947 = vadd.f32 %v1911, %v1946
  %v1948 = vpop.f32.mrf.mxu0
  %v1949 = vadd.f32 %v1911, %v1948
  %1950 = vdwg.mxu0
  %v1951 = vpack.c.bf16 %v1843, %v1843
  %v1952 = vpack.c.bf16 %v1845, %v1845
  %v1953 = vpack.c.bf16 %v1895, %v1895
  %v1954 = vpack.c.bf16 %v1897, %v1897
  %v1956 = vsel %vm224, %v1951, 0
  %v1959 = vsel %vm224, %v1953, 0
  %1961 = vmatpush.bf16.xpose.msra.mxu0 0
  %1962 = vmatpush.bf16.xpose.msra.mxu0 0
  %1963 = vmatpush.bf16.xpose.msra.mxu0 0
  %1964 = vmatpush.bf16.xpose.msra.mxu0 0
  %1965 = vmatpush.bf16.xpose.msra.mxu0 0
  %1966 = vmatpush.bf16.xpose.msra.mxu0 0
  %1967 = vmatpush.bf16.xpose.msra.mxu0 0
  %1968 = vmatpush.bf16.xpose.msra.mxu0 %v1959
  %1969 = vmatmul.bf16.gmra.mxu0 %v1956
  %v1970 = vpop.f32.mrf.mxu0
  %v1971 = vadd.f32 0.0, %v1970
  %v1972 = vpop.f32.mrf.mxu0
  %1973 = vdwg.mxu0
  %v1975 = vsel %vm224, %v1952, 0
  %v1978 = vsel %vm224, %v1954, 0
  %1980 = vmatpush.bf16.xpose.msra.mxu0 0
  %1981 = vmatpush.bf16.xpose.msra.mxu0 0
  %1982 = vmatpush.bf16.xpose.msra.mxu0 0
  %1983 = vmatpush.bf16.xpose.msra.mxu0 0
  %1984 = vmatpush.bf16.xpose.msra.mxu0 0
  %1985 = vmatpush.bf16.xpose.msra.mxu0 0
  %1986 = vmatpush.bf16.xpose.msra.mxu0 0
  %1987 = vmatpush.bf16.xpose.msra.mxu0 %v1978
  %1988 = vmatmul.bf16.gmra.mxu0 %v1975
  %v1989 = vpop.f32.mrf.mxu0
  %v1990 = vadd.f32 0.0, %v1989
  %v1991 = vpop.f32.mrf.mxu0
  %1992 = vdwg.mxu0
  %v1993 = vmul.f32 %v1971, 0.35355338
  %v1994 = vmul.f32 %v1990, 0.35355338
  %v1995 = vsel %vm224, %v1993, -inf
  %1996 = vmax.xlane.f32.xlu0 %v1995
  %v1997 = vpop.xlane.xlu0 %1996
  %v1998 = vsel %vm224, %v1994, -inf
  %1999 = vmax.xlane.f32.xlu0 %v1998
  %v2000 = vpop.xlane.xlu0 %1999
  %v2001 = vsub.f32 %v1993, %v1997
  %v2002 = vsub.f32 %v1994, %v2000
  %v2003 = vmul.f32 %v2001, 1.442695
  %v2004 = vpow.pop %v2003
  %v2005 = vmul.f32 %v2002, 1.442695
  %v2006 = vpow.pop %v2005
  %v2007 = vsel %vm224, %v2004, 0.0
  %2008 = vadd.xlane.f32.xlu0 %v2007
  %v2009 = vpop.xlane.xlu0 %2008
  %v2010 = vsel %vm224, %v2006, 0.0
  %2011 = vadd.xlane.f32.xlu0 %v2010
  %v2012 = vpop.xlane.xlu0 %2011
  %v2013 = vrcp.pop %v2009
  %v2014 = vrcp.pop %v2012
  %v2015 = vmul.f32 %v2004, %v2013
  %v2016 = vmul.f32 %v2006, %v2014
  %v2017 = vpack.c.bf16 %v2015, %v2015
  %v2018 = vpack.c.bf16 %v2016, %v2016
  %v2019 = vpack.c.bf16 %v1947, %v1947
  %v2020 = vpack.c.bf16 %v1949, %v1949
  %v2022 = vsel %vm224, %v2017, 0
  %v2025 = vsel %vm294, %v2019, 0
  %2027 = vmatpush.bf16.msra.mxu0 0
  %2028 = vmatpush.bf16.msra.mxu0 0
  %2029 = vmatpush.bf16.msra.mxu0 0
  %2030 = vmatpush.bf16.msra.mxu0 0
  %2031 = vmatpush.bf16.msra.mxu0 0
  %2032 = vmatpush.bf16.msra.mxu0 0
  %2033 = vmatpush.bf16.msra.mxu0 0
  %2034 = vmatpush.bf16.msra.mxu0 %v2025
  %2035 = vmatmul.bf16.gmra.mxu0 %v2022
  %v2036 = vpop.f32.mrf.mxu0
  %v2037 = vadd.f32 0.0, %v2036
  %v2038 = vpop.f32.mrf.mxu0
  %2039 = vdwg.mxu0
  %v2041 = vsel %vm224, %v2018, 0
  %v2044 = vsel %vm294, %v2020, 0
  %2046 = vmatpush.bf16.msra.mxu0 0
  %2047 = vmatpush.bf16.msra.mxu0 0
  %2048 = vmatpush.bf16.msra.mxu0 0
  %2049 = vmatpush.bf16.msra.mxu0 0
  %2050 = vmatpush.bf16.msra.mxu0 0
  %2051 = vmatpush.bf16.msra.mxu0 0
  %2052 = vmatpush.bf16.msra.mxu0 0
  %2053 = vmatpush.bf16.msra.mxu0 %v2044
  %2054 = vmatmul.bf16.gmra.mxu0 %v2041
  %v2055 = vpop.f32.mrf.mxu0
  %v2056 = vadd.f32 0.0, %v2055
  %v2057 = vpop.f32.mrf.mxu0
  %2058 = vdwg.mxu0
  %v2059 = vpack.c.bf16 %v2056, %v2037
  %s2060 = scalar_lea.vmem %s4, 24
  %v2061 = vld [vmem:[%s2060] sm:$0xf]
  %v2063 = vsel %vm224, %v2059, 0
  %v2066 = vsel %vm294, %v2061, 0
  %2068 = vmatpush.bf16.msra.mxu0 0
  %2069 = vmatpush.bf16.msra.mxu0 0
  %2070 = vmatpush.bf16.msra.mxu0 0
  %2071 = vmatpush.bf16.msra.mxu0 0
  %2072 = vmatpush.bf16.msra.mxu0 0
  %2073 = vmatpush.bf16.msra.mxu0 0
  %2074 = vmatpush.bf16.msra.mxu0 0
  %2075 = vmatpush.bf16.msra.mxu0 %v2066
  %2076 = vmatmul.bf16.gmra.mxu0 %v2063
  %v2077 = vpop.f32.mrf.mxu0
  %v2078 = vadd.f32 0.0, %v2077
  %v2079 = vpop.f32.mrf.mxu0
  %v2080 = vadd.f32 0.0, %v2079
  %2081 = vdwg.mxu0
  %v2082 = vadd.f32 %v1793, %v2078
  %v2083 = vadd.f32 %v1794, %v2080
  %s2084 = scalar_lea.vmem %s2, 224
  %v2085 = vld [vmem:[%s2084] sm:$0xf]
  %v2086 = vld [vmem:[%s2084 + $0x4] sm:$0xf]
  %v2087 = vld [vmem:[%s2084 + $0x8] sm:$0xf]
  %v2088 = vld [vmem:[%s2084 + $0xc] sm:$0xf]
  %v2089 = vld [vmem:[%s2084 + $0x10] sm:$0xf]
  %v2090 = vld [vmem:[%s2084 + $0x14] sm:$0xf]
  %v2091 = vld [vmem:[%s2084 + $0x18] sm:$0xf]
  %v2092 = vld [vmem:[%s2084 + $0x1c] sm:$0xf]
  %s2093 = scalar_lea.vmem %s3, 7
  %v2094 = vld [vmem:[%s2093] sm:$0x1]
  %v2096 = vperm.slane %v2094, 0
  %v2106 = vunpack.c.l.b16 %v2085
  %v2107 = vunpack.c.l.b16 %v2086
  %v2108 = vunpack.c.l.b16 %v2087
  %v2109 = vunpack.c.l.b16 %v2088
  %v2110 = vunpack.c.l.b16 %v2089
  %v2111 = vunpack.c.l.b16 %v2090
  %v2112 = vunpack.c.l.b16 %v2091
  %v2113 = vunpack.c.l.b16 %v2092
  %v2114 = vpack.c.b16 %v2107, %v2106
  %v2115 = vpack.c.b16 %v2109, %v2108
  %v2116 = vpack.c.b16 %v2111, %v2110
  %v2117 = vpack.c.b16 %v2113, %v2112
  %2122 = vmatpush.bf16.msra.mxu0 0
  %2123 = vmatpush.bf16.msra.mxu0 0
  %2124 = vmatpush.bf16.msra.mxu0 0
  %2125 = vmatpush.bf16.msra.mxu0 0
  %2126 = vmatpush.bf16.msra.mxu0 %v2117
  %2127 = vmatpush.bf16.msra.mxu0 %v2116
  %2128 = vmatpush.bf16.msra.mxu0 %v2115
  %2129 = vmatpush.bf16.msra.mxu0 %v2114
  %2130 = vmatmul.bf16.gmra.mxu0 %v100
  %v2131 = vpop.f32.mrf.mxu0
  %v2132 = vadd.f32 %v2096, %v2131
  %v2133 = vpop.f32.mrf.mxu0
  %v2134 = vadd.f32 %v2096, %v2133
  %2135 = vdwg.mxu0
  %s2136 = scalar_lea.vmem %s2, 480
  %v2137 = vld [vmem:[%s2136] sm:$0xf]
  %v2138 = vld [vmem:[%s2136 + $0x4] sm:$0xf]
  %v2139 = vld [vmem:[%s2136 + $0x8] sm:$0xf]
  %v2140 = vld [vmem:[%s2136 + $0xc] sm:$0xf]
  %v2141 = vld [vmem:[%s2136 + $0x10] sm:$0xf]
  %v2142 = vld [vmem:[%s2136 + $0x14] sm:$0xf]
  %v2143 = vld [vmem:[%s2136 + $0x18] sm:$0xf]
  %v2144 = vld [vmem:[%s2136 + $0x1c] sm:$0xf]
  %s2145 = scalar_lea.vmem %s3, 15
  %v2146 = vld [vmem:[%s2145] sm:$0x1]
  %v2148 = vperm.slane %v2146, 0
  %v2158 = vunpack.c.l.b16 %v2137
  %v2159 = vunpack.c.l.b16 %v2138
  %v2160 = vunpack.c.l.b16 %v2139
  %v2161 = vunpack.c.l.b16 %v2140
  %v2162 = vunpack.c.l.b16 %v2141
  %v2163 = vunpack.c.l.b16 %v2142
  %v2164 = vunpack.c.l.b16 %v2143
  %v2165 = vunpack.c.l.b16 %v2144
  %v2166 = vpack.c.b16 %v2159, %v2158
  %v2167 = vpack.c.b16 %v2161, %v2160
  %v2168 = vpack.c.b16 %v2163, %v2162
  %v2169 = vpack.c.b16 %v2165, %v2164
  %2174 = vmatpush.bf16.msra.mxu0 0
  %2175 = vmatpush.bf16.msra.mxu0 0
  %2176 = vmatpush.bf16.msra.mxu0 0
  %2177 = vmatpush.bf16.msra.mxu0 0
  %2178 = vmatpush.bf16.msra.mxu0 %v2169
  %2179 = vmatpush.bf16.msra.mxu0 %v2168
  %2180 = vmatpush.bf16.msra.mxu0 %v2167
  %2181 = vmatpush.bf16.msra.mxu0 %v2166
  %2182 = vmatmul.bf16.gmra.mxu0 %v100
  %v2183 = vpop.f32.mrf.mxu0
  %v2184 = vadd.f32 %v2148, %v2183
  %v2185 = vpop.f32.mrf.mxu0
  %v2186 = vadd.f32 %v2148, %v2185
  %2187 = vdwg.mxu0
  %s2188 = scalar_lea.vmem %s2, 736
  %v2189 = vld [vmem:[%s2188] sm:$0xf]
  %v2190 = vld [vmem:[%s2188 + $0x4] sm:$0xf]
  %v2191 = vld [vmem:[%s2188 + $0x8] sm:$0xf]
  %v2192 = vld [vmem:[%s2188 + $0xc] sm:$0xf]
  %v2193 = vld [vmem:[%s2188 + $0x10] sm:$0xf]
  %v2194 = vld [vmem:[%s2188 + $0x14] sm:$0xf]
  %v2195 = vld [vmem:[%s2188 + $0x18] sm:$0xf]
  %v2196 = vld [vmem:[%s2188 + $0x1c] sm:$0xf]
  %s2197 = scalar_lea.vmem %s3, 23
  %v2198 = vld [vmem:[%s2197] sm:$0x1]
  %v2200 = vperm.slane %v2198, 0
  %v2210 = vunpack.c.l.b16 %v2189
  %v2211 = vunpack.c.l.b16 %v2190
  %v2212 = vunpack.c.l.b16 %v2191
  %v2213 = vunpack.c.l.b16 %v2192
  %v2214 = vunpack.c.l.b16 %v2193
  %v2215 = vunpack.c.l.b16 %v2194
  %v2216 = vunpack.c.l.b16 %v2195
  %v2217 = vunpack.c.l.b16 %v2196
  %v2218 = vpack.c.b16 %v2211, %v2210
  %v2219 = vpack.c.b16 %v2213, %v2212
  %v2220 = vpack.c.b16 %v2215, %v2214
  %v2221 = vpack.c.b16 %v2217, %v2216
  %2226 = vmatpush.bf16.msra.mxu0 0
  %2227 = vmatpush.bf16.msra.mxu0 0
  %2228 = vmatpush.bf16.msra.mxu0 0
  %2229 = vmatpush.bf16.msra.mxu0 0
  %2230 = vmatpush.bf16.msra.mxu0 %v2221
  %2231 = vmatpush.bf16.msra.mxu0 %v2220
  %2232 = vmatpush.bf16.msra.mxu0 %v2219
  %2233 = vmatpush.bf16.msra.mxu0 %v2218
  %2234 = vmatmul.bf16.gmra.mxu0 %v100
  %v2235 = vpop.f32.mrf.mxu0
  %v2236 = vadd.f32 %v2200, %v2235
  %v2237 = vpop.f32.mrf.mxu0
  %v2238 = vadd.f32 %v2200, %v2237
  %2239 = vdwg.mxu0
  %v2240 = vpack.c.bf16 %v2132, %v2132
  %v2241 = vpack.c.bf16 %v2134, %v2134
  %v2242 = vpack.c.bf16 %v2184, %v2184
  %v2243 = vpack.c.bf16 %v2186, %v2186
  %v2245 = vsel %vm224, %v2240, 0
  %v2248 = vsel %vm224, %v2242, 0
  %2250 = vmatpush.bf16.xpose.msra.mxu0 0
  %2251 = vmatpush.bf16.xpose.msra.mxu0 0
  %2252 = vmatpush.bf16.xpose.msra.mxu0 0
  %2253 = vmatpush.bf16.xpose.msra.mxu0 0
  %2254 = vmatpush.bf16.xpose.msra.mxu0 0
  %2255 = vmatpush.bf16.xpose.msra.mxu0 0
  %2256 = vmatpush.bf16.xpose.msra.mxu0 0
  %2257 = vmatpush.bf16.xpose.msra.mxu0 %v2248
  %2258 = vmatmul.bf16.gmra.mxu0 %v2245
  %v2259 = vpop.f32.mrf.mxu0
  %v2260 = vadd.f32 0.0, %v2259
  %v2261 = vpop.f32.mrf.mxu0
  %2262 = vdwg.mxu0
  %v2264 = vsel %vm224, %v2241, 0
  %v2267 = vsel %vm224, %v2243, 0
  %2269 = vmatpush.bf16.xpose.msra.mxu0 0
  %2270 = vmatpush.bf16.xpose.msra.mxu0 0
  %2271 = vmatpush.bf16.xpose.msra.mxu0 0
  %2272 = vmatpush.bf16.xpose.msra.mxu0 0
  %2273 = vmatpush.bf16.xpose.msra.mxu0 0
  %2274 = vmatpush.bf16.xpose.msra.mxu0 0
  %2275 = vmatpush.bf16.xpose.msra.mxu0 0
  %2276 = vmatpush.bf16.xpose.msra.mxu0 %v2267
  %2277 = vmatmul.bf16.gmra.mxu0 %v2264
  %v2278 = vpop.f32.mrf.mxu0
  %v2279 = vadd.f32 0.0, %v2278
  %v2280 = vpop.f32.mrf.mxu0
  %2281 = vdwg.mxu0
  %v2282 = vmul.f32 %v2260, 0.35355338
  %v2283 = vmul.f32 %v2279, 0.35355338
  %v2284 = vsel %vm224, %v2282, -inf
  %2285 = vmax.xlane.f32.xlu0 %v2284
  %v2286 = vpop.xlane.xlu0 %2285
  %v2287 = vsel %vm224, %v2283, -inf
  %2288 = vmax.xlane.f32.xlu0 %v2287
  %v2289 = vpop.xlane.xlu0 %2288
  %v2290 = vsub.f32 %v2282, %v2286
  %v2291 = vsub.f32 %v2283, %v2289
  %v2292 = vmul.f32 %v2290, 1.442695
  %v2293 = vpow.pop %v2292
  %v2294 = vmul.f32 %v2291, 1.442695
  %v2295 = vpow.pop %v2294
  %v2296 = vsel %vm224, %v2293, 0.0
  %2297 = vadd.xlane.f32.xlu0 %v2296
  %v2298 = vpop.xlane.xlu0 %2297
  %v2299 = vsel %vm224, %v2295, 0.0
  %2300 = vadd.xlane.f32.xlu0 %v2299
  %v2301 = vpop.xlane.xlu0 %2300
  %v2302 = vrcp.pop %v2298
  %v2303 = vrcp.pop %v2301
  %v2304 = vmul.f32 %v2293, %v2302
  %v2305 = vmul.f32 %v2295, %v2303
  %v2306 = vpack.c.bf16 %v2304, %v2304
  %v2307 = vpack.c.bf16 %v2305, %v2305
  %v2308 = vpack.c.bf16 %v2236, %v2236
  %v2309 = vpack.c.bf16 %v2238, %v2238
  %v2311 = vsel %vm224, %v2306, 0
  %v2314 = vsel %vm294, %v2308, 0
  %2316 = vmatpush.bf16.msra.mxu0 0
  %2317 = vmatpush.bf16.msra.mxu0 0
  %2318 = vmatpush.bf16.msra.mxu0 0
  %2319 = vmatpush.bf16.msra.mxu0 0
  %2320 = vmatpush.bf16.msra.mxu0 0
  %2321 = vmatpush.bf16.msra.mxu0 0
  %2322 = vmatpush.bf16.msra.mxu0 0
  %2323 = vmatpush.bf16.msra.mxu0 %v2314
  %2324 = vmatmul.bf16.gmra.mxu0 %v2311
  %v2325 = vpop.f32.mrf.mxu0
  %v2326 = vadd.f32 0.0, %v2325
  %v2327 = vpop.f32.mrf.mxu0
  %2328 = vdwg.mxu0
  %v2330 = vsel %vm224, %v2307, 0
  %v2333 = vsel %vm294, %v2309, 0
  %2335 = vmatpush.bf16.msra.mxu0 0
  %2336 = vmatpush.bf16.msra.mxu0 0
  %2337 = vmatpush.bf16.msra.mxu0 0
  %2338 = vmatpush.bf16.msra.mxu0 0
  %2339 = vmatpush.bf16.msra.mxu0 0
  %2340 = vmatpush.bf16.msra.mxu0 0
  %2341 = vmatpush.bf16.msra.mxu0 0
  %2342 = vmatpush.bf16.msra.mxu0 %v2333
  %2343 = vmatmul.bf16.gmra.mxu0 %v2330
  %v2344 = vpop.f32.mrf.mxu0
  %v2345 = vadd.f32 0.0, %v2344
  %v2346 = vpop.f32.mrf.mxu0
  %2347 = vdwg.mxu0
  %v2348 = vpack.c.bf16 %v2345, %v2326
  %s2349 = scalar_lea.vmem %s4, 28
  %v2350 = vld [vmem:[%s2349] sm:$0xf]
  %v2352 = vsel %vm224, %v2348, 0
  %v2355 = vsel %vm294, %v2350, 0
  %2357 = vmatpush.bf16.msra.mxu0 0
  %2358 = vmatpush.bf16.msra.mxu0 0
  %2359 = vmatpush.bf16.msra.mxu0 0
  %2360 = vmatpush.bf16.msra.mxu0 0
  %2361 = vmatpush.bf16.msra.mxu0 0
  %2362 = vmatpush.bf16.msra.mxu0 0
  %2363 = vmatpush.bf16.msra.mxu0 0
  %2364 = vmatpush.bf16.msra.mxu0 %v2355
  %2365 = vmatmul.bf16.gmra.mxu0 %v2352
  %v2366 = vpop.f32.mrf.mxu0
  %v2367 = vadd.f32 0.0, %v2366
  %v2368 = vpop.f32.mrf.mxu0
  %v2369 = vadd.f32 0.0, %v2368
  %2370 = vdwg.mxu0
  %v2371 = vadd.f32 %v2082, %v2367
  %v2372 = vadd.f32 %v2083, %v2369
  %v2373 = vld [vmem:[%s5] sm:$0x1]
  %v2375 = vperm.slane %v2373, 0
  %v2377 = vadd.f32 %v2371, %v2375
  %v2378 = vadd.f32 %v2372, %v2375
  %v2379 = vadd.f32 %v54, %v2377
  %v2380 = vadd.f32 %v55, %v2378
  %v2381 = vsel %vm98, %v2379, 0.0
  %2382 = vadd.xlane.f32.xlu0 %v2381
  %v2383 = vpop.xlane.xlu0 %2382
  %v2384 = vsel %vm98, %v2380, 0.0
  %2385 = vadd.xlane.f32.xlu0 %v2384
  %v2386 = vpop.xlane.xlu0 %2385
  %v2387 = vrcp.pop 64.0
  %v2388 = vmul.f32 64.0, %v2387
  %v2389 = vsub.f32 1.0, %v2388
  %v2390 = vmul.f32 %v2387, %v2389
  %v2391 = vadd.f32 %v2387, %v2390
  %vm2392 = vweird.f32 %v2387
  %v2393 = vsel %vm2392, %v2387, %v2391
  %v2394 = vmul.f32 %v2383, %v2393
  %v2395 = vmul.f32 %v2386, %v2393
  %v2396 = vsub.f32 %v2379, %v2394
  %v2397 = vsub.f32 %v2380, %v2395
  %v2398 = vmul.f32 %v2396, %v2396
  %v2399 = vmul.f32 %v2397, %v2397
  %v2400 = vsel %vm98, %v2398, 0.0
  %2401 = vadd.xlane.f32.xlu0 %v2400
  %v2402 = vpop.xlane.xlu0 %2401
  %v2403 = vsel %vm98, %v2399, 0.0
  %2404 = vadd.xlane.f32.xlu0 %v2403
  %v2405 = vpop.xlane.xlu0 %2404
  %v2406 = vmul.f32 %v2402, %v2393
  %v2407 = vmul.f32 %v2405, %v2393
  %v2408 = vadd.f32 %v2406, 1e-05
  %v2409 = vadd.f32 %v2407, 1e-05
  %v2410 = vrsqrt.pop %v2408
  %v2411 = vmul.f32 %v2410, %v2408
  %v2412 = vmul.f32 %v2411, %v2410
  %v2413 = vmul.f32 0.5, %v2412
  %v2414 = vsub.f32 1.5, %v2413
  %v2415 = vmul.f32 %v2410, %v2414
  %vm2416 = vweird.f32 %v2408
  %vm2417 = vweird.f32 %v2410
  %vm2418 = vmor %vm2416, %vm2417
  %v2419 = vsel %vm2418, %v2410, %v2415
  %v2420 = vrsqrt.pop %v2409
  %v2421 = vmul.f32 %v2420, %v2409
  %v2422 = vmul.f32 %v2421, %v2420
  %v2423 = vmul.f32 0.5, %v2422
  %v2424 = vsub.f32 1.5, %v2423
  %v2425 = vmul.f32 %v2420, %v2424
  %vm2426 = vweird.f32 %v2409
  %vm2427 = vweird.f32 %v2420
  %vm2428 = vmor %vm2426, %vm2427
  %v2429 = vsel %vm2428, %v2420, %v2425
  %v2430 = vmul.f32 %v2396, %v2419
  %v2431 = vmul.f32 %v2397, %v2429
  %v2432 = vperm.slane %v59, 0
  %v2433 = vmul.f32 %v2430, %v2432
  %v2434 = vmul.f32 %v2431, %v2432
  %v2435 = vperm.slane %v60, 0
  %v2436 = vadd.f32 %v2433, %v2435
  %v2437 = vadd.f32 %v2434, %v2435
  %v2438 = vpack.c.bf16 %v2437, %v2436
  %v2439 = vpack.c.bf16 %v57, %v56
  %v2440 = vpack.c.bf16 %v58, %v58
  %v2441 = vld [vmem:[%s6] sm:$0xf]
  %v2442 = vld [vmem:[%s6 + $0x4] sm:$0xf]
  %v2443 = vld [vmem:[%s6 + $0x8] sm:$0xf]
  %v2444 = vld [vmem:[%s6 + $0xc] sm:$0xf]
  %v2445 = vld [vmem:[%s6 + $0x10] sm:$0xf]
  %v2446 = vld [vmem:[%s6 + $0x14] sm:$0xf]
  %v2447 = vld [vmem:[%s6 + $0x18] sm:$0xf]
  %v2448 = vld [vmem:[%s6 + $0x1c] sm:$0xf]
  %v2449 = vld [vmem:[%s7] sm:$0x1]
  %v2451 = vperm.slane %v2449, 0
  %v2461 = vunpack.c.l.b16 %v2441
  %v2462 = vunpack.c.l.b16 %v2442
  %v2463 = vunpack.c.l.b16 %v2443
  %v2464 = vunpack.c.l.b16 %v2444
  %v2465 = vunpack.c.l.b16 %v2445
  %v2466 = vunpack.c.l.b16 %v2446
  %v2467 = vunpack.c.l.b16 %v2447
  %v2468 = vunpack.c.l.b16 %v2448
  %v2469 = vpack.c.b16 %v2462, %v2461
  %v2470 = vpack.c.b16 %v2464, %v2463
  %v2471 = vpack.c.b16 %v2466, %v2465
  %v2472 = vpack.c.b16 %v2468, %v2467
  %v2478 = vsel %vm98, %v2438, 0
  %2480 = vmatpush.bf16.msra.mxu0 0
  %2481 = vmatpush.bf16.msra.mxu0 0
  %2482 = vmatpush.bf16.msra.mxu0 0
  %2483 = vmatpush.bf16.msra.mxu0 0
  %2484 = vmatpush.bf16.msra.mxu0 %v2472
  %2485 = vmatpush.bf16.msra.mxu0 %v2471
  %2486 = vmatpush.bf16.msra.mxu0 %v2470
  %2487 = vmatpush.bf16.msra.mxu0 %v2469
  %2488 = vmatmul.bf16.gmra.mxu0 %v2478
  %v2489 = vpop.f32.mrf.mxu0
  %v2490 = vadd.f32 %v2451, %v2489
  %v2491 = vpop.f32.mrf.mxu0
  %v2492 = vadd.f32 %v2451, %v2491
  %2493 = vdwg.mxu0
  %s2494 = scalar_lea.vmem %s6, 256
  %v2495 = vld [vmem:[%s2494] sm:$0xf]
  %v2496 = vld [vmem:[%s2494 + $0x4] sm:$0xf]
  %v2497 = vld [vmem:[%s2494 + $0x8] sm:$0xf]
  %v2498 = vld [vmem:[%s2494 + $0xc] sm:$0xf]
  %v2499 = vld [vmem:[%s2494 + $0x10] sm:$0xf]
  %v2500 = vld [vmem:[%s2494 + $0x14] sm:$0xf]
  %v2501 = vld [vmem:[%s2494 + $0x18] sm:$0xf]
  %v2502 = vld [vmem:[%s2494 + $0x1c] sm:$0xf]
  %s2503 = scalar_lea.vmem %s7, 8
  %v2504 = vld [vmem:[%s2503] sm:$0x1]
  %v2506 = vperm.slane %v2504, 0
  %v2516 = vunpack.c.l.b16 %v2495
  %v2517 = vunpack.c.l.b16 %v2496
  %v2518 = vunpack.c.l.b16 %v2497
  %v2519 = vunpack.c.l.b16 %v2498
  %v2520 = vunpack.c.l.b16 %v2499
  %v2521 = vunpack.c.l.b16 %v2500
  %v2522 = vunpack.c.l.b16 %v2501
  %v2523 = vunpack.c.l.b16 %v2502
  %v2524 = vpack.c.b16 %v2517, %v2516
  %v2525 = vpack.c.b16 %v2519, %v2518
  %v2526 = vpack.c.b16 %v2521, %v2520
  %v2527 = vpack.c.b16 %v2523, %v2522
  %v2533 = vsel %vm98, %v2439, 0
  %v2536 = vsel %vm98, %v2440, 0
  %2538 = vmatpush.bf16.msra.mxu0 0
  %2539 = vmatpush.bf16.msra.mxu0 0
  %2540 = vmatpush.bf16.msra.mxu0 0
  %2541 = vmatpush.bf16.msra.mxu0 0
  %2542 = vmatpush.bf16.msra.mxu0 %v2527
  %2543 = vmatpush.bf16.msra.mxu0 %v2526
  %2544 = vmatpush.bf16.msra.mxu0 %v2525
  %2545 = vmatpush.bf16.msra.mxu0 %v2524
  %2546 = vmatmul.bf16.gmra.mxu0 %v2533
  %v2547 = vpop.f32.mrf.mxu0
  %v2548 = vadd.f32 %v2506, %v2547
  %v2549 = vpop.f32.mrf.mxu0
  %v2550 = vadd.f32 %v2506, %v2549
  %2551 = vmatmul.bf16.gmra.mxu0 %v2536
  %v2552 = vpop.f32.mrf.mxu0
  %v2553 = vadd.f32 %v2506, %v2552
  %v2554 = vpop.f32.mrf.mxu0
  %2555 = vdwg.mxu0
  %s2556 = scalar_lea.vmem %s6, 512
  %v2557 = vld [vmem:[%s2556] sm:$0xf]
  %v2558 = vld [vmem:[%s2556 + $0x4] sm:$0xf]
  %v2559 = vld [vmem:[%s2556 + $0x8] sm:$0xf]
  %v2560 = vld [vmem:[%s2556 + $0xc] sm:$0xf]
  %v2561 = vld [vmem:[%s2556 + $0x10] sm:$0xf]
  %v2562 = vld [vmem:[%s2556 + $0x14] sm:$0xf]
  %v2563 = vld [vmem:[%s2556 + $0x18] sm:$0xf]
  %v2564 = vld [vmem:[%s2556 + $0x1c] sm:$0xf]
  %s2565 = scalar_lea.vmem %s7, 16
  %v2566 = vld [vmem:[%s2565] sm:$0x1]
  %v2568 = vperm.slane %v2566, 0
  %v2578 = vunpack.c.l.b16 %v2557
  %v2579 = vunpack.c.l.b16 %v2558
  %v2580 = vunpack.c.l.b16 %v2559
  %v2581 = vunpack.c.l.b16 %v2560
  %v2582 = vunpack.c.l.b16 %v2561
  %v2583 = vunpack.c.l.b16 %v2562
  %v2584 = vunpack.c.l.b16 %v2563
  %v2585 = vunpack.c.l.b16 %v2564
  %v2586 = vpack.c.b16 %v2579, %v2578
  %v2587 = vpack.c.b16 %v2581, %v2580
  %v2588 = vpack.c.b16 %v2583, %v2582
  %v2589 = vpack.c.b16 %v2585, %v2584
  %2594 = vmatpush.bf16.msra.mxu0 0
  %2595 = vmatpush.bf16.msra.mxu0 0
  %2596 = vmatpush.bf16.msra.mxu0 0
  %2597 = vmatpush.bf16.msra.mxu0 0
  %2598 = vmatpush.bf16.msra.mxu0 %v2589
  %2599 = vmatpush.bf16.msra.mxu0 %v2588
  %2600 = vmatpush.bf16.msra.mxu0 %v2587
  %2601 = vmatpush.bf16.msra.mxu0 %v2586
  %2602 = vmatmul.bf16.gmra.mxu0 %v2533
  %v2603 = vpop.f32.mrf.mxu0
  %v2604 = vadd.f32 %v2568, %v2603
  %v2605 = vpop.f32.mrf.mxu0
  %v2606 = vadd.f32 %v2568, %v2605
  %2607 = vmatmul.bf16.gmra.mxu0 %v2536
  %v2608 = vpop.f32.mrf.mxu0
  %v2609 = vadd.f32 %v2568, %v2608
  %v2610 = vpop.f32.mrf.mxu0
  %2611 = vdwg.mxu0
  %v2615 = vrot.slane %v2548, 2
  %v2616 = vrot.slane %v2548, 4
  %v2617 = vrot.slane %v2548, 6
  %v2618 = vrot.slane %v2550, 2
  %v2619 = vrot.slane %v2550, 4
  %v2620 = vrot.slane %v2550, 6
  %v2621 = vrot.slane %v2553, 2
  %v2625 = vrot.slane %v2604, 2
  %v2626 = vrot.slane %v2604, 4
  %v2627 = vrot.slane %v2604, 6
  %v2628 = vrot.slane %v2606, 2
  %v2629 = vrot.slane %v2606, 4
  %v2630 = vrot.slane %v2606, 6
  %v2631 = vrot.slane %v2609, 2
  %v2632 = vpack.c.bf16 %v2490, %v2490
  %v2633 = vpack.c.bf16 %v2492, %v2492
  %2634 = vst [vmem:[#allocation1] ss:$4 sm:$0xff] %v2548
  %s2635 = scalar_lea.vmem [#allocation1], 1
  %2636 = vst [vmem:[%s2635] ss:$4 sm:$0xff] %v2615
  %s2637 = scalar_lea.vmem [#allocation1], 2
  %2638 = vst [vmem:[%s2637] ss:$4 sm:$0xff] %v2616
  %s2639 = scalar_lea.vmem [#allocation1], 3
  %2640 = vst [vmem:[%s2639] ss:$4 sm:$0xff] %v2617
  %s2641 = scalar_lea.vmem [#allocation1], 32
  %2642 = vst [vmem:[%s2641] ss:$4 sm:$0xff] %v2550
  %v2643 = vld.sshfl [vmem:[#allocation1] sm:$0xff pattern:$0x73625140]
  %v2644 = vld.sshfl [vmem:[#allocation1 + $0x20] sm:$0xff pattern:$0x73625140]
  %2645 = vst [vmem:[#allocation1] ss:$4 sm:$0xff] %v2618
  %2646 = vst [vmem:[%s2635] ss:$4 sm:$0xff] %v2619
  %2647 = vst [vmem:[%s2637] ss:$4 sm:$0xff] %v2620
  %2648 = vst [vmem:[%s2639] ss:$4 sm:$0xff] %v2553
  %2649 = vst [vmem:[%s2641] ss:$4 sm:$0xff] %v2621
  %v2650 = vld.sshfl [vmem:[#allocation1] sm:$0xff pattern:$0x73625140]
  %v2651 = vld.sshfl [vmem:[#allocation1 + $0x20] sm:$0xff pattern:$0x73625140]
  %v2656 = vpack.c.bf16 %v2643, %v2643
  %v2657 = vpack.c.bf16 %v2644, %v2644
  %v2658 = vpack.c.bf16 %v2650, %v2650
  %v2659 = vpack.c.bf16 %v2651, %v2651
  %v2662 = vunpack.c.l.b16 %v2656
  %v2663 = vunpack.c.l.b16 %v2657
  %v2664 = vpack.c.b16 %v2663, %v2662
  %v2666 = vsel %vm224, %v2632, 0
  %v2669 = vsel %vm224, %v2664, 0
  %2671 = vmatpush.bf16.xpose.msra.mxu0 0
  %2672 = vmatpush.bf16.xpose.msra.mxu0 0
  %2673 = vmatpush.bf16.xpose.msra.mxu0 0
  %2674 = vmatpush.bf16.xpose.msra.mxu0 0
  %2675 = vmatpush.bf16.xpose.msra.mxu0 0
  %2676 = vmatpush.bf16.xpose.msra.mxu0 0
  %2677 = vmatpush.bf16.xpose.msra.mxu0 0
  %2678 = vmatpush.bf16.xpose.msra.mxu0 %v2669
  %2679 = vmatmul.bf16.gmra.mxu0 %v2666
  %v2680 = vpop.f32.mrf.mxu0
  %v2681 = vadd.f32 0.0, %v2680
  %v2682 = vpop.f32.mrf.mxu0
  %2683 = vdwg.mxu0
  %v2686 = vunpack.c.l.b16 %v2658
  %v2687 = vunpack.c.l.b16 %v2659
  %v2688 = vpack.c.b16 %v2687, %v2686
  %v2690 = vsel %vm224, %v2633, 0
  %v2693 = vsel %vm224, %v2688, 0
  %2695 = vmatpush.bf16.xpose.msra.mxu0 0
  %2696 = vmatpush.bf16.xpose.msra.mxu0 0
  %2697 = vmatpush.bf16.xpose.msra.mxu0 0
  %2698 = vmatpush.bf16.xpose.msra.mxu0 0
  %2699 = vmatpush.bf16.xpose.msra.mxu0 0
  %2700 = vmatpush.bf16.xpose.msra.mxu0 0
  %2701 = vmatpush.bf16.xpose.msra.mxu0 0
  %2702 = vmatpush.bf16.xpose.msra.mxu0 %v2693
  %2703 = vmatmul.bf16.gmra.mxu0 %v2690
  %v2704 = vpop.f32.mrf.mxu0
  %v2705 = vadd.f32 0.0, %v2704
  %v2706 = vpop.f32.mrf.mxu0
  %2707 = vdwg.mxu0
  %v2708 = vmul.f32 %v2681, 0.35355338
  %v2709 = vmul.f32 %v2705, 0.35355338
  %vm2710 = vcmask 80896
  %v2711 = vsel %vm2710, %v2708, -inf
  %2712 = vmax.xlane.f32.xlu0 %v2711
  %v2713 = vpop.xlane.xlu0 %2712
  %v2714 = vsel %vm2710, %v2709, -inf
  %2715 = vmax.xlane.f32.xlu0 %v2714
  %v2716 = vpop.xlane.xlu0 %2715
  %v2717 = vsub.f32 %v2708, %v2713
  %v2718 = vsub.f32 %v2709, %v2716
  %v2719 = vmul.f32 %v2717, 1.442695
  %v2720 = vpow.pop %v2719
  %v2721 = vmul.f32 %v2718, 1.442695
  %v2722 = vpow.pop %v2721
  %v2723 = vsel %vm2710, %v2720, 0.0
  %2724 = vadd.xlane.f32.xlu0 %v2723
  %v2725 = vpop.xlane.xlu0 %2724
  %v2726 = vsel %vm2710, %v2722, 0.0
  %2727 = vadd.xlane.f32.xlu0 %v2726
  %v2728 = vpop.xlane.xlu0 %2727
  %v2729 = vrcp.pop %v2725
  %v2730 = vrcp.pop %v2728
  %v2731 = vmul.f32 %v2720, %v2729
  %v2732 = vmul.f32 %v2722, %v2730
  %v2733 = vpack.c.bf16 %v2731, %v2731
  %v2734 = vpack.c.bf16 %v2732, %v2732
  %2735 = vst [vmem:[#allocation1] ss:$4 sm:$0xff] %v2604
  %s2736 = scalar_lea.vmem [#allocation1], 1
  %2737 = vst [vmem:[%s2736] ss:$4 sm:$0xff] %v2625
  %s2738 = scalar_lea.vmem [#allocation1], 2
  %2739 = vst [vmem:[%s2738] ss:$4 sm:$0xff] %v2626
  %s2740 = scalar_lea.vmem [#allocation1], 3
  %2741 = vst [vmem:[%s2740] ss:$4 sm:$0xff] %v2627
  %s2742 = scalar_lea.vmem [#allocation1], 32
  %2743 = vst [vmem:[%s2742] ss:$4 sm:$0xff] %v2606
  %v2744 = vld.sshfl [vmem:[#allocation1] sm:$0xff pattern:$0x73625140]
  %v2745 = vld.sshfl [vmem:[#allocation1 + $0x20] sm:$0xff pattern:$0x73625140]
  %2746 = vst [vmem:[#allocation1] ss:$4 sm:$0xff] %v2628
  %2747 = vst [vmem:[%s2736] ss:$4 sm:$0xff] %v2629
  %2748 = vst [vmem:[%s2738] ss:$4 sm:$0xff] %v2630
  %2749 = vst [vmem:[%s2740] ss:$4 sm:$0xff] %v2609
  %2750 = vst [vmem:[%s2742] ss:$4 sm:$0xff] %v2631
  %v2751 = vld.sshfl [vmem:[#allocation1] sm:$0xff pattern:$0x73625140]
  %v2752 = vld.sshfl [vmem:[#allocation1 + $0x20] sm:$0xff pattern:$0x73625140]
  %v2757 = vpack.c.bf16 %v2744, %v2744
  %v2758 = vpack.c.bf16 %v2745, %v2745
  %v2759 = vpack.c.bf16 %v2751, %v2751
  %v2760 = vpack.c.bf16 %v2752, %v2752
  %v2763 = vunpack.c.l.b16 %v2757
  %v2764 = vunpack.c.l.b16 %v2758
  %v2765 = vpack.c.b16 %v2764, %v2763
  %v2767 = vsel %vm2710, %v2733, 0
  %vm2769 = vcmask 1044480
  %v2771 = vsel %vm2769, %v2765, 0
  %2773 = vmatpush.bf16.msra.mxu0 0
  %2774 = vmatpush.bf16.msra.mxu0 0
  %2775 = vmatpush.bf16.msra.mxu0 0
  %2776 = vmatpush.bf16.msra.mxu0 0
  %2777 = vmatpush.bf16.msra.mxu0 0
  %2778 = vmatpush.bf16.msra.mxu0 0
  %2779 = vmatpush.bf16.msra.mxu0 0
  %2780 = vmatpush.bf16.msra.mxu0 %v2771
  %2781 = vmatmul.bf16.gmra.mxu0 %v2767
  %v2782 = vpop.f32.mrf.mxu0
  %v2783 = vadd.f32 0.0, %v2782
  %v2784 = vpop.f32.mrf.mxu0
  %2785 = vdwg.mxu0
  %v2788 = vunpack.c.l.b16 %v2759
  %v2789 = vunpack.c.l.b16 %v2760
  %v2790 = vpack.c.b16 %v2789, %v2788
  %v2792 = vsel %vm2710, %v2734, 0
  %v2795 = vsel %vm2769, %v2790, 0
  %2797 = vmatpush.bf16.msra.mxu0 0
  %2798 = vmatpush.bf16.msra.mxu0 0
  %2799 = vmatpush.bf16.msra.mxu0 0
  %2800 = vmatpush.bf16.msra.mxu0 0
  %2801 = vmatpush.bf16.msra.mxu0 0
  %2802 = vmatpush.bf16.msra.mxu0 0
  %2803 = vmatpush.bf16.msra.mxu0 0
  %2804 = vmatpush.bf16.msra.mxu0 %v2795
  %2805 = vmatmul.bf16.gmra.mxu0 %v2792
  %v2806 = vpop.f32.mrf.mxu0
  %v2807 = vadd.f32 0.0, %v2806
  %v2808 = vpop.f32.mrf.mxu0
  %2809 = vdwg.mxu0
  %v2810 = vpack.c.bf16 %v2807, %v2783
  %v2811 = vld [vmem:[%s8] sm:$0xf]
  %s2812 = scalar_lea.vmem %s6, 32
  %v2813 = vld [vmem:[%s2812] sm:$0xf]
  %v2814 = vld [vmem:[%s2812 + $0x4] sm:$0xf]
  %v2815 = vld [vmem:[%s2812 + $0x8] sm:$0xf]
  %v2816 = vld [vmem:[%s2812 + $0xc] sm:$0xf]
  %v2817 = vld [vmem:[%s2812 + $0x10] sm:$0xf]
  %v2818 = vld [vmem:[%s2812 + $0x14] sm:$0xf]
  %v2819 = vld [vmem:[%s2812 + $0x18] sm:$0xf]
  %v2820 = vld [vmem:[%s2812 + $0x1c] sm:$0xf]
  %s2821 = scalar_lea.vmem %s7, 1
  %v2822 = vld [vmem:[%s2821] sm:$0x1]
  %v2824 = vperm.slane %v2822, 0
  %v2834 = vunpack.c.l.b16 %v2813
  %v2835 = vunpack.c.l.b16 %v2814
  %v2836 = vunpack.c.l.b16 %v2815
  %v2837 = vunpack.c.l.b16 %v2816
  %v2838 = vunpack.c.l.b16 %v2817
  %v2839 = vunpack.c.l.b16 %v2818
  %v2840 = vunpack.c.l.b16 %v2819
  %v2841 = vunpack.c.l.b16 %v2820
  %v2842 = vpack.c.b16 %v2835, %v2834
  %v2843 = vpack.c.b16 %v2837, %v2836
  %v2844 = vpack.c.b16 %v2839, %v2838
  %v2845 = vpack.c.b16 %v2841, %v2840
  %2850 = vmatpush.bf16.msra.mxu0 0
  %2851 = vmatpush.bf16.msra.mxu0 0
  %2852 = vmatpush.bf16.msra.mxu0 0
  %2853 = vmatpush.bf16.msra.mxu0 0
  %2854 = vmatpush.bf16.msra.mxu0 %v2845
  %2855 = vmatpush.bf16.msra.mxu0 %v2844
  %2856 = vmatpush.bf16.msra.mxu0 %v2843
  %2857 = vmatpush.bf16.msra.mxu0 %v2842
  %2858 = vmatmul.bf16.gmra.mxu0 %v2478
  %v2859 = vpop.f32.mrf.mxu0
  %v2860 = vadd.f32 %v2824, %v2859
  %v2861 = vpop.f32.mrf.mxu0
  %v2862 = vadd.f32 %v2824, %v2861
  %2863 = vdwg.mxu0
  %s2864 = scalar_lea.vmem %s6, 288
  %v2865 = vld [vmem:[%s2864] sm:$0xf]
  %v2866 = vld [vmem:[%s2864 + $0x4] sm:$0xf]
  %v2867 = vld [vmem:[%s2864 + $0x8] sm:$0xf]
  %v2868 = vld [vmem:[%s2864 + $0xc] sm:$0xf]
  %v2869 = vld [vmem:[%s2864 + $0x10] sm:$0xf]
  %v2870 = vld [vmem:[%s2864 + $0x14] sm:$0xf]
  %v2871 = vld [vmem:[%s2864 + $0x18] sm:$0xf]
  %v2872 = vld [vmem:[%s2864 + $0x1c] sm:$0xf]
  %s2873 = scalar_lea.vmem %s7, 9
  %v2874 = vld [vmem:[%s2873] sm:$0x1]
  %v2876 = vperm.slane %v2874, 0
  %v2886 = vunpack.c.l.b16 %v2865
  %v2887 = vunpack.c.l.b16 %v2866
  %v2888 = vunpack.c.l.b16 %v2867
  %v2889 = vunpack.c.l.b16 %v2868
  %v2890 = vunpack.c.l.b16 %v2869
  %v2891 = vunpack.c.l.b16 %v2870
  %v2892 = vunpack.c.l.b16 %v2871
  %v2893 = vunpack.c.l.b16 %v2872
  %v2894 = vpack.c.b16 %v2887, %v2886
  %v2895 = vpack.c.b16 %v2889, %v2888
  %v2896 = vpack.c.b16 %v2891, %v2890
  %v2897 = vpack.c.b16 %v2893, %v2892
  %2902 = vmatpush.bf16.msra.mxu0 0
  %2903 = vmatpush.bf16.msra.mxu0 0
  %2904 = vmatpush.bf16.msra.mxu0 0
  %2905 = vmatpush.bf16.msra.mxu0 0
  %2906 = vmatpush.bf16.msra.mxu0 %v2897
  %2907 = vmatpush.bf16.msra.mxu0 %v2896
  %2908 = vmatpush.bf16.msra.mxu0 %v2895
  %2909 = vmatpush.bf16.msra.mxu0 %v2894
  %2910 = vmatmul.bf16.gmra.mxu0 %v2533
  %v2911 = vpop.f32.mrf.mxu0
  %v2912 = vadd.f32 %v2876, %v2911
  %v2913 = vpop.f32.mrf.mxu0
  %v2914 = vadd.f32 %v2876, %v2913
  %2915 = vmatmul.bf16.gmra.mxu0 %v2536
  %v2916 = vpop.f32.mrf.mxu0
  %v2917 = vadd.f32 %v2876, %v2916
  %v2918 = vpop.f32.mrf.mxu0
  %2919 = vdwg.mxu0
  %s2920 = scalar_lea.vmem %s6, 544
  %v2921 = vld [vmem:[%s2920] sm:$0xf]
  %v2922 = vld [vmem:[%s2920 + $0x4] sm:$0xf]
  %v2923 = vld [vmem:[%s2920 + $0x8] sm:$0xf]
  %v2924 = vld [vmem:[%s2920 + $0xc] sm:$0xf]
  %v2925 = vld [vmem:[%s2920 + $0x10] sm:$0xf]
  %v2926 = vld [vmem:[%s2920 + $0x14] sm:$0xf]
  %v2927 = vld [vmem:[%s2920 + $0x18] sm:$0xf]
  %v2928 = vld [vmem:[%s2920 + $0x1c] sm:$0xf]
  %s2929 = scalar_lea.vmem %s7, 17
  %v2930 = vld [vmem:[%s2929] sm:$0x1]
  %v2932 = vperm.slane %v2930, 0
  %v2942 = vunpack.c.l.b16 %v2921
  %v2943 = vunpack.c.l.b16 %v2922
  %v2944 = vunpack.c.l.b16 %v2923
  %v2945 = vunpack.c.l.b16 %v2924
  %v2946 = vunpack.c.l.b16 %v2925
  %v2947 = vunpack.c.l.b16 %v2926
  %v2948 = vunpack.c.l.b16 %v2927
  %v2949 = vunpack.c.l.b16 %v2928
  %v2950 = vpack.c.b16 %v2943, %v2942
  %v2951 = vpack.c.b16 %v2945, %v2944
  %v2952 = vpack.c.b16 %v2947, %v2946
  %v2953 = vpack.c.b16 %v2949, %v2948
  %2958 = vmatpush.bf16.msra.mxu0 0
  %2959 = vmatpush.bf16.msra.mxu0 0
  %2960 = vmatpush.bf16.msra.mxu0 0
  %2961 = vmatpush.bf16.msra.mxu0 0
  %2962 = vmatpush.bf16.msra.mxu0 %v2953
  %2963 = vmatpush.bf16.msra.mxu0 %v2952
  %2964 = vmatpush.bf16.msra.mxu0 %v2951
  %2965 = vmatpush.bf16.msra.mxu0 %v2950
  %2966 = vmatmul.bf16.gmra.mxu0 %v2533
  %v2967 = vpop.f32.mrf.mxu0
  %v2968 = vadd.f32 %v2932, %v2967
  %v2969 = vpop.f32.mrf.mxu0
  %v2970 = vadd.f32 %v2932, %v2969
  %2971 = vmatmul.bf16.gmra.mxu0 %v2536
  %v2972 = vpop.f32.mrf.mxu0
  %v2973 = vadd.f32 %v2932, %v2972
  %v2974 = vpop.f32.mrf.mxu0
  %2975 = vdwg.mxu0
  %v2979 = vrot.slane %v2912, 2
  %v2980 = vrot.slane %v2912, 4
  %v2981 = vrot.slane %v2912, 6
  %v2982 = vrot.slane %v2914, 2
  %v2983 = vrot.slane %v2914, 4
  %v2984 = vrot.slane %v2914, 6
  %v2985 = vrot.slane %v2917, 2
  %v2989 = vrot.slane %v2968, 2
  %v2990 = vrot.slane %v2968, 4
  %v2991 = vrot.slane %v2968, 6
  %v2992 = vrot.slane %v2970, 2
  %v2993 = vrot.slane %v2970, 4
  %v2994 = vrot.slane %v2970, 6
  %v2995 = vrot.slane %v2973, 2
  %v2996 = vpack.c.bf16 %v2860, %v2860
  %v2997 = vpack.c.bf16 %v2862, %v2862
  %2998 = vst [vmem:[#allocation1] ss:$4 sm:$0xff] %v2912
  %s2999 = scalar_lea.vmem [#allocation1], 1
  %3000 = vst [vmem:[%s2999] ss:$4 sm:$0xff] %v2979
  %s3001 = scalar_lea.vmem [#allocation1], 2
  %3002 = vst [vmem:[%s3001] ss:$4 sm:$0xff] %v2980
  %s3003 = scalar_lea.vmem [#allocation1], 3
  %3004 = vst [vmem:[%s3003] ss:$4 sm:$0xff] %v2981
  %s3005 = scalar_lea.vmem [#allocation1], 32
  %3006 = vst [vmem:[%s3005] ss:$4 sm:$0xff] %v2914
  %v3007 = vld.sshfl [vmem:[#allocation1] sm:$0xff pattern:$0x73625140]
  %v3008 = vld.sshfl [vmem:[#allocation1 + $0x20] sm:$0xff pattern:$0x73625140]
  %3009 = vst [vmem:[#allocation1] ss:$4 sm:$0xff] %v2982
  %3010 = vst [vmem:[%s2999] ss:$4 sm:$0xff] %v2983
  %3011 = vst [vmem:[%s3001] ss:$4 sm:$0xff] %v2984
  %3012 = vst [vmem:[%s3003] ss:$4 sm:$0xff] %v2917
  %3013 = vst [vmem:[%s3005] ss:$4 sm:$0xff] %v2985
  %v3014 = vld.sshfl [vmem:[#allocation1] sm:$0xff pattern:$0x73625140]
  %v3015 = vld.sshfl [vmem:[#allocation1 + $0x20] sm:$0xff pattern:$0x73625140]
  %v3020 = vpack.c.bf16 %v3007, %v3007
  %v3021 = vpack.c.bf16 %v3008, %v3008
  %v3022 = vpack.c.bf16 %v3014, %v3014
  %v3023 = vpack.c.bf16 %v3015, %v3015
  %v3026 = vunpack.c.l.b16 %v3020
  %v3027 = vunpack.c.l.b16 %v3021
  %v3028 = vpack.c.b16 %v3027, %v3026
  %v3030 = vsel %vm224, %v2996, 0
  %v3033 = vsel %vm224, %v3028, 0
  %3035 = vmatpush.bf16.xpose.msra.mxu0 0
  %3036 = vmatpush.bf16.xpose.msra.mxu0 0
  %3037 = vmatpush.bf16.xpose.msra.mxu0 0
  %3038 = vmatpush.bf16.xpose.msra.mxu0 0
  %3039 = vmatpush.bf16.xpose.msra.mxu0 0
  %3040 = vmatpush.bf16.xpose.msra.mxu0 0
  %3041 = vmatpush.bf16.xpose.msra.mxu0 0
  %3042 = vmatpush.bf16.xpose.msra.mxu0 %v3033
  %3043 = vmatmul.bf16.gmra.mxu0 %v3030
  %v3044 = vpop.f32.mrf.mxu0
  %v3045 = vadd.f32 0.0, %v3044
  %v3046 = vpop.f32.mrf.mxu0
  %3047 = vdwg.mxu0
  %v3050 = vunpack.c.l.b16 %v3022
  %v3051 = vunpack.c.l.b16 %v3023
  %v3052 = vpack.c.b16 %v3051, %v3050
  %v3054 = vsel %vm224, %v2997, 0
  %v3057 = vsel %vm224, %v3052, 0
  %3059 = vmatpush.bf16.xpose.msra.mxu0 0
  %3060 = vmatpush.bf16.xpose.msra.mxu0 0
  %3061 = vmatpush.bf16.xpose.msra.mxu0 0
  %3062 = vmatpush.bf16.xpose.msra.mxu0 0
  %3063 = vmatpush.bf16.xpose.msra.mxu0 0
  %3064 = vmatpush.bf16.xpose.msra.mxu0 0
  %3065 = vmatpush.bf16.xpose.msra.mxu0 0
  %3066 = vmatpush.bf16.xpose.msra.mxu0 %v3057
  %3067 = vmatmul.bf16.gmra.mxu0 %v3054
  %v3068 = vpop.f32.mrf.mxu0
  %v3069 = vadd.f32 0.0, %v3068
  %v3070 = vpop.f32.mrf.mxu0
  %3071 = vdwg.mxu0
  %v3072 = vmul.f32 %v3045, 0.35355338
  %v3073 = vmul.f32 %v3069, 0.35355338
  %v3074 = vsel %vm2710, %v3072, -inf
  %3075 = vmax.xlane.f32.xlu0 %v3074
  %v3076 = vpop.xlane.xlu0 %3075
  %v3077 = vsel %vm2710, %v3073, -inf
  %3078 = vmax.xlane.f32.xlu0 %v3077
  %v3079 = vpop.xlane.xlu0 %3078
  %v3080 = vsub.f32 %v3072, %v3076
  %v3081 = vsub.f32 %v3073, %v3079
  %v3082 = vmul.f32 %v3080, 1.442695
  %v3083 = vpow.pop %v3082
  %v3084 = vmul.f32 %v3081, 1.442695
  %v3085 = vpow.pop %v3084
  %v3086 = vsel %vm2710, %v3083, 0.0
  %3087 = vadd.xlane.f32.xlu0 %v3086
  %v3088 = vpop.xlane.xlu0 %3087
  %v3089 = vsel %vm2710, %v3085, 0.0
  %3090 = vadd.xlane.f32.xlu0 %v3089
  %v3091 = vpop.xlane.xlu0 %3090
  %v3092 = vrcp.pop %v3088
  %v3093 = vrcp.pop %v3091
  %v3094 = vmul.f32 %v3083, %v3092
  %v3095 = vmul.f32 %v3085, %v3093
  %v3096 = vpack.c.bf16 %v3094, %v3094
  %v3097 = vpack.c.bf16 %v3095, %v3095
  %3098 = vst [vmem:[#allocation1] ss:$4 sm:$0xff] %v2968
  %s3099 = scalar_lea.vmem [#allocation1], 1
  %3100 = vst [vmem:[%s3099] ss:$4 sm:$0xff] %v2989
  %s3101 = scalar_lea.vmem [#allocation1], 2
  %3102 = vst [vmem:[%s3101] ss:$4 sm:$0xff] %v2990
  %s3103 = scalar_lea.vmem [#allocation1], 3
  %3104 = vst [vmem:[%s3103] ss:$4 sm:$0xff] %v2991
  %s3105 = scalar_lea.vmem [#allocation1], 32
  %3106 = vst [vmem:[%s3105] ss:$4 sm:$0xff] %v2970
  %v3107 = vld.sshfl [vmem:[#allocation1] sm:$0xff pattern:$0x73625140]
  %v3108 = vld.sshfl [vmem:[#allocation1 + $0x20] sm:$0xff pattern:$0x73625140]
  %3109 = vst [vmem:[#allocation1] ss:$4 sm:$0xff] %v2992
  %3110 = vst [vmem:[%s3099] ss:$4 sm:$0xff] %v2993
  %3111 = vst [vmem:[%s3101] ss:$4 sm:$0xff] %v2994
  %3112 = vst [vmem:[%s3103] ss:$4 sm:$0xff] %v2973
  %3113 = vst [vmem:[%s3105] ss:$4 sm:$0xff] %v2995
  %v3114 = vld.sshfl [vmem:[#allocation1] sm:$0xff pattern:$0x73625140]
  %v3115 = vld.sshfl [vmem:[#allocation1 + $0x20] sm:$0xff pattern:$0x73625140]
  %v3120 = vpack.c.bf16 %v3107, %v3107
  %v3121 = vpack.c.bf16 %v3108, %v3108
  %v3122 = vpack.c.bf16 %v3114, %v3114
  %v3123 = vpack.c.bf16 %v3115, %v3115
  %v3126 = vunpack.c.l.b16 %v3120
  %v3127 = vunpack.c.l.b16 %v3121
  %v3128 = vpack.c.b16 %v3127, %v3126
  %v3130 = vsel %vm2710, %v3096, 0
  %v3133 = vsel %vm2769, %v3128, 0
  %3135 = vmatpush.bf16.msra.mxu0 0
  %3136 = vmatpush.bf16.msra.mxu0 0
  %3137 = vmatpush.bf16.msra.mxu0 0
  %3138 = vmatpush.bf16.msra.mxu0 0
  %3139 = vmatpush.bf16.msra.mxu0 0
  %3140 = vmatpush.bf16.msra.mxu0 0
  %3141 = vmatpush.bf16.msra.mxu0 0
  %3142 = vmatpush.bf16.msra.mxu0 %v3133
  %3143 = vmatmul.bf16.gmra.mxu0 %v3130
  %v3144 = vpop.f32.mrf.mxu0
  %v3145 = vadd.f32 0.0, %v3144
  %v3146 = vpop.f32.mrf.mxu0
  %3147 = vdwg.mxu0
  %v3150 = vunpack.c.l.b16 %v3122
  %v3151 = vunpack.c.l.b16 %v3123
  %v3152 = vpack.c.b16 %v3151, %v3150
  %v3154 = vsel %vm2710, %v3097, 0
  %v3157 = vsel %vm2769, %v3152, 0
  %3159 = vmatpush.bf16.msra.mxu0 0
  %3160 = vmatpush.bf16.msra.mxu0 0
  %3161 = vmatpush.bf16.msra.mxu0 0
  %3162 = vmatpush.bf16.msra.mxu0 0
  %3163 = vmatpush.bf16.msra.mxu0 0
  %3164 = vmatpush.bf16.msra.mxu0 0
  %3165 = vmatpush.bf16.msra.mxu0 0
  %3166 = vmatpush.bf16.msra.mxu0 %v3157
  %3167 = vmatmul.bf16.gmra.mxu0 %v3154
  %v3168 = vpop.f32.mrf.mxu0
  %v3169 = vadd.f32 0.0, %v3168
  %v3170 = vpop.f32.mrf.mxu0
  %3171 = vdwg.mxu0
  %v3172 = vpack.c.bf16 %v3169, %v3145
  %s3173 = scalar_lea.vmem %s8, 4
  %v3174 = vld [vmem:[%s3173] sm:$0xf]
  %v3176 = vsel %vm224, %v3172, 0
  %v3179 = vsel %vm294, %v3174, 0
  %3181 = vmatpush.bf16.msra.mxu0 0
  %3182 = vmatpush.bf16.msra.mxu0 0
  %3183 = vmatpush.bf16.msra.mxu0 0
  %3184 = vmatpush.bf16.msra.mxu0 0
  %3185 = vmatpush.bf16.msra.mxu0 0
  %3186 = vmatpush.bf16.msra.mxu0 0
  %3187 = vmatpush.bf16.msra.mxu0 0
  %3188 = vmatpush.bf16.msra.mxu0 %v3179
  %3189 = vmatmul.bf16.gmra.mxu0 %v3176
  %v3190 = vpop.f32.mrf.mxu0
  %v3191 = vadd.f32 0.0, %v3190
  %v3192 = vpop.f32.mrf.mxu0
  %v3193 = vadd.f32 0.0, %v3192
  %3194 = vdwg.mxu0
  %v3196 = vsel %vm224, %v2810, 0
  %v3199 = vsel %vm294, %v2811, 0
  %3201 = vmatpush.bf16.msra.mxu0 0
  %3202 = vmatpush.bf16.msra.mxu0 0
  %3203 = vmatpush.bf16.msra.mxu0 0
  %3204 = vmatpush.bf16.msra.mxu0 0
  %3205 = vmatpush.bf16.msra.mxu0 0
  %3206 = vmatpush.bf16.msra.mxu0 0
  %3207 = vmatpush.bf16.msra.mxu0 0
  %3208 = vmatpush.bf16.msra.mxu0 %v3199
  %3209 = vmatmul.bf16.gmra.mxu0 %v3196
  %v3210 = vpop.f32.mrf.mxu0
  %v3211 = vadd.f32 %v3191, %v3210
  %v3212 = vpop.f32.mrf.mxu0
  %v3213 = vadd.f32 %v3193, %v3212
  %3214 = vdwg.mxu0
  %s3215 = scalar_lea.vmem %s6, 64
  %v3216 = vld [vmem:[%s3215] sm:$0xf]
  %v3217 = vld [vmem:[%s3215 + $0x4] sm:$0xf]
  %v3218 = vld [vmem:[%s3215 + $0x8] sm:$0xf]
  %v3219 = vld [vmem:[%s3215 + $0xc] sm:$0xf]
  %v3220 = vld [vmem:[%s3215 + $0x10] sm:$0xf]
  %v3221 = vld [vmem:[%s3215 + $0x14] sm:$0xf]
  %v3222 = vld [vmem:[%s3215 + $0x18] sm:$0xf]
  %v3223 = vld [vmem:[%s3215 + $0x1c] sm:$0xf]
  %s3224 = scalar_lea.vmem %s7, 2
  %v3225 = vld [vmem:[%s3224] sm:$0x1]
  %v3227 = vperm.slane %v3225, 0
  %v3237 = vunpack.c.l.b16 %v3216
  %v3238 = vunpack.c.l.b16 %v3217
  %v3239 = vunpack.c.l.b16 %v3218
  %v3240 = vunpack.c.l.b16 %v3219
  %v3241 = vunpack.c.l.b16 %v3220
  %v3242 = vunpack.c.l.b16 %v3221
  %v3243 = vunpack.c.l.b16 %v3222
  %v3244 = vunpack.c.l.b16 %v3223
  %v3245 = vpack.c.b16 %v3238, %v3237
  %v3246 = vpack.c.b16 %v3240, %v3239
  %v3247 = vpack.c.b16 %v3242, %v3241
  %v3248 = vpack.c.b16 %v3244, %v3243
  %3253 = vmatpush.bf16.msra.mxu0 0
  %3254 = vmatpush.bf16.msra.mxu0 0
  %3255 = vmatpush.bf16.msra.mxu0 0
  %3256 = vmatpush.bf16.msra.mxu0 0
  %3257 = vmatpush.bf16.msra.mxu0 %v3248
  %3258 = vmatpush.bf16.msra.mxu0 %v3247
  %3259 = vmatpush.bf16.msra.mxu0 %v3246
  %3260 = vmatpush.bf16.msra.mxu0 %v3245
  %3261 = vmatmul.bf16.gmra.mxu0 %v2478
  %v3262 = vpop.f32.mrf.mxu0
  %v3263 = vadd.f32 %v3227, %v3262
  %v3264 = vpop.f32.mrf.mxu0
  %v3265 = vadd.f32 %v3227, %v3264
  %3266 = vdwg.mxu0
  %s3267 = scalar_lea.vmem %s6, 320
  %v3268 = vld [vmem:[%s3267] sm:$0xf]
  %v3269 = vld [vmem:[%s3267 + $0x4] sm:$0xf]
  %v3270 = vld [vmem:[%s3267 + $0x8] sm:$0xf]
  %v3271 = vld [vmem:[%s3267 + $0xc] sm:$0xf]
  %v3272 = vld [vmem:[%s3267 + $0x10] sm:$0xf]
  %v3273 = vld [vmem:[%s3267 + $0x14] sm:$0xf]
  %v3274 = vld [vmem:[%s3267 + $0x18] sm:$0xf]
  %v3275 = vld [vmem:[%s3267 + $0x1c] sm:$0xf]
  %s3276 = scalar_lea.vmem %s7, 10
  %v3277 = vld [vmem:[%s3276] sm:$0x1]
  %v3279 = vperm.slane %v3277, 0
  %v3289 = vunpack.c.l.b16 %v3268
  %v3290 = vunpack.c.l.b16 %v3269
  %v3291 = vunpack.c.l.b16 %v3270
  %v3292 = vunpack.c.l.b16 %v3271
  %v3293 = vunpack.c.l.b16 %v3272
  %v3294 = vunpack.c.l.b16 %v3273
  %v3295 = vunpack.c.l.b16 %v3274
  %v3296 = vunpack.c.l.b16 %v3275
  %v3297 = vpack.c.b16 %v3290, %v3289
  %v3298 = vpack.c.b16 %v3292, %v3291
  %v3299 = vpack.c.b16 %v3294, %v3293
  %v3300 = vpack.c.b16 %v3296, %v3295
  %3305 = vmatpush.bf16.msra.mxu0 0
  %3306 = vmatpush.bf16.msra.mxu0 0
  %3307 = vmatpush.bf16.msra.mxu0 0
  %3308 = vmatpush.bf16.msra.mxu0 0
  %3309 = vmatpush.bf16.msra.mxu0 %v3300
  %3310 = vmatpush.bf16.msra.mxu0 %v3299
  %3311 = vmatpush.bf16.msra.mxu0 %v3298
  %3312 = vmatpush.bf16.msra.mxu0 %v3297
  %3313 = vmatmul.bf16.gmra.mxu0 %v2533
  %v3314 = vpop.f32.mrf.mxu0
  %v3315 = vadd.f32 %v3279, %v3314
  %v3316 = vpop.f32.mrf.mxu0
  %v3317 = vadd.f32 %v3279, %v3316
  %3318 = vmatmul.bf16.gmra.mxu0 %v2536
  %v3319 = vpop.f32.mrf.mxu0
  %v3320 = vadd.f32 %v3279, %v3319
  %v3321 = vpop.f32.mrf.mxu0
  %3322 = vdwg.mxu0
  %s3323 = scalar_lea.vmem %s6, 576
  %v3324 = vld [vmem:[%s3323] sm:$0xf]
  %v3325 = vld [vmem:[%s3323 + $0x4] sm:$0xf]
  %v3326 = vld [vmem:[%s3323 + $0x8] sm:$0xf]
  %v3327 = vld [vmem:[%s3323 + $0xc] sm:$0xf]
  %v3328 = vld [vmem:[%s3323 + $0x10] sm:$0xf]
  %v3329 = vld [vmem:[%s3323 + $0x14] sm:$0xf]
  %v3330 = vld [vmem:[%s3323 + $0x18] sm:$0xf]
  %v3331 = vld [vmem:[%s3323 + $0x1c] sm:$0xf]
  %s3332 = scalar_lea.vmem %s7, 18
  %v3333 = vld [vmem:[%s3332] sm:$0x1]
  %v3335 = vperm.slane %v3333, 0
  %v3345 = vunpack.c.l.b16 %v3324
  %v3346 = vunpack.c.l.b16 %v3325
  %v3347 = vunpack.c.l.b16 %v3326
  %v3348 = vunpack.c.l.b16 %v3327
  %v3349 = vunpack.c.l.b16 %v3328
  %v3350 = vunpack.c.l.b16 %v3329
  %v3351 = vunpack.c.l.b16 %v3330
  %v3352 = vunpack.c.l.b16 %v3331
  %v3353 = vpack.c.b16 %v3346, %v3345
  %v3354 = vpack.c.b16 %v3348, %v3347
  %v3355 = vpack.c.b16 %v3350, %v3349
  %v3356 = vpack.c.b16 %v3352, %v3351
  %3361 = vmatpush.bf16.msra.mxu0 0
  %3362 = vmatpush.bf16.msra.mxu0 0
  %3363 = vmatpush.bf16.msra.mxu0 0
  %3364 = vmatpush.bf16.msra.mxu0 0
  %3365 = vmatpush.bf16.msra.mxu0 %v3356
  %3366 = vmatpush.bf16.msra.mxu0 %v3355
  %3367 = vmatpush.bf16.msra.mxu0 %v3354
  %3368 = vmatpush.bf16.msra.mxu0 %v3353
  %3369 = vmatmul.bf16.gmra.mxu0 %v2533
  %v3370 = vpop.f32.mrf.mxu0
  %v3371 = vadd.f32 %v3335, %v3370
  %v3372 = vpop.f32.mrf.mxu0
  %v3373 = vadd.f32 %v3335, %v3372
  %3374 = vmatmul.bf16.gmra.mxu0 %v2536
  %v3375 = vpop.f32.mrf.mxu0
  %v3376 = vadd.f32 %v3335, %v3375
  %v3377 = vpop.f32.mrf.mxu0
  %3378 = vdwg.mxu0
  %v3382 = vrot.slane %v3315, 2
  %v3383 = vrot.slane %v3315, 4
  %v3384 = vrot.slane %v3315, 6
  %v3385 = vrot.slane %v3317, 2
  %v3386 = vrot.slane %v3317, 4
  %v3387 = vrot.slane %v3317, 6
  %v3388 = vrot.slane %v3320, 2
  %v3392 = vrot.slane %v3371, 2
  %v3393 = vrot.slane %v3371, 4
  %v3394 = vrot.slane %v3371, 6
  %v3395 = vrot.slane %v3373, 2
  %v3396 = vrot.slane %v3373, 4
  %v3397 = vrot.slane %v3373, 6
  %v3398 = vrot.slane %v3376, 2
  %v3399 = vpack.c.bf16 %v3263, %v3263
  %v3400 = vpack.c.bf16 %v3265, %v3265
  %3401 = vst [vmem:[#allocation1] ss:$4 sm:$0xff] %v3315
  %s3402 = scalar_lea.vmem [#allocation1], 1
  %3403 = vst [vmem:[%s3402] ss:$4 sm:$0xff] %v3382
  %s3404 = scalar_lea.vmem [#allocation1], 2
  %3405 = vst [vmem:[%s3404] ss:$4 sm:$0xff] %v3383
  %s3406 = scalar_lea.vmem [#allocation1], 3
  %3407 = vst [vmem:[%s3406] ss:$4 sm:$0xff] %v3384
  %s3408 = scalar_lea.vmem [#allocation1], 32
  %3409 = vst [vmem:[%s3408] ss:$4 sm:$0xff] %v3317
  %v3410 = vld.sshfl [vmem:[#allocation1] sm:$0xff pattern:$0x73625140]
  %v3411 = vld.sshfl [vmem:[#allocation1 + $0x20] sm:$0xff pattern:$0x73625140]
  %3412 = vst [vmem:[#allocation1] ss:$4 sm:$0xff] %v3385
  %3413 = vst [vmem:[%s3402] ss:$4 sm:$0xff] %v3386
  %3414 = vst [vmem:[%s3404] ss:$4 sm:$0xff] %v3387
  %3415 = vst [vmem:[%s3406] ss:$4 sm:$0xff] %v3320
  %3416 = vst [vmem:[%s3408] ss:$4 sm:$0xff] %v3388
  %v3417 = vld.sshfl [vmem:[#allocation1] sm:$0xff pattern:$0x73625140]
  %v3418 = vld.sshfl [vmem:[#allocation1 + $0x20] sm:$0xff pattern:$0x73625140]
  %v3423 = vpack.c.bf16 %v3410, %v3410
  %v3424 = vpack.c.bf16 %v3411, %v3411
  %v3425 = vpack.c.bf16 %v3417, %v3417
  %v3426 = vpack.c.bf16 %v3418, %v3418
  %v3429 = vunpack.c.l.b16 %v3423
  %v3430 = vunpack.c.l.b16 %v3424
  %v3431 = vpack.c.b16 %v3430, %v3429
  %v3433 = vsel %vm224, %v3399, 0
  %v3436 = vsel %vm224, %v3431, 0
  %3438 = vmatpush.bf16.xpose.msra.mxu0 0
  %3439 = vmatpush.bf16.xpose.msra.mxu0 0
  %3440 = vmatpush.bf16.xpose.msra.mxu0 0
  %3441 = vmatpush.bf16.xpose.msra.mxu0 0
  %3442 = vmatpush.bf16.xpose.msra.mxu0 0
  %3443 = vmatpush.bf16.xpose.msra.mxu0 0
  %3444 = vmatpush.bf16.xpose.msra.mxu0 0
  %3445 = vmatpush.bf16.xpose.msra.mxu0 %v3436
  %3446 = vmatmul.bf16.gmra.mxu0 %v3433
  %v3447 = vpop.f32.mrf.mxu0
  %v3448 = vadd.f32 0.0, %v3447
  %v3449 = vpop.f32.mrf.mxu0
  %3450 = vdwg.mxu0
  %v3453 = vunpack.c.l.b16 %v3425
  %v3454 = vunpack.c.l.b16 %v3426
  %v3455 = vpack.c.b16 %v3454, %v3453
  %v3457 = vsel %vm224, %v3400, 0
  %v3460 = vsel %vm224, %v3455, 0
  %3462 = vmatpush.bf16.xpose.msra.mxu0 0
  %3463 = vmatpush.bf16.xpose.msra.mxu0 0
  %3464 = vmatpush.bf16.xpose.msra.mxu0 0
  %3465 = vmatpush.bf16.xpose.msra.mxu0 0
  %3466 = vmatpush.bf16.xpose.msra.mxu0 0
  %3467 = vmatpush.bf16.xpose.msra.mxu0 0
  %3468 = vmatpush.bf16.xpose.msra.mxu0 0
  %3469 = vmatpush.bf16.xpose.msra.mxu0 %v3460
  %3470 = vmatmul.bf16.gmra.mxu0 %v3457
  %v3471 = vpop.f32.mrf.mxu0
  %v3472 = vadd.f32 0.0, %v3471
  %v3473 = vpop.f32.mrf.mxu0
  %3474 = vdwg.mxu0
  %v3475 = vmul.f32 %v3448, 0.35355338
  %v3476 = vmul.f32 %v3472, 0.35355338
  %v3477 = vsel %vm2710, %v3475, -inf
  %3478 = vmax.xlane.f32.xlu0 %v3477
  %v3479 = vpop.xlane.xlu0 %3478
  %v3480 = vsel %vm2710, %v3476, -inf
  %3481 = vmax.xlane.f32.xlu0 %v3480
  %v3482 = vpop.xlane.xlu0 %3481
  %v3483 = vsub.f32 %v3475, %v3479
  %v3484 = vsub.f32 %v3476, %v3482
  %v3485 = vmul.f32 %v3483, 1.442695
  %v3486 = vpow.pop %v3485
  %v3487 = vmul.f32 %v3484, 1.442695
  %v3488 = vpow.pop %v3487
  %v3489 = vsel %vm2710, %v3486, 0.0
  %3490 = vadd.xlane.f32.xlu0 %v3489
  %v3491 = vpop.xlane.xlu0 %3490
  %v3492 = vsel %vm2710, %v3488, 0.0
  %3493 = vadd.xlane.f32.xlu0 %v3492
  %v3494 = vpop.xlane.xlu0 %3493
  %v3495 = vrcp.pop %v3491
  %v3496 = vrcp.pop %v3494
  %v3497 = vmul.f32 %v3486, %v3495
  %v3498 = vmul.f32 %v3488, %v3496
  %v3499 = vpack.c.bf16 %v3497, %v3497
  %v3500 = vpack.c.bf16 %v3498, %v3498
  %3501 = vst [vmem:[#allocation1] ss:$4 sm:$0xff] %v3371
  %s3502 = scalar_lea.vmem [#allocation1], 1
  %3503 = vst [vmem:[%s3502] ss:$4 sm:$0xff] %v3392
  %s3504 = scalar_lea.vmem [#allocation1], 2
  %3505 = vst [vmem:[%s3504] ss:$4 sm:$0xff] %v3393
  %s3506 = scalar_lea.vmem [#allocation1], 3
  %3507 = vst [vmem:[%s3506] ss:$4 sm:$0xff] %v3394
  %s3508 = scalar_lea.vmem [#allocation1], 32
  %3509 = vst [vmem:[%s3508] ss:$4 sm:$0xff] %v3373
  %v3510 = vld.sshfl [vmem:[#allocation1] sm:$0xff pattern:$0x73625140]
  %v3511 = vld.sshfl [vmem:[#allocation1 + $0x20] sm:$0xff pattern:$0x73625140]
  %3512 = vst [vmem:[#allocation1] ss:$4 sm:$0xff] %v3395
  %3513 = vst [vmem:[%s3502] ss:$4 sm:$0xff] %v3396
  %3514 = vst [vmem:[%s3504] ss:$4 sm:$0xff] %v3397
  %3515 = vst [vmem:[%s3506] ss:$4 sm:$0xff] %v3376
  %3516 = vst [vmem:[%s3508] ss:$4 sm:$0xff] %v3398
  %v3517 = vld.sshfl [vmem:[#allocation1] sm:$0xff pattern:$0x73625140]
  %v3518 = vld.sshfl [vmem:[#allocation1 + $0x20] sm:$0xff pattern:$0x73625140]
  %v3523 = vpack.c.bf16 %v3510, %v3510
  %v3524 = vpack.c.bf16 %v3511, %v3511
  %v3525 = vpack.c.bf16 %v3517, %v3517
  %v3526 = vpack.c.bf16 %v3518, %v3518
  %v3529 = vunpack.c.l.b16 %v3523
  %v3530 = vunpack.c.l.b16 %v3524
  %v3531 = vpack.c.b16 %v3530, %v3529
  %v3533 = vsel %vm2710, %v3499, 0
  %v3536 = vsel %vm2769, %v3531, 0
  %3538 = vmatpush.bf16.msra.mxu0 0
  %3539 = vmatpush.bf16.msra.mxu0 0
  %3540 = vmatpush.bf16.msra.mxu0 0
  %3541 = vmatpush.bf16.msra.mxu0 0
  %3542 = vmatpush.bf16.msra.mxu0 0
  %3543 = vmatpush.bf16.msra.mxu0 0
  %3544 = vmatpush.bf16.msra.mxu0 0
  %3545 = vmatpush.bf16.msra.mxu0 %v3536
  %3546 = vmatmul.bf16.gmra.mxu0 %v3533
  %v3547 = vpop.f32.mrf.mxu0
  %v3548 = vadd.f32 0.0, %v3547
  %v3549 = vpop.f32.mrf.mxu0
  %3550 = vdwg.mxu0
  %v3553 = vunpack.c.l.b16 %v3525
  %v3554 = vunpack.c.l.b16 %v3526
  %v3555 = vpack.c.b16 %v3554, %v3553
  %v3557 = vsel %vm2710, %v3500, 0
  %v3560 = vsel %vm2769, %v3555, 0
  %3562 = vmatpush.bf16.msra.mxu0 0
  %3563 = vmatpush.bf16.msra.mxu0 0
  %3564 = vmatpush.bf16.msra.mxu0 0
  %3565 = vmatpush.bf16.msra.mxu0 0
  %3566 = vmatpush.bf16.msra.mxu0 0
  %3567 = vmatpush.bf16.msra.mxu0 0
  %3568 = vmatpush.bf16.msra.mxu0 0
  %3569 = vmatpush.bf16.msra.mxu0 %v3560
  %3570 = vmatmul.bf16.gmra.mxu0 %v3557
  %v3571 = vpop.f32.mrf.mxu0
  %v3572 = vadd.f32 0.0, %v3571
  %v3573 = vpop.f32.mrf.mxu0
  %3574 = vdwg.mxu0
  %v3575 = vpack.c.bf16 %v3572, %v3548
  %s3576 = scalar_lea.vmem %s8, 8
  %v3577 = vld [vmem:[%s3576] sm:$0xf]
  %v3579 = vsel %vm224, %v3575, 0
  %v3582 = vsel %vm294, %v3577, 0
  %3584 = vmatpush.bf16.msra.mxu0 0
  %3585 = vmatpush.bf16.msra.mxu0 0
  %3586 = vmatpush.bf16.msra.mxu0 0
  %3587 = vmatpush.bf16.msra.mxu0 0
  %3588 = vmatpush.bf16.msra.mxu0 0
  %3589 = vmatpush.bf16.msra.mxu0 0
  %3590 = vmatpush.bf16.msra.mxu0 0
  %3591 = vmatpush.bf16.msra.mxu0 %v3582
  %3592 = vmatmul.bf16.gmra.mxu0 %v3579
  %v3593 = vpop.f32.mrf.mxu0
  %v3594 = vadd.f32 0.0, %v3593
  %v3595 = vpop.f32.mrf.mxu0
  %v3596 = vadd.f32 0.0, %v3595
  %3597 = vdwg.mxu0
  %v3598 = vadd.f32 %v3211, %v3594
  %v3599 = vadd.f32 %v3213, %v3596
  %s3600 = scalar_lea.vmem %s6, 96
  %v3601 = vld [vmem:[%s3600] sm:$0xf]
  %v3602 = vld [vmem:[%s3600 + $0x4] sm:$0xf]
  %v3603 = vld [vmem:[%s3600 + $0x8] sm:$0xf]
  %v3604 = vld [vmem:[%s3600 + $0xc] sm:$0xf]
  %v3605 = vld [vmem:[%s3600 + $0x10] sm:$0xf]
  %v3606 = vld [vmem:[%s3600 + $0x14] sm:$0xf]
  %v3607 = vld [vmem:[%s3600 + $0x18] sm:$0xf]
  %v3608 = vld [vmem:[%s3600 + $0x1c] sm:$0xf]
  %s3609 = scalar_lea.vmem %s7, 3
  %v3610 = vld [vmem:[%s3609] sm:$0x1]
  %v3612 = vperm.slane %v3610, 0
  %v3622 = vunpack.c.l.b16 %v3601
  %v3623 = vunpack.c.l.b16 %v3602
  %v3624 = vunpack.c.l.b16 %v3603
  %v3625 = vunpack.c.l.b16 %v3604
  %v3626 = vunpack.c.l.b16 %v3605
  %v3627 = vunpack.c.l.b16 %v3606
  %v3628 = vunpack.c.l.b16 %v3607
  %v3629 = vunpack.c.l.b16 %v3608
  %v3630 = vpack.c.b16 %v3623, %v3622
  %v3631 = vpack.c.b16 %v3625, %v3624
  %v3632 = vpack.c.b16 %v3627, %v3626
  %v3633 = vpack.c.b16 %v3629, %v3628
  %3638 = vmatpush.bf16.msra.mxu0 0
  %3639 = vmatpush.bf16.msra.mxu0 0
  %3640 = vmatpush.bf16.msra.mxu0 0
  %3641 = vmatpush.bf16.msra.mxu0 0
  %3642 = vmatpush.bf16.msra.mxu0 %v3633
  %3643 = vmatpush.bf16.msra.mxu0 %v3632
  %3644 = vmatpush.bf16.msra.mxu0 %v3631
  %3645 = vmatpush.bf16.msra.mxu0 %v3630
  %3646 = vmatmul.bf16.gmra.mxu0 %v2478
  %v3647 = vpop.f32.mrf.mxu0
  %v3648 = vadd.f32 %v3612, %v3647
  %v3649 = vpop.f32.mrf.mxu0
  %v3650 = vadd.f32 %v3612, %v3649
  %3651 = vdwg.mxu0
  %s3652 = scalar_lea.vmem %s6, 352
  %v3653 = vld [vmem:[%s3652] sm:$0xf]
  %v3654 = vld [vmem:[%s3652 + $0x4] sm:$0xf]
  %v3655 = vld [vmem:[%s3652 + $0x8] sm:$0xf]
  %v3656 = vld [vmem:[%s3652 + $0xc] sm:$0xf]
  %v3657 = vld [vmem:[%s3652 + $0x10] sm:$0xf]
  %v3658 = vld [vmem:[%s3652 + $0x14] sm:$0xf]
  %v3659 = vld [vmem:[%s3652 + $0x18] sm:$0xf]
  %v3660 = vld [vmem:[%s3652 + $0x1c] sm:$0xf]
  %s3661 = scalar_lea.vmem %s7, 11
  %v3662 = vld [vmem:[%s3661] sm:$0x1]
  %v3664 = vperm.slane %v3662, 0
  %v3674 = vunpack.c.l.b16 %v3653
  %v3675 = vunpack.c.l.b16 %v3654
  %v3676 = vunpack.c.l.b16 %v3655
  %v3677 = vunpack.c.l.b16 %v3656
  %v3678 = vunpack.c.l.b16 %v3657
  %v3679 = vunpack.c.l.b16 %v3658
  %v3680 = vunpack.c.l.b16 %v3659
  %v3681 = vunpack.c.l.b16 %v3660
  %v3682 = vpack.c.b16 %v3675, %v3674
  %v3683 = vpack.c.b16 %v3677, %v3676
  %v3684 = vpack.c.b16 %v3679, %v3678
  %v3685 = vpack.c.b16 %v3681, %v3680
  %3690 = vmatpush.bf16.msra.mxu0 0
  %3691 = vmatpush.bf16.msra.mxu0 0
  %3692 = vmatpush.bf16.msra.mxu0 0
  %3693 = vmatpush.bf16.msra.mxu0 0
  %3694 = vmatpush.bf16.msra.mxu0 %v3685
  %3695 = vmatpush.bf16.msra.mxu0 %v3684
  %3696 = vmatpush.bf16.msra.mxu0 %v3683
  %3697 = vmatpush.bf16.msra.mxu0 %v3682
  %3698 = vmatmul.bf16.gmra.mxu0 %v2533
  %v3699 = vpop.f32.mrf.mxu0
  %v3700 = vadd.f32 %v3664, %v3699
  %v3701 = vpop.f32.mrf.mxu0
  %v3702 = vadd.f32 %v3664, %v3701
  %3703 = vmatmul.bf16.gmra.mxu0 %v2536
  %v3704 = vpop.f32.mrf.mxu0
  %v3705 = vadd.f32 %v3664, %v3704
  %v3706 = vpop.f32.mrf.mxu0
  %3707 = vdwg.mxu0
  %s3708 = scalar_lea.vmem %s6, 608
  %v3709 = vld [vmem:[%s3708] sm:$0xf]
  %v3710 = vld [vmem:[%s3708 + $0x4] sm:$0xf]
  %v3711 = vld [vmem:[%s3708 + $0x8] sm:$0xf]
  %v3712 = vld [vmem:[%s3708 + $0xc] sm:$0xf]
  %v3713 = vld [vmem:[%s3708 + $0x10] sm:$0xf]
  %v3714 = vld [vmem:[%s3708 + $0x14] sm:$0xf]
  %v3715 = vld [vmem:[%s3708 + $0x18] sm:$0xf]
  %v3716 = vld [vmem:[%s3708 + $0x1c] sm:$0xf]
  %s3717 = scalar_lea.vmem %s7, 19
  %v3718 = vld [vmem:[%s3717] sm:$0x1]
  %v3720 = vperm.slane %v3718, 0
  %v3730 = vunpack.c.l.b16 %v3709
  %v3731 = vunpack.c.l.b16 %v3710
  %v3732 = vunpack.c.l.b16 %v3711
  %v3733 = vunpack.c.l.b16 %v3712
  %v3734 = vunpack.c.l.b16 %v3713
  %v3735 = vunpack.c.l.b16 %v3714
  %v3736 = vunpack.c.l.b16 %v3715
  %v3737 = vunpack.c.l.b16 %v3716
  %v3738 = vpack.c.b16 %v3731, %v3730
  %v3739 = vpack.c.b16 %v3733, %v3732
  %v3740 = vpack.c.b16 %v3735, %v3734
  %v3741 = vpack.c.b16 %v3737, %v3736
  %3746 = vmatpush.bf16.msra.mxu0 0
  %3747 = vmatpush.bf16.msra.mxu0 0
  %3748 = vmatpush.bf16.msra.mxu0 0
  %3749 = vmatpush.bf16.msra.mxu0 0
  %3750 = vmatpush.bf16.msra.mxu0 %v3741
  %3751 = vmatpush.bf16.msra.mxu0 %v3740
  %3752 = vmatpush.bf16.msra.mxu0 %v3739
  %3753 = vmatpush.bf16.msra.mxu0 %v3738
  %3754 = vmatmul.bf16.gmra.mxu0 %v2533
  %v3755 = vpop.f32.mrf.mxu0
  %v3756 = vadd.f32 %v3720, %v3755
  %v3757 = vpop.f32.mrf.mxu0
  %v3758 = vadd.f32 %v3720, %v3757
  %3759 = vmatmul.bf16.gmra.mxu0 %v2536
  %v3760 = vpop.f32.mrf.mxu0
  %v3761 = vadd.f32 %v3720, %v3760
  %v3762 = vpop.f32.mrf.mxu0
  %3763 = vdwg.mxu0
  %v3767 = vrot.slane %v3700, 2
  %v3768 = vrot.slane %v3700, 4
  %v3769 = vrot.slane %v3700, 6
  %v3770 = vrot.slane %v3702, 2
  %v3771 = vrot.slane %v3702, 4
  %v3772 = vrot.slane %v3702, 6
  %v3773 = vrot.slane %v3705, 2
  %v3777 = vrot.slane %v3756, 2
  %v3778 = vrot.slane %v3756, 4
  %v3779 = vrot.slane %v3756, 6
  %v3780 = vrot.slane %v3758, 2
  %v3781 = vrot.slane %v3758, 4
  %v3782 = vrot.slane %v3758, 6
  %v3783 = vrot.slane %v3761, 2
  %v3784 = vpack.c.bf16 %v3648, %v3648
  %v3785 = vpack.c.bf16 %v3650, %v3650
  %3786 = vst [vmem:[#allocation1] ss:$4 sm:$0xff] %v3700
  %s3787 = scalar_lea.vmem [#allocation1], 1
  %3788 = vst [vmem:[%s3787] ss:$4 sm:$0xff] %v3767
  %s3789 = scalar_lea.vmem [#allocation1], 2
  %3790 = vst [vmem:[%s3789] ss:$4 sm:$0xff] %v3768
  %s3791 = scalar_lea.vmem [#allocation1], 3
  %3792 = vst [vmem:[%s3791] ss:$4 sm:$0xff] %v3769
  %s3793 = scalar_lea.vmem [#allocation1], 32
  %3794 = vst [vmem:[%s3793] ss:$4 sm:$0xff] %v3702
  %v3795 = vld.sshfl [vmem:[#allocation1] sm:$0xff pattern:$0x73625140]
  %v3796 = vld.sshfl [vmem:[#allocation1 + $0x20] sm:$0xff pattern:$0x73625140]
  %3797 = vst [vmem:[#allocation1] ss:$4 sm:$0xff] %v3770
  %3798 = vst [vmem:[%s3787] ss:$4 sm:$0xff] %v3771
  %3799 = vst [vmem:[%s3789] ss:$4 sm:$0xff] %v3772
  %3800 = vst [vmem:[%s3791] ss:$4 sm:$0xff] %v3705
  %3801 = vst [vmem:[%s3793] ss:$4 sm:$0xff] %v3773
  %v3802 = vld.sshfl [vmem:[#allocation1] sm:$0xff pattern:$0x73625140]
  %v3803 = vld.sshfl [vmem:[#allocation1 + $0x20] sm:$0xff pattern:$0x73625140]
  %v3808 = vpack.c.bf16 %v3795, %v3795
  %v3809 = vpack.c.bf16 %v3796, %v3796
  %v3810 = vpack.c.bf16 %v3802, %v3802
  %v3811 = vpack.c.bf16 %v3803, %v3803
  %v3814 = vunpack.c.l.b16 %v3808
  %v3815 = vunpack.c.l.b16 %v3809
  %v3816 = vpack.c.b16 %v3815, %v3814
  %v3818 = vsel %vm224, %v3784, 0
  %v3821 = vsel %vm224, %v3816, 0
  %3823 = vmatpush.bf16.xpose.msra.mxu0 0
  %3824 = vmatpush.bf16.xpose.msra.mxu0 0
  %3825 = vmatpush.bf16.xpose.msra.mxu0 0
  %3826 = vmatpush.bf16.xpose.msra.mxu0 0
  %3827 = vmatpush.bf16.xpose.msra.mxu0 0
  %3828 = vmatpush.bf16.xpose.msra.mxu0 0
  %3829 = vmatpush.bf16.xpose.msra.mxu0 0
  %3830 = vmatpush.bf16.xpose.msra.mxu0 %v3821
  %3831 = vmatmul.bf16.gmra.mxu0 %v3818
  %v3832 = vpop.f32.mrf.mxu0
  %v3833 = vadd.f32 0.0, %v3832
  %v3834 = vpop.f32.mrf.mxu0
  %3835 = vdwg.mxu0
  %v3838 = vunpack.c.l.b16 %v3810
  %v3839 = vunpack.c.l.b16 %v3811
  %v3840 = vpack.c.b16 %v3839, %v3838
  %v3842 = vsel %vm224, %v3785, 0
  %v3845 = vsel %vm224, %v3840, 0
  %3847 = vmatpush.bf16.xpose.msra.mxu0 0
  %3848 = vmatpush.bf16.xpose.msra.mxu0 0
  %3849 = vmatpush.bf16.xpose.msra.mxu0 0
  %3850 = vmatpush.bf16.xpose.msra.mxu0 0
  %3851 = vmatpush.bf16.xpose.msra.mxu0 0
  %3852 = vmatpush.bf16.xpose.msra.mxu0 0
  %3853 = vmatpush.bf16.xpose.msra.mxu0 0
  %3854 = vmatpush.bf16.xpose.msra.mxu0 %v3845
  %3855 = vmatmul.bf16.gmra.mxu0 %v3842
  %v3856 = vpop.f32.mrf.mxu0
  %v3857 = vadd.f32 0.0, %v3856
  %v3858 = vpop.f32.mrf.mxu0
  %3859 = vdwg.mxu0
  %v3860 = vmul.f32 %v3833, 0.35355338
  %v3861 = vmul.f32 %v3857, 0.35355338
  %v3862 = vsel %vm2710, %v3860, -inf
  %3863 = vmax.xlane.f32.xlu0 %v3862
  %v3864 = vpop.xlane.xlu0 %3863
  %v3865 = vsel %vm2710, %v3861, -inf
  %3866 = vmax.xlane.f32.xlu0 %v3865
  %v3867 = vpop.xlane.xlu0 %3866
  %v3868 = vsub.f32 %v3860, %v3864
  %v3869 = vsub.f32 %v3861, %v3867
  %v3870 = vmul.f32 %v3868, 1.442695
  %v3871 = vpow.pop %v3870
  %v3872 = vmul.f32 %v3869, 1.442695
  %v3873 = vpow.pop %v3872
  %v3874 = vsel %vm2710, %v3871, 0.0
  %3875 = vadd.xlane.f32.xlu0 %v3874
  %v3876 = vpop.xlane.xlu0 %3875
  %v3877 = vsel %vm2710, %v3873, 0.0
  %3878 = vadd.xlane.f32.xlu0 %v3877
  %v3879 = vpop.xlane.xlu0 %3878
  %v3880 = vrcp.pop %v3876
  %v3881 = vrcp.pop %v3879
  %v3882 = vmul.f32 %v3871, %v3880
  %v3883 = vmul.f32 %v3873, %v3881
  %v3884 = vpack.c.bf16 %v3882, %v3882
  %v3885 = vpack.c.bf16 %v3883, %v3883
  %3886 = vst [vmem:[#allocation1] ss:$4 sm:$0xff] %v3756
  %s3887 = scalar_lea.vmem [#allocation1], 1
  %3888 = vst [vmem:[%s3887] ss:$4 sm:$0xff] %v3777
  %s3889 = scalar_lea.vmem [#allocation1], 2
  %3890 = vst [vmem:[%s3889] ss:$4 sm:$0xff] %v3778
  %s3891 = scalar_lea.vmem [#allocation1], 3
  %3892 = vst [vmem:[%s3891] ss:$4 sm:$0xff] %v3779
  %s3893 = scalar_lea.vmem [#allocation1], 32
  %3894 = vst [vmem:[%s3893] ss:$4 sm:$0xff] %v3758
  %v3895 = vld.sshfl [vmem:[#allocation1] sm:$0xff pattern:$0x73625140]
  %v3896 = vld.sshfl [vmem:[#allocation1 + $0x20] sm:$0xff pattern:$0x73625140]
  %3897 = vst [vmem:[#allocation1] ss:$4 sm:$0xff] %v3780
  %3898 = vst [vmem:[%s3887] ss:$4 sm:$0xff] %v3781
  %3899 = vst [vmem:[%s3889] ss:$4 sm:$0xff] %v3782
  %3900 = vst [vmem:[%s3891] ss:$4 sm:$0xff] %v3761
  %3901 = vst [vmem:[%s3893] ss:$4 sm:$0xff] %v3783
  %v3902 = vld.sshfl [vmem:[#allocation1] sm:$0xff pattern:$0x73625140]
  %v3903 = vld.sshfl [vmem:[#allocation1 + $0x20] sm:$0xff pattern:$0x73625140]
  %v3908 = vpack.c.bf16 %v3895, %v3895
  %v3909 = vpack.c.bf16 %v3896, %v3896
  %v3910 = vpack.c.bf16 %v3902, %v3902
  %v3911 = vpack.c.bf16 %v3903, %v3903
  %v3914 = vunpack.c.l.b16 %v3908
  %v3915 = vunpack.c.l.b16 %v3909
  %v3916 = vpack.c.b16 %v3915, %v3914
  %v3918 = vsel %vm2710, %v3884, 0
  %v3921 = vsel %vm2769, %v3916, 0
  %3923 = vmatpush.bf16.msra.mxu0 0
  %3924 = vmatpush.bf16.msra.mxu0 0
  %3925 = vmatpush.bf16.msra.mxu0 0
  %3926 = vmatpush.bf16.msra.mxu0 0
  %3927 = vmatpush.bf16.msra.mxu0 0
  %3928 = vmatpush.bf16.msra.mxu0 0
  %3929 = vmatpush.bf16.msra.mxu0 0
  %3930 = vmatpush.bf16.msra.mxu0 %v3921
  %3931 = vmatmul.bf16.gmra.mxu0 %v3918
  %v3932 = vpop.f32.mrf.mxu0
  %v3933 = vadd.f32 0.0, %v3932
  %v3934 = vpop.f32.mrf.mxu0
  %3935 = vdwg.mxu0
  %v3938 = vunpack.c.l.b16 %v3910
  %v3939 = vunpack.c.l.b16 %v3911
  %v3940 = vpack.c.b16 %v3939, %v3938
  %v3942 = vsel %vm2710, %v3885, 0
  %v3945 = vsel %vm2769, %v3940, 0
  %3947 = vmatpush.bf16.msra.mxu0 0
  %3948 = vmatpush.bf16.msra.mxu0 0
  %3949 = vmatpush.bf16.msra.mxu0 0
  %3950 = vmatpush.bf16.msra.mxu0 0
  %3951 = vmatpush.bf16.msra.mxu0 0
  %3952 = vmatpush.bf16.msra.mxu0 0
  %3953 = vmatpush.bf16.msra.mxu0 0
  %3954 = vmatpush.bf16.msra.mxu0 %v3945
  %3955 = vmatmul.bf16.gmra.mxu0 %v3942
  %v3956 = vpop.f32.mrf.mxu0
  %v3957 = vadd.f32 0.0, %v3956
  %v3958 = vpop.f32.mrf.mxu0
  %3959 = vdwg.mxu0
  %v3960 = vpack.c.bf16 %v3957, %v3933
  %s3961 = scalar_lea.vmem %s8, 12
  %v3962 = vld [vmem:[%s3961] sm:$0xf]
  %v3964 = vsel %vm224, %v3960, 0
  %v3967 = vsel %vm294, %v3962, 0
  %3969 = vmatpush.bf16.msra.mxu0 0
  %3970 = vmatpush.bf16.msra.mxu0 0
  %3971 = vmatpush.bf16.msra.mxu0 0
  %3972 = vmatpush.bf16.msra.mxu0 0
  %3973 = vmatpush.bf16.msra.mxu0 0
  %3974 = vmatpush.bf16.msra.mxu0 0
  %3975 = vmatpush.bf16.msra.mxu0 0
  %3976 = vmatpush.bf16.msra.mxu0 %v3967
  %3977 = vmatmul.bf16.gmra.mxu0 %v3964
  %v3978 = vpop.f32.mrf.mxu0
  %v3979 = vadd.f32 0.0, %v3978
  %v3980 = vpop.f32.mrf.mxu0
  %v3981 = vadd.f32 0.0, %v3980
  %3982 = vdwg.mxu0
  %v3983 = vadd.f32 %v3598, %v3979
  %v3984 = vadd.f32 %v3599, %v3981
  %s3985 = scalar_lea.vmem %s6, 128
  %v3986 = vld [vmem:[%s3985] sm:$0xf]
  %v3987 = vld [vmem:[%s3985 + $0x4] sm:$0xf]
  %v3988 = vld [vmem:[%s3985 + $0x8] sm:$0xf]
  %v3989 = vld [vmem:[%s3985 + $0xc] sm:$0xf]
  %v3990 = vld [vmem:[%s3985 + $0x10] sm:$0xf]
  %v3991 = vld [vmem:[%s3985 + $0x14] sm:$0xf]
  %v3992 = vld [vmem:[%s3985 + $0x18] sm:$0xf]
  %v3993 = vld [vmem:[%s3985 + $0x1c] sm:$0xf]
  %s3994 = scalar_lea.vmem %s7, 4
  %v3995 = vld [vmem:[%s3994] sm:$0x1]
  %v3997 = vperm.slane %v3995, 0
  %v4007 = vunpack.c.l.b16 %v3986
  %v4008 = vunpack.c.l.b16 %v3987
  %v4009 = vunpack.c.l.b16 %v3988
  %v4010 = vunpack.c.l.b16 %v3989
  %v4011 = vunpack.c.l.b16 %v3990
  %v4012 = vunpack.c.l.b16 %v3991
  %v4013 = vunpack.c.l.b16 %v3992
  %v4014 = vunpack.c.l.b16 %v3993
  %v4015 = vpack.c.b16 %v4008, %v4007
  %v4016 = vpack.c.b16 %v4010, %v4009
  %v4017 = vpack.c.b16 %v4012, %v4011
  %v4018 = vpack.c.b16 %v4014, %v4013
  %4023 = vmatpush.bf16.msra.mxu0 0
  %4024 = vmatpush.bf16.msra.mxu0 0
  %4025 = vmatpush.bf16.msra.mxu0 0
  %4026 = vmatpush.bf16.msra.mxu0 0
  %4027 = vmatpush.bf16.msra.mxu0 %v4018
  %4028 = vmatpush.bf16.msra.mxu0 %v4017
  %4029 = vmatpush.bf16.msra.mxu0 %v4016
  %4030 = vmatpush.bf16.msra.mxu0 %v4015
  %4031 = vmatmul.bf16.gmra.mxu0 %v2478
  %v4032 = vpop.f32.mrf.mxu0
  %v4033 = vadd.f32 %v3997, %v4032
  %v4034 = vpop.f32.mrf.mxu0
  %v4035 = vadd.f32 %v3997, %v4034
  %4036 = vdwg.mxu0
  %s4037 = scalar_lea.vmem %s6, 384
  %v4038 = vld [vmem:[%s4037] sm:$0xf]
  %v4039 = vld [vmem:[%s4037 + $0x4] sm:$0xf]
  %v4040 = vld [vmem:[%s4037 + $0x8] sm:$0xf]
  %v4041 = vld [vmem:[%s4037 + $0xc] sm:$0xf]
  %v4042 = vld [vmem:[%s4037 + $0x10] sm:$0xf]
  %v4043 = vld [vmem:[%s4037 + $0x14] sm:$0xf]
  %v4044 = vld [vmem:[%s4037 + $0x18] sm:$0xf]
  %v4045 = vld [vmem:[%s4037 + $0x1c] sm:$0xf]
  %s4046 = scalar_lea.vmem %s7, 12
  %v4047 = vld [vmem:[%s4046] sm:$0x1]
  %v4049 = vperm.slane %v4047, 0
  %v4059 = vunpack.c.l.b16 %v4038
  %v4060 = vunpack.c.l.b16 %v4039
  %v4061 = vunpack.c.l.b16 %v4040
  %v4062 = vunpack.c.l.b16 %v4041
  %v4063 = vunpack.c.l.b16 %v4042
  %v4064 = vunpack.c.l.b16 %v4043
  %v4065 = vunpack.c.l.b16 %v4044
  %v4066 = vunpack.c.l.b16 %v4045
  %v4067 = vpack.c.b16 %v4060, %v4059
  %v4068 = vpack.c.b16 %v4062, %v4061
  %v4069 = vpack.c.b16 %v4064, %v4063
  %v4070 = vpack.c.b16 %v4066, %v4065
  %4075 = vmatpush.bf16.msra.mxu0 0
  %4076 = vmatpush.bf16.msra.mxu0 0
  %4077 = vmatpush.bf16.msra.mxu0 0
  %4078 = vmatpush.bf16.msra.mxu0 0
  %4079 = vmatpush.bf16.msra.mxu0 %v4070
  %4080 = vmatpush.bf16.msra.mxu0 %v4069
  %4081 = vmatpush.bf16.msra.mxu0 %v4068
  %4082 = vmatpush.bf16.msra.mxu0 %v4067
  %4083 = vmatmul.bf16.gmra.mxu0 %v2533
  %v4084 = vpop.f32.mrf.mxu0
  %v4085 = vadd.f32 %v4049, %v4084
  %v4086 = vpop.f32.mrf.mxu0
  %v4087 = vadd.f32 %v4049, %v4086
  %4088 = vmatmul.bf16.gmra.mxu0 %v2536
  %v4089 = vpop.f32.mrf.mxu0
  %v4090 = vadd.f32 %v4049, %v4089
  %v4091 = vpop.f32.mrf.mxu0
  %4092 = vdwg.mxu0
  %s4093 = scalar_lea.vmem %s6, 640
  %v4094 = vld [vmem:[%s4093] sm:$0xf]
  %v4095 = vld [vmem:[%s4093 + $0x4] sm:$0xf]
  %v4096 = vld [vmem:[%s4093 + $0x8] sm:$0xf]
  %v4097 = vld [vmem:[%s4093 + $0xc] sm:$0xf]
  %v4098 = vld [vmem:[%s4093 + $0x10] sm:$0xf]
  %v4099 = vld [vmem:[%s4093 + $0x14] sm:$0xf]
  %v4100 = vld [vmem:[%s4093 + $0x18] sm:$0xf]
  %v4101 = vld [vmem:[%s4093 + $0x1c] sm:$0xf]
  %s4102 = scalar_lea.vmem %s7, 20
  %v4103 = vld [vmem:[%s4102] sm:$0x1]
  %v4105 = vperm.slane %v4103, 0
  %v4115 = vunpack.c.l.b16 %v4094
  %v4116 = vunpack.c.l.b16 %v4095
  %v4117 = vunpack.c.l.b16 %v4096
  %v4118 = vunpack.c.l.b16 %v4097
  %v4119 = vunpack.c.l.b16 %v4098
  %v4120 = vunpack.c.l.b16 %v4099
  %v4121 = vunpack.c.l.b16 %v4100
  %v4122 = vunpack.c.l.b16 %v4101
  %v4123 = vpack.c.b16 %v4116, %v4115
  %v4124 = vpack.c.b16 %v4118, %v4117
  %v4125 = vpack.c.b16 %v4120, %v4119
  %v4126 = vpack.c.b16 %v4122, %v4121
  %4131 = vmatpush.bf16.msra.mxu0 0
  %4132 = vmatpush.bf16.msra.mxu0 0
  %4133 = vmatpush.bf16.msra.mxu0 0
  %4134 = vmatpush.bf16.msra.mxu0 0
  %4135 = vmatpush.bf16.msra.mxu0 %v4126
  %4136 = vmatpush.bf16.msra.mxu0 %v4125
  %4137 = vmatpush.bf16.msra.mxu0 %v4124
  %4138 = vmatpush.bf16.msra.mxu0 %v4123
  %4139 = vmatmul.bf16.gmra.mxu0 %v2533
  %v4140 = vpop.f32.mrf.mxu0
  %v4141 = vadd.f32 %v4105, %v4140
  %v4142 = vpop.f32.mrf.mxu0
  %v4143 = vadd.f32 %v4105, %v4142
  %4144 = vmatmul.bf16.gmra.mxu0 %v2536
  %v4145 = vpop.f32.mrf.mxu0
  %v4146 = vadd.f32 %v4105, %v4145
  %v4147 = vpop.f32.mrf.mxu0
  %4148 = vdwg.mxu0
  %v4152 = vrot.slane %v4085, 2
  %v4153 = vrot.slane %v4085, 4
  %v4154 = vrot.slane %v4085, 6
  %v4155 = vrot.slane %v4087, 2
  %v4156 = vrot.slane %v4087, 4
  %v4157 = vrot.slane %v4087, 6
  %v4158 = vrot.slane %v4090, 2
  %v4162 = vrot.slane %v4141, 2
  %v4163 = vrot.slane %v4141, 4
  %v4164 = vrot.slane %v4141, 6
  %v4165 = vrot.slane %v4143, 2
  %v4166 = vrot.slane %v4143, 4
  %v4167 = vrot.slane %v4143, 6
  %v4168 = vrot.slane %v4146, 2
  %v4169 = vpack.c.bf16 %v4033, %v4033
  %v4170 = vpack.c.bf16 %v4035, %v4035
  %4171 = vst [vmem:[#allocation1] ss:$4 sm:$0xff] %v4085
  %s4172 = scalar_lea.vmem [#allocation1], 1
  %4173 = vst [vmem:[%s4172] ss:$4 sm:$0xff] %v4152
  %s4174 = scalar_lea.vmem [#allocation1], 2
  %4175 = vst [vmem:[%s4174] ss:$4 sm:$0xff] %v4153
  %s4176 = scalar_lea.vmem [#allocation1], 3
  %4177 = vst [vmem:[%s4176] ss:$4 sm:$0xff] %v4154
  %s4178 = scalar_lea.vmem [#allocation1], 32
  %4179 = vst [vmem:[%s4178] ss:$4 sm:$0xff] %v4087
  %v4180 = vld.sshfl [vmem:[#allocation1] sm:$0xff pattern:$0x73625140]
  %v4181 = vld.sshfl [vmem:[#allocation1 + $0x20] sm:$0xff pattern:$0x73625140]
  %4182 = vst [vmem:[#allocation1] ss:$4 sm:$0xff] %v4155
  %4183 = vst [vmem:[%s4172] ss:$4 sm:$0xff] %v4156
  %4184 = vst [vmem:[%s4174] ss:$4 sm:$0xff] %v4157
  %4185 = vst [vmem:[%s4176] ss:$4 sm:$0xff] %v4090
  %4186 = vst [vmem:[%s4178] ss:$4 sm:$0xff] %v4158
  %v4187 = vld.sshfl [vmem:[#allocation1] sm:$0xff pattern:$0x73625140]
  %v4188 = vld.sshfl [vmem:[#allocation1 + $0x20] sm:$0xff pattern:$0x73625140]
  %v4193 = vpack.c.bf16 %v4180, %v4180
  %v4194 = vpack.c.bf16 %v4181, %v4181
  %v4195 = vpack.c.bf16 %v4187, %v4187
  %v4196 = vpack.c.bf16 %v4188, %v4188
  %v4199 = vunpack.c.l.b16 %v4193
  %v4200 = vunpack.c.l.b16 %v4194
  %v4201 = vpack.c.b16 %v4200, %v4199
  %v4203 = vsel %vm224, %v4169, 0
  %v4206 = vsel %vm224, %v4201, 0
  %4208 = vmatpush.bf16.xpose.msra.mxu0 0
  %4209 = vmatpush.bf16.xpose.msra.mxu0 0
  %4210 = vmatpush.bf16.xpose.msra.mxu0 0
  %4211 = vmatpush.bf16.xpose.msra.mxu0 0
  %4212 = vmatpush.bf16.xpose.msra.mxu0 0
  %4213 = vmatpush.bf16.xpose.msra.mxu0 0
  %4214 = vmatpush.bf16.xpose.msra.mxu0 0
  %4215 = vmatpush.bf16.xpose.msra.mxu0 %v4206
  %4216 = vmatmul.bf16.gmra.mxu0 %v4203
  %v4217 = vpop.f32.mrf.mxu0
  %v4218 = vadd.f32 0.0, %v4217
  %v4219 = vpop.f32.mrf.mxu0
  %4220 = vdwg.mxu0
  %v4223 = vunpack.c.l.b16 %v4195
  %v4224 = vunpack.c.l.b16 %v4196
  %v4225 = vpack.c.b16 %v4224, %v4223
  %v4227 = vsel %vm224, %v4170, 0
  %v4230 = vsel %vm224, %v4225, 0
  %4232 = vmatpush.bf16.xpose.msra.mxu0 0
  %4233 = vmatpush.bf16.xpose.msra.mxu0 0
  %4234 = vmatpush.bf16.xpose.msra.mxu0 0
  %4235 = vmatpush.bf16.xpose.msra.mxu0 0
  %4236 = vmatpush.bf16.xpose.msra.mxu0 0
  %4237 = vmatpush.bf16.xpose.msra.mxu0 0
  %4238 = vmatpush.bf16.xpose.msra.mxu0 0
  %4239 = vmatpush.bf16.xpose.msra.mxu0 %v4230
  %4240 = vmatmul.bf16.gmra.mxu0 %v4227
  %v4241 = vpop.f32.mrf.mxu0
  %v4242 = vadd.f32 0.0, %v4241
  %v4243 = vpop.f32.mrf.mxu0
  %4244 = vdwg.mxu0
  %v4245 = vmul.f32 %v4218, 0.35355338
  %v4246 = vmul.f32 %v4242, 0.35355338
  %v4247 = vsel %vm2710, %v4245, -inf
  %4248 = vmax.xlane.f32.xlu0 %v4247
  %v4249 = vpop.xlane.xlu0 %4248
  %v4250 = vsel %vm2710, %v4246, -inf
  %4251 = vmax.xlane.f32.xlu0 %v4250
  %v4252 = vpop.xlane.xlu0 %4251
  %v4253 = vsub.f32 %v4245, %v4249
  %v4254 = vsub.f32 %v4246, %v4252
  %v4255 = vmul.f32 %v4253, 1.442695
  %v4256 = vpow.pop %v4255
  %v4257 = vmul.f32 %v4254, 1.442695
  %v4258 = vpow.pop %v4257
  %v4259 = vsel %vm2710, %v4256, 0.0
  %4260 = vadd.xlane.f32.xlu0 %v4259
  %v4261 = vpop.xlane.xlu0 %4260
  %v4262 = vsel %vm2710, %v4258, 0.0
  %4263 = vadd.xlane.f32.xlu0 %v4262
  %v4264 = vpop.xlane.xlu0 %4263
  %v4265 = vrcp.pop %v4261
  %v4266 = vrcp.pop %v4264
  %v4267 = vmul.f32 %v4256, %v4265
  %v4268 = vmul.f32 %v4258, %v4266
  %v4269 = vpack.c.bf16 %v4267, %v4267
  %v4270 = vpack.c.bf16 %v4268, %v4268
  %4271 = vst [vmem:[#allocation1] ss:$4 sm:$0xff] %v4141
  %s4272 = scalar_lea.vmem [#allocation1], 1
  %4273 = vst [vmem:[%s4272] ss:$4 sm:$0xff] %v4162
  %s4274 = scalar_lea.vmem [#allocation1], 2
  %4275 = vst [vmem:[%s4274] ss:$4 sm:$0xff] %v4163
  %s4276 = scalar_lea.vmem [#allocation1], 3
  %4277 = vst [vmem:[%s4276] ss:$4 sm:$0xff] %v4164
  %s4278 = scalar_lea.vmem [#allocation1], 32
  %4279 = vst [vmem:[%s4278] ss:$4 sm:$0xff] %v4143
  %v4280 = vld.sshfl [vmem:[#allocation1] sm:$0xff pattern:$0x73625140]
  %v4281 = vld.sshfl [vmem:[#allocation1 + $0x20] sm:$0xff pattern:$0x73625140]
  %4282 = vst [vmem:[#allocation1] ss:$4 sm:$0xff] %v4165
  %4283 = vst [vmem:[%s4272] ss:$4 sm:$0xff] %v4166
  %4284 = vst [vmem:[%s4274] ss:$4 sm:$0xff] %v4167
  %4285 = vst [vmem:[%s4276] ss:$4 sm:$0xff] %v4146
  %4286 = vst [vmem:[%s4278] ss:$4 sm:$0xff] %v4168
  %v4287 = vld.sshfl [vmem:[#allocation1] sm:$0xff pattern:$0x73625140]
  %v4288 = vld.sshfl [vmem:[#allocation1 + $0x20] sm:$0xff pattern:$0x73625140]
  %v4293 = vpack.c.bf16 %v4280, %v4280
  %v4294 = vpack.c.bf16 %v4281, %v4281
  %v4295 = vpack.c.bf16 %v4287, %v4287
  %v4296 = vpack.c.bf16 %v4288, %v4288
  %v4299 = vunpack.c.l.b16 %v4293
  %v4300 = vunpack.c.l.b16 %v4294
  %v4301 = vpack.c.b16 %v4300, %v4299
  %v4303 = vsel %vm2710, %v4269, 0
  %v4306 = vsel %vm2769, %v4301, 0
  %4308 = vmatpush.bf16.msra.mxu0 0
  %4309 = vmatpush.bf16.msra.mxu0 0
  %4310 = vmatpush.bf16.msra.mxu0 0
  %4311 = vmatpush.bf16.msra.mxu0 0
  %4312 = vmatpush.bf16.msra.mxu0 0
  %4313 = vmatpush.bf16.msra.mxu0 0
  %4314 = vmatpush.bf16.msra.mxu0 0
  %4315 = vmatpush.bf16.msra.mxu0 %v4306
  %4316 = vmatmul.bf16.gmra.mxu0 %v4303
  %v4317 = vpop.f32.mrf.mxu0
  %v4318 = vadd.f32 0.0, %v4317
  %v4319 = vpop.f32.mrf.mxu0
  %4320 = vdwg.mxu0
  %v4323 = vunpack.c.l.b16 %v4295
  %v4324 = vunpack.c.l.b16 %v4296
  %v4325 = vpack.c.b16 %v4324, %v4323
  %v4327 = vsel %vm2710, %v4270, 0
  %v4330 = vsel %vm2769, %v4325, 0
  %4332 = vmatpush.bf16.msra.mxu0 0
  %4333 = vmatpush.bf16.msra.mxu0 0
  %4334 = vmatpush.bf16.msra.mxu0 0
  %4335 = vmatpush.bf16.msra.mxu0 0
  %4336 = vmatpush.bf16.msra.mxu0 0
  %4337 = vmatpush.bf16.msra.mxu0 0
  %4338 = vmatpush.bf16.msra.mxu0 0
  %4339 = vmatpush.bf16.msra.mxu0 %v4330
  %4340 = vmatmul.bf16.gmra.mxu0 %v4327
  %v4341 = vpop.f32.mrf.mxu0
  %v4342 = vadd.f32 0.0, %v4341
  %v4343 = vpop.f32.mrf.mxu0
  %4344 = vdwg.mxu0
  %v4345 = vpack.c.bf16 %v4342, %v4318
  %s4346 = scalar_lea.vmem %s8, 16
  %v4347 = vld [vmem:[%s4346] sm:$0xf]
  %v4349 = vsel %vm224, %v4345, 0
  %v4352 = vsel %vm294, %v4347, 0
  %4354 = vmatpush.bf16.msra.mxu0 0
  %4355 = vmatpush.bf16.msra.mxu0 0
  %4356 = vmatpush.bf16.msra.mxu0 0
  %4357 = vmatpush.bf16.msra.mxu0 0
  %4358 = vmatpush.bf16.msra.mxu0 0
  %4359 = vmatpush.bf16.msra.mxu0 0
  %4360 = vmatpush.bf16.msra.mxu0 0
  %4361 = vmatpush.bf16.msra.mxu0 %v4352
  %4362 = vmatmul.bf16.gmra.mxu0 %v4349
  %v4363 = vpop.f32.mrf.mxu0
  %v4364 = vadd.f32 0.0, %v4363
  %v4365 = vpop.f32.mrf.mxu0
  %v4366 = vadd.f32 0.0, %v4365
  %4367 = vdwg.mxu0
  %v4368 = vadd.f32 %v3983, %v4364
  %v4369 = vadd.f32 %v3984, %v4366
  %s4370 = scalar_lea.vmem %s6, 160
  %v4371 = vld [vmem:[%s4370] sm:$0xf]
  %v4372 = vld [vmem:[%s4370 + $0x4] sm:$0xf]
  %v4373 = vld [vmem:[%s4370 + $0x8] sm:$0xf]
  %v4374 = vld [vmem:[%s4370 + $0xc] sm:$0xf]
  %v4375 = vld [vmem:[%s4370 + $0x10] sm:$0xf]
  %v4376 = vld [vmem:[%s4370 + $0x14] sm:$0xf]
  %v4377 = vld [vmem:[%s4370 + $0x18] sm:$0xf]
  %v4378 = vld [vmem:[%s4370 + $0x1c] sm:$0xf]
  %s4379 = scalar_lea.vmem %s7, 5
  %v4380 = vld [vmem:[%s4379] sm:$0x1]
  %v4382 = vperm.slane %v4380, 0
  %v4392 = vunpack.c.l.b16 %v4371
  %v4393 = vunpack.c.l.b16 %v4372
  %v4394 = vunpack.c.l.b16 %v4373
  %v4395 = vunpack.c.l.b16 %v4374
  %v4396 = vunpack.c.l.b16 %v4375
  %v4397 = vunpack.c.l.b16 %v4376
  %v4398 = vunpack.c.l.b16 %v4377
  %v4399 = vunpack.c.l.b16 %v4378
  %v4400 = vpack.c.b16 %v4393, %v4392
  %v4401 = vpack.c.b16 %v4395, %v4394
  %v4402 = vpack.c.b16 %v4397, %v4396
  %v4403 = vpack.c.b16 %v4399, %v4398
  %4408 = vmatpush.bf16.msra.mxu0 0
  %4409 = vmatpush.bf16.msra.mxu0 0
  %4410 = vmatpush.bf16.msra.mxu0 0
  %4411 = vmatpush.bf16.msra.mxu0 0
  %4412 = vmatpush.bf16.msra.mxu0 %v4403
  %4413 = vmatpush.bf16.msra.mxu0 %v4402
  %4414 = vmatpush.bf16.msra.mxu0 %v4401
  %4415 = vmatpush.bf16.msra.mxu0 %v4400
  %4416 = vmatmul.bf16.gmra.mxu0 %v2478
  %v4417 = vpop.f32.mrf.mxu0
  %v4418 = vadd.f32 %v4382, %v4417
  %v4419 = vpop.f32.mrf.mxu0
  %v4420 = vadd.f32 %v4382, %v4419
  %4421 = vdwg.mxu0
  %s4422 = scalar_lea.vmem %s6, 416
  %v4423 = vld [vmem:[%s4422] sm:$0xf]
  %v4424 = vld [vmem:[%s4422 + $0x4] sm:$0xf]
  %v4425 = vld [vmem:[%s4422 + $0x8] sm:$0xf]
  %v4426 = vld [vmem:[%s4422 + $0xc] sm:$0xf]
  %v4427 = vld [vmem:[%s4422 + $0x10] sm:$0xf]
  %v4428 = vld [vmem:[%s4422 + $0x14] sm:$0xf]
  %v4429 = vld [vmem:[%s4422 + $0x18] sm:$0xf]
  %v4430 = vld [vmem:[%s4422 + $0x1c] sm:$0xf]
  %s4431 = scalar_lea.vmem %s7, 13
  %v4432 = vld [vmem:[%s4431] sm:$0x1]
  %v4434 = vperm.slane %v4432, 0
  %v4444 = vunpack.c.l.b16 %v4423
  %v4445 = vunpack.c.l.b16 %v4424
  %v4446 = vunpack.c.l.b16 %v4425
  %v4447 = vunpack.c.l.b16 %v4426
  %v4448 = vunpack.c.l.b16 %v4427
  %v4449 = vunpack.c.l.b16 %v4428
  %v4450 = vunpack.c.l.b16 %v4429
  %v4451 = vunpack.c.l.b16 %v4430
  %v4452 = vpack.c.b16 %v4445, %v4444
  %v4453 = vpack.c.b16 %v4447, %v4446
  %v4454 = vpack.c.b16 %v4449, %v4448
  %v4455 = vpack.c.b16 %v4451, %v4450
  %4460 = vmatpush.bf16.msra.mxu0 0
  %4461 = vmatpush.bf16.msra.mxu0 0
  %4462 = vmatpush.bf16.msra.mxu0 0
  %4463 = vmatpush.bf16.msra.mxu0 0
  %4464 = vmatpush.bf16.msra.mxu0 %v4455
  %4465 = vmatpush.bf16.msra.mxu0 %v4454
  %4466 = vmatpush.bf16.msra.mxu0 %v4453
  %4467 = vmatpush.bf16.msra.mxu0 %v4452
  %4468 = vmatmul.bf16.gmra.mxu0 %v2533
  %v4469 = vpop.f32.mrf.mxu0
  %v4470 = vadd.f32 %v4434, %v4469
  %v4471 = vpop.f32.mrf.mxu0
  %v4472 = vadd.f32 %v4434, %v4471
  %4473 = vmatmul.bf16.gmra.mxu0 %v2536
  %v4474 = vpop.f32.mrf.mxu0
  %v4475 = vadd.f32 %v4434, %v4474
  %v4476 = vpop.f32.mrf.mxu0
  %4477 = vdwg.mxu0
  %s4478 = scalar_lea.vmem %s6, 672
  %v4479 = vld [vmem:[%s4478] sm:$0xf]
  %v4480 = vld [vmem:[%s4478 + $0x4] sm:$0xf]
  %v4481 = vld [vmem:[%s4478 + $0x8] sm:$0xf]
  %v4482 = vld [vmem:[%s4478 + $0xc] sm:$0xf]
  %v4483 = vld [vmem:[%s4478 + $0x10] sm:$0xf]
  %v4484 = vld [vmem:[%s4478 + $0x14] sm:$0xf]
  %v4485 = vld [vmem:[%s4478 + $0x18] sm:$0xf]
  %v4486 = vld [vmem:[%s4478 + $0x1c] sm:$0xf]
  %s4487 = scalar_lea.vmem %s7, 21
  %v4488 = vld [vmem:[%s4487] sm:$0x1]
  %v4490 = vperm.slane %v4488, 0
  %v4500 = vunpack.c.l.b16 %v4479
  %v4501 = vunpack.c.l.b16 %v4480
  %v4502 = vunpack.c.l.b16 %v4481
  %v4503 = vunpack.c.l.b16 %v4482
  %v4504 = vunpack.c.l.b16 %v4483
  %v4505 = vunpack.c.l.b16 %v4484
  %v4506 = vunpack.c.l.b16 %v4485
  %v4507 = vunpack.c.l.b16 %v4486
  %v4508 = vpack.c.b16 %v4501, %v4500
  %v4509 = vpack.c.b16 %v4503, %v4502
  %v4510 = vpack.c.b16 %v4505, %v4504
  %v4511 = vpack.c.b16 %v4507, %v4506
  %4516 = vmatpush.bf16.msra.mxu0 0
  %4517 = vmatpush.bf16.msra.mxu0 0
  %4518 = vmatpush.bf16.msra.mxu0 0
  %4519 = vmatpush.bf16.msra.mxu0 0
  %4520 = vmatpush.bf16.msra.mxu0 %v4511
  %4521 = vmatpush.bf16.msra.mxu0 %v4510
  %4522 = vmatpush.bf16.msra.mxu0 %v4509
  %4523 = vmatpush.bf16.msra.mxu0 %v4508
  %4524 = vmatmul.bf16.gmra.mxu0 %v2533
  %v4525 = vpop.f32.mrf.mxu0
  %v4526 = vadd.f32 %v4490, %v4525
  %v4527 = vpop.f32.mrf.mxu0
  %v4528 = vadd.f32 %v4490, %v4527
  %4529 = vmatmul.bf16.gmra.mxu0 %v2536
  %v4530 = vpop.f32.mrf.mxu0
  %v4531 = vadd.f32 %v4490, %v4530
  %v4532 = vpop.f32.mrf.mxu0
  %4533 = vdwg.mxu0
  %v4537 = vrot.slane %v4470, 2
  %v4538 = vrot.slane %v4470, 4
  %v4539 = vrot.slane %v4470, 6
  %v4540 = vrot.slane %v4472, 2
  %v4541 = vrot.slane %v4472, 4
  %v4542 = vrot.slane %v4472, 6
  %v4543 = vrot.slane %v4475, 2
  %v4547 = vrot.slane %v4526, 2
  %v4548 = vrot.slane %v4526, 4
  %v4549 = vrot.slane %v4526, 6
  %v4550 = vrot.slane %v4528, 2
  %v4551 = vrot.slane %v4528, 4
  %v4552 = vrot.slane %v4528, 6
  %v4553 = vrot.slane %v4531, 2
  %v4554 = vpack.c.bf16 %v4418, %v4418
  %v4555 = vpack.c.bf16 %v4420, %v4420
  %4556 = vst [vmem:[#allocation1] ss:$4 sm:$0xff] %v4470
  %s4557 = scalar_lea.vmem [#allocation1], 1
  %4558 = vst [vmem:[%s4557] ss:$4 sm:$0xff] %v4537
  %s4559 = scalar_lea.vmem [#allocation1], 2
  %4560 = vst [vmem:[%s4559] ss:$4 sm:$0xff] %v4538
  %s4561 = scalar_lea.vmem [#allocation1], 3
  %4562 = vst [vmem:[%s4561] ss:$4 sm:$0xff] %v4539
  %s4563 = scalar_lea.vmem [#allocation1], 32
  %4564 = vst [vmem:[%s4563] ss:$4 sm:$0xff] %v4472
  %v4565 = vld.sshfl [vmem:[#allocation1] sm:$0xff pattern:$0x73625140]
  %v4566 = vld.sshfl [vmem:[#allocation1 + $0x20] sm:$0xff pattern:$0x73625140]
  %4567 = vst [vmem:[#allocation1] ss:$4 sm:$0xff] %v4540
  %4568 = vst [vmem:[%s4557] ss:$4 sm:$0xff] %v4541
  %4569 = vst [vmem:[%s4559] ss:$4 sm:$0xff] %v4542
  %4570 = vst [vmem:[%s4561] ss:$4 sm:$0xff] %v4475
  %4571 = vst [vmem:[%s4563] ss:$4 sm:$0xff] %v4543
  %v4572 = vld.sshfl [vmem:[#allocation1] sm:$0xff pattern:$0x73625140]
  %v4573 = vld.sshfl [vmem:[#allocation1 + $0x20] sm:$0xff pattern:$0x73625140]
  %v4578 = vpack.c.bf16 %v4565, %v4565
  %v4579 = vpack.c.bf16 %v4566, %v4566
  %v4580 = vpack.c.bf16 %v4572, %v4572
  %v4581 = vpack.c.bf16 %v4573, %v4573
  %v4584 = vunpack.c.l.b16 %v4578
  %v4585 = vunpack.c.l.b16 %v4579
  %v4586 = vpack.c.b16 %v4585, %v4584
  %v4588 = vsel %vm224, %v4554, 0
  %v4591 = vsel %vm224, %v4586, 0
  %4593 = vmatpush.bf16.xpose.msra.mxu0 0
  %4594 = vmatpush.bf16.xpose.msra.mxu0 0
  %4595 = vmatpush.bf16.xpose.msra.mxu0 0
  %4596 = vmatpush.bf16.xpose.msra.mxu0 0
  %4597 = vmatpush.bf16.xpose.msra.mxu0 0
  %4598 = vmatpush.bf16.xpose.msra.mxu0 0
  %4599 = vmatpush.bf16.xpose.msra.mxu0 0
  %4600 = vmatpush.bf16.xpose.msra.mxu0 %v4591
  %4601 = vmatmul.bf16.gmra.mxu0 %v4588
  %v4602 = vpop.f32.mrf.mxu0
  %v4603 = vadd.f32 0.0, %v4602
  %v4604 = vpop.f32.mrf.mxu0
  %4605 = vdwg.mxu0
  %v4608 = vunpack.c.l.b16 %v4580
  %v4609 = vunpack.c.l.b16 %v4581
  %v4610 = vpack.c.b16 %v4609, %v4608
  %v4612 = vsel %vm224, %v4555, 0
  %v4615 = vsel %vm224, %v4610, 0
  %4617 = vmatpush.bf16.xpose.msra.mxu0 0
  %4618 = vmatpush.bf16.xpose.msra.mxu0 0
  %4619 = vmatpush.bf16.xpose.msra.mxu0 0
  %4620 = vmatpush.bf16.xpose.msra.mxu0 0
  %4621 = vmatpush.bf16.xpose.msra.mxu0 0
  %4622 = vmatpush.bf16.xpose.msra.mxu0 0
  %4623 = vmatpush.bf16.xpose.msra.mxu0 0
  %4624 = vmatpush.bf16.xpose.msra.mxu0 %v4615
  %4625 = vmatmul.bf16.gmra.mxu0 %v4612
  %v4626 = vpop.f32.mrf.mxu0
  %v4627 = vadd.f32 0.0, %v4626
  %v4628 = vpop.f32.mrf.mxu0
  %4629 = vdwg.mxu0
  %v4630 = vmul.f32 %v4603, 0.35355338
  %v4631 = vmul.f32 %v4627, 0.35355338
  %v4632 = vsel %vm2710, %v4630, -inf
  %4633 = vmax.xlane.f32.xlu0 %v4632
  %v4634 = vpop.xlane.xlu0 %4633
  %v4635 = vsel %vm2710, %v4631, -inf
  %4636 = vmax.xlane.f32.xlu0 %v4635
  %v4637 = vpop.xlane.xlu0 %4636
  %v4638 = vsub.f32 %v4630, %v4634
  %v4639 = vsub.f32 %v4631, %v4637
  %v4640 = vmul.f32 %v4638, 1.442695
  %v4641 = vpow.pop %v4640
  %v4642 = vmul.f32 %v4639, 1.442695
  %v4643 = vpow.pop %v4642
  %v4644 = vsel %vm2710, %v4641, 0.0
  %4645 = vadd.xlane.f32.xlu0 %v4644
  %v4646 = vpop.xlane.xlu0 %4645
  %v4647 = vsel %vm2710, %v4643, 0.0
  %4648 = vadd.xlane.f32.xlu0 %v4647
  %v4649 = vpop.xlane.xlu0 %4648
  %v4650 = vrcp.pop %v4646
  %v4651 = vrcp.pop %v4649
  %v4652 = vmul.f32 %v4641, %v4650
  %v4653 = vmul.f32 %v4643, %v4651
  %v4654 = vpack.c.bf16 %v4652, %v4652
  %v4655 = vpack.c.bf16 %v4653, %v4653
  %4656 = vst [vmem:[#allocation1] ss:$4 sm:$0xff] %v4526
  %s4657 = scalar_lea.vmem [#allocation1], 1
  %4658 = vst [vmem:[%s4657] ss:$4 sm:$0xff] %v4547
  %s4659 = scalar_lea.vmem [#allocation1], 2
  %4660 = vst [vmem:[%s4659] ss:$4 sm:$0xff] %v4548
  %s4661 = scalar_lea.vmem [#allocation1], 3
  %4662 = vst [vmem:[%s4661] ss:$4 sm:$0xff] %v4549
  %s4663 = scalar_lea.vmem [#allocation1], 32
  %4664 = vst [vmem:[%s4663] ss:$4 sm:$0xff] %v4528
  %v4665 = vld.sshfl [vmem:[#allocation1] sm:$0xff pattern:$0x73625140]
  %v4666 = vld.sshfl [vmem:[#allocation1 + $0x20] sm:$0xff pattern:$0x73625140]
  %4667 = vst [vmem:[#allocation1] ss:$4 sm:$0xff] %v4550
  %4668 = vst [vmem:[%s4657] ss:$4 sm:$0xff] %v4551
  %4669 = vst [vmem:[%s4659] ss:$4 sm:$0xff] %v4552
  %4670 = vst [vmem:[%s4661] ss:$4 sm:$0xff] %v4531
  %4671 = vst [vmem:[%s4663] ss:$4 sm:$0xff] %v4553
  %v4672 = vld.sshfl [vmem:[#allocation1] sm:$0xff pattern:$0x73625140]
  %v4673 = vld.sshfl [vmem:[#allocation1 + $0x20] sm:$0xff pattern:$0x73625140]
  %v4678 = vpack.c.bf16 %v4665, %v4665
  %v4679 = vpack.c.bf16 %v4666, %v4666
  %v4680 = vpack.c.bf16 %v4672, %v4672
  %v4681 = vpack.c.bf16 %v4673, %v4673
  %v4684 = vunpack.c.l.b16 %v4678
  %v4685 = vunpack.c.l.b16 %v4679
  %v4686 = vpack.c.b16 %v4685, %v4684
  %v4688 = vsel %vm2710, %v4654, 0
  %v4691 = vsel %vm2769, %v4686, 0
  %4693 = vmatpush.bf16.msra.mxu0 0
  %4694 = vmatpush.bf16.msra.mxu0 0
  %4695 = vmatpush.bf16.msra.mxu0 0
  %4696 = vmatpush.bf16.msra.mxu0 0
  %4697 = vmatpush.bf16.msra.mxu0 0
  %4698 = vmatpush.bf16.msra.mxu0 0
  %4699 = vmatpush.bf16.msra.mxu0 0
  %4700 = vmatpush.bf16.msra.mxu0 %v4691
  %4701 = vmatmul.bf16.gmra.mxu0 %v4688
  %v4702 = vpop.f32.mrf.mxu0
  %v4703 = vadd.f32 0.0, %v4702
  %v4704 = vpop.f32.mrf.mxu0
  %4705 = vdwg.mxu0
  %v4708 = vunpack.c.l.b16 %v4680
  %v4709 = vunpack.c.l.b16 %v4681
  %v4710 = vpack.c.b16 %v4709, %v4708
  %v4712 = vsel %vm2710, %v4655, 0
  %v4715 = vsel %vm2769, %v4710, 0
  %4717 = vmatpush.bf16.msra.mxu0 0
  %4718 = vmatpush.bf16.msra.mxu0 0
  %4719 = vmatpush.bf16.msra.mxu0 0
  %4720 = vmatpush.bf16.msra.mxu0 0
  %4721 = vmatpush.bf16.msra.mxu0 0
  %4722 = vmatpush.bf16.msra.mxu0 0
  %4723 = vmatpush.bf16.msra.mxu0 0
  %4724 = vmatpush.bf16.msra.mxu0 %v4715
  %4725 = vmatmul.bf16.gmra.mxu0 %v4712
  %v4726 = vpop.f32.mrf.mxu0
  %v4727 = vadd.f32 0.0, %v4726
  %v4728 = vpop.f32.mrf.mxu0
  %4729 = vdwg.mxu0
  %v4730 = vpack.c.bf16 %v4727, %v4703
  %s4731 = scalar_lea.vmem %s8, 20
  %v4732 = vld [vmem:[%s4731] sm:$0xf]
  %v4734 = vsel %vm224, %v4730, 0
  %v4737 = vsel %vm294, %v4732, 0
  %4739 = vmatpush.bf16.msra.mxu0 0
  %4740 = vmatpush.bf16.msra.mxu0 0
  %4741 = vmatpush.bf16.msra.mxu0 0
  %4742 = vmatpush.bf16.msra.mxu0 0
  %4743 = vmatpush.bf16.msra.mxu0 0
  %4744 = vmatpush.bf16.msra.mxu0 0
  %4745 = vmatpush.bf16.msra.mxu0 0
  %4746 = vmatpush.bf16.msra.mxu0 %v4737
  %4747 = vmatmul.bf16.gmra.mxu0 %v4734
  %v4748 = vpop.f32.mrf.mxu0
  %v4749 = vadd.f32 0.0, %v4748
  %v4750 = vpop.f32.mrf.mxu0
  %v4751 = vadd.f32 0.0, %v4750
  %4752 = vdwg.mxu0
  %v4753 = vadd.f32 %v4368, %v4749
  %v4754 = vadd.f32 %v4369, %v4751
  %s4755 = scalar_lea.vmem %s6, 192
  %v4756 = vld [vmem:[%s4755] sm:$0xf]
  %v4757 = vld [vmem:[%s4755 + $0x4] sm:$0xf]
  %v4758 = vld [vmem:[%s4755 + $0x8] sm:$0xf]
  %v4759 = vld [vmem:[%s4755 + $0xc] sm:$0xf]
  %v4760 = vld [vmem:[%s4755 + $0x10] sm:$0xf]
  %v4761 = vld [vmem:[%s4755 + $0x14] sm:$0xf]
  %v4762 = vld [vmem:[%s4755 + $0x18] sm:$0xf]
  %v4763 = vld [vmem:[%s4755 + $0x1c] sm:$0xf]
  %s4764 = scalar_lea.vmem %s7, 6
  %v4765 = vld [vmem:[%s4764] sm:$0x1]
  %v4767 = vperm.slane %v4765, 0
  %v4777 = vunpack.c.l.b16 %v4756
  %v4778 = vunpack.c.l.b16 %v4757
  %v4779 = vunpack.c.l.b16 %v4758
  %v4780 = vunpack.c.l.b16 %v4759
  %v4781 = vunpack.c.l.b16 %v4760
  %v4782 = vunpack.c.l.b16 %v4761
  %v4783 = vunpack.c.l.b16 %v4762
  %v4784 = vunpack.c.l.b16 %v4763
  %v4785 = vpack.c.b16 %v4778, %v4777
  %v4786 = vpack.c.b16 %v4780, %v4779
  %v4787 = vpack.c.b16 %v4782, %v4781
  %v4788 = vpack.c.b16 %v4784, %v4783
  %4793 = vmatpush.bf16.msra.mxu0 0
  %4794 = vmatpush.bf16.msra.mxu0 0
  %4795 = vmatpush.bf16.msra.mxu0 0
  %4796 = vmatpush.bf16.msra.mxu0 0
  %4797 = vmatpush.bf16.msra.mxu0 %v4788
  %4798 = vmatpush.bf16.msra.mxu0 %v4787
  %4799 = vmatpush.bf16.msra.mxu0 %v4786
  %4800 = vmatpush.bf16.msra.mxu0 %v4785
  %4801 = vmatmul.bf16.gmra.mxu0 %v2478
  %v4802 = vpop.f32.mrf.mxu0
  %v4803 = vadd.f32 %v4767, %v4802
  %v4804 = vpop.f32.mrf.mxu0
  %v4805 = vadd.f32 %v4767, %v4804
  %4806 = vdwg.mxu0
  %s4807 = scalar_lea.vmem %s6, 448
  %v4808 = vld [vmem:[%s4807] sm:$0xf]
  %v4809 = vld [vmem:[%s4807 + $0x4] sm:$0xf]
  %v4810 = vld [vmem:[%s4807 + $0x8] sm:$0xf]
  %v4811 = vld [vmem:[%s4807 + $0xc] sm:$0xf]
  %v4812 = vld [vmem:[%s4807 + $0x10] sm:$0xf]
  %v4813 = vld [vmem:[%s4807 + $0x14] sm:$0xf]
  %v4814 = vld [vmem:[%s4807 + $0x18] sm:$0xf]
  %v4815 = vld [vmem:[%s4807 + $0x1c] sm:$0xf]
  %s4816 = scalar_lea.vmem %s7, 14
  %v4817 = vld [vmem:[%s4816] sm:$0x1]
  %v4819 = vperm.slane %v4817, 0
  %v4829 = vunpack.c.l.b16 %v4808
  %v4830 = vunpack.c.l.b16 %v4809
  %v4831 = vunpack.c.l.b16 %v4810
  %v4832 = vunpack.c.l.b16 %v4811
  %v4833 = vunpack.c.l.b16 %v4812
  %v4834 = vunpack.c.l.b16 %v4813
  %v4835 = vunpack.c.l.b16 %v4814
  %v4836 = vunpack.c.l.b16 %v4815
  %v4837 = vpack.c.b16 %v4830, %v4829
  %v4838 = vpack.c.b16 %v4832, %v4831
  %v4839 = vpack.c.b16 %v4834, %v4833
  %v4840 = vpack.c.b16 %v4836, %v4835
  %4845 = vmatpush.bf16.msra.mxu0 0
  %4846 = vmatpush.bf16.msra.mxu0 0
  %4847 = vmatpush.bf16.msra.mxu0 0
  %4848 = vmatpush.bf16.msra.mxu0 0
  %4849 = vmatpush.bf16.msra.mxu0 %v4840
  %4850 = vmatpush.bf16.msra.mxu0 %v4839
  %4851 = vmatpush.bf16.msra.mxu0 %v4838
  %4852 = vmatpush.bf16.msra.mxu0 %v4837
  %4853 = vmatmul.bf16.gmra.mxu0 %v2533
  %v4854 = vpop.f32.mrf.mxu0
  %v4855 = vadd.f32 %v4819, %v4854
  %v4856 = vpop.f32.mrf.mxu0
  %v4857 = vadd.f32 %v4819, %v4856
  %4858 = vmatmul.bf16.gmra.mxu0 %v2536
  %v4859 = vpop.f32.mrf.mxu0
  %v4860 = vadd.f32 %v4819, %v4859
  %v4861 = vpop.f32.mrf.mxu0
  %4862 = vdwg.mxu0
  %s4863 = scalar_lea.vmem %s6, 704
  %v4864 = vld [vmem:[%s4863] sm:$0xf]
  %v4865 = vld [vmem:[%s4863 + $0x4] sm:$0xf]
  %v4866 = vld [vmem:[%s4863 + $0x8] sm:$0xf]
  %v4867 = vld [vmem:[%s4863 + $0xc] sm:$0xf]
  %v4868 = vld [vmem:[%s4863 + $0x10] sm:$0xf]
  %v4869 = vld [vmem:[%s4863 + $0x14] sm:$0xf]
  %v4870 = vld [vmem:[%s4863 + $0x18] sm:$0xf]
  %v4871 = vld [vmem:[%s4863 + $0x1c] sm:$0xf]
  %s4872 = scalar_lea.vmem %s7, 22
  %v4873 = vld [vmem:[%s4872] sm:$0x1]
  %v4875 = vperm.slane %v4873, 0
  %v4885 = vunpack.c.l.b16 %v4864
  %v4886 = vunpack.c.l.b16 %v4865
  %v4887 = vunpack.c.l.b16 %v4866
  %v4888 = vunpack.c.l.b16 %v4867
  %v4889 = vunpack.c.l.b16 %v4868
  %v4890 = vunpack.c.l.b16 %v4869
  %v4891 = vunpack.c.l.b16 %v4870
  %v4892 = vunpack.c.l.b16 %v4871
  %v4893 = vpack.c.b16 %v4886, %v4885
  %v4894 = vpack.c.b16 %v4888, %v4887
  %v4895 = vpack.c.b16 %v4890, %v4889
  %v4896 = vpack.c.b16 %v4892, %v4891
  %4901 = vmatpush.bf16.msra.mxu0 0
  %4902 = vmatpush.bf16.msra.mxu0 0
  %4903 = vmatpush.bf16.msra.mxu0 0
  %4904 = vmatpush.bf16.msra.mxu0 0
  %4905 = vmatpush.bf16.msra.mxu0 %v4896
  %4906 = vmatpush.bf16.msra.mxu0 %v4895
  %4907 = vmatpush.bf16.msra.mxu0 %v4894
  %4908 = vmatpush.bf16.msra.mxu0 %v4893
  %4909 = vmatmul.bf16.gmra.mxu0 %v2533
  %v4910 = vpop.f32.mrf.mxu0
  %v4911 = vadd.f32 %v4875, %v4910
  %v4912 = vpop.f32.mrf.mxu0
  %v4913 = vadd.f32 %v4875, %v4912
  %4914 = vmatmul.bf16.gmra.mxu0 %v2536
  %v4915 = vpop.f32.mrf.mxu0
  %v4916 = vadd.f32 %v4875, %v4915
  %v4917 = vpop.f32.mrf.mxu0
  %4918 = vdwg.mxu0
  %v4922 = vrot.slane %v4855, 2
  %v4923 = vrot.slane %v4855, 4
  %v4924 = vrot.slane %v4855, 6
  %v4925 = vrot.slane %v4857, 2
  %v4926 = vrot.slane %v4857, 4
  %v4927 = vrot.slane %v4857, 6
  %v4928 = vrot.slane %v4860, 2
  %v4932 = vrot.slane %v4911, 2
  %v4933 = vrot.slane %v4911, 4
  %v4934 = vrot.slane %v4911, 6
  %v4935 = vrot.slane %v4913, 2
  %v4936 = vrot.slane %v4913, 4
  %v4937 = vrot.slane %v4913, 6
  %v4938 = vrot.slane %v4916, 2
  %v4939 = vpack.c.bf16 %v4803, %v4803
  %v4940 = vpack.c.bf16 %v4805, %v4805
  %4941 = vst [vmem:[#allocation1] ss:$4 sm:$0xff] %v4855
  %s4942 = scalar_lea.vmem [#allocation1], 1
  %4943 = vst [vmem:[%s4942] ss:$4 sm:$0xff] %v4922
  %s4944 = scalar_lea.vmem [#allocation1], 2
  %4945 = vst [vmem:[%s4944] ss:$4 sm:$0xff] %v4923
  %s4946 = scalar_lea.vmem [#allocation1], 3
  %4947 = vst [vmem:[%s4946] ss:$4 sm:$0xff] %v4924
  %s4948 = scalar_lea.vmem [#allocation1], 32
  %4949 = vst [vmem:[%s4948] ss:$4 sm:$0xff] %v4857
  %v4950 = vld.sshfl [vmem:[#allocation1] sm:$0xff pattern:$0x73625140]
  %v4951 = vld.sshfl [vmem:[#allocation1 + $0x20] sm:$0xff pattern:$0x73625140]
  %4952 = vst [vmem:[#allocation1] ss:$4 sm:$0xff] %v4925
  %4953 = vst [vmem:[%s4942] ss:$4 sm:$0xff] %v4926
  %4954 = vst [vmem:[%s4944] ss:$4 sm:$0xff] %v4927
  %4955 = vst [vmem:[%s4946] ss:$4 sm:$0xff] %v4860
  %4956 = vst [vmem:[%s4948] ss:$4 sm:$0xff] %v4928
  %v4957 = vld.sshfl [vmem:[#allocation1] sm:$0xff pattern:$0x73625140]
  %v4958 = vld.sshfl [vmem:[#allocation1 + $0x20] sm:$0xff pattern:$0x73625140]
  %v4963 = vpack.c.bf16 %v4950, %v4950
  %v4964 = vpack.c.bf16 %v4951, %v4951
  %v4965 = vpack.c.bf16 %v4957, %v4957
  %v4966 = vpack.c.bf16 %v4958, %v4958
  %v4969 = vunpack.c.l.b16 %v4963
  %v4970 = vunpack.c.l.b16 %v4964
  %v4971 = vpack.c.b16 %v4970, %v4969
  %v4973 = vsel %vm224, %v4939, 0
  %v4976 = vsel %vm224, %v4971, 0
  %4978 = vmatpush.bf16.xpose.msra.mxu0 0
  %4979 = vmatpush.bf16.xpose.msra.mxu0 0
  %4980 = vmatpush.bf16.xpose.msra.mxu0 0
  %4981 = vmatpush.bf16.xpose.msra.mxu0 0
  %4982 = vmatpush.bf16.xpose.msra.mxu0 0
  %4983 = vmatpush.bf16.xpose.msra.mxu0 0
  %4984 = vmatpush.bf16.xpose.msra.mxu0 0
  %4985 = vmatpush.bf16.xpose.msra.mxu0 %v4976
  %4986 = vmatmul.bf16.gmra.mxu0 %v4973
  %v4987 = vpop.f32.mrf.mxu0
  %v4988 = vadd.f32 0.0, %v4987
  %v4989 = vpop.f32.mrf.mxu0
  %4990 = vdwg.mxu0
  %v4993 = vunpack.c.l.b16 %v4965
  %v4994 = vunpack.c.l.b16 %v4966
  %v4995 = vpack.c.b16 %v4994, %v4993
  %v4997 = vsel %vm224, %v4940, 0
  %v5000 = vsel %vm224, %v4995, 0
  %5002 = vmatpush.bf16.xpose.msra.mxu0 0
  %5003 = vmatpush.bf16.xpose.msra.mxu0 0
  %5004 = vmatpush.bf16.xpose.msra.mxu0 0
  %5005 = vmatpush.bf16.xpose.msra.mxu0 0
  %5006 = vmatpush.bf16.xpose.msra.mxu0 0
  %5007 = vmatpush.bf16.xpose.msra.mxu0 0
  %5008 = vmatpush.bf16.xpose.msra.mxu0 0
  %5009 = vmatpush.bf16.xpose.msra.mxu0 %v5000
  %5010 = vmatmul.bf16.gmra.mxu0 %v4997
  %v5011 = vpop.f32.mrf.mxu0
  %v5012 = vadd.f32 0.0, %v5011
  %v5013 = vpop.f32.mrf.mxu0
  %5014 = vdwg.mxu0
  %v5015 = vmul.f32 %v4988, 0.35355338
  %v5016 = vmul.f32 %v5012, 0.35355338
  %v5017 = vsel %vm2710, %v5015, -inf
  %5018 = vmax.xlane.f32.xlu0 %v5017
  %v5019 = vpop.xlane.xlu0 %5018
  %v5020 = vsel %vm2710, %v5016, -inf
  %5021 = vmax.xlane.f32.xlu0 %v5020
  %v5022 = vpop.xlane.xlu0 %5021
  %v5023 = vsub.f32 %v5015, %v5019
  %v5024 = vsub.f32 %v5016, %v5022
  %v5025 = vmul.f32 %v5023, 1.442695
  %v5026 = vpow.pop %v5025
  %v5027 = vmul.f32 %v5024, 1.442695
  %v5028 = vpow.pop %v5027
  %v5029 = vsel %vm2710, %v5026, 0.0
  %5030 = vadd.xlane.f32.xlu0 %v5029
  %v5031 = vpop.xlane.xlu0 %5030
  %v5032 = vsel %vm2710, %v5028, 0.0
  %5033 = vadd.xlane.f32.xlu0 %v5032
  %v5034 = vpop.xlane.xlu0 %5033
  %v5035 = vrcp.pop %v5031
  %v5036 = vrcp.pop %v5034
  %v5037 = vmul.f32 %v5026, %v5035
  %v5038 = vmul.f32 %v5028, %v5036
  %v5039 = vpack.c.bf16 %v5037, %v5037
  %v5040 = vpack.c.bf16 %v5038, %v5038
  %5041 = vst [vmem:[#allocation1] ss:$4 sm:$0xff] %v4911
  %s5042 = scalar_lea.vmem [#allocation1], 1
  %5043 = vst [vmem:[%s5042] ss:$4 sm:$0xff] %v4932
  %s5044 = scalar_lea.vmem [#allocation1], 2
  %5045 = vst [vmem:[%s5044] ss:$4 sm:$0xff] %v4933
  %s5046 = scalar_lea.vmem [#allocation1], 3
  %5047 = vst [vmem:[%s5046] ss:$4 sm:$0xff] %v4934
  %s5048 = scalar_lea.vmem [#allocation1], 32
  %5049 = vst [vmem:[%s5048] ss:$4 sm:$0xff] %v4913
  %v5050 = vld.sshfl [vmem:[#allocation1] sm:$0xff pattern:$0x73625140]
  %v5051 = vld.sshfl [vmem:[#allocation1 + $0x20] sm:$0xff pattern:$0x73625140]
  %5052 = vst [vmem:[#allocation1] ss:$4 sm:$0xff] %v4935
  %5053 = vst [vmem:[%s5042] ss:$4 sm:$0xff] %v4936
  %5054 = vst [vmem:[%s5044] ss:$4 sm:$0xff] %v4937
  %5055 = vst [vmem:[%s5046] ss:$4 sm:$0xff] %v4916
  %5056 = vst [vmem:[%s5048] ss:$4 sm:$0xff] %v4938
  %v5057 = vld.sshfl [vmem:[#allocation1] sm:$0xff pattern:$0x73625140]
  %v5058 = vld.sshfl [vmem:[#allocation1 + $0x20] sm:$0xff pattern:$0x73625140]
  %v5063 = vpack.c.bf16 %v5050, %v5050
  %v5064 = vpack.c.bf16 %v5051, %v5051
  %v5065 = vpack.c.bf16 %v5057, %v5057
  %v5066 = vpack.c.bf16 %v5058, %v5058
  %v5069 = vunpack.c.l.b16 %v5063
  %v5070 = vunpack.c.l.b16 %v5064
  %v5071 = vpack.c.b16 %v5070, %v5069
  %v5073 = vsel %vm2710, %v5039, 0
  %v5076 = vsel %vm2769, %v5071, 0
  %5078 = vmatpush.bf16.msra.mxu0 0
  %5079 = vmatpush.bf16.msra.mxu0 0
  %5080 = vmatpush.bf16.msra.mxu0 0
  %5081 = vmatpush.bf16.msra.mxu0 0
  %5082 = vmatpush.bf16.msra.mxu0 0
  %5083 = vmatpush.bf16.msra.mxu0 0
  %5084 = vmatpush.bf16.msra.mxu0 0
  %5085 = vmatpush.bf16.msra.mxu0 %v5076
  %5086 = vmatmul.bf16.gmra.mxu0 %v5073
  %v5087 = vpop.f32.mrf.mxu0
  %v5088 = vadd.f32 0.0, %v5087
  %v5089 = vpop.f32.mrf.mxu0
  %5090 = vdwg.mxu0
  %v5093 = vunpack.c.l.b16 %v5065
  %v5094 = vunpack.c.l.b16 %v5066
  %v5095 = vpack.c.b16 %v5094, %v5093
  %v5097 = vsel %vm2710, %v5040, 0
  %v5100 = vsel %vm2769, %v5095, 0
  %5102 = vmatpush.bf16.msra.mxu0 0
  %5103 = vmatpush.bf16.msra.mxu0 0
  %5104 = vmatpush.bf16.msra.mxu0 0
  %5105 = vmatpush.bf16.msra.mxu0 0
  %5106 = vmatpush.bf16.msra.mxu0 0
  %5107 = vmatpush.bf16.msra.mxu0 0
  %5108 = vmatpush.bf16.msra.mxu0 0
  %5109 = vmatpush.bf16.msra.mxu0 %v5100
  %5110 = vmatmul.bf16.gmra.mxu0 %v5097
  %v5111 = vpop.f32.mrf.mxu0
  %v5112 = vadd.f32 0.0, %v5111
  %v5113 = vpop.f32.mrf.mxu0
  %5114 = vdwg.mxu0
  %v5115 = vpack.c.bf16 %v5112, %v5088
  %s5116 = scalar_lea.vmem %s8, 24
  %v5117 = vld [vmem:[%s5116] sm:$0xf]
  %v5119 = vsel %vm224, %v5115, 0
  %v5122 = vsel %vm294, %v5117, 0
  %5124 = vmatpush.bf16.msra.mxu0 0
  %5125 = vmatpush.bf16.msra.mxu0 0
  %5126 = vmatpush.bf16.msra.mxu0 0
  %5127 = vmatpush.bf16.msra.mxu0 0
  %5128 = vmatpush.bf16.msra.mxu0 0
  %5129 = vmatpush.bf16.msra.mxu0 0
  %5130 = vmatpush.bf16.msra.mxu0 0
  %5131 = vmatpush.bf16.msra.mxu0 %v5122
  %5132 = vmatmul.bf16.gmra.mxu0 %v5119
  %v5133 = vpop.f32.mrf.mxu0
  %v5134 = vadd.f32 0.0, %v5133
  %v5135 = vpop.f32.mrf.mxu0
  %v5136 = vadd.f32 0.0, %v5135
  %5137 = vdwg.mxu0
  %v5138 = vadd.f32 %v4753, %v5134
  %v5139 = vadd.f32 %v4754, %v5136
  %s5140 = scalar_lea.vmem %s6, 224
  %v5141 = vld [vmem:[%s5140] sm:$0xf]
  %v5142 = vld [vmem:[%s5140 + $0x4] sm:$0xf]
  %v5143 = vld [vmem:[%s5140 + $0x8] sm:$0xf]
  %v5144 = vld [vmem:[%s5140 + $0xc] sm:$0xf]
  %v5145 = vld [vmem:[%s5140 + $0x10] sm:$0xf]
  %v5146 = vld [vmem:[%s5140 + $0x14] sm:$0xf]
  %v5147 = vld [vmem:[%s5140 + $0x18] sm:$0xf]
  %v5148 = vld [vmem:[%s5140 + $0x1c] sm:$0xf]
  %s5149 = scalar_lea.vmem %s7, 7
  %v5150 = vld [vmem:[%s5149] sm:$0x1]
  %v5152 = vperm.slane %v5150, 0
  %v5162 = vunpack.c.l.b16 %v5141
  %v5163 = vunpack.c.l.b16 %v5142
  %v5164 = vunpack.c.l.b16 %v5143
  %v5165 = vunpack.c.l.b16 %v5144
  %v5166 = vunpack.c.l.b16 %v5145
  %v5167 = vunpack.c.l.b16 %v5146
  %v5168 = vunpack.c.l.b16 %v5147
  %v5169 = vunpack.c.l.b16 %v5148
  %v5170 = vpack.c.b16 %v5163, %v5162
  %v5171 = vpack.c.b16 %v5165, %v5164
  %v5172 = vpack.c.b16 %v5167, %v5166
  %v5173 = vpack.c.b16 %v5169, %v5168
  %5178 = vmatpush.bf16.msra.mxu0 0
  %5179 = vmatpush.bf16.msra.mxu0 0
  %5180 = vmatpush.bf16.msra.mxu0 0
  %5181 = vmatpush.bf16.msra.mxu0 0
  %5182 = vmatpush.bf16.msra.mxu0 %v5173
  %5183 = vmatpush.bf16.msra.mxu0 %v5172
  %5184 = vmatpush.bf16.msra.mxu0 %v5171
  %5185 = vmatpush.bf16.msra.mxu0 %v5170
  %5186 = vmatmul.bf16.gmra.mxu0 %v2478
  %v5187 = vpop.f32.mrf.mxu0
  %v5188 = vadd.f32 %v5152, %v5187
  %v5189 = vpop.f32.mrf.mxu0
  %v5190 = vadd.f32 %v5152, %v5189
  %5191 = vdwg.mxu0
  %s5192 = scalar_lea.vmem %s6, 480
  %v5193 = vld [vmem:[%s5192] sm:$0xf]
  %v5194 = vld [vmem:[%s5192 + $0x4] sm:$0xf]
  %v5195 = vld [vmem:[%s5192 + $0x8] sm:$0xf]
  %v5196 = vld [vmem:[%s5192 + $0xc] sm:$0xf]
  %v5197 = vld [vmem:[%s5192 + $0x10] sm:$0xf]
  %v5198 = vld [vmem:[%s5192 + $0x14] sm:$0xf]
  %v5199 = vld [vmem:[%s5192 + $0x18] sm:$0xf]
  %v5200 = vld [vmem:[%s5192 + $0x1c] sm:$0xf]
  %s5201 = scalar_lea.vmem %s7, 15
  %v5202 = vld [vmem:[%s5201] sm:$0x1]
  %v5204 = vperm.slane %v5202, 0
  %v5214 = vunpack.c.l.b16 %v5193
  %v5215 = vunpack.c.l.b16 %v5194
  %v5216 = vunpack.c.l.b16 %v5195
  %v5217 = vunpack.c.l.b16 %v5196
  %v5218 = vunpack.c.l.b16 %v5197
  %v5219 = vunpack.c.l.b16 %v5198
  %v5220 = vunpack.c.l.b16 %v5199
  %v5221 = vunpack.c.l.b16 %v5200
  %v5222 = vpack.c.b16 %v5215, %v5214
  %v5223 = vpack.c.b16 %v5217, %v5216
  %v5224 = vpack.c.b16 %v5219, %v5218
  %v5225 = vpack.c.b16 %v5221, %v5220
  %5230 = vmatpush.bf16.msra.mxu0 0
  %5231 = vmatpush.bf16.msra.mxu0 0
  %5232 = vmatpush.bf16.msra.mxu0 0
  %5233 = vmatpush.bf16.msra.mxu0 0
  %5234 = vmatpush.bf16.msra.mxu0 %v5225
  %5235 = vmatpush.bf16.msra.mxu0 %v5224
  %5236 = vmatpush.bf16.msra.mxu0 %v5223
  %5237 = vmatpush.bf16.msra.mxu0 %v5222
  %5238 = vmatmul.bf16.gmra.mxu0 %v2533
  %v5239 = vpop.f32.mrf.mxu0
  %v5240 = vadd.f32 %v5204, %v5239
  %v5241 = vpop.f32.mrf.mxu0
  %v5242 = vadd.f32 %v5204, %v5241
  %5243 = vmatmul.bf16.gmra.mxu0 %v2536
  %v5244 = vpop.f32.mrf.mxu0
  %v5245 = vadd.f32 %v5204, %v5244
  %v5246 = vpop.f32.mrf.mxu0
  %5247 = vdwg.mxu0
  %s5248 = scalar_lea.vmem %s6, 736
  %v5249 = vld [vmem:[%s5248] sm:$0xf]
  %v5250 = vld [vmem:[%s5248 + $0x4] sm:$0xf]
  %v5251 = vld [vmem:[%s5248 + $0x8] sm:$0xf]
  %v5252 = vld [vmem:[%s5248 + $0xc] sm:$0xf]
  %v5253 = vld [vmem:[%s5248 + $0x10] sm:$0xf]
  %v5254 = vld [vmem:[%s5248 + $0x14] sm:$0xf]
  %v5255 = vld [vmem:[%s5248 + $0x18] sm:$0xf]
  %v5256 = vld [vmem:[%s5248 + $0x1c] sm:$0xf]
  %s5257 = scalar_lea.vmem %s7, 23
  %v5258 = vld [vmem:[%s5257] sm:$0x1]
  %v5260 = vperm.slane %v5258, 0
  %v5270 = vunpack.c.l.b16 %v5249
  %v5271 = vunpack.c.l.b16 %v5250
  %v5272 = vunpack.c.l.b16 %v5251
  %v5273 = vunpack.c.l.b16 %v5252
  %v5274 = vunpack.c.l.b16 %v5253
  %v5275 = vunpack.c.l.b16 %v5254
  %v5276 = vunpack.c.l.b16 %v5255
  %v5277 = vunpack.c.l.b16 %v5256
  %v5278 = vpack.c.b16 %v5271, %v5270
  %v5279 = vpack.c.b16 %v5273, %v5272
  %v5280 = vpack.c.b16 %v5275, %v5274
  %v5281 = vpack.c.b16 %v5277, %v5276
  %5286 = vmatpush.bf16.msra.mxu0 0
  %5287 = vmatpush.bf16.msra.mxu0 0
  %5288 = vmatpush.bf16.msra.mxu0 0
  %5289 = vmatpush.bf16.msra.mxu0 0
  %5290 = vmatpush.bf16.msra.mxu0 %v5281
  %5291 = vmatpush.bf16.msra.mxu0 %v5280
  %5292 = vmatpush.bf16.msra.mxu0 %v5279
  %5293 = vmatpush.bf16.msra.mxu0 %v5278
  %5294 = vmatmul.bf16.gmra.mxu0 %v2533
  %v5295 = vpop.f32.mrf.mxu0
  %v5296 = vadd.f32 %v5260, %v5295
  %v5297 = vpop.f32.mrf.mxu0
  %v5298 = vadd.f32 %v5260, %v5297
  %5299 = vmatmul.bf16.gmra.mxu0 %v2536
  %v5300 = vpop.f32.mrf.mxu0
  %v5301 = vadd.f32 %v5260, %v5300
  %v5302 = vpop.f32.mrf.mxu0
  %5303 = vdwg.mxu0
  %v5307 = vrot.slane %v5240, 2
  %v5308 = vrot.slane %v5240, 4
  %v5309 = vrot.slane %v5240, 6
  %v5310 = vrot.slane %v5242, 2
  %v5311 = vrot.slane %v5242, 4
  %v5312 = vrot.slane %v5242, 6
  %v5313 = vrot.slane %v5245, 2
  %v5317 = vrot.slane %v5296, 2
  %v5318 = vrot.slane %v5296, 4
  %v5319 = vrot.slane %v5296, 6
  %v5320 = vrot.slane %v5298, 2
  %v5321 = vrot.slane %v5298, 4
  %v5322 = vrot.slane %v5298, 6
  %v5323 = vrot.slane %v5301, 2
  %v5324 = vpack.c.bf16 %v5188, %v5188
  %v5325 = vpack.c.bf16 %v5190, %v5190
  %5326 = vst [vmem:[#allocation1] ss:$4 sm:$0xff] %v5240
  %s5327 = scalar_lea.vmem [#allocation1], 1
  %5328 = vst [vmem:[%s5327] ss:$4 sm:$0xff] %v5307
  %s5329 = scalar_lea.vmem [#allocation1], 2
  %5330 = vst [vmem:[%s5329] ss:$4 sm:$0xff] %v5308
  %s5331 = scalar_lea.vmem [#allocation1], 3
  %5332 = vst [vmem:[%s5331] ss:$4 sm:$0xff] %v5309
  %s5333 = scalar_lea.vmem [#allocation1], 32
  %5334 = vst [vmem:[%s5333] ss:$4 sm:$0xff] %v5242
  %v5335 = vld.sshfl [vmem:[#allocation1] sm:$0xff pattern:$0x73625140]
  %v5336 = vld.sshfl [vmem:[#allocation1 + $0x20] sm:$0xff pattern:$0x73625140]
  %5337 = vst [vmem:[#allocation1] ss:$4 sm:$0xff] %v5310
  %5338 = vst [vmem:[%s5327] ss:$4 sm:$0xff] %v5311
  %5339 = vst [vmem:[%s5329] ss:$4 sm:$0xff] %v5312
  %5340 = vst [vmem:[%s5331] ss:$4 sm:$0xff] %v5245
  %5341 = vst [vmem:[%s5333] ss:$4 sm:$0xff] %v5313
  %v5342 = vld.sshfl [vmem:[#allocation1] sm:$0xff pattern:$0x73625140]
  %v5343 = vld.sshfl [vmem:[#allocation1 + $0x20] sm:$0xff pattern:$0x73625140]
  %v5348 = vpack.c.bf16 %v5335, %v5335
  %v5349 = vpack.c.bf16 %v5336, %v5336
  %v5350 = vpack.c.bf16 %v5342, %v5342
  %v5351 = vpack.c.bf16 %v5343, %v5343
  %v5354 = vunpack.c.l.b16 %v5348
  %v5355 = vunpack.c.l.b16 %v5349
  %v5356 = vpack.c.b16 %v5355, %v5354
  %v5358 = vsel %vm224, %v5324, 0
  %v5361 = vsel %vm224, %v5356, 0
  %5363 = vmatpush.bf16.xpose.msra.mxu0 0
  %5364 = vmatpush.bf16.xpose.msra.mxu0 0
  %5365 = vmatpush.bf16.xpose.msra.mxu0 0
  %5366 = vmatpush.bf16.xpose.msra.mxu0 0
  %5367 = vmatpush.bf16.xpose.msra.mxu0 0
  %5368 = vmatpush.bf16.xpose.msra.mxu0 0
  %5369 = vmatpush.bf16.xpose.msra.mxu0 0
  %5370 = vmatpush.bf16.xpose.msra.mxu0 %v5361
  %5371 = vmatmul.bf16.gmra.mxu0 %v5358
  %v5372 = vpop.f32.mrf.mxu0
  %v5373 = vadd.f32 0.0, %v5372
  %v5374 = vpop.f32.mrf.mxu0
  %5375 = vdwg.mxu0
  %v5378 = vunpack.c.l.b16 %v5350
  %v5379 = vunpack.c.l.b16 %v5351
  %v5380 = vpack.c.b16 %v5379, %v5378
  %v5382 = vsel %vm224, %v5325, 0
  %v5385 = vsel %vm224, %v5380, 0
  %5387 = vmatpush.bf16.xpose.msra.mxu0 0
  %5388 = vmatpush.bf16.xpose.msra.mxu0 0
  %5389 = vmatpush.bf16.xpose.msra.mxu0 0
  %5390 = vmatpush.bf16.xpose.msra.mxu0 0
  %5391 = vmatpush.bf16.xpose.msra.mxu0 0
  %5392 = vmatpush.bf16.xpose.msra.mxu0 0
  %5393 = vmatpush.bf16.xpose.msra.mxu0 0
  %5394 = vmatpush.bf16.xpose.msra.mxu0 %v5385
  %5395 = vmatmul.bf16.gmra.mxu0 %v5382
  %v5396 = vpop.f32.mrf.mxu0
  %v5397 = vadd.f32 0.0, %v5396
  %v5398 = vpop.f32.mrf.mxu0
  %5399 = vdwg.mxu0
  %v5400 = vmul.f32 %v5373, 0.35355338
  %v5401 = vmul.f32 %v5397, 0.35355338
  %v5402 = vsel %vm2710, %v5400, -inf
  %5403 = vmax.xlane.f32.xlu0 %v5402
  %v5404 = vpop.xlane.xlu0 %5403
  %v5405 = vsel %vm2710, %v5401, -inf
  %5406 = vmax.xlane.f32.xlu0 %v5405
  %v5407 = vpop.xlane.xlu0 %5406
  %v5408 = vsub.f32 %v5400, %v5404
  %v5409 = vsub.f32 %v5401, %v5407
  %v5410 = vmul.f32 %v5408, 1.442695
  %v5411 = vpow.pop %v5410
  %v5412 = vmul.f32 %v5409, 1.442695
  %v5413 = vpow.pop %v5412
  %v5414 = vsel %vm2710, %v5411, 0.0
  %5415 = vadd.xlane.f32.xlu0 %v5414
  %v5416 = vpop.xlane.xlu0 %5415
  %v5417 = vsel %vm2710, %v5413, 0.0
  %5418 = vadd.xlane.f32.xlu0 %v5417
  %v5419 = vpop.xlane.xlu0 %5418
  %v5420 = vrcp.pop %v5416
  %v5421 = vrcp.pop %v5419
  %v5422 = vmul.f32 %v5411, %v5420
  %v5423 = vmul.f32 %v5413, %v5421
  %v5424 = vpack.c.bf16 %v5422, %v5422
  %v5425 = vpack.c.bf16 %v5423, %v5423
  %5426 = vst [vmem:[#allocation1] ss:$4 sm:$0xff] %v5296
  %s5427 = scalar_lea.vmem [#allocation1], 1
  %5428 = vst [vmem:[%s5427] ss:$4 sm:$0xff] %v5317
  %s5429 = scalar_lea.vmem [#allocation1], 2
  %5430 = vst [vmem:[%s5429] ss:$4 sm:$0xff] %v5318
  %s5431 = scalar_lea.vmem [#allocation1], 3
  %5432 = vst [vmem:[%s5431] ss:$4 sm:$0xff] %v5319
  %s5433 = scalar_lea.vmem [#allocation1], 32
  %5434 = vst [vmem:[%s5433] ss:$4 sm:$0xff] %v5298
  %v5435 = vld.sshfl [vmem:[#allocation1] sm:$0xff pattern:$0x73625140]
  %v5436 = vld.sshfl [vmem:[#allocation1 + $0x20] sm:$0xff pattern:$0x73625140]
  %5437 = vst [vmem:[#allocation1] ss:$4 sm:$0xff] %v5320
  %5438 = vst [vmem:[%s5427] ss:$4 sm:$0xff] %v5321
  %5439 = vst [vmem:[%s5429] ss:$4 sm:$0xff] %v5322
  %5440 = vst [vmem:[%s5431] ss:$4 sm:$0xff] %v5301
  %5441 = vst [vmem:[%s5433] ss:$4 sm:$0xff] %v5323
  %v5442 = vld.sshfl [vmem:[#allocation1] sm:$0xff pattern:$0x73625140]
  %v5443 = vld.sshfl [vmem:[#allocation1 + $0x20] sm:$0xff pattern:$0x73625140]
  %v5448 = vpack.c.bf16 %v5435, %v5435
  %v5449 = vpack.c.bf16 %v5436, %v5436
  %v5450 = vpack.c.bf16 %v5442, %v5442
  %v5451 = vpack.c.bf16 %v5443, %v5443
  %v5454 = vunpack.c.l.b16 %v5448
  %v5455 = vunpack.c.l.b16 %v5449
  %v5456 = vpack.c.b16 %v5455, %v5454
  %v5458 = vsel %vm2710, %v5424, 0
  %v5461 = vsel %vm2769, %v5456, 0
  %5463 = vmatpush.bf16.msra.mxu0 0
  %5464 = vmatpush.bf16.msra.mxu0 0
  %5465 = vmatpush.bf16.msra.mxu0 0
  %5466 = vmatpush.bf16.msra.mxu0 0
  %5467 = vmatpush.bf16.msra.mxu0 0
  %5468 = vmatpush.bf16.msra.mxu0 0
  %5469 = vmatpush.bf16.msra.mxu0 0
  %5470 = vmatpush.bf16.msra.mxu0 %v5461
  %5471 = vmatmul.bf16.gmra.mxu0 %v5458
  %v5472 = vpop.f32.mrf.mxu0
  %v5473 = vadd.f32 0.0, %v5472
  %v5474 = vpop.f32.mrf.mxu0
  %5475 = vdwg.mxu0
  %v5478 = vunpack.c.l.b16 %v5450
  %v5479 = vunpack.c.l.b16 %v5451
  %v5480 = vpack.c.b16 %v5479, %v5478
  %v5482 = vsel %vm2710, %v5425, 0
  %v5485 = vsel %vm2769, %v5480, 0
  %5487 = vmatpush.bf16.msra.mxu0 0
  %5488 = vmatpush.bf16.msra.mxu0 0
  %5489 = vmatpush.bf16.msra.mxu0 0
  %5490 = vmatpush.bf16.msra.mxu0 0
  %5491 = vmatpush.bf16.msra.mxu0 0
  %5492 = vmatpush.bf16.msra.mxu0 0
  %5493 = vmatpush.bf16.msra.mxu0 0
  %5494 = vmatpush.bf16.msra.mxu0 %v5485
  %5495 = vmatmul.bf16.gmra.mxu0 %v5482
  %v5496 = vpop.f32.mrf.mxu0
  %v5497 = vadd.f32 0.0, %v5496
  %v5498 = vpop.f32.mrf.mxu0
  %5499 = vdwg.mxu0
  %v5500 = vpack.c.bf16 %v5497, %v5473
  %s5501 = scalar_lea.vmem %s8, 28
  %v5502 = vld [vmem:[%s5501] sm:$0xf]
  %v5504 = vsel %vm224, %v5500, 0
  %v5507 = vsel %vm294, %v5502, 0
  %5509 = vmatpush.bf16.msra.mxu0 0
  %5510 = vmatpush.bf16.msra.mxu0 0
  %5511 = vmatpush.bf16.msra.mxu0 0
  %5512 = vmatpush.bf16.msra.mxu0 0
  %5513 = vmatpush.bf16.msra.mxu0 0
  %5514 = vmatpush.bf16.msra.mxu0 0
  %5515 = vmatpush.bf16.msra.mxu0 0
  %5516 = vmatpush.bf16.msra.mxu0 %v5507
  %5517 = vmatmul.bf16.gmra.mxu0 %v5504
  %v5518 = vpop.f32.mrf.mxu0
  %v5519 = vadd.f32 0.0, %v5518
  %v5520 = vpop.f32.mrf.mxu0
  %v5521 = vadd.f32 0.0, %v5520
  %5522 = vdwg.mxu0
  %v5523 = vadd.f32 %v5138, %v5519
  %v5524 = vadd.f32 %v5139, %v5521
  %v5525 = vld [vmem:[%s9] sm:$0x1]
  %v5527 = vperm.slane %v5525, 0
  %v5529 = vadd.f32 %v5523, %v5527
  %v5530 = vadd.f32 %v5524, %v5527
  %v5531 = vadd.f32 %v2436, %v5529
  %v5532 = vadd.f32 %v2437, %v5530
  %v5533 = vsel %vm98, %v5531, 0.0
  %5534 = vadd.xlane.f32.xlu0 %v5533
  %v5535 = vpop.xlane.xlu0 %5534
  %v5536 = vsel %vm98, %v5532, 0.0
  %5537 = vadd.xlane.f32.xlu0 %v5536
  %v5538 = vpop.xlane.xlu0 %5537
  %v5539 = vmul.f32 %v5535, %v2393
  %v5540 = vmul.f32 %v5538, %v2393
  %v5541 = vsub.f32 %v5531, %v5539
  %v5542 = vsub.f32 %v5532, %v5540
  %v5543 = vmul.f32 %v5541, %v5541
  %v5544 = vmul.f32 %v5542, %v5542
  %v5545 = vsel %vm98, %v5543, 0.0
  %5546 = vadd.xlane.f32.xlu0 %v5545
  %v5547 = vpop.xlane.xlu0 %5546
  %v5548 = vsel %vm98, %v5544, 0.0
  %5549 = vadd.xlane.f32.xlu0 %v5548
  %v5550 = vpop.xlane.xlu0 %5549
  %v5551 = vmul.f32 %v5547, %v2393
  %v5552 = vmul.f32 %v5550, %v2393
  %v5553 = vadd.f32 %v5551, 1e-05
  %v5554 = vadd.f32 %v5552, 1e-05
  %v5555 = vrsqrt.pop %v5553
  %v5556 = vmul.f32 %v5555, %v5553
  %v5557 = vmul.f32 %v5556, %v5555
  %v5558 = vmul.f32 0.5, %v5557
  %v5559 = vsub.f32 1.5, %v5558
  %v5560 = vmul.f32 %v5555, %v5559
  %vm5561 = vweird.f32 %v5553
  %vm5562 = vweird.f32 %v5555
  %vm5563 = vmor %vm5561, %vm5562
  %v5564 = vsel %vm5563, %v5555, %v5560
  %v5565 = vrsqrt.pop %v5554
  %v5566 = vmul.f32 %v5565, %v5554
  %v5567 = vmul.f32 %v5566, %v5565
  %v5568 = vmul.f32 0.5, %v5567
  %v5569 = vsub.f32 1.5, %v5568
  %v5570 = vmul.f32 %v5565, %v5569
  %vm5571 = vweird.f32 %v5554
  %vm5572 = vweird.f32 %v5565
  %vm5573 = vmor %vm5571, %vm5572
  %v5574 = vsel %vm5573, %v5565, %v5570
  %v5575 = vmul.f32 %v5541, %v5564
  %v5576 = vmul.f32 %v5542, %v5574
  %v5577 = vperm.slane %v59, 1
  %v5578 = vmul.f32 %v5575, %v5577
  %v5579 = vmul.f32 %v5576, %v5577
  %v5580 = vperm.slane %v60, 1
  %v5581 = vadd.f32 %v5578, %v5580
  %v5582 = vadd.f32 %v5579, %v5580
  %v5583 = vpack.c.bf16 %v5582, %v5581
  %v5584 = vld [vmem:[%s10] sm:$0xff]
  %v5585 = vld [vmem:[%s10 + $0x8] sm:$0xff]
  %v5586 = vld [vmem:[%s10 + $0x10] sm:$0xff]
  %v5587 = vld [vmem:[%s10 + $0x18] sm:$0xff]
  %v5588 = vld [vmem:[%s10 + $0x20] sm:$0xff]
  %v5589 = vld [vmem:[%s10 + $0x28] sm:$0xff]
  %v5590 = vld [vmem:[%s10 + $0x30] sm:$0xff]
  %v5591 = vld [vmem:[%s10 + $0x38] sm:$0xff]
  %v5592 = vld [vmem:[%s10 + $0x40] sm:$0xff]
  %v5593 = vld [vmem:[%s10 + $0x48] sm:$0xff]
  %v5594 = vld [vmem:[%s10 + $0x50] sm:$0xff]
  %v5595 = vld [vmem:[%s10 + $0x58] sm:$0xff]
  %v5596 = vld [vmem:[%s10 + $0x60] sm:$0xff]
  %v5597 = vld [vmem:[%s10 + $0x68] sm:$0xff]
  %v5598 = vld [vmem:[%s10 + $0x70] sm:$0xff]
  %v5599 = vld [vmem:[%s10 + $0x78] sm:$0xff]
  %v5600 = vld [vmem:[%s10 + $0x80] sm:$0xff]
  %v5601 = vld [vmem:[%s10 + $0x88] sm:$0xff]
  %v5602 = vld [vmem:[%s10 + $0x90] sm:$0xff]
  %v5603 = vld [vmem:[%s10 + $0x98] sm:$0xff]
  %v5604 = vld [vmem:[%s10 + $0xa0] sm:$0xff]
  %v5605 = vld [vmem:[%s10 + $0xa8] sm:$0xff]
  %v5606 = vld [vmem:[%s10 + $0xb0] sm:$0xff]
  %v5607 = vld [vmem:[%s10 + $0xb8] sm:$0xff]
  %v5608 = vld [vmem:[%s10 + $0xc0] sm:$0xff]
  %v5609 = vld [vmem:[%s10 + $0xc8] sm:$0xff]
  %v5610 = vld [vmem:[%s10 + $0xd0] sm:$0xff]
  %v5611 = vld [vmem:[%s10 + $0xd8] sm:$0xff]
  %v5612 = vld [vmem:[%s10 + $0xe0] sm:$0xff]
  %v5613 = vld [vmem:[%s10 + $0xe8] sm:$0xff]
  %v5614 = vld [vmem:[%s10 + $0xf0] sm:$0xff]
  %v5615 = vld [vmem:[%s10 + $0xf8] sm:$0xff]
  %v5616 = vld [vmem:[%s10 + $0x100] sm:$0xff]
  %v5617 = vld [vmem:[%s10 + $0x108] sm:$0xff]
  %v5618 = vld [vmem:[%s10 + $0x110] sm:$0xff]
  %v5619 = vld [vmem:[%s10 + $0x118] sm:$0xff]
  %v5620 = vld [vmem:[%s10 + $0x120] sm:$0xff]
  %v5621 = vld [vmem:[%s10 + $0x128] sm:$0xff]
  %v5622 = vld [vmem:[%s10 + $0x130] sm:$0xff]
  %v5623 = vld [vmem:[%s10 + $0x138] sm:$0xff]
  %v5624 = vld [vmem:[%s10 + $0x140] sm:$0xff]
  %v5625 = vld [vmem:[%s10 + $0x148] sm:$0xff]
  %v5626 = vld [vmem:[%s10 + $0x150] sm:$0xff]
  %v5627 = vld [vmem:[%s10 + $0x158] sm:$0xff]
  %v5628 = vld [vmem:[%s10 + $0x160] sm:$0xff]
  %v5629 = vld [vmem:[%s10 + $0x168] sm:$0xff]
  %v5630 = vld [vmem:[%s10 + $0x170] sm:$0xff]
  %v5631 = vld [vmem:[%s10 + $0x178] sm:$0xff]
  %v5632 = vld [vmem:[%s10 + $0x180] sm:$0xff]
  %v5633 = vld [vmem:[%s10 + $0x188] sm:$0xff]
  %v5634 = vld [vmem:[%s10 + $0x190] sm:$0xff]
  %v5635 = vld [vmem:[%s10 + $0x198] sm:$0xff]
  %v5636 = vld [vmem:[%s10 + $0x1a0] sm:$0xff]
  %v5637 = vld [vmem:[%s10 + $0x1a8] sm:$0xff]
  %v5638 = vld [vmem:[%s10 + $0x1b0] sm:$0xff]
  %v5639 = vld [vmem:[%s10 + $0x1b8] sm:$0xff]
  %v5640 = vld [vmem:[%s10 + $0x1c0] sm:$0xff]
  %v5641 = vld [vmem:[%s10 + $0x1c8] sm:$0xff]
  %v5642 = vld [vmem:[%s10 + $0x1d0] sm:$0xff]
  %v5643 = vld [vmem:[%s10 + $0x1d8] sm:$0xff]
  %v5644 = vld [vmem:[%s10 + $0x1e0] sm:$0xff]
  %v5645 = vld [vmem:[%s10 + $0x1e8] sm:$0xff]
  %v5646 = vld [vmem:[%s10 + $0x1f0] sm:$0xff]
  %v5647 = vld [vmem:[%s10 + $0x1f8] sm:$0xff]
  %v5648 = vld [vmem:[%s11] sm:$0xff]
  %v5649 = vld [vmem:[%s11 + $0x8] sm:$0xff]
  %v5652 = vperm.slane %v5648, 0
  %v5653 = vperm.slane %v5648, 1
  %v5654 = vperm.slane %v5648, 2
  %v5655 = vperm.slane %v5648, 3
  %v5656 = vperm.slane %v5648, 4
  %v5657 = vperm.slane %v5648, 5
  %v5658 = vperm.slane %v5648, 6
  %v5659 = vperm.slane %v5648, 7
  %v5660 = vperm.slane %v5649, 0
  %v5661 = vperm.slane %v5649, 1
  %v5662 = vperm.slane %v5649, 2
  %v5663 = vperm.slane %v5649, 3
  %v5664 = vperm.slane %v5649, 4
  %v5665 = vperm.slane %v5649, 5
  %v5666 = vperm.slane %v5649, 6
  %v5667 = vperm.slane %v5649, 7
  %v5748 = vunpack.c.l.b16 %v5584
  %v5749 = vunpack.c.h.b16 %v5584
  %v5750 = vunpack.c.l.b16 %v5585
  %v5751 = vunpack.c.h.b16 %v5585
  %v5752 = vunpack.c.l.b16 %v5586
  %v5753 = vunpack.c.h.b16 %v5586
  %v5754 = vunpack.c.l.b16 %v5587
  %v5755 = vunpack.c.h.b16 %v5587
  %v5756 = vunpack.c.l.b16 %v5588
  %v5757 = vunpack.c.h.b16 %v5588
  %v5758 = vunpack.c.l.b16 %v5589
  %v5759 = vunpack.c.h.b16 %v5589
  %v5760 = vunpack.c.l.b16 %v5590
  %v5761 = vunpack.c.h.b16 %v5590
  %v5762 = vunpack.c.l.b16 %v5591
  %v5763 = vunpack.c.h.b16 %v5591
  %v5764 = vunpack.c.l.b16 %v5592
  %v5765 = vunpack.c.h.b16 %v5592
  %v5766 = vunpack.c.l.b16 %v5593
  %v5767 = vunpack.c.h.b16 %v5593
  %v5768 = vunpack.c.l.b16 %v5594
  %v5769 = vunpack.c.h.b16 %v5594
  %v5770 = vunpack.c.l.b16 %v5595
  %v5771 = vunpack.c.h.b16 %v5595
  %v5772 = vunpack.c.l.b16 %v5596
  %v5773 = vunpack.c.h.b16 %v5596
  %v5774 = vunpack.c.l.b16 %v5597
  %v5775 = vunpack.c.h.b16 %v5597
  %v5776 = vunpack.c.l.b16 %v5598
  %v5777 = vunpack.c.h.b16 %v5598
  %v5778 = vunpack.c.l.b16 %v5599
  %v5779 = vunpack.c.h.b16 %v5599
  %v5780 = vunpack.c.l.b16 %v5600
  %v5781 = vunpack.c.h.b16 %v5600
  %v5782 = vunpack.c.l.b16 %v5601
  %v5783 = vunpack.c.h.b16 %v5601
  %v5784 = vunpack.c.l.b16 %v5602
  %v5785 = vunpack.c.h.b16 %v5602
  %v5786 = vunpack.c.l.b16 %v5603
  %v5787 = vunpack.c.h.b16 %v5603
  %v5788 = vunpack.c.l.b16 %v5604
  %v5789 = vunpack.c.h.b16 %v5604
  %v5790 = vunpack.c.l.b16 %v5605
  %v5791 = vunpack.c.h.b16 %v5605
  %v5792 = vunpack.c.l.b16 %v5606
  %v5793 = vunpack.c.h.b16 %v5606
  %v5794 = vunpack.c.l.b16 %v5607
  %v5795 = vunpack.c.h.b16 %v5607
  %v5796 = vunpack.c.l.b16 %v5608
  %v5797 = vunpack.c.h.b16 %v5608
  %v5798 = vunpack.c.l.b16 %v5609
  %v5799 = vunpack.c.h.b16 %v5609
  %v5800 = vunpack.c.l.b16 %v5610
  %v5801 = vunpack.c.h.b16 %v5610
  %v5802 = vunpack.c.l.b16 %v5611
  %v5803 = vunpack.c.h.b16 %v5611
  %v5804 = vunpack.c.l.b16 %v5612
  %v5805 = vunpack.c.h.b16 %v5612
  %v5806 = vunpack.c.l.b16 %v5613
  %v5807 = vunpack.c.h.b16 %v5613
  %v5808 = vunpack.c.l.b16 %v5614
  %v5809 = vunpack.c.h.b16 %v5614
  %v5810 = vunpack.c.l.b16 %v5615
  %v5811 = vunpack.c.h.b16 %v5615
  %v5812 = vunpack.c.l.b16 %v5616
  %v5813 = vunpack.c.h.b16 %v5616
  %v5814 = vunpack.c.l.b16 %v5617
  %v5815 = vunpack.c.h.b16 %v5617
  %v5816 = vunpack.c.l.b16 %v5618
  %v5817 = vunpack.c.h.b16 %v5618
  %v5818 = vunpack.c.l.b16 %v5619
  %v5819 = vunpack.c.h.b16 %v5619
  %v5820 = vunpack.c.l.b16 %v5620
  %v5821 = vunpack.c.h.b16 %v5620
  %v5822 = vunpack.c.l.b16 %v5621
  %v5823 = vunpack.c.h.b16 %v5621
  %v5824 = vunpack.c.l.b16 %v5622
  %v5825 = vunpack.c.h.b16 %v5622
  %v5826 = vunpack.c.l.b16 %v5623
  %v5827 = vunpack.c.h.b16 %v5623
  %v5828 = vunpack.c.l.b16 %v5624
  %v5829 = vunpack.c.h.b16 %v5624
  %v5830 = vunpack.c.l.b16 %v5625
  %v5831 = vunpack.c.h.b16 %v5625
  %v5832 = vunpack.c.l.b16 %v5626
  %v5833 = vunpack.c.h.b16 %v5626
  %v5834 = vunpack.c.l.b16 %v5627
  %v5835 = vunpack.c.h.b16 %v5627
  %v5836 = vunpack.c.l.b16 %v5628
  %v5837 = vunpack.c.h.b16 %v5628
  %v5838 = vunpack.c.l.b16 %v5629
  %v5839 = vunpack.c.h.b16 %v5629
  %v5840 = vunpack.c.l.b16 %v5630
  %v5841 = vunpack.c.h.b16 %v5630
  %v5842 = vunpack.c.l.b16 %v5631
  %v5843 = vunpack.c.h.b16 %v5631
  %v5844 = vunpack.c.l.b16 %v5632
  %v5845 = vunpack.c.h.b16 %v5632
  %v5846 = vunpack.c.l.b16 %v5633
  %v5847 = vunpack.c.h.b16 %v5633
  %v5848 = vunpack.c.l.b16 %v5634
  %v5849 = vunpack.c.h.b16 %v5634
  %v5850 = vunpack.c.l.b16 %v5635
  %v5851 = vunpack.c.h.b16 %v5635
  %v5852 = vunpack.c.l.b16 %v5636
  %v5853 = vunpack.c.h.b16 %v5636
  %v5854 = vunpack.c.l.b16 %v5637
  %v5855 = vunpack.c.h.b16 %v5637
  %v5856 = vunpack.c.l.b16 %v5638
  %v5857 = vunpack.c.h.b16 %v5638
  %v5858 = vunpack.c.l.b16 %v5639
  %v5859 = vunpack.c.h.b16 %v5639
  %v5860 = vunpack.c.l.b16 %v5640
  %v5861 = vunpack.c.h.b16 %v5640
  %v5862 = vunpack.c.l.b16 %v5641
  %v5863 = vunpack.c.h.b16 %v5641
  %v5864 = vunpack.c.l.b16 %v5642
  %v5865 = vunpack.c.h.b16 %v5642
  %v5866 = vunpack.c.l.b16 %v5643
  %v5867 = vunpack.c.h.b16 %v5643
  %v5868 = vunpack.c.l.b16 %v5644
  %v5869 = vunpack.c.h.b16 %v5644
  %v5870 = vunpack.c.l.b16 %v5645
  %v5871 = vunpack.c.h.b16 %v5645
  %v5872 = vunpack.c.l.b16 %v5646
  %v5873 = vunpack.c.h.b16 %v5646
  %v5874 = vunpack.c.l.b16 %v5647
  %v5875 = vunpack.c.h.b16 %v5647
  %v5876 = vpack.c.b16 %v5764, %v5748
  %v5877 = vpack.c.b16 %v5765, %v5749
  %v5878 = vpack.c.b16 %v5766, %v5750
  %v5879 = vpack.c.b16 %v5767, %v5751
  %v5880 = vpack.c.b16 %v5768, %v5752
  %v5881 = vpack.c.b16 %v5769, %v5753
  %v5882 = vpack.c.b16 %v5770, %v5754
  %v5883 = vpack.c.b16 %v5771, %v5755
  %v5884 = vpack.c.b16 %v5772, %v5756
  %v5885 = vpack.c.b16 %v5773, %v5757
  %v5886 = vpack.c.b16 %v5774, %v5758
  %v5887 = vpack.c.b16 %v5775, %v5759
  %v5888 = vpack.c.b16 %v5776, %v5760
  %v5889 = vpack.c.b16 %v5777, %v5761
  %v5890 = vpack.c.b16 %v5778, %v5762
  %v5891 = vpack.c.b16 %v5779, %v5763
  %v5892 = vpack.c.b16 %v5796, %v5780
  %v5893 = vpack.c.b16 %v5797, %v5781
  %v5894 = vpack.c.b16 %v5798, %v5782
  %v5895 = vpack.c.b16 %v5799, %v5783
  %v5896 = vpack.c.b16 %v5800, %v5784
  %v5897 = vpack.c.b16 %v5801, %v5785
  %v5898 = vpack.c.b16 %v5802, %v5786
  %v5899 = vpack.c.b16 %v5803, %v5787
  %v5900 = vpack.c.b16 %v5804, %v5788
  %v5901 = vpack.c.b16 %v5805, %v5789
  %v5902 = vpack.c.b16 %v5806, %v5790
  %v5903 = vpack.c.b16 %v5807, %v5791
  %v5904 = vpack.c.b16 %v5808, %v5792
  %v5905 = vpack.c.b16 %v5809, %v5793
  %v5906 = vpack.c.b16 %v5810, %v5794
  %v5907 = vpack.c.b16 %v5811, %v5795
  %v5908 = vpack.c.b16 %v5828, %v5812
  %v5909 = vpack.c.b16 %v5829, %v5813
  %v5910 = vpack.c.b16 %v5830, %v5814
  %v5911 = vpack.c.b16 %v5831, %v5815
  %v5912 = vpack.c.b16 %v5832, %v5816
  %v5913 = vpack.c.b16 %v5833, %v5817
  %v5914 = vpack.c.b16 %v5834, %v5818
  %v5915 = vpack.c.b16 %v5835, %v5819
  %v5916 = vpack.c.b16 %v5836, %v5820
  %v5917 = vpack.c.b16 %v5837, %v5821
  %v5918 = vpack.c.b16 %v5838, %v5822
  %v5919 = vpack.c.b16 %v5839, %v5823
  %v5920 = vpack.c.b16 %v5840, %v5824
  %v5921 = vpack.c.b16 %v5841, %v5825
  %v5922 = vpack.c.b16 %v5842, %v5826
  %v5923 = vpack.c.b16 %v5843, %v5827
  %v5924 = vpack.c.b16 %v5860, %v5844
  %v5925 = vpack.c.b16 %v5861, %v5845
  %v5926 = vpack.c.b16 %v5862, %v5846
  %v5927 = vpack.c.b16 %v5863, %v5847
  %v5928 = vpack.c.b16 %v5864, %v5848
  %v5929 = vpack.c.b16 %v5865, %v5849
  %v5930 = vpack.c.b16 %v5866, %v5850
  %v5931 = vpack.c.b16 %v5867, %v5851
  %v5932 = vpack.c.b16 %v5868, %v5852
  %v5933 = vpack.c.b16 %v5869, %v5853
  %v5934 = vpack.c.b16 %v5870, %v5854
  %v5935 = vpack.c.b16 %v5871, %v5855
  %v5936 = vpack.c.b16 %v5872, %v5856
  %v5937 = vpack.c.b16 %v5873, %v5857
  %v5938 = vpack.c.b16 %v5874, %v5858
  %v5939 = vpack.c.b16 %v5875, %v5859
  %v6005 = vsel %vm98, %v5583, 0
  %6007 = vmatpush.bf16.msra.mxu0 0
  %6008 = vmatpush.bf16.msra.mxu0 0
  %6009 = vmatpush.bf16.msra.mxu0 0
  %6010 = vmatpush.bf16.msra.mxu0 0
  %6011 = vmatpush.bf16.msra.mxu0 %v5924
  %6012 = vmatpush.bf16.msra.mxu0 %v5908
  %6013 = vmatpush.bf16.msra.mxu0 %v5892
  %6014 = vmatpush.bf16.msra.mxu0 %v5876
  %6015 = vmatmul.bf16.gmra.mxu0 %v6005
  %v6016 = vpop.f32.mrf.mxu0
  %v6017 = vadd.f32 %v5652, %v6016
  %v6018 = vpop.f32.mrf.mxu0
  %v6019 = vadd.f32 %v5652, %v6018
  %6020 = vdwg.mxu0
  %6021 = vmatpush.bf16.msra.mxu0 0
  %6022 = vmatpush.bf16.msra.mxu0 0
  %6023 = vmatpush.bf16.msra.mxu0 0
  %6024 = vmatpush.bf16.msra.mxu0 0
  %6025 = vmatpush.bf16.msra.mxu0 %v5925
  %6026 = vmatpush.bf16.msra.mxu0 %v5909
  %6027 = vmatpush.bf16.msra.mxu0 %v5893
  %6028 = vmatpush.bf16.msra.mxu0 %v5877
  %6029 = vmatmul.bf16.gmra.mxu0 %v6005
  %v6030 = vpop.f32.mrf.mxu0
  %v6031 = vadd.f32 %v5653, %v6030
  %v6032 = vpop.f32.mrf.mxu0
  %v6033 = vadd.f32 %v5653, %v6032
  %6034 = vdwg.mxu0
  %6035 = vmatpush.bf16.msra.mxu0 0
  %6036 = vmatpush.bf16.msra.mxu0 0
  %6037 = vmatpush.bf16.msra.mxu0 0
  %6038 = vmatpush.bf16.msra.mxu0 0
  %6039 = vmatpush.bf16.msra.mxu0 %v5926
  %6040 = vmatpush.bf16.msra.mxu0 %v5910
  %6041 = vmatpush.bf16.msra.mxu0 %v5894
  %6042 = vmatpush.bf16.msra.mxu0 %v5878
  %6043 = vmatmul.bf16.gmra.mxu0 %v6005
  %v6044 = vpop.f32.mrf.mxu0
  %v6045 = vadd.f32 %v5654, %v6044
  %v6046 = vpop.f32.mrf.mxu0
  %v6047 = vadd.f32 %v5654, %v6046
  %6048 = vdwg.mxu0
  %6049 = vmatpush.bf16.msra.mxu0 0
  %6050 = vmatpush.bf16.msra.mxu0 0
  %6051 = vmatpush.bf16.msra.mxu0 0
  %6052 = vmatpush.bf16.msra.mxu0 0
  %6053 = vmatpush.bf16.msra.mxu0 %v5927
  %6054 = vmatpush.bf16.msra.mxu0 %v5911
  %6055 = vmatpush.bf16.msra.mxu0 %v5895
  %6056 = vmatpush.bf16.msra.mxu0 %v5879
  %6057 = vmatmul.bf16.gmra.mxu0 %v6005
  %v6058 = vpop.f32.mrf.mxu0
  %v6059 = vadd.f32 %v5655, %v6058
  %v6060 = vpop.f32.mrf.mxu0
  %v6061 = vadd.f32 %v5655, %v6060
  %6062 = vdwg.mxu0
  %6063 = vmatpush.bf16.msra.mxu0 0
  %6064 = vmatpush.bf16.msra.mxu0 0
  %6065 = vmatpush.bf16.msra.mxu0 0
  %6066 = vmatpush.bf16.msra.mxu0 0
  %6067 = vmatpush.bf16.msra.mxu0 %v5928
  %6068 = vmatpush.bf16.msra.mxu0 %v5912
  %6069 = vmatpush.bf16.msra.mxu0 %v5896
  %6070 = vmatpush.bf16.msra.mxu0 %v5880
  %6071 = vmatmul.bf16.gmra.mxu0 %v6005
  %v6072 = vpop.f32.mrf.mxu0
  %v6073 = vadd.f32 %v5656, %v6072
  %v6074 = vpop.f32.mrf.mxu0
  %v6075 = vadd.f32 %v5656, %v6074
  %6076 = vdwg.mxu0
  %6077 = vmatpush.bf16.msra.mxu0 0
  %6078 = vmatpush.bf16.msra.mxu0 0
  %6079 = vmatpush.bf16.msra.mxu0 0
  %6080 = vmatpush.bf16.msra.mxu0 0
  %6081 = vmatpush.bf16.msra.mxu0 %v5929
  %6082 = vmatpush.bf16.msra.mxu0 %v5913
  %6083 = vmatpush.bf16.msra.mxu0 %v5897
  %6084 = vmatpush.bf16.msra.mxu0 %v5881
  %6085 = vmatmul.bf16.gmra.mxu0 %v6005
  %v6086 = vpop.f32.mrf.mxu0
  %v6087 = vadd.f32 %v5657, %v6086
  %v6088 = vpop.f32.mrf.mxu0
  %v6089 = vadd.f32 %v5657, %v6088
  %6090 = vdwg.mxu0
  %6091 = vmatpush.bf16.msra.mxu0 0
  %6092 = vmatpush.bf16.msra.mxu0 0
  %6093 = vmatpush.bf16.msra.mxu0 0
  %6094 = vmatpush.bf16.msra.mxu0 0
  %6095 = vmatpush.bf16.msra.mxu0 %v5930
  %6096 = vmatpush.bf16.msra.mxu0 %v5914
  %6097 = vmatpush.bf16.msra.mxu0 %v5898
  %6098 = vmatpush.bf16.msra.mxu0 %v5882
  %6099 = vmatmul.bf16.gmra.mxu0 %v6005
  %v6100 = vpop.f32.mrf.mxu0
  %v6101 = vadd.f32 %v5658, %v6100
  %v6102 = vpop.f32.mrf.mxu0
  %v6103 = vadd.f32 %v5658, %v6102
  %6104 = vdwg.mxu0
  %6105 = vmatpush.bf16.msra.mxu0 0
  %6106 = vmatpush.bf16.msra.mxu0 0
  %6107 = vmatpush.bf16.msra.mxu0 0
  %6108 = vmatpush.bf16.msra.mxu0 0
  %6109 = vmatpush.bf16.msra.mxu0 %v5931
  %6110 = vmatpush.bf16.msra.mxu0 %v5915
  %6111 = vmatpush.bf16.msra.mxu0 %v5899
  %6112 = vmatpush.bf16.msra.mxu0 %v5883
  %6113 = vmatmul.bf16.gmra.mxu0 %v6005
  %v6114 = vpop.f32.mrf.mxu0
  %v6115 = vadd.f32 %v5659, %v6114
  %v6116 = vpop.f32.mrf.mxu0
  %v6117 = vadd.f32 %v5659, %v6116
  %6118 = vdwg.mxu0
  %6119 = vmatpush.bf16.msra.mxu0 0
  %6120 = vmatpush.bf16.msra.mxu0 0
  %6121 = vmatpush.bf16.msra.mxu0 0
  %6122 = vmatpush.bf16.msra.mxu0 0
  %6123 = vmatpush.bf16.msra.mxu0 %v5932
  %6124 = vmatpush.bf16.msra.mxu0 %v5916
  %6125 = vmatpush.bf16.msra.mxu0 %v5900
  %6126 = vmatpush.bf16.msra.mxu0 %v5884
  %6127 = vmatmul.bf16.gmra.mxu0 %v6005
  %v6128 = vpop.f32.mrf.mxu0
  %v6129 = vadd.f32 %v5660, %v6128
  %v6130 = vpop.f32.mrf.mxu0
  %v6131 = vadd.f32 %v5660, %v6130
  %6132 = vdwg.mxu0
  %6133 = vmatpush.bf16.msra.mxu0 0
  %6134 = vmatpush.bf16.msra.mxu0 0
  %6135 = vmatpush.bf16.msra.mxu0 0
  %6136 = vmatpush.bf16.msra.mxu0 0
  %6137 = vmatpush.bf16.msra.mxu0 %v5933
  %6138 = vmatpush.bf16.msra.mxu0 %v5917
  %6139 = vmatpush.bf16.msra.mxu0 %v5901
  %6140 = vmatpush.bf16.msra.mxu0 %v5885
  %6141 = vmatmul.bf16.gmra.mxu0 %v6005
  %v6142 = vpop.f32.mrf.mxu0
  %v6143 = vadd.f32 %v5661, %v6142
  %v6144 = vpop.f32.mrf.mxu0
  %v6145 = vadd.f32 %v5661, %v6144
  %6146 = vdwg.mxu0
  %6147 = vmatpush.bf16.msra.mxu0 0
  %6148 = vmatpush.bf16.msra.mxu0 0
  %6149 = vmatpush.bf16.msra.mxu0 0
  %6150 = vmatpush.bf16.msra.mxu0 0
  %6151 = vmatpush.bf16.msra.mxu0 %v5934
  %6152 = vmatpush.bf16.msra.mxu0 %v5918
  %6153 = vmatpush.bf16.msra.mxu0 %v5902
  %6154 = vmatpush.bf16.msra.mxu0 %v5886
  %6155 = vmatmul.bf16.gmra.mxu0 %v6005
  %v6156 = vpop.f32.mrf.mxu0
  %v6157 = vadd.f32 %v5662, %v6156
  %v6158 = vpop.f32.mrf.mxu0
  %v6159 = vadd.f32 %v5662, %v6158
  %6160 = vdwg.mxu0
  %6161 = vmatpush.bf16.msra.mxu0 0
  %6162 = vmatpush.bf16.msra.mxu0 0
  %6163 = vmatpush.bf16.msra.mxu0 0
  %6164 = vmatpush.bf16.msra.mxu0 0
  %6165 = vmatpush.bf16.msra.mxu0 %v5935
  %6166 = vmatpush.bf16.msra.mxu0 %v5919
  %6167 = vmatpush.bf16.msra.mxu0 %v5903
  %6168 = vmatpush.bf16.msra.mxu0 %v5887
  %6169 = vmatmul.bf16.gmra.mxu0 %v6005
  %v6170 = vpop.f32.mrf.mxu0
  %v6171 = vadd.f32 %v5663, %v6170
  %v6172 = vpop.f32.mrf.mxu0
  %v6173 = vadd.f32 %v5663, %v6172
  %6174 = vdwg.mxu0
  %6175 = vmatpush.bf16.msra.mxu0 0
  %6176 = vmatpush.bf16.msra.mxu0 0
  %6177 = vmatpush.bf16.msra.mxu0 0
  %6178 = vmatpush.bf16.msra.mxu0 0
  %6179 = vmatpush.bf16.msra.mxu0 %v5936
  %6180 = vmatpush.bf16.msra.mxu0 %v5920
  %6181 = vmatpush.bf16.msra.mxu0 %v5904
  %6182 = vmatpush.bf16.msra.mxu0 %v5888
  %6183 = vmatmul.bf16.gmra.mxu0 %v6005
  %v6184 = vpop.f32.mrf.mxu0
  %v6185 = vadd.f32 %v5664, %v6184
  %v6186 = vpop.f32.mrf.mxu0
  %v6187 = vadd.f32 %v5664, %v6186
  %6188 = vdwg.mxu0
  %6189 = vmatpush.bf16.msra.mxu0 0
  %6190 = vmatpush.bf16.msra.mxu0 0
  %6191 = vmatpush.bf16.msra.mxu0 0
  %6192 = vmatpush.bf16.msra.mxu0 0
  %6193 = vmatpush.bf16.msra.mxu0 %v5937
  %6194 = vmatpush.bf16.msra.mxu0 %v5921
  %6195 = vmatpush.bf16.msra.mxu0 %v5905
  %6196 = vmatpush.bf16.msra.mxu0 %v5889
  %6197 = vmatmul.bf16.gmra.mxu0 %v6005
  %v6198 = vpop.f32.mrf.mxu0
  %v6199 = vadd.f32 %v5665, %v6198
  %v6200 = vpop.f32.mrf.mxu0
  %v6201 = vadd.f32 %v5665, %v6200
  %6202 = vdwg.mxu0
  %6203 = vmatpush.bf16.msra.mxu0 0
  %6204 = vmatpush.bf16.msra.mxu0 0
  %6205 = vmatpush.bf16.msra.mxu0 0
  %6206 = vmatpush.bf16.msra.mxu0 0
  %6207 = vmatpush.bf16.msra.mxu0 %v5938
  %6208 = vmatpush.bf16.msra.mxu0 %v5922
  %6209 = vmatpush.bf16.msra.mxu0 %v5906
  %6210 = vmatpush.bf16.msra.mxu0 %v5890
  %6211 = vmatmul.bf16.gmra.mxu0 %v6005
  %v6212 = vpop.f32.mrf.mxu0
  %v6213 = vadd.f32 %v5666, %v6212
  %v6214 = vpop.f32.mrf.mxu0
  %v6215 = vadd.f32 %v5666, %v6214
  %6216 = vdwg.mxu0
  %6217 = vmatpush.bf16.msra.mxu0 0
  %6218 = vmatpush.bf16.msra.mxu0 0
  %6219 = vmatpush.bf16.msra.mxu0 0
  %6220 = vmatpush.bf16.msra.mxu0 0
  %6221 = vmatpush.bf16.msra.mxu0 %v5939
  %6222 = vmatpush.bf16.msra.mxu0 %v5923
  %6223 = vmatpush.bf16.msra.mxu0 %v5907
  %6224 = vmatpush.bf16.msra.mxu0 %v5891
  %6225 = vmatmul.bf16.gmra.mxu0 %v6005
  %v6226 = vpop.f32.mrf.mxu0
  %v6227 = vadd.f32 %v5667, %v6226
  %v6228 = vpop.f32.mrf.mxu0
  %v6229 = vadd.f32 %v5667, %v6228
  %6230 = vdwg.mxu0
  %v6231 = vmax.f32 %v6017, 0.0
  %v6232 = vmax.f32 %v6031, 0.0
  %v6233 = vmax.f32 %v6045, 0.0
  %v6234 = vmax.f32 %v6059, 0.0
  %v6235 = vmax.f32 %v6073, 0.0
  %v6236 = vmax.f32 %v6087, 0.0
  %v6237 = vmax.f32 %v6101, 0.0
  %v6238 = vmax.f32 %v6115, 0.0
  %v6239 = vmax.f32 %v6129, 0.0
  %v6240 = vmax.f32 %v6143, 0.0
  %v6241 = vmax.f32 %v6157, 0.0
  %v6242 = vmax.f32 %v6171, 0.0
  %v6243 = vmax.f32 %v6185, 0.0
  %v6244 = vmax.f32 %v6199, 0.0
  %v6245 = vmax.f32 %v6213, 0.0
  %v6246 = vmax.f32 %v6227, 0.0
  %v6247 = vmax.f32 %v6019, 0.0
  %v6248 = vmax.f32 %v6033, 0.0
  %v6249 = vmax.f32 %v6047, 0.0
  %v6250 = vmax.f32 %v6061, 0.0
  %v6251 = vmax.f32 %v6075, 0.0
  %v6252 = vmax.f32 %v6089, 0.0
  %v6253 = vmax.f32 %v6103, 0.0
  %v6254 = vmax.f32 %v6117, 0.0
  %v6255 = vmax.f32 %v6131, 0.0
  %v6256 = vmax.f32 %v6145, 0.0
  %v6257 = vmax.f32 %v6159, 0.0
  %v6258 = vmax.f32 %v6173, 0.0
  %v6259 = vmax.f32 %v6187, 0.0
  %v6260 = vmax.f32 %v6201, 0.0
  %v6261 = vmax.f32 %v6215, 0.0
  %v6262 = vmax.f32 %v6229, 0.0
  %v6263 = vpack.c.bf16 %v6247, %v6231
  %v6264 = vpack.c.bf16 %v6248, %v6232
  %v6265 = vpack.c.bf16 %v6249, %v6233
  %v6266 = vpack.c.bf16 %v6250, %v6234
  %v6267 = vpack.c.bf16 %v6251, %v6235
  %v6268 = vpack.c.bf16 %v6252, %v6236
  %v6269 = vpack.c.bf16 %v6253, %v6237
  %v6270 = vpack.c.bf16 %v6254, %v6238
  %v6271 = vpack.c.bf16 %v6255, %v6239
  %v6272 = vpack.c.bf16 %v6256, %v6240
  %v6273 = vpack.c.bf16 %v6257, %v6241
  %v6274 = vpack.c.bf16 %v6258, %v6242
  %v6275 = vpack.c.bf16 %v6259, %v6243
  %v6276 = vpack.c.bf16 %v6260, %v6244
  %v6277 = vpack.c.bf16 %v6261, %v6245
  %v6278 = vpack.c.bf16 %v6262, %v6246
  %v6279 = vld [vmem:[%s12] sm:$0xf]
  %v6280 = vld [vmem:[%s12 + $0x4] sm:$0xf]
  %v6281 = vld [vmem:[%s12 + $0x8] sm:$0xf]
  %v6282 = vld [vmem:[%s12 + $0xc] sm:$0xf]
  %v6283 = vld [vmem:[%s12 + $0x10] sm:$0xf]
  %v6284 = vld [vmem:[%s12 + $0x14] sm:$0xf]
  %v6285 = vld [vmem:[%s12 + $0x18] sm:$0xf]
  %v6286 = vld [vmem:[%s12 + $0x1c] sm:$0xf]
  %v6287 = vld [vmem:[%s12 + $0x20] sm:$0xf]
  %v6288 = vld [vmem:[%s12 + $0x24] sm:$0xf]
  %v6289 = vld [vmem:[%s12 + $0x28] sm:$0xf]
  %v6290 = vld [vmem:[%s12 + $0x2c] sm:$0xf]
  %v6291 = vld [vmem:[%s12 + $0x30] sm:$0xf]
  %v6292 = vld [vmem:[%s12 + $0x34] sm:$0xf]
  %v6293 = vld [vmem:[%s12 + $0x38] sm:$0xf]
  %v6294 = vld [vmem:[%s12 + $0x3c] sm:$0xf]
  %v6295 = vld [vmem:[%s12 + $0x40] sm:$0xf]
  %v6296 = vld [vmem:[%s12 + $0x44] sm:$0xf]
  %v6297 = vld [vmem:[%s12 + $0x48] sm:$0xf]
  %v6298 = vld [vmem:[%s12 + $0x4c] sm:$0xf]
  %v6299 = vld [vmem:[%s12 + $0x50] sm:$0xf]
  %v6300 = vld [vmem:[%s12 + $0x54] sm:$0xf]
  %v6301 = vld [vmem:[%s12 + $0x58] sm:$0xf]
  %v6302 = vld [vmem:[%s12 + $0x5c] sm:$0xf]
  %v6303 = vld [vmem:[%s12 + $0x60] sm:$0xf]
  %v6304 = vld [vmem:[%s12 + $0x64] sm:$0xf]
  %v6305 = vld [vmem:[%s12 + $0x68] sm:$0xf]
  %v6306 = vld [vmem:[%s12 + $0x6c] sm:$0xf]
  %v6307 = vld [vmem:[%s12 + $0x70] sm:$0xf]
  %v6308 = vld [vmem:[%s12 + $0x74] sm:$0xf]
  %v6309 = vld [vmem:[%s12 + $0x78] sm:$0xf]
  %v6310 = vld [vmem:[%s12 + $0x7c] sm:$0xf]
  %v6311 = vld [vmem:[%s12 + $0x80] sm:$0xf]
  %v6312 = vld [vmem:[%s12 + $0x84] sm:$0xf]
  %v6313 = vld [vmem:[%s12 + $0x88] sm:$0xf]
  %v6314 = vld [vmem:[%s12 + $0x8c] sm:$0xf]
  %v6315 = vld [vmem:[%s12 + $0x90] sm:$0xf]
  %v6316 = vld [vmem:[%s12 + $0x94] sm:$0xf]
  %v6317 = vld [vmem:[%s12 + $0x98] sm:$0xf]
  %v6318 = vld [vmem:[%s12 + $0x9c] sm:$0xf]
  %v6319 = vld [vmem:[%s12 + $0xa0] sm:$0xf]
  %v6320 = vld [vmem:[%s12 + $0xa4] sm:$0xf]
  %v6321 = vld [vmem:[%s12 + $0xa8] sm:$0xf]
  %v6322 = vld [vmem:[%s12 + $0xac] sm:$0xf]
  %v6323 = vld [vmem:[%s12 + $0xb0] sm:$0xf]
  %v6324 = vld [vmem:[%s12 + $0xb4] sm:$0xf]
  %v6325 = vld [vmem:[%s12 + $0xb8] sm:$0xf]
  %v6326 = vld [vmem:[%s12 + $0xbc] sm:$0xf]
  %v6327 = vld [vmem:[%s12 + $0xc0] sm:$0xf]
  %v6328 = vld [vmem:[%s12 + $0xc4] sm:$0xf]
  %v6329 = vld [vmem:[%s12 + $0xc8] sm:$0xf]
  %v6330 = vld [vmem:[%s12 + $0xcc] sm:$0xf]
  %v6331 = vld [vmem:[%s12 + $0xd0] sm:$0xf]
  %v6332 = vld [vmem:[%s12 + $0xd4] sm:$0xf]
  %v6333 = vld [vmem:[%s12 + $0xd8] sm:$0xf]
  %v6334 = vld [vmem:[%s12 + $0xdc] sm:$0xf]
  %v6335 = vld [vmem:[%s12 + $0xe0] sm:$0xf]
  %v6336 = vld [vmem:[%s12 + $0xe4] sm:$0xf]
  %v6337 = vld [vmem:[%s12 + $0xe8] sm:$0xf]
  %v6338 = vld [vmem:[%s12 + $0xec] sm:$0xf]
  %v6339 = vld [vmem:[%s12 + $0xf0] sm:$0xf]
  %v6340 = vld [vmem:[%s12 + $0xf4] sm:$0xf]
  %v6341 = vld [vmem:[%s12 + $0xf8] sm:$0xf]
  %v6342 = vld [vmem:[%s12 + $0xfc] sm:$0xf]
  %v6343 = vld [vmem:[%s12 + $0x100] sm:$0xf]
  %v6344 = vld [vmem:[%s12 + $0x104] sm:$0xf]
  %v6345 = vld [vmem:[%s12 + $0x108] sm:$0xf]
  %v6346 = vld [vmem:[%s12 + $0x10c] sm:$0xf]
  %v6347 = vld [vmem:[%s12 + $0x110] sm:$0xf]
  %v6348 = vld [vmem:[%s12 + $0x114] sm:$0xf]
  %v6349 = vld [vmem:[%s12 + $0x118] sm:$0xf]
  %v6350 = vld [vmem:[%s12 + $0x11c] sm:$0xf]
  %v6351 = vld [vmem:[%s12 + $0x120] sm:$0xf]
  %v6352 = vld [vmem:[%s12 + $0x124] sm:$0xf]
  %v6353 = vld [vmem:[%s12 + $0x128] sm:$0xf]
  %v6354 = vld [vmem:[%s12 + $0x12c] sm:$0xf]
  %v6355 = vld [vmem:[%s12 + $0x130] sm:$0xf]
  %v6356 = vld [vmem:[%s12 + $0x134] sm:$0xf]
  %v6357 = vld [vmem:[%s12 + $0x138] sm:$0xf]
  %v6358 = vld [vmem:[%s12 + $0x13c] sm:$0xf]
  %v6359 = vld [vmem:[%s12 + $0x140] sm:$0xf]
  %v6360 = vld [vmem:[%s12 + $0x144] sm:$0xf]
  %v6361 = vld [vmem:[%s12 + $0x148] sm:$0xf]
  %v6362 = vld [vmem:[%s12 + $0x14c] sm:$0xf]
  %v6363 = vld [vmem:[%s12 + $0x150] sm:$0xf]
  %v6364 = vld [vmem:[%s12 + $0x154] sm:$0xf]
  %v6365 = vld [vmem:[%s12 + $0x158] sm:$0xf]
  %v6366 = vld [vmem:[%s12 + $0x15c] sm:$0xf]
  %v6367 = vld [vmem:[%s12 + $0x160] sm:$0xf]
  %v6368 = vld [vmem:[%s12 + $0x164] sm:$0xf]
  %v6369 = vld [vmem:[%s12 + $0x168] sm:$0xf]
  %v6370 = vld [vmem:[%s12 + $0x16c] sm:$0xf]
  %v6371 = vld [vmem:[%s12 + $0x170] sm:$0xf]
  %v6372 = vld [vmem:[%s12 + $0x174] sm:$0xf]
  %v6373 = vld [vmem:[%s12 + $0x178] sm:$0xf]
  %v6374 = vld [vmem:[%s12 + $0x17c] sm:$0xf]
  %v6375 = vld [vmem:[%s12 + $0x180] sm:$0xf]
  %v6376 = vld [vmem:[%s12 + $0x184] sm:$0xf]
  %v6377 = vld [vmem:[%s12 + $0x188] sm:$0xf]
  %v6378 = vld [vmem:[%s12 + $0x18c] sm:$0xf]
  %v6379 = vld [vmem:[%s12 + $0x190] sm:$0xf]
  %v6380 = vld [vmem:[%s12 + $0x194] sm:$0xf]
  %v6381 = vld [vmem:[%s12 + $0x198] sm:$0xf]
  %v6382 = vld [vmem:[%s12 + $0x19c] sm:$0xf]
  %v6383 = vld [vmem:[%s12 + $0x1a0] sm:$0xf]
  %v6384 = vld [vmem:[%s12 + $0x1a4] sm:$0xf]
  %v6385 = vld [vmem:[%s12 + $0x1a8] sm:$0xf]
  %v6386 = vld [vmem:[%s12 + $0x1ac] sm:$0xf]
  %v6387 = vld [vmem:[%s12 + $0x1b0] sm:$0xf]
  %v6388 = vld [vmem:[%s12 + $0x1b4] sm:$0xf]
  %v6389 = vld [vmem:[%s12 + $0x1b8] sm:$0xf]
  %v6390 = vld [vmem:[%s12 + $0x1bc] sm:$0xf]
  %v6391 = vld [vmem:[%s12 + $0x1c0] sm:$0xf]
  %v6392 = vld [vmem:[%s12 + $0x1c4] sm:$0xf]
  %v6393 = vld [vmem:[%s12 + $0x1c8] sm:$0xf]
  %v6394 = vld [vmem:[%s12 + $0x1cc] sm:$0xf]
  %v6395 = vld [vmem:[%s12 + $0x1d0] sm:$0xf]
  %v6396 = vld [vmem:[%s12 + $0x1d4] sm:$0xf]
  %v6397 = vld [vmem:[%s12 + $0x1d8] sm:$0xf]
  %v6398 = vld [vmem:[%s12 + $0x1dc] sm:$0xf]
  %v6399 = vld [vmem:[%s12 + $0x1e0] sm:$0xf]
  %v6400 = vld [vmem:[%s12 + $0x1e4] sm:$0xf]
  %v6401 = vld [vmem:[%s12 + $0x1e8] sm:$0xf]
  %v6402 = vld [vmem:[%s12 + $0x1ec] sm:$0xf]
  %v6403 = vld [vmem:[%s12 + $0x1f0] sm:$0xf]
  %v6404 = vld [vmem:[%s12 + $0x1f4] sm:$0xf]
  %v6405 = vld [vmem:[%s12 + $0x1f8] sm:$0xf]
  %v6406 = vld [vmem:[%s12 + $0x1fc] sm:$0xf]
  %v6407 = vld [vmem:[%s12 + $0x200] sm:$0xf]
  %v6408 = vld [vmem:[%s12 + $0x204] sm:$0xf]
  %v6409 = vld [vmem:[%s12 + $0x208] sm:$0xf]
  %v6410 = vld [vmem:[%s12 + $0x20c] sm:$0xf]
  %v6411 = vld [vmem:[%s12 + $0x210] sm:$0xf]
  %v6412 = vld [vmem:[%s12 + $0x214] sm:$0xf]
  %v6413 = vld [vmem:[%s12 + $0x218] sm:$0xf]
  %v6414 = vld [vmem:[%s12 + $0x21c] sm:$0xf]
  %v6415 = vld [vmem:[%s12 + $0x220] sm:$0xf]
  %v6416 = vld [vmem:[%s12 + $0x224] sm:$0xf]
  %v6417 = vld [vmem:[%s12 + $0x228] sm:$0xf]
  %v6418 = vld [vmem:[%s12 + $0x22c] sm:$0xf]
  %v6419 = vld [vmem:[%s12 + $0x230] sm:$0xf]
  %v6420 = vld [vmem:[%s12 + $0x234] sm:$0xf]
  %v6421 = vld [vmem:[%s12 + $0x238] sm:$0xf]
  %v6422 = vld [vmem:[%s12 + $0x23c] sm:$0xf]
  %v6423 = vld [vmem:[%s12 + $0x240] sm:$0xf]
  %v6424 = vld [vmem:[%s12 + $0x244] sm:$0xf]
  %v6425 = vld [vmem:[%s12 + $0x248] sm:$0xf]
  %v6426 = vld [vmem:[%s12 + $0x24c] sm:$0xf]
  %v6427 = vld [vmem:[%s12 + $0x250] sm:$0xf]
  %v6428 = vld [vmem:[%s12 + $0x254] sm:$0xf]
  %v6429 = vld [vmem:[%s12 + $0x258] sm:$0xf]
  %v6430 = vld [vmem:[%s12 + $0x25c] sm:$0xf]
  %v6431 = vld [vmem:[%s12 + $0x260] sm:$0xf]
  %v6432 = vld [vmem:[%s12 + $0x264] sm:$0xf]
  %v6433 = vld [vmem:[%s12 + $0x268] sm:$0xf]
  %v6434 = vld [vmem:[%s12 + $0x26c] sm:$0xf]
  %v6435 = vld [vmem:[%s12 + $0x270] sm:$0xf]
  %v6436 = vld [vmem:[%s12 + $0x274] sm:$0xf]
  %v6437 = vld [vmem:[%s12 + $0x278] sm:$0xf]
  %v6438 = vld [vmem:[%s12 + $0x27c] sm:$0xf]
  %v6439 = vld [vmem:[%s12 + $0x280] sm:$0xf]
  %v6440 = vld [vmem:[%s12 + $0x284] sm:$0xf]
  %v6441 = vld [vmem:[%s12 + $0x288] sm:$0xf]
  %v6442 = vld [vmem:[%s12 + $0x28c] sm:$0xf]
  %v6443 = vld [vmem:[%s12 + $0x290] sm:$0xf]
  %v6444 = vld [vmem:[%s12 + $0x294] sm:$0xf]
  %v6445 = vld [vmem:[%s12 + $0x298] sm:$0xf]
  %v6446 = vld [vmem:[%s12 + $0x29c] sm:$0xf]
  %v6447 = vld [vmem:[%s12 + $0x2a0] sm:$0xf]
  %v6448 = vld [vmem:[%s12 + $0x2a4] sm:$0xf]
  %v6449 = vld [vmem:[%s12 + $0x2a8] sm:$0xf]
  %v6450 = vld [vmem:[%s12 + $0x2ac] sm:$0xf]
  %v6451 = vld [vmem:[%s12 + $0x2b0] sm:$0xf]
  %v6452 = vld [vmem:[%s12 + $0x2b4] sm:$0xf]
  %v6453 = vld [vmem:[%s12 + $0x2b8] sm:$0xf]
  %v6454 = vld [vmem:[%s12 + $0x2bc] sm:$0xf]
  %v6455 = vld [vmem:[%s12 + $0x2c0] sm:$0xf]
  %v6456 = vld [vmem:[%s12 + $0x2c4] sm:$0xf]
  %v6457 = vld [vmem:[%s12 + $0x2c8] sm:$0xf]
  %v6458 = vld [vmem:[%s12 + $0x2cc] sm:$0xf]
  %v6459 = vld [vmem:[%s12 + $0x2d0] sm:$0xf]
  %v6460 = vld [vmem:[%s12 + $0x2d4] sm:$0xf]
  %v6461 = vld [vmem:[%s12 + $0x2d8] sm:$0xf]
  %v6462 = vld [vmem:[%s12 + $0x2dc] sm:$0xf]
  %v6463 = vld [vmem:[%s12 + $0x2e0] sm:$0xf]
  %v6464 = vld [vmem:[%s12 + $0x2e4] sm:$0xf]
  %v6465 = vld [vmem:[%s12 + $0x2e8] sm:$0xf]
  %v6466 = vld [vmem:[%s12 + $0x2ec] sm:$0xf]
  %v6467 = vld [vmem:[%s12 + $0x2f0] sm:$0xf]
  %v6468 = vld [vmem:[%s12 + $0x2f4] sm:$0xf]
  %v6469 = vld [vmem:[%s12 + $0x2f8] sm:$0xf]
  %v6470 = vld [vmem:[%s12 + $0x2fc] sm:$0xf]
  %v6471 = vld [vmem:[%s12 + $0x300] sm:$0xf]
  %v6472 = vld [vmem:[%s12 + $0x304] sm:$0xf]
  %v6473 = vld [vmem:[%s12 + $0x308] sm:$0xf]
  %v6474 = vld [vmem:[%s12 + $0x30c] sm:$0xf]
  %v6475 = vld [vmem:[%s12 + $0x310] sm:$0xf]
  %v6476 = vld [vmem:[%s12 + $0x314] sm:$0xf]
  %v6477 = vld [vmem:[%s12 + $0x318] sm:$0xf]
  %v6478 = vld [vmem:[%s12 + $0x31c] sm:$0xf]
  %v6479 = vld [vmem:[%s12 + $0x320] sm:$0xf]
  %v6480 = vld [vmem:[%s12 + $0x324] sm:$0xf]
  %v6481 = vld [vmem:[%s12 + $0x328] sm:$0xf]
  %v6482 = vld [vmem:[%s12 + $0x32c] sm:$0xf]
  %v6483 = vld [vmem:[%s12 + $0x330] sm:$0xf]
  %v6484 = vld [vmem:[%s12 + $0x334] sm:$0xf]
  %v6485 = vld [vmem:[%s12 + $0x338] sm:$0xf]
  %v6486 = vld [vmem:[%s12 + $0x33c] sm:$0xf]
  %v6487 = vld [vmem:[%s12 + $0x340] sm:$0xf]
  %v6488 = vld [vmem:[%s12 + $0x344] sm:$0xf]
  %v6489 = vld [vmem:[%s12 + $0x348] sm:$0xf]
  %v6490 = vld [vmem:[%s12 + $0x34c] sm:$0xf]
  %v6491 = vld [vmem:[%s12 + $0x350] sm:$0xf]
  %v6492 = vld [vmem:[%s12 + $0x354] sm:$0xf]
  %v6493 = vld [vmem:[%s12 + $0x358] sm:$0xf]
  %v6494 = vld [vmem:[%s12 + $0x35c] sm:$0xf]
  %v6495 = vld [vmem:[%s12 + $0x360] sm:$0xf]
  %v6496 = vld [vmem:[%s12 + $0x364] sm:$0xf]
  %v6497 = vld [vmem:[%s12 + $0x368] sm:$0xf]
  %v6498 = vld [vmem:[%s12 + $0x36c] sm:$0xf]
  %v6499 = vld [vmem:[%s12 + $0x370] sm:$0xf]
  %v6500 = vld [vmem:[%s12 + $0x374] sm:$0xf]
  %v6501 = vld [vmem:[%s12 + $0x378] sm:$0xf]
  %v6502 = vld [vmem:[%s12 + $0x37c] sm:$0xf]
  %v6503 = vld [vmem:[%s12 + $0x380] sm:$0xf]
  %v6504 = vld [vmem:[%s12 + $0x384] sm:$0xf]
  %v6505 = vld [vmem:[%s12 + $0x388] sm:$0xf]
  %v6506 = vld [vmem:[%s12 + $0x38c] sm:$0xf]
  %v6507 = vld [vmem:[%s12 + $0x390] sm:$0xf]
  %v6508 = vld [vmem:[%s12 + $0x394] sm:$0xf]
  %v6509 = vld [vmem:[%s12 + $0x398] sm:$0xf]
  %v6510 = vld [vmem:[%s12 + $0x39c] sm:$0xf]
  %v6511 = vld [vmem:[%s12 + $0x3a0] sm:$0xf]
  %v6512 = vld [vmem:[%s12 + $0x3a4] sm:$0xf]
  %v6513 = vld [vmem:[%s12 + $0x3a8] sm:$0xf]
  %v6514 = vld [vmem:[%s12 + $0x3ac] sm:$0xf]
  %v6515 = vld [vmem:[%s12 + $0x3b0] sm:$0xf]
  %v6516 = vld [vmem:[%s12 + $0x3b4] sm:$0xf]
  %v6517 = vld [vmem:[%s12 + $0x3b8] sm:$0xf]
  %v6518 = vld [vmem:[%s12 + $0x3bc] sm:$0xf]
  %v6519 = vld [vmem:[%s12 + $0x3c0] sm:$0xf]
  %v6520 = vld [vmem:[%s12 + $0x3c4] sm:$0xf]
  %v6521 = vld [vmem:[%s12 + $0x3c8] sm:$0xf]
  %v6522 = vld [vmem:[%s12 + $0x3cc] sm:$0xf]
  %v6523 = vld [vmem:[%s12 + $0x3d0] sm:$0xf]
  %v6524 = vld [vmem:[%s12 + $0x3d4] sm:$0xf]
  %v6525 = vld [vmem:[%s12 + $0x3d8] sm:$0xf]
  %v6526 = vld [vmem:[%s12 + $0x3dc] sm:$0xf]
  %v6527 = vld [vmem:[%s12 + $0x3e0] sm:$0xf]
  %v6528 = vld [vmem:[%s12 + $0x3e4] sm:$0xf]
  %v6529 = vld [vmem:[%s12 + $0x3e8] sm:$0xf]
  %v6530 = vld [vmem:[%s12 + $0x3ec] sm:$0xf]
  %v6531 = vld [vmem:[%s12 + $0x3f0] sm:$0xf]
  %v6532 = vld [vmem:[%s12 + $0x3f4] sm:$0xf]
  %v6533 = vld [vmem:[%s12 + $0x3f8] sm:$0xf]
  %v6534 = vld [vmem:[%s12 + $0x3fc] sm:$0xf]
  %v6535 = vld [vmem:[%s13] sm:$0x1]
  %v6537 = vperm.slane %v6535, 0
  %v6795 = vunpack.c.l.b16 %v6279
  %v6796 = vunpack.c.l.b16 %v6280
  %v6797 = vunpack.c.l.b16 %v6281
  %v6798 = vunpack.c.l.b16 %v6282
  %v6799 = vunpack.c.l.b16 %v6283
  %v6800 = vunpack.c.l.b16 %v6284
  %v6801 = vunpack.c.l.b16 %v6285
  %v6802 = vunpack.c.l.b16 %v6286
  %v6803 = vunpack.c.l.b16 %v6287
  %v6804 = vunpack.c.l.b16 %v6288
  %v6805 = vunpack.c.l.b16 %v6289
  %v6806 = vunpack.c.l.b16 %v6290
  %v6807 = vunpack.c.l.b16 %v6291
  %v6808 = vunpack.c.l.b16 %v6292
  %v6809 = vunpack.c.l.b16 %v6293
  %v6810 = vunpack.c.l.b16 %v6294
  %v6811 = vunpack.c.l.b16 %v6295
  %v6812 = vunpack.c.l.b16 %v6296
  %v6813 = vunpack.c.l.b16 %v6297
  %v6814 = vunpack.c.l.b16 %v6298
  %v6815 = vunpack.c.l.b16 %v6299
  %v6816 = vunpack.c.l.b16 %v6300
  %v6817 = vunpack.c.l.b16 %v6301
  %v6818 = vunpack.c.l.b16 %v6302
  %v6819 = vunpack.c.l.b16 %v6303
  %v6820 = vunpack.c.l.b16 %v6304
  %v6821 = vunpack.c.l.b16 %v6305
  %v6822 = vunpack.c.l.b16 %v6306
  %v6823 = vunpack.c.l.b16 %v6307
  %v6824 = vunpack.c.l.b16 %v6308
  %v6825 = vunpack.c.l.b16 %v6309
  %v6826 = vunpack.c.l.b16 %v6310
  %v6827 = vunpack.c.l.b16 %v6311
  %v6828 = vunpack.c.l.b16 %v6312
  %v6829 = vunpack.c.l.b16 %v6313
  %v6830 = vunpack.c.l.b16 %v6314
  %v6831 = vunpack.c.l.b16 %v6315
  %v6832 = vunpack.c.l.b16 %v6316
  %v6833 = vunpack.c.l.b16 %v6317
  %v6834 = vunpack.c.l.b16 %v6318
  %v6835 = vunpack.c.l.b16 %v6319
  %v6836 = vunpack.c.l.b16 %v6320
  %v6837 = vunpack.c.l.b16 %v6321
  %v6838 = vunpack.c.l.b16 %v6322
  %v6839 = vunpack.c.l.b16 %v6323
  %v6840 = vunpack.c.l.b16 %v6324
  %v6841 = vunpack.c.l.b16 %v6325
  %v6842 = vunpack.c.l.b16 %v6326
  %v6843 = vunpack.c.l.b16 %v6327
  %v6844 = vunpack.c.l.b16 %v6328
  %v6845 = vunpack.c.l.b16 %v6329
  %v6846 = vunpack.c.l.b16 %v6330
  %v6847 = vunpack.c.l.b16 %v6331
  %v6848 = vunpack.c.l.b16 %v6332
  %v6849 = vunpack.c.l.b16 %v6333
  %v6850 = vunpack.c.l.b16 %v6334
  %v6851 = vunpack.c.l.b16 %v6335
  %v6852 = vunpack.c.l.b16 %v6336
  %v6853 = vunpack.c.l.b16 %v6337
  %v6854 = vunpack.c.l.b16 %v6338
  %v6855 = vunpack.c.l.b16 %v6339
  %v6856 = vunpack.c.l.b16 %v6340
  %v6857 = vunpack.c.l.b16 %v6341
  %v6858 = vunpack.c.l.b16 %v6342
  %v6859 = vunpack.c.l.b16 %v6343
  %v6860 = vunpack.c.l.b16 %v6344
  %v6861 = vunpack.c.l.b16 %v6345
  %v6862 = vunpack.c.l.b16 %v6346
  %v6863 = vunpack.c.l.b16 %v6347
  %v6864 = vunpack.c.l.b16 %v6348
  %v6865 = vunpack.c.l.b16 %v6349
  %v6866 = vunpack.c.l.b16 %v6350
  %v6867 = vunpack.c.l.b16 %v6351
  %v6868 = vunpack.c.l.b16 %v6352
  %v6869 = vunpack.c.l.b16 %v6353
  %v6870 = vunpack.c.l.b16 %v6354
  %v6871 = vunpack.c.l.b16 %v6355
  %v6872 = vunpack.c.l.b16 %v6356
  %v6873 = vunpack.c.l.b16 %v6357
  %v6874 = vunpack.c.l.b16 %v6358
  %v6875 = vunpack.c.l.b16 %v6359
  %v6876 = vunpack.c.l.b16 %v6360
  %v6877 = vunpack.c.l.b16 %v6361
  %v6878 = vunpack.c.l.b16 %v6362
  %v6879 = vunpack.c.l.b16 %v6363
  %v6880 = vunpack.c.l.b16 %v6364
  %v6881 = vunpack.c.l.b16 %v6365
  %v6882 = vunpack.c.l.b16 %v6366
  %v6883 = vunpack.c.l.b16 %v6367
  %v6884 = vunpack.c.l.b16 %v6368
  %v6885 = vunpack.c.l.b16 %v6369
  %v6886 = vunpack.c.l.b16 %v6370
  %v6887 = vunpack.c.l.b16 %v6371
  %v6888 = vunpack.c.l.b16 %v6372
  %v6889 = vunpack.c.l.b16 %v6373
  %v6890 = vunpack.c.l.b16 %v6374
  %v6891 = vunpack.c.l.b16 %v6375
  %v6892 = vunpack.c.l.b16 %v6376
  %v6893 = vunpack.c.l.b16 %v6377
  %v6894 = vunpack.c.l.b16 %v6378
  %v6895 = vunpack.c.l.b16 %v6379
  %v6896 = vunpack.c.l.b16 %v6380
  %v6897 = vunpack.c.l.b16 %v6381
  %v6898 = vunpack.c.l.b16 %v6382
  %v6899 = vunpack.c.l.b16 %v6383
  %v6900 = vunpack.c.l.b16 %v6384
  %v6901 = vunpack.c.l.b16 %v6385
  %v6902 = vunpack.c.l.b16 %v6386
  %v6903 = vunpack.c.l.b16 %v6387
  %v6904 = vunpack.c.l.b16 %v6388
  %v6905 = vunpack.c.l.b16 %v6389
  %v6906 = vunpack.c.l.b16 %v6390
  %v6907 = vunpack.c.l.b16 %v6391
  %v6908 = vunpack.c.l.b16 %v6392
  %v6909 = vunpack.c.l.b16 %v6393
  %v6910 = vunpack.c.l.b16 %v6394
  %v6911 = vunpack.c.l.b16 %v6395
  %v6912 = vunpack.c.l.b16 %v6396
  %v6913 = vunpack.c.l.b16 %v6397
  %v6914 = vunpack.c.l.b16 %v6398
  %v6915 = vunpack.c.l.b16 %v6399
  %v6916 = vunpack.c.l.b16 %v6400
  %v6917 = vunpack.c.l.b16 %v6401
  %v6918 = vunpack.c.l.b16 %v6402
  %v6919 = vunpack.c.l.b16 %v6403
  %v6920 = vunpack.c.l.b16 %v6404
  %v6921 = vunpack.c.l.b16 %v6405
  %v6922 = vunpack.c.l.b16 %v6406
  %v6923 = vunpack.c.l.b16 %v6407
  %v6924 = vunpack.c.l.b16 %v6408
  %v6925 = vunpack.c.l.b16 %v6409
  %v6926 = vunpack.c.l.b16 %v6410
  %v6927 = vunpack.c.l.b16 %v6411
  %v6928 = vunpack.c.l.b16 %v6412
  %v6929 = vunpack.c.l.b16 %v6413
  %v6930 = vunpack.c.l.b16 %v6414
  %v6931 = vunpack.c.l.b16 %v6415
  %v6932 = vunpack.c.l.b16 %v6416
  %v6933 = vunpack.c.l.b16 %v6417
  %v6934 = vunpack.c.l.b16 %v6418
  %v6935 = vunpack.c.l.b16 %v6419
  %v6936 = vunpack.c.l.b16 %v6420
  %v6937 = vunpack.c.l.b16 %v6421
  %v6938 = vunpack.c.l.b16 %v6422
  %v6939 = vunpack.c.l.b16 %v6423
  %v6940 = vunpack.c.l.b16 %v6424
  %v6941 = vunpack.c.l.b16 %v6425
  %v6942 = vunpack.c.l.b16 %v6426
  %v6943 = vunpack.c.l.b16 %v6427
  %v6944 = vunpack.c.l.b16 %v6428
  %v6945 = vunpack.c.l.b16 %v6429
  %v6946 = vunpack.c.l.b16 %v6430
  %v6947 = vunpack.c.l.b16 %v6431
  %v6948 = vunpack.c.l.b16 %v6432
  %v6949 = vunpack.c.l.b16 %v6433
  %v6950 = vunpack.c.l.b16 %v6434
  %v6951 = vunpack.c.l.b16 %v6435
  %v6952 = vunpack.c.l.b16 %v6436
  %v6953 = vunpack.c.l.b16 %v6437
  %v6954 = vunpack.c.l.b16 %v6438
  %v6955 = vunpack.c.l.b16 %v6439
  %v6956 = vunpack.c.l.b16 %v6440
  %v6957 = vunpack.c.l.b16 %v6441
  %v6958 = vunpack.c.l.b16 %v6442
  %v6959 = vunpack.c.l.b16 %v6443
  %v6960 = vunpack.c.l.b16 %v6444
  %v6961 = vunpack.c.l.b16 %v6445
  %v6962 = vunpack.c.l.b16 %v6446
  %v6963 = vunpack.c.l.b16 %v6447
  %v6964 = vunpack.c.l.b16 %v6448
  %v6965 = vunpack.c.l.b16 %v6449
  %v6966 = vunpack.c.l.b16 %v6450
  %v6967 = vunpack.c.l.b16 %v6451
  %v6968 = vunpack.c.l.b16 %v6452
  %v6969 = vunpack.c.l.b16 %v6453
  %v6970 = vunpack.c.l.b16 %v6454
  %v6971 = vunpack.c.l.b16 %v6455
  %v6972 = vunpack.c.l.b16 %v6456
  %v6973 = vunpack.c.l.b16 %v6457
  %v6974 = vunpack.c.l.b16 %v6458
  %v6975 = vunpack.c.l.b16 %v6459
  %v6976 = vunpack.c.l.b16 %v6460
  %v6977 = vunpack.c.l.b16 %v6461
  %v6978 = vunpack.c.l.b16 %v6462
  %v6979 = vunpack.c.l.b16 %v6463
  %v6980 = vunpack.c.l.b16 %v6464
  %v6981 = vunpack.c.l.b16 %v6465
  %v6982 = vunpack.c.l.b16 %v6466
  %v6983 = vunpack.c.l.b16 %v6467
  %v6984 = vunpack.c.l.b16 %v6468
  %v6985 = vunpack.c.l.b16 %v6469
  %v6986 = vunpack.c.l.b16 %v6470
  %v6987 = vunpack.c.l.b16 %v6471
  %v6988 = vunpack.c.l.b16 %v6472
  %v6989 = vunpack.c.l.b16 %v6473
  %v6990 = vunpack.c.l.b16 %v6474
  %v6991 = vunpack.c.l.b16 %v6475
  %v6992 = vunpack.c.l.b16 %v6476
  %v6993 = vunpack.c.l.b16 %v6477
  %v6994 = vunpack.c.l.b16 %v6478
  %v6995 = vunpack.c.l.b16 %v6479
  %v6996 = vunpack.c.l.b16 %v6480
  %v6997 = vunpack.c.l.b16 %v6481
  %v6998 = vunpack.c.l.b16 %v6482
  %v6999 = vunpack.c.l.b16 %v6483
  %v7000 = vunpack.c.l.b16 %v6484
  %v7001 = vunpack.c.l.b16 %v6485
  %v7002 = vunpack.c.l.b16 %v6486
  %v7003 = vunpack.c.l.b16 %v6487
  %v7004 = vunpack.c.l.b16 %v6488
  %v7005 = vunpack.c.l.b16 %v6489
  %v7006 = vunpack.c.l.b16 %v6490
  %v7007 = vunpack.c.l.b16 %v6491
  %v7008 = vunpack.c.l.b16 %v6492
  %v7009 = vunpack.c.l.b16 %v6493
  %v7010 = vunpack.c.l.b16 %v6494
  %v7011 = vunpack.c.l.b16 %v6495
  %v7012 = vunpack.c.l.b16 %v6496
  %v7013 = vunpack.c.l.b16 %v6497
  %v7014 = vunpack.c.l.b16 %v6498
  %v7015 = vunpack.c.l.b16 %v6499
  %v7016 = vunpack.c.l.b16 %v6500
  %v7017 = vunpack.c.l.b16 %v6501
  %v7018 = vunpack.c.l.b16 %v6502
  %v7019 = vunpack.c.l.b16 %v6503
  %v7020 = vunpack.c.l.b16 %v6504
  %v7021 = vunpack.c.l.b16 %v6505
  %v7022 = vunpack.c.l.b16 %v6506
  %v7023 = vunpack.c.l.b16 %v6507
  %v7024 = vunpack.c.l.b16 %v6508
  %v7025 = vunpack.c.l.b16 %v6509
  %v7026 = vunpack.c.l.b16 %v6510
  %v7027 = vunpack.c.l.b16 %v6511
  %v7028 = vunpack.c.l.b16 %v6512
  %v7029 = vunpack.c.l.b16 %v6513
  %v7030 = vunpack.c.l.b16 %v6514
  %v7031 = vunpack.c.l.b16 %v6515
  %v7032 = vunpack.c.l.b16 %v6516
  %v7033 = vunpack.c.l.b16 %v6517
  %v7034 = vunpack.c.l.b16 %v6518
  %v7035 = vunpack.c.l.b16 %v6519
  %v7036 = vunpack.c.l.b16 %v6520
  %v7037 = vunpack.c.l.b16 %v6521
  %v7038 = vunpack.c.l.b16 %v6522
  %v7039 = vunpack.c.l.b16 %v6523
  %v7040 = vunpack.c.l.b16 %v6524
  %v7041 = vunpack.c.l.b16 %v6525
  %v7042 = vunpack.c.l.b16 %v6526
  %v7043 = vunpack.c.l.b16 %v6527
  %v7044 = vunpack.c.l.b16 %v6528
  %v7045 = vunpack.c.l.b16 %v6529
  %v7046 = vunpack.c.l.b16 %v6530
  %v7047 = vunpack.c.l.b16 %v6531
  %v7048 = vunpack.c.l.b16 %v6532
  %v7049 = vunpack.c.l.b16 %v6533
  %v7050 = vunpack.c.l.b16 %v6534
  %v7051 = vpack.c.b16 %v6796, %v6795
  %v7052 = vpack.c.b16 %v6798, %v6797
  %v7053 = vpack.c.b16 %v6800, %v6799
  %v7054 = vpack.c.b16 %v6802, %v6801
  %v7055 = vpack.c.b16 %v6804, %v6803
  %v7056 = vpack.c.b16 %v6806, %v6805
  %v7057 = vpack.c.b16 %v6808, %v6807
  %v7058 = vpack.c.b16 %v6810, %v6809
  %v7059 = vpack.c.b16 %v6812, %v6811
  %v7060 = vpack.c.b16 %v6814, %v6813
  %v7061 = vpack.c.b16 %v6816, %v6815
  %v7062 = vpack.c.b16 %v6818, %v6817
  %v7063 = vpack.c.b16 %v6820, %v6819
  %v7064 = vpack.c.b16 %v6822, %v6821
  %v7065 = vpack.c.b16 %v6824, %v6823
  %v7066 = vpack.c.b16 %v6826, %v6825
  %v7067 = vpack.c.b16 %v6828, %v6827
  %v7068 = vpack.c.b16 %v6830, %v6829
  %v7069 = vpack.c.b16 %v6832, %v6831
  %v7070 = vpack.c.b16 %v6834, %v6833
  %v7071 = vpack.c.b16 %v6836, %v6835
  %v7072 = vpack.c.b16 %v6838, %v6837
  %v7073 = vpack.c.b16 %v6840, %v6839
  %v7074 = vpack.c.b16 %v6842, %v6841
  %v7075 = vpack.c.b16 %v6844, %v6843
  %v7076 = vpack.c.b16 %v6846, %v6845
  %v7077 = vpack.c.b16 %v6848, %v6847
  %v7078 = vpack.c.b16 %v6850, %v6849
  %v7079 = vpack.c.b16 %v6852, %v6851
  %v7080 = vpack.c.b16 %v6854, %v6853
  %v7081 = vpack.c.b16 %v6856, %v6855
  %v7082 = vpack.c.b16 %v6858, %v6857
  %v7083 = vpack.c.b16 %v6860, %v6859
  %v7084 = vpack.c.b16 %v6862, %v6861
  %v7085 = vpack.c.b16 %v6864, %v6863
  %v7086 = vpack.c.b16 %v6866, %v6865
  %v7087 = vpack.c.b16 %v6868, %v6867
  %v7088 = vpack.c.b16 %v6870, %v6869
  %v7089 = vpack.c.b16 %v6872, %v6871
  %v7090 = vpack.c.b16 %v6874, %v6873
  %v7091 = vpack.c.b16 %v6876, %v6875
  %v7092 = vpack.c.b16 %v6878, %v6877
  %v7093 = vpack.c.b16 %v6880, %v6879
  %v7094 = vpack.c.b16 %v6882, %v6881
  %v7095 = vpack.c.b16 %v6884, %v6883
  %v7096 = vpack.c.b16 %v6886, %v6885
  %v7097 = vpack.c.b16 %v6888, %v6887
  %v7098 = vpack.c.b16 %v6890, %v6889
  %v7099 = vpack.c.b16 %v6892, %v6891
  %v7100 = vpack.c.b16 %v6894, %v6893
  %v7101 = vpack.c.b16 %v6896, %v6895
  %v7102 = vpack.c.b16 %v6898, %v6897
  %v7103 = vpack.c.b16 %v6900, %v6899
  %v7104 = vpack.c.b16 %v6902, %v6901
  %v7105 = vpack.c.b16 %v6904, %v6903
  %v7106 = vpack.c.b16 %v6906, %v6905
  %v7107 = vpack.c.b16 %v6908, %v6907
  %v7108 = vpack.c.b16 %v6910, %v6909
  %v7109 = vpack.c.b16 %v6912, %v6911
  %v7110 = vpack.c.b16 %v6914, %v6913
  %v7111 = vpack.c.b16 %v6916, %v6915
  %v7112 = vpack.c.b16 %v6918, %v6917
  %v7113 = vpack.c.b16 %v6920, %v6919
  %v7114 = vpack.c.b16 %v6922, %v6921
  %v7115 = vpack.c.b16 %v6924, %v6923
  %v7116 = vpack.c.b16 %v6926, %v6925
  %v7117 = vpack.c.b16 %v6928, %v6927
  %v7118 = vpack.c.b16 %v6930, %v6929
  %v7119 = vpack.c.b16 %v6932, %v6931
  %v7120 = vpack.c.b16 %v6934, %v6933
  %v7121 = vpack.c.b16 %v6936, %v6935
  %v7122 = vpack.c.b16 %v6938, %v6937
  %v7123 = vpack.c.b16 %v6940, %v6939
  %v7124 = vpack.c.b16 %v6942, %v6941
  %v7125 = vpack.c.b16 %v6944, %v6943
  %v7126 = vpack.c.b16 %v6946, %v6945
  %v7127 = vpack.c.b16 %v6948, %v6947
  %v7128 = vpack.c.b16 %v6950, %v6949
  %v7129 = vpack.c.b16 %v6952, %v6951
  %v7130 = vpack.c.b16 %v6954, %v6953
  %v7131 = vpack.c.b16 %v6956, %v6955
  %v7132 = vpack.c.b16 %v6958, %v6957
  %v7133 = vpack.c.b16 %v6960, %v6959
  %v7134 = vpack.c.b16 %v6962, %v6961
  %v7135 = vpack.c.b16 %v6964, %v6963
  %v7136 = vpack.c.b16 %v6966, %v6965
  %v7137 = vpack.c.b16 %v6968, %v6967
  %v7138 = vpack.c.b16 %v6970, %v6969
  %v7139 = vpack.c.b16 %v6972, %v6971
  %v7140 = vpack.c.b16 %v6974, %v6973
  %v7141 = vpack.c.b16 %v6976, %v6975
  %v7142 = vpack.c.b16 %v6978, %v6977
  %v7143 = vpack.c.b16 %v6980, %v6979
  %v7144 = vpack.c.b16 %v6982, %v6981
  %v7145 = vpack.c.b16 %v6984, %v6983
  %v7146 = vpack.c.b16 %v6986, %v6985
  %v7147 = vpack.c.b16 %v6988, %v6987
  %v7148 = vpack.c.b16 %v6990, %v6989
  %v7149 = vpack.c.b16 %v6992, %v6991
  %v7150 = vpack.c.b16 %v6994, %v6993
  %v7151 = vpack.c.b16 %v6996, %v6995
  %v7152 = vpack.c.b16 %v6998, %v6997
  %v7153 = vpack.c.b16 %v7000, %v6999
  %v7154 = vpack.c.b16 %v7002, %v7001
  %v7155 = vpack.c.b16 %v7004, %v7003
  %v7156 = vpack.c.b16 %v7006, %v7005
  %v7157 = vpack.c.b16 %v7008, %v7007
  %v7158 = vpack.c.b16 %v7010, %v7009
  %v7159 = vpack.c.b16 %v7012, %v7011
  %v7160 = vpack.c.b16 %v7014, %v7013
  %v7161 = vpack.c.b16 %v7016, %v7015
  %v7162 = vpack.c.b16 %v7018, %v7017
  %v7163 = vpack.c.b16 %v7020, %v7019
  %v7164 = vpack.c.b16 %v7022, %v7021
  %v7165 = vpack.c.b16 %v7024, %v7023
  %v7166 = vpack.c.b16 %v7026, %v7025
  %v7167 = vpack.c.b16 %v7028, %v7027
  %v7168 = vpack.c.b16 %v7030, %v7029
  %v7169 = vpack.c.b16 %v7032, %v7031
  %v7170 = vpack.c.b16 %v7034, %v7033
  %v7171 = vpack.c.b16 %v7036, %v7035
  %v7172 = vpack.c.b16 %v7038, %v7037
  %v7173 = vpack.c.b16 %v7040, %v7039
  %v7174 = vpack.c.b16 %v7042, %v7041
  %v7175 = vpack.c.b16 %v7044, %v7043
  %v7176 = vpack.c.b16 %v7046, %v7045
  %v7177 = vpack.c.b16 %v7048, %v7047
  %v7178 = vpack.c.b16 %v7050, %v7049
  %7307 = vmatpush.bf16.msra.mxu0 %v7058
  %7308 = vmatpush.bf16.msra.mxu0 %v7057
  %7309 = vmatpush.bf16.msra.mxu0 %v7056
  %7310 = vmatpush.bf16.msra.mxu0 %v7055
  %7311 = vmatpush.bf16.msra.mxu0 %v7054
  %7312 = vmatpush.bf16.msra.mxu0 %v7053
  %7313 = vmatpush.bf16.msra.mxu0 %v7052
  %7314 = vmatpush.bf16.msra.mxu0 %v7051
  %7315 = vmatmul.bf16.gmra.mxu0 %v6263
  %v7316 = vpop.f32.mrf.mxu0
  %v7317 = vadd.f32 %v6537, %v7316
  %v7318 = vpop.f32.mrf.mxu0
  %v7319 = vadd.f32 %v6537, %v7318
  %7320 = vdwg.mxu0
  %7321 = vmatpush.bf16.msra.mxu0 %v7066
  %7322 = vmatpush.bf16.msra.mxu0 %v7065
  %7323 = vmatpush.bf16.msra.mxu0 %v7064
  %7324 = vmatpush.bf16.msra.mxu0 %v7063
  %7325 = vmatpush.bf16.msra.mxu0 %v7062
  %7326 = vmatpush.bf16.msra.mxu0 %v7061
  %7327 = vmatpush.bf16.msra.mxu0 %v7060
  %7328 = vmatpush.bf16.msra.mxu0 %v7059
  %7329 = vmatmul.bf16.gmra.mxu0 %v6264
  %v7330 = vpop.f32.mrf.mxu0
  %v7331 = vadd.f32 %v7317, %v7330
  %v7332 = vpop.f32.mrf.mxu0
  %v7333 = vadd.f32 %v7319, %v7332
  %7334 = vdwg.mxu0
  %7335 = vmatpush.bf16.msra.mxu0 %v7074
  %7336 = vmatpush.bf16.msra.mxu0 %v7073
  %7337 = vmatpush.bf16.msra.mxu0 %v7072
  %7338 = vmatpush.bf16.msra.mxu0 %v7071
  %7339 = vmatpush.bf16.msra.mxu0 %v7070
  %7340 = vmatpush.bf16.msra.mxu0 %v7069
  %7341 = vmatpush.bf16.msra.mxu0 %v7068
  %7342 = vmatpush.bf16.msra.mxu0 %v7067
  %7343 = vmatmul.bf16.gmra.mxu0 %v6265
  %v7344 = vpop.f32.mrf.mxu0
  %v7345 = vadd.f32 %v7331, %v7344
  %v7346 = vpop.f32.mrf.mxu0
  %v7347 = vadd.f32 %v7333, %v7346
  %7348 = vdwg.mxu0
  %7349 = vmatpush.bf16.msra.mxu0 %v7082
  %7350 = vmatpush.bf16.msra.mxu0 %v7081
  %7351 = vmatpush.bf16.msra.mxu0 %v7080
  %7352 = vmatpush.bf16.msra.mxu0 %v7079
  %7353 = vmatpush.bf16.msra.mxu0 %v7078
  %7354 = vmatpush.bf16.msra.mxu0 %v7077
  %7355 = vmatpush.bf16.msra.mxu0 %v7076
  %7356 = vmatpush.bf16.msra.mxu0 %v7075
  %7357 = vmatmul.bf16.gmra.mxu0 %v6266
  %v7358 = vpop.f32.mrf.mxu0
  %v7359 = vadd.f32 %v7345, %v7358
  %v7360 = vpop.f32.mrf.mxu0
  %v7361 = vadd.f32 %v7347, %v7360
  %7362 = vdwg.mxu0
  %7363 = vmatpush.bf16.msra.mxu0 %v7090
  %7364 = vmatpush.bf16.msra.mxu0 %v7089
  %7365 = vmatpush.bf16.msra.mxu0 %v7088
  %7366 = vmatpush.bf16.msra.mxu0 %v7087
  %7367 = vmatpush.bf16.msra.mxu0 %v7086
  %7368 = vmatpush.bf16.msra.mxu0 %v7085
  %7369 = vmatpush.bf16.msra.mxu0 %v7084
  %7370 = vmatpush.bf16.msra.mxu0 %v7083
  %7371 = vmatmul.bf16.gmra.mxu0 %v6267
  %v7372 = vpop.f32.mrf.mxu0
  %v7373 = vadd.f32 %v7359, %v7372
  %v7374 = vpop.f32.mrf.mxu0
  %v7375 = vadd.f32 %v7361, %v7374
  %7376 = vdwg.mxu0
  %7377 = vmatpush.bf16.msra.mxu0 %v7098
  %7378 = vmatpush.bf16.msra.mxu0 %v7097
  %7379 = vmatpush.bf16.msra.mxu0 %v7096
  %7380 = vmatpush.bf16.msra.mxu0 %v7095
  %7381 = vmatpush.bf16.msra.mxu0 %v7094
  %7382 = vmatpush.bf16.msra.mxu0 %v7093
  %7383 = vmatpush.bf16.msra.mxu0 %v7092
  %7384 = vmatpush.bf16.msra.mxu0 %v7091
  %7385 = vmatmul.bf16.gmra.mxu0 %v6268
  %v7386 = vpop.f32.mrf.mxu0
  %v7387 = vadd.f32 %v7373, %v7386
  %v7388 = vpop.f32.mrf.mxu0
  %v7389 = vadd.f32 %v7375, %v7388
  %7390 = vdwg.mxu0
  %7391 = vmatpush.bf16.msra.mxu0 %v7106
  %7392 = vmatpush.bf16.msra.mxu0 %v7105
  %7393 = vmatpush.bf16.msra.mxu0 %v7104
  %7394 = vmatpush.bf16.msra.mxu0 %v7103
  %7395 = vmatpush.bf16.msra.mxu0 %v7102
  %7396 = vmatpush.bf16.msra.mxu0 %v7101
  %7397 = vmatpush.bf16.msra.mxu0 %v7100
  %7398 = vmatpush.bf16.msra.mxu0 %v7099
  %7399 = vmatmul.bf16.gmra.mxu0 %v6269
  %v7400 = vpop.f32.mrf.mxu0
  %v7401 = vadd.f32 %v7387, %v7400
  %v7402 = vpop.f32.mrf.mxu0
  %v7403 = vadd.f32 %v7389, %v7402
  %7404 = vdwg.mxu0
  %7405 = vmatpush.bf16.msra.mxu0 %v7114
  %7406 = vmatpush.bf16.msra.mxu0 %v7113
  %7407 = vmatpush.bf16.msra.mxu0 %v7112
  %7408 = vmatpush.bf16.msra.mxu0 %v7111
  %7409 = vmatpush.bf16.msra.mxu0 %v7110
  %7410 = vmatpush.bf16.msra.mxu0 %v7109
  %7411 = vmatpush.bf16.msra.mxu0 %v7108
  %7412 = vmatpush.bf16.msra.mxu0 %v7107
  %7413 = vmatmul.bf16.gmra.mxu0 %v6270
  %v7414 = vpop.f32.mrf.mxu0
  %v7415 = vadd.f32 %v7401, %v7414
  %v7416 = vpop.f32.mrf.mxu0
  %v7417 = vadd.f32 %v7403, %v7416
  %7418 = vdwg.mxu0
  %7419 = vmatpush.bf16.msra.mxu0 %v7122
  %7420 = vmatpush.bf16.msra.mxu0 %v7121
  %7421 = vmatpush.bf16.msra.mxu0 %v7120
  %7422 = vmatpush.bf16.msra.mxu0 %v7119
  %7423 = vmatpush.bf16.msra.mxu0 %v7118
  %7424 = vmatpush.bf16.msra.mxu0 %v7117
  %7425 = vmatpush.bf16.msra.mxu0 %v7116
  %7426 = vmatpush.bf16.msra.mxu0 %v7115
  %7427 = vmatmul.bf16.gmra.mxu0 %v6271
  %v7428 = vpop.f32.mrf.mxu0
  %v7429 = vadd.f32 %v7415, %v7428
  %v7430 = vpop.f32.mrf.mxu0
  %v7431 = vadd.f32 %v7417, %v7430
  %7432 = vdwg.mxu0
  %7433 = vmatpush.bf16.msra.mxu0 %v7130
  %7434 = vmatpush.bf16.msra.mxu0 %v7129
  %7435 = vmatpush.bf16.msra.mxu0 %v7128
  %7436 = vmatpush.bf16.msra.mxu0 %v7127
  %7437 = vmatpush.bf16.msra.mxu0 %v7126
  %7438 = vmatpush.bf16.msra.mxu0 %v7125
  %7439 = vmatpush.bf16.msra.mxu0 %v7124
  %7440 = vmatpush.bf16.msra.mxu0 %v7123
  %7441 = vmatmul.bf16.gmra.mxu0 %v6272
  %v7442 = vpop.f32.mrf.mxu0
  %v7443 = vadd.f32 %v7429, %v7442
  %v7444 = vpop.f32.mrf.mxu0
  %v7445 = vadd.f32 %v7431, %v7444
  %7446 = vdwg.mxu0
  %7447 = vmatpush.bf16.msra.mxu0 %v7138
  %7448 = vmatpush.bf16.msra.mxu0 %v7137
  %7449 = vmatpush.bf16.msra.mxu0 %v7136
  %7450 = vmatpush.bf16.msra.mxu0 %v7135
  %7451 = vmatpush.bf16.msra.mxu0 %v7134
  %7452 = vmatpush.bf16.msra.mxu0 %v7133
  %7453 = vmatpush.bf16.msra.mxu0 %v7132
  %7454 = vmatpush.bf16.msra.mxu0 %v7131
  %7455 = vmatmul.bf16.gmra.mxu0 %v6273
  %v7456 = vpop.f32.mrf.mxu0
  %v7457 = vadd.f32 %v7443, %v7456
  %v7458 = vpop.f32.mrf.mxu0
  %v7459 = vadd.f32 %v7445, %v7458
  %7460 = vdwg.mxu0
  %7461 = vmatpush.bf16.msra.mxu0 %v7146
  %7462 = vmatpush.bf16.msra.mxu0 %v7145
  %7463 = vmatpush.bf16.msra.mxu0 %v7144
  %7464 = vmatpush.bf16.msra.mxu0 %v7143
  %7465 = vmatpush.bf16.msra.mxu0 %v7142
  %7466 = vmatpush.bf16.msra.mxu0 %v7141
  %7467 = vmatpush.bf16.msra.mxu0 %v7140
  %7468 = vmatpush.bf16.msra.mxu0 %v7139
  %7469 = vmatmul.bf16.gmra.mxu0 %v6274
  %v7470 = vpop.f32.mrf.mxu0
  %v7471 = vadd.f32 %v7457, %v7470
  %v7472 = vpop.f32.mrf.mxu0
  %v7473 = vadd.f32 %v7459, %v7472
  %7474 = vdwg.mxu0
  %7475 = vmatpush.bf16.msra.mxu0 %v7154
  %7476 = vmatpush.bf16.msra.mxu0 %v7153
  %7477 = vmatpush.bf16.msra.mxu0 %v7152
  %7478 = vmatpush.bf16.msra.mxu0 %v7151
  %7479 = vmatpush.bf16.msra.mxu0 %v7150
  %7480 = vmatpush.bf16.msra.mxu0 %v7149
  %7481 = vmatpush.bf16.msra.mxu0 %v7148
  %7482 = vmatpush.bf16.msra.mxu0 %v7147
  %7483 = vmatmul.bf16.gmra.mxu0 %v6275
  %v7484 = vpop.f32.mrf.mxu0
  %v7485 = vadd.f32 %v7471, %v7484
  %v7486 = vpop.f32.mrf.mxu0
  %v7487 = vadd.f32 %v7473, %v7486
  %7488 = vdwg.mxu0
  %7489 = vmatpush.bf16.msra.mxu0 %v7162
  %7490 = vmatpush.bf16.msra.mxu0 %v7161
  %7491 = vmatpush.bf16.msra.mxu0 %v7160
  %7492 = vmatpush.bf16.msra.mxu0 %v7159
  %7493 = vmatpush.bf16.msra.mxu0 %v7158
  %7494 = vmatpush.bf16.msra.mxu0 %v7157
  %7495 = vmatpush.bf16.msra.mxu0 %v7156
  %7496 = vmatpush.bf16.msra.mxu0 %v7155
  %7497 = vmatmul.bf16.gmra.mxu0 %v6276
  %v7498 = vpop.f32.mrf.mxu0
  %v7499 = vadd.f32 %v7485, %v7498
  %v7500 = vpop.f32.mrf.mxu0
  %v7501 = vadd.f32 %v7487, %v7500
  %7502 = vdwg.mxu0
  %7503 = vmatpush.bf16.msra.mxu0 %v7170
  %7504 = vmatpush.bf16.msra.mxu0 %v7169
  %7505 = vmatpush.bf16.msra.mxu0 %v7168
  %7506 = vmatpush.bf16.msra.mxu0 %v7167
  %7507 = vmatpush.bf16.msra.mxu0 %v7166
  %7508 = vmatpush.bf16.msra.mxu0 %v7165
  %7509 = vmatpush.bf16.msra.mxu0 %v7164
  %7510 = vmatpush.bf16.msra.mxu0 %v7163
  %7511 = vmatmul.bf16.gmra.mxu0 %v6277
  %v7512 = vpop.f32.mrf.mxu0
  %v7513 = vadd.f32 %v7499, %v7512
  %v7514 = vpop.f32.mrf.mxu0
  %v7515 = vadd.f32 %v7501, %v7514
  %7516 = vdwg.mxu0
  %7517 = vmatpush.bf16.msra.mxu0 %v7178
  %7518 = vmatpush.bf16.msra.mxu0 %v7177
  %7519 = vmatpush.bf16.msra.mxu0 %v7176
  %7520 = vmatpush.bf16.msra.mxu0 %v7175
  %7521 = vmatpush.bf16.msra.mxu0 %v7174
  %7522 = vmatpush.bf16.msra.mxu0 %v7173
  %7523 = vmatpush.bf16.msra.mxu0 %v7172
  %7524 = vmatpush.bf16.msra.mxu0 %v7171
  %7525 = vmatmul.bf16.gmra.mxu0 %v6278
  %v7526 = vpop.f32.mrf.mxu0
  %v7527 = vadd.f32 %v7513, %v7526
  %v7528 = vpop.f32.mrf.mxu0
  %v7529 = vadd.f32 %v7515, %v7528
  %7530 = vdwg.mxu0
  %v7531 = vadd.f32 %v5581, %v7527
  %v7532 = vadd.f32 %v5582, %v7529
  %v7533 = vsel %vm98, %v7531, 0.0
  %7534 = vadd.xlane.f32.xlu0 %v7533
  %v7535 = vpop.xlane.xlu0 %7534
  %v7536 = vsel %vm98, %v7532, 0.0
  %7537 = vadd.xlane.f32.xlu0 %v7536
  %v7538 = vpop.xlane.xlu0 %7537
  %v7539 = vmul.f32 %v7535, %v2393
  %v7540 = vmul.f32 %v7538, %v2393
  %v7541 = vsub.f32 %v7531, %v7539
  %v7542 = vsub.f32 %v7532, %v7540
  %v7543 = vmul.f32 %v7541, %v7541
  %v7544 = vmul.f32 %v7542, %v7542
  %v7545 = vsel %vm98, %v7543, 0.0
  %7546 = vadd.xlane.f32.xlu0 %v7545
  %v7547 = vpop.xlane.xlu0 %7546
  %v7548 = vsel %vm98, %v7544, 0.0
  %7549 = vadd.xlane.f32.xlu0 %v7548
  %v7550 = vpop.xlane.xlu0 %7549
  %v7551 = vmul.f32 %v7547, %v2393
  %v7552 = vmul.f32 %v7550, %v2393
  %v7553 = vadd.f32 %v7551, 1e-05
  %v7554 = vadd.f32 %v7552, 1e-05
  %v7555 = vrsqrt.pop %v7553
  %v7556 = vmul.f32 %v7555, %v7553
  %v7557 = vmul.f32 %v7556, %v7555
  %v7558 = vmul.f32 0.5, %v7557
  %v7559 = vsub.f32 1.5, %v7558
  %v7560 = vmul.f32 %v7555, %v7559
  %vm7561 = vweird.f32 %v7553
  %vm7562 = vweird.f32 %v7555
  %vm7563 = vmor %vm7561, %vm7562
  %v7564 = vsel %vm7563, %v7555, %v7560
  %v7565 = vrsqrt.pop %v7554
  %v7566 = vmul.f32 %v7565, %v7554
  %v7567 = vmul.f32 %v7566, %v7565
  %v7568 = vmul.f32 0.5, %v7567
  %v7569 = vsub.f32 1.5, %v7568
  %v7570 = vmul.f32 %v7565, %v7569
  %vm7571 = vweird.f32 %v7554
  %vm7572 = vweird.f32 %v7565
  %vm7573 = vmor %vm7571, %vm7572
  %v7574 = vsel %vm7573, %v7565, %v7570
  %v7575 = vmul.f32 %v7541, %v7564
  %v7576 = vmul.f32 %v7542, %v7574
  %v7577 = vperm.slane %v59, 2
  %v7578 = vmul.f32 %v7575, %v7577
  %v7579 = vmul.f32 %v7576, %v7577
  %v7580 = vperm.slane %v60, 2
  %v7581 = vadd.f32 %v7578, %v7580
  %v7582 = vadd.f32 %v7579, %v7580
  %7583 = vst.msk [vmem:[%s16] sm:$0xff] %vm98, %v7581
  %7584 = vst.msk [vmem:[%s16 + $0x8] sm:$0xff] %vm98, %v7582
  // Predicated region
  $region66: #{transformer_decoder_forward.1} parent=0 // pred_check
    _
  $region67: #{transformer_decoder_forward.1} parent=0 // pred_check_branch
    %7586 = sbr.rel (0) target = $region69
  $region68: #{transformer_decoder_forward.1} parent=0 // pred_region
    _
  $region69: #{transformer_decoder_forward.1} parent=0 // pred_fallthru
    _
  // Predicated region
  $region70: #{transformer_decoder_forward.1} parent=0 // pred_check
    _
  $region71: #{transformer_decoder_forward.1} parent=0 // pred_check_branch
    %7588 = sbr.rel (0) target = $region73
  $region72: #{transformer_decoder_forward.1} parent=0 // pred_region
    _
  $region73: #{transformer_decoder_forward.1} parent=0 // pred_fallthru
    _

</llo_original>
